<compile_context>
chip_gen: v7x
topology: tpu7x:2x2x1
jax: 0.10.0
libtpu: 0.0.40
codegen_flags: <defaults>
</compile_context>

<pallas_src>
import jax
import jax.numpy as jnp
import numpy as np
from jax.experimental import pallas as pl
from jax.experimental.pallas import tpu as pltpu

NEG_SLOPE = 0.01     # nn.LeakyReLU default
BN_EPS = 1e-5        # nn.BatchNorm1d default
HIDDEN = 16          # LSTM hidden size
T_STEPS = 8          # conv out-channels == LSTM sequence length
LSTM_IN = 40         # pooled length == LSTM input_size
BB = 8               # batch-block size (sublane aligned)
LANE = 128           # lane tile width
GATES = 4 * LANE     # 4 gates, one 128-lane tile each (per direction)
NP = 128             # padded class lanes (lane-dense output store)
CK = 18              # conv reduction (in_channels * kernel) = 6*3


# ---------------------------------------------------------------------------
# Fused kernel: conv+leaky+pool+BN  ->  biLSTM  ->  leaky+FC+softmax
# ---------------------------------------------------------------------------
def crnn_kernel(x2_ref, w2_ref, cbias_ref, scale_ref, shift_ref,
                wih_ref, gbias_ref, whhf_ref, whhb_ref,
                wfcf_ref, wfcb_ref, fcb_ref,
                out_ref,
                gx_ref):
    T = T_STEPS

    # ---- Conv1d(6->8,k=3,'same') as ONE batch-block-diagonal matmul whose output
    #      rows are already in (timestep t, batch bb) order; MaxPool1d(3,3) is the
    #      max of three lane-aligned 128-wide stripes; bias + LeakyReLU commute with
    #      max (exact); BatchNorm is the eval-mode affine.
    y = jnp.dot(w2_ref[...], x2_ref[0],
                preferred_element_type=jnp.float32)                    # (64, 384)
    m = jnp.maximum(jnp.maximum(y[:, 0:LANE], y[:, LANE:2 * LANE]),
                    y[:, 2 * LANE:3 * LANE])                           # (64, 128)
    m = m + cbias_ref[...]                                             # (64, 1) bias
    m = jnp.where(m > 0, m, NEG_SLOPE * m)                             # LeakyReLU
    seq = m * scale_ref[...] + shift_ref[...]                          # BN affine
    # Lanes >= 40 of `seq` hold junk; wih rows >= 40 are zero, so they contribute 0.

    # ---- Hoisted input-to-hidden projections for BOTH directions: one full-tile
    #      matmul (64,128)@(128,1024). Each gate keeps its own 128-lane tile.
    gx_ref[...] = (jnp.dot(seq, wih_ref[...],
                           preferred_element_type=jnp.float32)
                   + gbias_ref[...])                                   # (64, 1024)

    # ---- Interleaved bidirectional recurrence + FC logit accumulation ----
    def lstm_step(gx, h, c, whh_ref):
        g = gx + jnp.dot(h, whh_ref[...], preferred_element_type=jnp.float32)
        i = jax.nn.sigmoid(g[:, 0 * LANE:1 * LANE])
        f = jax.nn.sigmoid(g[:, 1 * LANE:2 * LANE])
        gg = jnp.tanh(g[:, 2 * LANE:3 * LANE])
        o = jax.nn.sigmoid(g[:, 3 * LANE:4 * LANE])
        c_new = f * c + i * gg
        h_new = o * jnp.tanh(c_new)
        return h_new, c_new

    zeros = jnp.zeros((BB, LANE), jnp.float32)
    h_f, c_f, h_b, c_b = zeros, zeros, zeros, zeros
    logits = jnp.zeros((BB, NP), jnp.float32)

    for s in range(T):
        tf, tb = s, T - 1 - s
        gx_f = gx_ref[tf * BB:(tf + 1) * BB, 0:GATES]
        gx_b = gx_ref[tb * BB:(tb + 1) * BB, GATES:2 * GATES]
        h_f, c_f = lstm_step(gx_f, h_f, c_f, whhf_ref)
        h_b, c_b = lstm_step(gx_b, h_b, c_b, whhb_ref)
        # LeakyReLU (fc front-end); padded hidden lanes are exactly 0 and the FC
        # weight rows there are 0, so full 128-lane matmuls are exact.
        zf = jnp.where(h_f > 0, h_f, NEG_SLOPE * h_f)
        zb = jnp.where(h_b > 0, h_b, NEG_SLOPE * h_b)
        logits = logits + jnp.dot(zf, wfcf_ref[tf], preferred_element_type=jnp.float32)
        logits = logits + jnp.dot(zb, wfcb_ref[tb], preferred_element_type=jnp.float32)

    # ---- Softmax; padded class lanes carry a -1e30 bias so exp() underflows to 0.
    logits = logits + fcb_ref[...]
    mx = jnp.max(logits, axis=1, keepdims=True)
    e = jnp.exp(logits - mx)
    denom = jnp.sum(e, axis=1, keepdims=True)
    out_ref[...] = e * pl.reciprocal(denom, approx=False)


# ---------------------------------------------------------------------------
# Wrapper: im2col / parameter folding+padding, single pallas_call, unpad output
# ---------------------------------------------------------------------------
def crnn_forward(x, params):
    B, c_in, L = x.shape
    assert c_in == 6 and L % 3 == 0
    Lp = L // 3
    assert Lp == LSTM_IN, "LSTM input_size=40 requires L == 120"
    T, H = T_STEPS, HIDDEN
    n_class = params["fc_w"].shape[0]
    assert n_class <= NP

    nblocks = pl.cdiv(B, BB)
    Bp = nblocks * BB

    # im2col for the k=3 'same' conv grouped by pooling phase p (l = 3*j + p).
    # Layout: X2[block, ck*BB + bb, p*128 + j] = xpad[bb, c, 3j + p + k], ck = c*3+k.
    xb = jnp.pad(x, ((0, Bp - B), (0, 0), (0, 0)))                       # (Bp, 6, L)
    xpad = jnp.pad(xb, ((0, 0), (0, 0), (1, 1)))                         # (Bp, 6, L+2)
    cols = jnp.stack([xpad[:, :, k:k + L] for k in range(3)], axis=2)    # (b, c, k, l)
    cols = cols.reshape(Bp, 6, 3, Lp, 3)                                 # (b, c, k, j, p)
    a = jnp.transpose(cols, (0, 1, 2, 4, 3)).reshape(Bp, CK, 3, Lp)      # (b, ck, p, j)
    a = jnp.pad(a, ((0, 0), (0, 0), (0, 0), (0, LANE - Lp)))             # j -> 128
    a = a.reshape(nblocks, BB, CK, 3, LANE)
    x2 = jnp.transpose(a, (0, 2, 1, 3, 4)).reshape(nblocks, CK * BB, 3 * LANE)

    # Conv weight replicated block-diagonally over the batch block so the matmul
    # output rows land directly in (timestep, batch) order.
    wconv = params["conv_w"].reshape(T, CK)                              # (8, 18)
    w2 = jnp.kron(wconv, jnp.eye(BB, dtype=jnp.float32))                 # (64, 144)
    cbias = jnp.repeat(params["conv_b"], BB).reshape(T * BB, 1)
    scale1 = params["bn_gamma"] / jnp.sqrt(params["bn_var"] + BN_EPS)
    shift1 = params["bn_beta"] - params["bn_mean"] * scale1
    scale = jnp.repeat(scale1, BB).reshape(T * BB, 1)
    shift = jnp.repeat(shift1, BB).reshape(T * BB, 1)

    # LSTM weights: every gate gets its own 128-lane tile (tile-aligned slices in-kernel).
    def expand_gates(w):      # torch (4H, K) -> (K, 4*128), zero-padded lanes
        K = w.shape[1]
        wt = w.T.reshape(K, 4, H)
        wt = jnp.pad(wt, ((0, 0), (0, 0), (0, LANE - H)))
        return wt.reshape(K, GATES)

    def expand_bias(b):       # (4H,) -> (4*128,)
        return jnp.pad(b.reshape(4, H), ((0, 0), (0, LANE - H))).reshape(GATES)

    wih = jnp.concatenate([expand_gates(params["w_ih_f"]),
                           expand_gates(params["w_ih_b"])], axis=1)      # (40, 1024)
    wih = jnp.pad(wih, ((0, LANE - LSTM_IN), (0, 0)))                    # (128, 1024)
    gbias = jnp.concatenate(
        [expand_bias(params["b_ih_f"] + params["b_hh_f"]),
         expand_bias(params["b_ih_b"] + params["b_hh_b"])]).reshape(1, 2 * GATES)
    whh_f = jnp.pad(expand_gates(params["w_hh_f"]), ((0, LANE - H), (0, 0)))  # (128, 512)
    whh_b = jnp.pad(expand_gates(params["w_hh_b"]), ((0, LANE - H), (0, 0)))  # (128, 512)

    # FC weights split per (timestep, direction); hidden rows and class lanes padded
    # to 128 so the per-step logit matmuls are full-tile.
    fc_wT = params["fc_w"].T.reshape(T, 2, H, n_class)                   # (t, dir, h, n)
    wfc_f = jnp.pad(fc_wT[:, 0], ((0, 0), (0, LANE - H), (0, NP - n_class)))  # (8,128,128)
    wfc_b = jnp.pad(fc_wT[:, 1], ((0, 0), (0, LANE - H), (0, NP - n_class)))  # (8,128,128)
    fcb = jnp.concatenate([params["fc_b"],
                           jnp.full((NP - n_class,), -1e30, jnp.float32)]).reshape(1, NP)

    def bcast_spec(shape):
        return pl.BlockSpec(shape, lambda i, _s=shape: (0,) * len(_s))

    out = pl.pallas_call(
        crnn_kernel,
        out_shape=jax.ShapeDtypeStruct((Bp, NP), jnp.float32),
        grid=(nblocks,),
        in_specs=[
            pl.BlockSpec((1, CK * BB, 3 * LANE), lambda i: (i, 0, 0)),  # x2 per block
            bcast_spec((T * BB, CK * BB)),       # block-diag conv weight
            bcast_spec((T * BB, 1)),             # conv bias   (per row)
            bcast_spec((T * BB, 1)),             # BN scale    (per row)
            bcast_spec((T * BB, 1)),             # BN shift    (per row)
            bcast_spec((LANE, 2 * GATES)),       # W_ih (both directions, rows padded)
            bcast_spec((1, 2 * GATES)),          # gate biases
            bcast_spec((LANE, GATES)),           # W_hh forward  (rows padded to 128)
            bcast_spec((LANE, GATES)),           # W_hh backward (rows padded to 128)
            bcast_spec((T, LANE, NP)),           # FC weight, forward halves per t
            bcast_spec((T, LANE, NP)),           # FC weight, backward halves per t
            bcast_spec((1, NP)),                 # FC bias (padded lanes = -1e30)
        ],
        out_specs=pl.BlockSpec((BB, NP), lambda i: (i, 0)),
        scratch_shapes=[
            pltpu.VMEM((T * BB, 2 * GATES), jnp.float32),    # hoisted gate projections
        ],
        compiler_params=pltpu.CompilerParams(dimension_semantics=("parallel",)),
    )(x2, w2, cbias, scale, shift, wih, gbias, whh_f, whh_b, wfc_f, wfc_b, fcb)

    return out[:B, :n_class]


# ---------------------------------------------------------------------------
# Deterministic parameter init (PyTorch-style shapes; synthetic values)
# ---------------------------------------------------------------------------
def init_params(key, n_class):
    keys = jax.random.split(key, 12)
    H = HIDDEN

    def u(k, shape, fan_in):
        bound = 1.0 / np.sqrt(fan_in)
        return jax.random.uniform(k, shape, jnp.float32, -bound, bound)

    return dict(
        conv_w=u(keys[0], (8, 6, 3), 6 * 3),
        conv_b=u(keys[1], (8,), 6 * 3),
        bn_gamma=jnp.ones((8,), jnp.float32),
        bn_beta=jnp.zeros((8,), jnp.float32),
        bn_mean=jnp.zeros((8,), jnp.float32),
        bn_var=jnp.ones((8,), jnp.float32),
        w_ih_f=u(keys[2], (4 * H, LSTM_IN), H),
        w_hh_f=u(keys[3], (4 * H, H), H),
        b_ih_f=u(keys[4], (4 * H,), H),
        b_hh_f=u(keys[5], (4 * H,), H),
        w_ih_b=u(keys[6], (4 * H, LSTM_IN), H),
        w_hh_b=u(keys[7], (4 * H, H), H),
        b_ih_b=u(keys[8], (4 * H,), H),
        b_hh_b=u(keys[9], (4 * H,), H),
        fc_w=u(keys[10], (n_class, 256), 256),
        fc_b=u(keys[11], (n_class,), 256),
    )


# ---------------------------------------------------------------------------
# Pure-JAX reference (eval-mode semantics, matches PyTorch forward)
# ---------------------------------------------------------------------------
def crnn_reference(x, params):
    B, _, L = x.shape
    Lp = L // 3
    H = HIDDEN
    xp = jnp.pad(x, ((0, 0), (0, 0), (1, 1)))
    y = sum(jnp.einsum("oc,bcl->bol", params["conv_w"][:, :, k], xp[:, :, k:k + L])
            for k in range(3)) + params["conv_b"][None, :, None]
    y = jnp.where(y > 0, y, NEG_SLOPE * y)
    y = y.reshape(B, 8, Lp, 3).max(axis=-1)
    y = (y - params["bn_mean"][None, :, None]) / jnp.sqrt(params["bn_var"][None, :, None] + BN_EPS)
    y = y * params["bn_gamma"][None, :, None] + params["bn_beta"][None, :, None]
    seq = y                                                  # (B, 8, 40)

    def run_dir(wih, whh, bih, bhh, reverse):
        h = jnp.zeros((B, H)); c = jnp.zeros((B, H))
        outs = [None] * T_STEPS
        order = range(T_STEPS - 1, -1, -1) if reverse else range(T_STEPS)
        for t in order:
            g = seq[:, t, :] @ wih.T + h @ whh.T + bih + bhh
            i = jax.nn.sigmoid(g[:, :H]); f = jax.nn.sigmoid(g[:, H:2 * H])
            gg = jnp.tanh(g[:, 2 * H:3 * H]); o = jax.nn.sigmoid(g[:, 3 * H:4 * H])
            c = f * c + i * gg
            h = o * jnp.tanh(c)
            outs[t] = h
        return jnp.stack(outs, axis=1)                        # (B, 8, H)

    fwd = run_dir(params["w_ih_f"], params["w_hh_f"], params["b_ih_f"], params["b_hh_f"], False)
    bwd = run_dir(params["w_ih_b"], params["w_hh_b"], params["b_ih_b"], params["b_hh_b"], True)
    lstm_out = jnp.concatenate([fwd, bwd], axis=-1)           # (B, 8, 32)
    z = jnp.where(lstm_out > 0, lstm_out, NEG_SLOPE * lstm_out).reshape(B, 256)
    logits = z @ params["fc_w"].T + params["fc_b"]
    return jax.nn.softmax(logits, axis=1)


if __name__ == "__main__":
    key = jax.random.PRNGKey(0)
    kx, kp = jax.random.split(key)
    n_class = 5
    # x: (batch=2, channels=6, length=120); L=120 is required so that
    # MaxPool1d(3,3) yields 40 features (LSTM input_size) and flatten -> 256.
    x = jax.random.normal(kx, (2, 6, 120), jnp.float32)
    params = init_params(kp, n_class)

    fwd_fn = jax.jit(crnn_forward)
    out = jax.block_until_ready(fwd_fn(x, params))
    ref = jax.block_until_ready(crnn_reference(x, params))
    assert out.shape == (2, n_class)
    np.testing.assert_allclose(np.asarray(out), np.asarray(ref), rtol=1e-4, atol=2e-5)
    # TODO(synk): Dropout is the inference-mode identity; training-mode dropout and
    # batch-statistics BatchNorm are not implemented.
    print("KERNEL_OK")
</pallas_src>

<mosaic_0001>
module attributes {stable_mosaic.version = 11 : i64} {
  func.func @crnn_kernel(%arg0: i32, %arg1: memref<1x144x384xf32, #tpu.memory_space<vmem>>, %arg2: memref<64x144xf32, #tpu.memory_space<vmem>>, %arg3: memref<64x1xf32, #tpu.memory_space<vmem>>, %arg4: memref<64x1xf32, #tpu.memory_space<vmem>>, %arg5: memref<64x1xf32, #tpu.memory_space<vmem>>, %arg6: memref<128x1024xf32, #tpu.memory_space<vmem>>, %arg7: memref<1x1024xf32, #tpu.memory_space<vmem>>, %arg8: memref<128x512xf32, #tpu.memory_space<vmem>>, %arg9: memref<128x512xf32, #tpu.memory_space<vmem>>, %arg10: memref<8x128x128xf32, #tpu.memory_space<vmem>>, %arg11: memref<8x128x128xf32, #tpu.memory_space<vmem>>, %arg12: memref<1x128xf32, #tpu.memory_space<vmem>>, %arg13: memref<8x128xf32, #tpu.memory_space<vmem>>, %arg14: memref<64x1024xf32, #tpu.memory_space<vmem>>) attributes {dimension_semantics = [#tpu.dimension_semantics<parallel>], iteration_bounds = array<i64: 1>, scalar_prefetch = 0 : i64, scratch_operands = 1 : i64, tpu.core_type = #tpu.core_type<tc>, window_params = [{transform_indices = @transform_0, window_bounds = array<i64: 1, 144, 384>}, {pipeline_mode = #tpu.pipeline_mode<synchronous>, transform_indices = @transform_1, window_bounds = array<i64: 64, 144>}, {pipeline_mode = #tpu.pipeline_mode<synchronous>, transform_indices = @transform_2, window_bounds = array<i64: 64, 1>}, {pipeline_mode = #tpu.pipeline_mode<synchronous>, transform_indices = @transform_3, window_bounds = array<i64: 64, 1>}, {pipeline_mode = #tpu.pipeline_mode<synchronous>, transform_indices = @transform_4, window_bounds = array<i64: 64, 1>}, {pipeline_mode = #tpu.pipeline_mode<synchronous>, transform_indices = @transform_5, window_bounds = array<i64: 128, 1024>}, {pipeline_mode = #tpu.pipeline_mode<synchronous>, transform_indices = @transform_6, window_bounds = array<i64: 1, 1024>}, {pipeline_mode = #tpu.pipeline_mode<synchronous>, transform_indices = @transform_7, window_bounds = array<i64: 128, 512>}, {pipeline_mode = #tpu.pipeline_mode<synchronous>, transform_indices = @transform_8, window_bounds = array<i64: 128, 512>}, {pipeline_mode = #tpu.pipeline_mode<synchronous>, transform_indices = @transform_9, window_bounds = array<i64: 8, 128, 128>}, {pipeline_mode = #tpu.pipeline_mode<synchronous>, transform_indices = @transform_10, window_bounds = array<i64: 8, 128, 128>}, {pipeline_mode = #tpu.pipeline_mode<synchronous>, transform_indices = @transform_11, window_bounds = array<i64: 1, 128>}, {transform_indices = @transform_12, window_bounds = array<i64: 8, 128>}]} {
    %c0 = arith.constant 0 : index
    %c0_0 = arith.constant 0 : index
    %0 = vector.load %arg2[%c0, %c0_0] : memref<64x144xf32, #tpu.memory_space<vmem>>, vector<64x144xf32>
    %c0_1 = arith.constant 0 : index
    %c0_2 = arith.constant 0 : index
    %c0_3 = arith.constant 0 : index
    %1 = vector.load %arg1[%c0_1, %c0_2, %c0_3] : memref<1x144x384xf32, #tpu.memory_space<vmem>>, vector<1x144x384xf32>
    %2 = vector.shape_cast %1 : vector<1x144x384xf32> to vector<144x384xf32>
    %cst = arith.constant dense<0.000000e+00> : vector<64x384xf32>
    %3 = tpu.matmul %0, %2, %cst {dimension_numbers = #tpu.dot_dimension_numbers<[1], [0], [0], [1], [0, 0, 1, 1], [], []>} : vector<64x144xf32>, vector<144x384xf32>, vector<64x384xf32> -> vector<64x384xf32>
    %4 = vector.extract_strided_slice %3 {offsets = [0, 0], sizes = [64, 128], strides = [1, 1]} : vector<64x384xf32> to vector<64x128xf32>
    %5 = vector.extract_strided_slice %3 {offsets = [0, 128], sizes = [64, 128], strides = [1, 1]} : vector<64x384xf32> to vector<64x128xf32>
    %6 = arith.maximumf %4, %5 : vector<64x128xf32>
    %7 = vector.extract_strided_slice %3 {offsets = [0, 256], sizes = [64, 128], strides = [1, 1]} : vector<64x384xf32> to vector<64x128xf32>
    %8 = arith.maximumf %6, %7 : vector<64x128xf32>
    %c0_4 = arith.constant 0 : index
    %c0_5 = arith.constant 0 : index
    %9 = vector.load %arg3[%c0_4, %c0_5] : memref<64x1xf32, #tpu.memory_space<vmem>>, vector<64x1xf32>
    %10 = vector.broadcast %9 : vector<64x1xf32> to vector<64x128xf32>
    %11 = arith.addf %8, %10 : vector<64x128xf32>
    %cst_6 = arith.constant 0.000000e+00 : f32
    %12 = vector.broadcast %cst_6 : f32 to vector<64x128xf32>
    %13 = arith.cmpf ogt, %11, %12 : vector<64x128xf32>
    %cst_7 = arith.constant 0.00999999977 : f32
    %14 = vector.broadcast %cst_7 : f32 to vector<64x128xf32>
    %15 = arith.mulf %14, %11 : vector<64x128xf32>
    %16 = arith.select %13, %11, %15 : vector<64x128xi1>, vector<64x128xf32>
    %c0_8 = arith.constant 0 : index
    %c0_9 = arith.constant 0 : index
    %17 = vector.load %arg4[%c0_8, %c0_9] : memref<64x1xf32, #tpu.memory_space<vmem>>, vector<64x1xf32>
    %18 = vector.broadcast %17 : vector<64x1xf32> to vector<64x128xf32>
    %19 = arith.mulf %16, %18 : vector<64x128xf32>
    %c0_10 = arith.constant 0 : index
    %c0_11 = arith.constant 0 : index
    %20 = vector.load %arg5[%c0_10, %c0_11] : memref<64x1xf32, #tpu.memory_space<vmem>>, vector<64x1xf32>
    %21 = vector.broadcast %20 : vector<64x1xf32> to vector<64x128xf32>
    %22 = arith.addf %19, %21 : vector<64x128xf32>
    %c0_12 = arith.constant 0 : index
    %c0_13 = arith.constant 0 : index
    %23 = vector.load %arg6[%c0_12, %c0_13] : memref<128x1024xf32, #tpu.memory_space<vmem>>, vector<128x1024xf32>
    %cst_14 = arith.constant dense<0.000000e+00> : vector<64x1024xf32>
    %24 = tpu.matmul %22, %23, %cst_14 {dimension_numbers = #tpu.dot_dimension_numbers<[1], [0], [0], [1], [0, 0, 1, 1], [], []>} : vector<64x128xf32>, vector<128x1024xf32>, vector<64x1024xf32> -> vector<64x1024xf32>
    %c0_15 = arith.constant 0 : index
    %c0_16 = arith.constant 0 : index
    %25 = vector.load %arg7[%c0_15, %c0_16] : memref<1x1024xf32, #tpu.memory_space<vmem>>, vector<1x1024xf32>
    %26 = vector.broadcast %25 : vector<1x1024xf32> to vector<64x1024xf32>
    %27 = arith.addf %24, %26 : vector<64x1024xf32>
    %c0_17 = arith.constant 0 : index
    %c0_18 = arith.constant 0 : index
    %28 = vector.load %arg14[%c0_17, %c0_18] : memref<64x1024xf32, #tpu.memory_space<vmem>>, vector<64x1024xf32>
    tpu.vector_store %arg14[%c0_17, %c0_18], %27 {strides = array<i32>} : memref<64x1024xf32, #tpu.memory_space<vmem>>, vector<64x1024xf32>,
    %cst_19 = arith.constant 0.000000e+00 : f32
    %29 = vector.broadcast %cst_19 : f32 to vector<8x128xf32>
    %cst_20 = arith.constant 0.000000e+00 : f32
    %30 = vector.broadcast %cst_20 : f32 to vector<8x128xf32>
    %c0_21 = arith.constant 0 : index
    %c0_22 = arith.constant 0 : index
    %31 = vector.load %arg14[%c0_21, %c0_22] : memref<64x1024xf32, #tpu.memory_space<vmem>>, vector<8x512xf32>
    %c56 = arith.constant 56 : index
    %c512 = arith.constant 512 : index
    %32 = vector.load %arg14[%c56, %c512] : memref<64x1024xf32, #tpu.memory_space<vmem>>, vector<8x512xf32>
    %c0_23 = arith.constant 0 : index
    %c0_24 = arith.constant 0 : index
    %33 = vector.load %arg8[%c0_23, %c0_24] : memref<128x512xf32, #tpu.memory_space<vmem>>, vector<128x512xf32>
    %cst_25 = arith.constant dense<0.000000e+00> : vector<8x512xf32>
    %34 = tpu.matmul %29, %33, %cst_25 {dimension_numbers = #tpu.dot_dimension_numbers<[1], [0], [0], [1], [0, 0, 1, 1], [], []>} : vector<8x128xf32>, vector<128x512xf32>, vector<8x512xf32> -> vector<8x512xf32>
    %35 = arith.addf %31, %34 : vector<8x512xf32>
    %36 = vector.extract_strided_slice %35 {offsets = [0, 0], sizes = [8, 128], strides = [1, 1]} : vector<8x512xf32> to vector<8x128xf32>
    %37 = arith.negf %36 : vector<8x128xf32>
    %38 = math.exp %37 : vector<8x128xf32>
    %cst_26 = arith.constant 1.000000e+00 : f32
    %39 = vector.broadcast %cst_26 : f32 to vector<8x128xf32>
    %40 = arith.addf %39, %38 : vector<8x128xf32>
    %41 = arith.divf %39, %40 : vector<8x128xf32>
    %42 = vector.extract_strided_slice %35 {offsets = [0, 128], sizes = [8, 128], strides = [1, 1]} : vector<8x512xf32> to vector<8x128xf32>
    %43 = arith.negf %42 : vector<8x128xf32>
    %44 = math.exp %43 : vector<8x128xf32>
    %cst_27 = arith.constant 1.000000e+00 : f32
    %45 = vector.broadcast %cst_27 : f32 to vector<8x128xf32>
    %46 = arith.addf %45, %44 : vector<8x128xf32>
    %47 = arith.divf %45, %46 : vector<8x128xf32>
    %48 = vector.extract_strided_slice %35 {offsets = [0, 256], sizes = [8, 128], strides = [1, 1]} : vector<8x512xf32> to vector<8x128xf32>
    %49 = math.tanh %48 : vector<8x128xf32>
    %50 = vector.extract_strided_slice %35 {offsets = [0, 384], sizes = [8, 128], strides = [1, 1]} : vector<8x512xf32> to vector<8x128xf32>
    %51 = arith.negf %50 : vector<8x128xf32>
    %52 = math.exp %51 : vector<8x128xf32>
    %cst_28 = arith.constant 1.000000e+00 : f32
    %53 = vector.broadcast %cst_28 : f32 to vector<8x128xf32>
    %54 = arith.addf %53, %52 : vector<8x128xf32>
    %55 = arith.divf %53, %54 : vector<8x128xf32>
    %56 = arith.mulf %47, %29 : vector<8x128xf32>
    %57 = arith.mulf %41, %49 : vector<8x128xf32>
    %58 = arith.addf %56, %57 : vector<8x128xf32>
    %59 = math.tanh %58 : vector<8x128xf32>
    %60 = arith.mulf %55, %59 : vector<8x128xf32>
    %c0_29 = arith.constant 0 : index
    %c0_30 = arith.constant 0 : index
    %61 = vector.load %arg9[%c0_29, %c0_30] : memref<128x512xf32, #tpu.memory_space<vmem>>, vector<128x512xf32>
    %cst_31 = arith.constant dense<0.000000e+00> : vector<8x512xf32>
    %62 = tpu.matmul %29, %61, %cst_31 {dimension_numbers = #tpu.dot_dimension_numbers<[1], [0], [0], [1], [0, 0, 1, 1], [], []>} : vector<8x128xf32>, vector<128x512xf32>, vector<8x512xf32> -> vector<8x512xf32>
    %63 = arith.addf %32, %62 : vector<8x512xf32>
    %64 = vector.extract_strided_slice %63 {offsets = [0, 0], sizes = [8, 128], strides = [1, 1]} : vector<8x512xf32> to vector<8x128xf32>
    %65 = arith.negf %64 : vector<8x128xf32>
    %66 = math.exp %65 : vector<8x128xf32>
    %cst_32 = arith.constant 1.000000e+00 : f32
    %67 = vector.broadcast %cst_32 : f32 to vector<8x128xf32>
    %68 = arith.addf %67, %66 : vector<8x128xf32>
    %69 = arith.divf %67, %68 : vector<8x128xf32>
    %70 = vector.extract_strided_slice %63 {offsets = [0, 128], sizes = [8, 128], strides = [1, 1]} : vector<8x512xf32> to vector<8x128xf32>
    %71 = arith.negf %70 : vector<8x128xf32>
    %72 = math.exp %71 : vector<8x128xf32>
    %cst_33 = arith.constant 1.000000e+00 : f32
    %73 = vector.broadcast %cst_33 : f32 to vector<8x128xf32>
    %74 = arith.addf %73, %72 : vector<8x128xf32>
    %75 = arith.divf %73, %74 : vector<8x128xf32>
    %76 = vector.extract_strided_slice %63 {offsets = [0, 256], sizes = [8, 128], strides = [1, 1]} : vector<8x512xf32> to vector<8x128xf32>
    %77 = math.tanh %76 : vector<8x128xf32>
    %78 = vector.extract_strided_slice %63 {offsets = [0, 384], sizes = [8, 128], strides = [1, 1]} : vector<8x512xf32> to vector<8x128xf32>
    %79 = arith.negf %78 : vector<8x128xf32>
    %80 = math.exp %79 : vector<8x128xf32>
    %cst_34 = arith.constant 1.000000e+00 : f32
    %81 = vector.broadcast %cst_34 : f32 to vector<8x128xf32>
    %82 = arith.addf %81, %80 : vector<8x128xf32>
    %83 = arith.divf %81, %82 : vector<8x128xf32>
    %84 = arith.mulf %75, %29 : vector<8x128xf32>
    %85 = arith.mulf %69, %77 : vector<8x128xf32>
    %86 = arith.addf %84, %85 : vector<8x128xf32>
    %87 = math.tanh %86 : vector<8x128xf32>
    %88 = arith.mulf %83, %87 : vector<8x128xf32>
    %cst_35 = arith.constant 0.000000e+00 : f32
    %89 = vector.broadcast %cst_35 : f32 to vector<8x128xf32>
    %90 = arith.cmpf ogt, %60, %89 : vector<8x128xf32>
    %cst_36 = arith.constant 0.00999999977 : f32
    %91 = vector.broadcast %cst_36 : f32 to vector<8x128xf32>
    %92 = arith.mulf %91, %60 : vector<8x128xf32>
    %93 = arith.select %90, %60, %92 : vector<8x128xi1>, vector<8x128xf32>
    %cst_37 = arith.constant 0.000000e+00 : f32
    %94 = vector.broadcast %cst_37 : f32 to vector<8x128xf32>
    %95 = arith.cmpf ogt, %88, %94 : vector<8x128xf32>
    %cst_38 = arith.constant 0.00999999977 : f32
    %96 = vector.broadcast %cst_38 : f32 to vector<8x128xf32>
    %97 = arith.mulf %96, %88 : vector<8x128xf32>
    %98 = arith.select %95, %88, %97 : vector<8x128xi1>, vector<8x128xf32>
    %c0_39 = arith.constant 0 : index
    %c0_40 = arith.constant 0 : index
    %c0_41 = arith.constant 0 : index
    %99 = vector.load %arg10[%c0_39, %c0_40, %c0_41] : memref<8x128x128xf32, #tpu.memory_space<vmem>>, vector<1x128x128xf32>
    %100 = vector.shape_cast %99 : vector<1x128x128xf32> to vector<128x128xf32>
    %cst_42 = arith.constant dense<0.000000e+00> : vector<8x128xf32>
    %101 = tpu.matmul %93, %100, %cst_42 {dimension_numbers = #tpu.dot_dimension_numbers<[1], [0], [0], [1], [0, 0, 1, 1], [], []>} : vector<8x128xf32>, vector<128x128xf32>, vector<8x128xf32> -> vector<8x128xf32>
    %102 = arith.addf %30, %101 : vector<8x128xf32>
    %c7 = arith.constant 7 : index
    %c0_43 = arith.constant 0 : index
    %c0_44 = arith.constant 0 : index
    %103 = vector.load %arg11[%c7, %c0_43, %c0_44] : memref<8x128x128xf32, #tpu.memory_space<vmem>>, vector<1x128x128xf32>
    %104 = vector.shape_cast %103 : vector<1x128x128xf32> to vector<128x128xf32>
    %cst_45 = arith.constant dense<0.000000e+00> : vector<8x128xf32>
    %105 = tpu.matmul %98, %104, %cst_45 {dimension_numbers = #tpu.dot_dimension_numbers<[1], [0], [0], [1], [0, 0, 1, 1], [], []>} : vector<8x128xf32>, vector<128x128xf32>, vector<8x128xf32> -> vector<8x128xf32>
    %106 = arith.addf %102, %105 : vector<8x128xf32>
    %c8 = arith.constant 8 : index
    %c0_46 = arith.constant 0 : index
    %107 = vector.load %arg14[%c8, %c0_46] : memref<64x1024xf32, #tpu.memory_space<vmem>>, vector<8x512xf32>
    %c48 = arith.constant 48 : index
    %c512_47 = arith.constant 512 : index
    %108 = vector.load %arg14[%c48, %c512_47] : memref<64x1024xf32, #tpu.memory_space<vmem>>, vector<8x512xf32>
    %c0_48 = arith.constant 0 : index
    %c0_49 = arith.constant 0 : index
    %109 = vector.load %arg8[%c0_48, %c0_49] : memref<128x512xf32, #tpu.memory_space<vmem>>, vector<128x512xf32>
    %cst_50 = arith.constant dense<0.000000e+00> : vector<8x512xf32>
    %110 = tpu.matmul %60, %109, %cst_50 {dimension_numbers = #tpu.dot_dimension_numbers<[1], [0], [0], [1], [0, 0, 1, 1], [], []>} : vector<8x128xf32>, vector<128x512xf32>, vector<8x512xf32> -> vector<8x512xf32>
    %111 = arith.addf %107, %110 : vector<8x512xf32>
    %112 = vector.extract_strided_slice %111 {offsets = [0, 0], sizes = [8, 128], strides = [1, 1]} : vector<8x512xf32> to vector<8x128xf32>
    %113 = arith.negf %112 : vector<8x128xf32>
    %114 = math.exp %113 : vector<8x128xf32>
    %cst_51 = arith.constant 1.000000e+00 : f32
    %115 = vector.broadcast %cst_51 : f32 to vector<8x128xf32>
    %116 = arith.addf %115, %114 : vector<8x128xf32>
    %117 = arith.divf %115, %116 : vector<8x128xf32>
    %118 = vector.extract_strided_slice %111 {offsets = [0, 128], sizes = [8, 128], strides = [1, 1]} : vector<8x512xf32> to vector<8x128xf32>
    %119 = arith.negf %118 : vector<8x128xf32>
    %120 = math.exp %119 : vector<8x128xf32>
    %cst_52 = arith.constant 1.000000e+00 : f32
    %121 = vector.broadcast %cst_52 : f32 to vector<8x128xf32>
    %122 = arith.addf %121, %120 : vector<8x128xf32>
    %123 = arith.divf %121, %122 : vector<8x128xf32>
    %124 = vector.extract_strided_slice %111 {offsets = [0, 256], sizes = [8, 128], strides = [1, 1]} : vector<8x512xf32> to vector<8x128xf32>
    %125 = math.tanh %124 : vector<8x128xf32>
    %126 = vector.extract_strided_slice %111 {offsets = [0, 384], sizes = [8, 128], strides = [1, 1]} : vector<8x512xf32> to vector<8x128xf32>
    %127 = arith.negf %126 : vector<8x128xf32>
    %128 = math.exp %127 : vector<8x128xf32>
    %cst_53 = arith.constant 1.000000e+00 : f32
    %129 = vector.broadcast %cst_53 : f32 to vector<8x128xf32>
    %130 = arith.addf %129, %128 : vector<8x128xf32>
    %131 = arith.divf %129, %130 : vector<8x128xf32>
    %132 = arith.mulf %123, %58 : vector<8x128xf32>
    %133 = arith.mulf %117, %125 : vector<8x128xf32>
    %134 = arith.addf %132, %133 : vector<8x128xf32>
    %135 = math.tanh %134 : vector<8x128xf32>
    %136 = arith.mulf %131, %135 : vector<8x128xf32>
    %c0_54 = arith.constant 0 : index
    %c0_55 = arith.constant 0 : index
    %137 = vector.load %arg9[%c0_54, %c0_55] : memref<128x512xf32, #tpu.memory_space<vmem>>, vector<128x512xf32>
    %cst_56 = arith.constant dense<0.000000e+00> : vector<8x512xf32>
    %138 = tpu.matmul %88, %137, %cst_56 {dimension_numbers = #tpu.dot_dimension_numbers<[1], [0], [0], [1], [0, 0, 1, 1], [], []>} : vector<8x128xf32>, vector<128x512xf32>, vector<8x512xf32> -> vector<8x512xf32>
    %139 = arith.addf %108, %138 : vector<8x512xf32>
    %140 = vector.extract_strided_slice %139 {offsets = [0, 0], sizes = [8, 128], strides = [1, 1]} : vector<8x512xf32> to vector<8x128xf32>
    %141 = arith.negf %140 : vector<8x128xf32>
    %142 = math.exp %141 : vector<8x128xf32>
    %cst_57 = arith.constant 1.000000e+00 : f32
    %143 = vector.broadcast %cst_57 : f32 to vector<8x128xf32>
    %144 = arith.addf %143, %142 : vector<8x128xf32>
    %145 = arith.divf %143, %144 : vector<8x128xf32>
    %146 = vector.extract_strided_slice %139 {offsets = [0, 128], sizes = [8, 128], strides = [1, 1]} : vector<8x512xf32> to vector<8x128xf32>
    %147 = arith.negf %146 : vector<8x128xf32>
    %148 = math.exp %147 : vector<8x128xf32>
    %cst_58 = arith.constant 1.000000e+00 : f32
    %149 = vector.broadcast %cst_58 : f32 to vector<8x128xf32>
    %150 = arith.addf %149, %148 : vector<8x128xf32>
    %151 = arith.divf %149, %150 : vector<8x128xf32>
    %152 = vector.extract_strided_slice %139 {offsets = [0, 256], sizes = [8, 128], strides = [1, 1]} : vector<8x512xf32> to vector<8x128xf32>
    %153 = math.tanh %152 : vector<8x128xf32>
    %154 = vector.extract_strided_slice %139 {offsets = [0, 384], sizes = [8, 128], strides = [1, 1]} : vector<8x512xf32> to vector<8x128xf32>
    %155 = arith.negf %154 : vector<8x128xf32>
    %156 = math.exp %155 : vector<8x128xf32>
    %cst_59 = arith.constant 1.000000e+00 : f32
    %157 = vector.broadcast %cst_59 : f32 to vector<8x128xf32>
    %158 = arith.addf %157, %156 : vector<8x128xf32>
    %159 = arith.divf %157, %158 : vector<8x128xf32>
    %160 = arith.mulf %151, %86 : vector<8x128xf32>
    %161 = arith.mulf %145, %153 : vector<8x128xf32>
    %162 = arith.addf %160, %161 : vector<8x128xf32>
    %163 = math.tanh %162 : vector<8x128xf32>
    %164 = arith.mulf %159, %163 : vector<8x128xf32>
    %cst_60 = arith.constant 0.000000e+00 : f32
    %165 = vector.broadcast %cst_60 : f32 to vector<8x128xf32>
    %166 = arith.cmpf ogt, %136, %165 : vector<8x128xf32>
    %cst_61 = arith.constant 0.00999999977 : f32
    %167 = vector.broadcast %cst_61 : f32 to vector<8x128xf32>
    %168 = arith.mulf %167, %136 : vector<8x128xf32>
    %169 = arith.select %166, %136, %168 : vector<8x128xi1>, vector<8x128xf32>
    %cst_62 = arith.constant 0.000000e+00 : f32
    %170 = vector.broadcast %cst_62 : f32 to vector<8x128xf32>
    %171 = arith.cmpf ogt, %164, %170 : vector<8x128xf32>
    %cst_63 = arith.constant 0.00999999977 : f32
    %172 = vector.broadcast %cst_63 : f32 to vector<8x128xf32>
    %173 = arith.mulf %172, %164 : vector<8x128xf32>
    %174 = arith.select %171, %164, %173 : vector<8x128xi1>, vector<8x128xf32>
    %c1 = arith.constant 1 : index
    %c0_64 = arith.constant 0 : index
    %c0_65 = arith.constant 0 : index
    %175 = vector.load %arg10[%c1, %c0_64, %c0_65] : memref<8x128x128xf32, #tpu.memory_space<vmem>>, vector<1x128x128xf32>
    %176 = vector.shape_cast %175 : vector<1x128x128xf32> to vector<128x128xf32>
    %cst_66 = arith.constant dense<0.000000e+00> : vector<8x128xf32>
    %177 = tpu.matmul %169, %176, %cst_66 {dimension_numbers = #tpu.dot_dimension_numbers<[1], [0], [0], [1], [0, 0, 1, 1], [], []>} : vector<8x128xf32>, vector<128x128xf32>, vector<8x128xf32> -> vector<8x128xf32>
    %178 = arith.addf %106, %177 : vector<8x128xf32>
    %c6 = arith.constant 6 : index
    %c0_67 = arith.constant 0 : index
    %c0_68 = arith.constant 0 : index
    %179 = vector.load %arg11[%c6, %c0_67, %c0_68] : memref<8x128x128xf32, #tpu.memory_space<vmem>>, vector<1x128x128xf32>
    %180 = vector.shape_cast %179 : vector<1x128x128xf32> to vector<128x128xf32>
    %cst_69 = arith.constant dense<0.000000e+00> : vector<8x128xf32>
    %181 = tpu.matmul %174, %180, %cst_69 {dimension_numbers = #tpu.dot_dimension_numbers<[1], [0], [0], [1], [0, 0, 1, 1], [], []>} : vector<8x128xf32>, vector<128x128xf32>, vector<8x128xf32> -> vector<8x128xf32>
    %182 = arith.addf %178, %181 : vector<8x128xf32>
    %c16 = arith.constant 16 : index
    %c0_70 = arith.constant 0 : index
    %183 = vector.load %arg14[%c16, %c0_70] : memref<64x1024xf32, #tpu.memory_space<vmem>>, vector<8x512xf32>
    %c40 = arith.constant 40 : index
    %c512_71 = arith.constant 512 : index
    %184 = vector.load %arg14[%c40, %c512_71] : memref<64x1024xf32, #tpu.memory_space<vmem>>, vector<8x512xf32>
    %c0_72 = arith.constant 0 : index
    %c0_73 = arith.constant 0 : index
    %185 = vector.load %arg8[%c0_72, %c0_73] : memref<128x512xf32, #tpu.memory_space<vmem>>, vector<128x512xf32>
    %cst_74 = arith.constant dense<0.000000e+00> : vector<8x512xf32>
    %186 = tpu.matmul %136, %185, %cst_74 {dimension_numbers = #tpu.dot_dimension_numbers<[1], [0], [0], [1], [0, 0, 1, 1], [], []>} : vector<8x128xf32>, vector<128x512xf32>, vector<8x512xf32> -> vector<8x512xf32>
    %187 = arith.addf %183, %186 : vector<8x512xf32>
    %188 = vector.extract_strided_slice %187 {offsets = [0, 0], sizes = [8, 128], strides = [1, 1]} : vector<8x512xf32> to vector<8x128xf32>
    %189 = arith.negf %188 : vector<8x128xf32>
    %190 = math.exp %189 : vector<8x128xf32>
    %cst_75 = arith.constant 1.000000e+00 : f32
    %191 = vector.broadcast %cst_75 : f32 to vector<8x128xf32>
    %192 = arith.addf %191, %190 : vector<8x128xf32>
    %193 = arith.divf %191, %192 : vector<8x128xf32>
    %194 = vector.extract_strided_slice %187 {offsets = [0, 128], sizes = [8, 128], strides = [1, 1]} : vector<8x512xf32> to vector<8x128xf32>
    %195 = arith.negf %194 : vector<8x128xf32>
    %196 = math.exp %195 : vector<8x128xf32>
    %cst_76 = arith.constant 1.000000e+00 : f32
    %197 = vector.broadcast %cst_76 : f32 to vector<8x128xf32>
    %198 = arith.addf %197, %196 : vector<8x128xf32>
    %199 = arith.divf %197, %198 : vector<8x128xf32>
    %200 = vector.extract_strided_slice %187 {offsets = [0, 256], sizes = [8, 128], strides = [1, 1]} : vector<8x512xf32> to vector<8x128xf32>
    %201 = math.tanh %200 : vector<8x128xf32>
    %202 = vector.extract_strided_slice %187 {offsets = [0, 384], sizes = [8, 128], strides = [1, 1]} : vector<8x512xf32> to vector<8x128xf32>
    %203 = arith.negf %202 : vector<8x128xf32>
    %204 = math.exp %203 : vector<8x128xf32>
    %cst_77 = arith.constant 1.000000e+00 : f32
    %205 = vector.broadcast %cst_77 : f32 to vector<8x128xf32>
    %206 = arith.addf %205, %204 : vector<8x128xf32>
    %207 = arith.divf %205, %206 : vector<8x128xf32>
    %208 = arith.mulf %199, %134 : vector<8x128xf32>
    %209 = arith.mulf %193, %201 : vector<8x128xf32>
    %210 = arith.addf %208, %209 : vector<8x128xf32>
    %211 = math.tanh %210 : vector<8x128xf32>
    %212 = arith.mulf %207, %211 : vector<8x128xf32>
    %c0_78 = arith.constant 0 : index
    %c0_79 = arith.constant 0 : index
    %213 = vector.load %arg9[%c0_78, %c0_79] : memref<128x512xf32, #tpu.memory_space<vmem>>, vector<128x512xf32>
    %cst_80 = arith.constant dense<0.000000e+00> : vector<8x512xf32>
    %214 = tpu.matmul %164, %213, %cst_80 {dimension_numbers = #tpu.dot_dimension_numbers<[1], [0], [0], [1], [0, 0, 1, 1], [], []>} : vector<8x128xf32>, vector<128x512xf32>, vector<8x512xf32> -> vector<8x512xf32>
    %215 = arith.addf %184, %214 : vector<8x512xf32>
    %216 = vector.extract_strided_slice %215 {offsets = [0, 0], sizes = [8, 128], strides = [1, 1]} : vector<8x512xf32> to vector<8x128xf32>
    %217 = arith.negf %216 : vector<8x128xf32>
    %218 = math.exp %217 : vector<8x128xf32>
    %cst_81 = arith.constant 1.000000e+00 : f32
    %219 = vector.broadcast %cst_81 : f32 to vector<8x128xf32>
    %220 = arith.addf %219, %218 : vector<8x128xf32>
    %221 = arith.divf %219, %220 : vector<8x128xf32>
    %222 = vector.extract_strided_slice %215 {offsets = [0, 128], sizes = [8, 128], strides = [1, 1]} : vector<8x512xf32> to vector<8x128xf32>
    %223 = arith.negf %222 : vector<8x128xf32>
    %224 = math.exp %223 : vector<8x128xf32>
    %cst_82 = arith.constant 1.000000e+00 : f32
    %225 = vector.broadcast %cst_82 : f32 to vector<8x128xf32>
    %226 = arith.addf %225, %224 : vector<8x128xf32>
    %227 = arith.divf %225, %226 : vector<8x128xf32>
    %228 = vector.extract_strided_slice %215 {offsets = [0, 256], sizes = [8, 128], strides = [1, 1]} : vector<8x512xf32> to vector<8x128xf32>
    %229 = math.tanh %228 : vector<8x128xf32>
    %230 = vector.extract_strided_slice %215 {offsets = [0, 384], sizes = [8, 128], strides = [1, 1]} : vector<8x512xf32> to vector<8x128xf32>
    %231 = arith.negf %230 : vector<8x128xf32>
    %232 = math.exp %231 : vector<8x128xf32>
    %cst_83 = arith.constant 1.000000e+00 : f32
    %233 = vector.broadcast %cst_83 : f32 to vector<8x128xf32>
    %234 = arith.addf %233, %232 : vector<8x128xf32>
    %235 = arith.divf %233, %234 : vector<8x128xf32>
    %236 = arith.mulf %227, %162 : vector<8x128xf32>
    %237 = arith.mulf %221, %229 : vector<8x128xf32>
    %238 = arith.addf %236, %237 : vector<8x128xf32>
    %239 = math.tanh %238 : vector<8x128xf32>
    %240 = arith.mulf %235, %239 : vector<8x128xf32>
    %cst_84 = arith.constant 0.000000e+00 : f32
    %241 = vector.broadcast %cst_84 : f32 to vector<8x128xf32>
    %242 = arith.cmpf ogt, %212, %241 : vector<8x128xf32>
    %cst_85 = arith.constant 0.00999999977 : f32
    %243 = vector.broadcast %cst_85 : f32 to vector<8x128xf32>
    %244 = arith.mulf %243, %212 : vector<8x128xf32>
    %245 = arith.select %242, %212, %244 : vector<8x128xi1>, vector<8x128xf32>
    %cst_86 = arith.constant 0.000000e+00 : f32
    %246 = vector.broadcast %cst_86 : f32 to vector<8x128xf32>
    %247 = arith.cmpf ogt, %240, %246 : vector<8x128xf32>
    %cst_87 = arith.constant 0.00999999977 : f32
    %248 = vector.broadcast %cst_87 : f32 to vector<8x128xf32>
    %249 = arith.mulf %248, %240 : vector<8x128xf32>
    %250 = arith.select %247, %240, %249 : vector<8x128xi1>, vector<8x128xf32>
    %c2 = arith.constant 2 : index
    %c0_88 = arith.constant 0 : index
    %c0_89 = arith.constant 0 : index
    %251 = vector.load %arg10[%c2, %c0_88, %c0_89] : memref<8x128x128xf32, #tpu.memory_space<vmem>>, vector<1x128x128xf32>
    %252 = vector.shape_cast %251 : vector<1x128x128xf32> to vector<128x128xf32>
    %cst_90 = arith.constant dense<0.000000e+00> : vector<8x128xf32>
    %253 = tpu.matmul %245, %252, %cst_90 {dimension_numbers = #tpu.dot_dimension_numbers<[1], [0], [0], [1], [0, 0, 1, 1], [], []>} : vector<8x128xf32>, vector<128x128xf32>, vector<8x128xf32> -> vector<8x128xf32>
    %254 = arith.addf %182, %253 : vector<8x128xf32>
    %c5 = arith.constant 5 : index
    %c0_91 = arith.constant 0 : index
    %c0_92 = arith.constant 0 : index
    %255 = vector.load %arg11[%c5, %c0_91, %c0_92] : memref<8x128x128xf32, #tpu.memory_space<vmem>>, vector<1x128x128xf32>
    %256 = vector.shape_cast %255 : vector<1x128x128xf32> to vector<128x128xf32>
    %cst_93 = arith.constant dense<0.000000e+00> : vector<8x128xf32>
    %257 = tpu.matmul %250, %256, %cst_93 {dimension_numbers = #tpu.dot_dimension_numbers<[1], [0], [0], [1], [0, 0, 1, 1], [], []>} : vector<8x128xf32>, vector<128x128xf32>, vector<8x128xf32> -> vector<8x128xf32>
    %258 = arith.addf %254, %257 : vector<8x128xf32>
    %c24 = arith.constant 24 : index
    %c0_94 = arith.constant 0 : index
    %259 = vector.load %arg14[%c24, %c0_94] : memref<64x1024xf32, #tpu.memory_space<vmem>>, vector<8x512xf32>
    %c32 = arith.constant 32 : index
    %c512_95 = arith.constant 512 : index
    %260 = vector.load %arg14[%c32, %c512_95] : memref<64x1024xf32, #tpu.memory_space<vmem>>, vector<8x512xf32>
    %c0_96 = arith.constant 0 : index
    %c0_97 = arith.constant 0 : index
    %261 = vector.load %arg8[%c0_96, %c0_97] : memref<128x512xf32, #tpu.memory_space<vmem>>, vector<128x512xf32>
    %cst_98 = arith.constant dense<0.000000e+00> : vector<8x512xf32>
    %262 = tpu.matmul %212, %261, %cst_98 {dimension_numbers = #tpu.dot_dimension_numbers<[1], [0], [0], [1], [0, 0, 1, 1], [], []>} : vector<8x128xf32>, vector<128x512xf32>, vector<8x512xf32> -> vector<8x512xf32>
    %263 = arith.addf %259, %262 : vector<8x512xf32>
    %264 = vector.extract_strided_slice %263 {offsets = [0, 0], sizes = [8, 128], strides = [1, 1]} : vector<8x512xf32> to vector<8x128xf32>
    %265 = arith.negf %264 : vector<8x128xf32>
    %266 = math.exp %265 : vector<8x128xf32>
    %cst_99 = arith.constant 1.000000e+00 : f32
    %267 = vector.broadcast %cst_99 : f32 to vector<8x128xf32>
    %268 = arith.addf %267, %266 : vector<8x128xf32>
    %269 = arith.divf %267, %268 : vector<8x128xf32>
    %270 = vector.extract_strided_slice %263 {offsets = [0, 128], sizes = [8, 128], strides = [1, 1]} : vector<8x512xf32> to vector<8x128xf32>
    %271 = arith.negf %270 : vector<8x128xf32>
    %272 = math.exp %271 : vector<8x128xf32>
    %cst_100 = arith.constant 1.000000e+00 : f32
    %273 = vector.broadcast %cst_100 : f32 to vector<8x128xf32>
    %274 = arith.addf %273, %272 : vector<8x128xf32>
    %275 = arith.divf %273, %274 : vector<8x128xf32>
    %276 = vector.extract_strided_slice %263 {offsets = [0, 256], sizes = [8, 128], strides = [1, 1]} : vector<8x512xf32> to vector<8x128xf32>
    %277 = math.tanh %276 : vector<8x128xf32>
    %278 = vector.extract_strided_slice %263 {offsets = [0, 384], sizes = [8, 128], strides = [1, 1]} : vector<8x512xf32> to vector<8x128xf32>
    %279 = arith.negf %278 : vector<8x128xf32>
    %280 = math.exp %279 : vector<8x128xf32>
    %cst_101 = arith.constant 1.000000e+00 : f32
    %281 = vector.broadcast %cst_101 : f32 to vector<8x128xf32>
    %282 = arith.addf %281, %280 : vector<8x128xf32>
    %283 = arith.divf %281, %282 : vector<8x128xf32>
    %284 = arith.mulf %275, %210 : vector<8x128xf32>
    %285 = arith.mulf %269, %277 : vector<8x128xf32>
    %286 = arith.addf %284, %285 : vector<8x128xf32>
    %287 = math.tanh %286 : vector<8x128xf32>
    %288 = arith.mulf %283, %287 : vector<8x128xf32>
    %c0_102 = arith.constant 0 : index
    %c0_103 = arith.constant 0 : index
    %289 = vector.load %arg9[%c0_102, %c0_103] : memref<128x512xf32, #tpu.memory_space<vmem>>, vector<128x512xf32>
    %cst_104 = arith.constant dense<0.000000e+00> : vector<8x512xf32>
    %290 = tpu.matmul %240, %289, %cst_104 {dimension_numbers = #tpu.dot_dimension_numbers<[1], [0], [0], [1], [0, 0, 1, 1], [], []>} : vector<8x128xf32>, vector<128x512xf32>, vector<8x512xf32> -> vector<8x512xf32>
    %291 = arith.addf %260, %290 : vector<8x512xf32>
    %292 = vector.extract_strided_slice %291 {offsets = [0, 0], sizes = [8, 128], strides = [1, 1]} : vector<8x512xf32> to vector<8x128xf32>
    %293 = arith.negf %292 : vector<8x128xf32>
    %294 = math.exp %293 : vector<8x128xf32>
    %cst_105 = arith.constant 1.000000e+00 : f32
    %295 = vector.broadcast %cst_105 : f32 to vector<8x128xf32>
    %296 = arith.addf %295, %294 : vector<8x128xf32>
    %297 = arith.divf %295, %296 : vector<8x128xf32>
    %298 = vector.extract_strided_slice %291 {offsets = [0, 128], sizes = [8, 128], strides = [1, 1]} : vector<8x512xf32> to vector<8x128xf32>
    %299 = arith.negf %298 : vector<8x128xf32>
    %300 = math.exp %299 : vector<8x128xf32>
    %cst_106 = arith.constant 1.000000e+00 : f32
    %301 = vector.broadcast %cst_106 : f32 to vector<8x128xf32>
    %302 = arith.addf %301, %300 : vector<8x128xf32>
    %303 = arith.divf %301, %302 : vector<8x128xf32>
    %304 = vector.extract_strided_slice %291 {offsets = [0, 256], sizes = [8, 128], strides = [1, 1]} : vector<8x512xf32> to vector<8x128xf32>
    %305 = math.tanh %304 : vector<8x128xf32>
    %306 = vector.extract_strided_slice %291 {offsets = [0, 384], sizes = [8, 128], strides = [1, 1]} : vector<8x512xf32> to vector<8x128xf32>
    %307 = arith.negf %306 : vector<8x128xf32>
    %308 = math.exp %307 : vector<8x128xf32>
    %cst_107 = arith.constant 1.000000e+00 : f32
    %309 = vector.broadcast %cst_107 : f32 to vector<8x128xf32>
    %310 = arith.addf %309, %308 : vector<8x128xf32>
    %311 = arith.divf %309, %310 : vector<8x128xf32>
    %312 = arith.mulf %303, %238 : vector<8x128xf32>
    %313 = arith.mulf %297, %305 : vector<8x128xf32>
    %314 = arith.addf %312, %313 : vector<8x128xf32>
    %315 = math.tanh %314 : vector<8x128xf32>
    %316 = arith.mulf %311, %315 : vector<8x128xf32>
    %cst_108 = arith.constant 0.000000e+00 : f32
    %317 = vector.broadcast %cst_108 : f32 to vector<8x128xf32>
    %318 = arith.cmpf ogt, %288, %317 : vector<8x128xf32>
    %cst_109 = arith.constant 0.00999999977 : f32
    %319 = vector.broadcast %cst_109 : f32 to vector<8x128xf32>
    %320 = arith.mulf %319, %288 : vector<8x128xf32>
    %321 = arith.select %318, %288, %320 : vector<8x128xi1>, vector<8x128xf32>
    %cst_110 = arith.constant 0.000000e+00 : f32
    %322 = vector.broadcast %cst_110 : f32 to vector<8x128xf32>
    %323 = arith.cmpf ogt, %316, %322 : vector<8x128xf32>
    %cst_111 = arith.constant 0.00999999977 : f32
    %324 = vector.broadcast %cst_111 : f32 to vector<8x128xf32>
    %325 = arith.mulf %324, %316 : vector<8x128xf32>
    %326 = arith.select %323, %316, %325 : vector<8x128xi1>, vector<8x128xf32>
    %c3 = arith.constant 3 : index
    %c0_112 = arith.constant 0 : index
    %c0_113 = arith.constant 0 : index
    %327 = vector.load %arg10[%c3, %c0_112, %c0_113] : memref<8x128x128xf32, #tpu.memory_space<vmem>>, vector<1x128x128xf32>
    %328 = vector.shape_cast %327 : vector<1x128x128xf32> to vector<128x128xf32>
    %cst_114 = arith.constant dense<0.000000e+00> : vector<8x128xf32>
    %329 = tpu.matmul %321, %328, %cst_114 {dimension_numbers = #tpu.dot_dimension_numbers<[1], [0], [0], [1], [0, 0, 1, 1], [], []>} : vector<8x128xf32>, vector<128x128xf32>, vector<8x128xf32> -> vector<8x128xf32>
    %330 = arith.addf %258, %329 : vector<8x128xf32>
    %c4 = arith.constant 4 : index
    %c0_115 = arith.constant 0 : index
    %c0_116 = arith.constant 0 : index
    %331 = vector.load %arg11[%c4, %c0_115, %c0_116] : memref<8x128x128xf32, #tpu.memory_space<vmem>>, vector<1x128x128xf32>
    %332 = vector.shape_cast %331 : vector<1x128x128xf32> to vector<128x128xf32>
    %cst_117 = arith.constant dense<0.000000e+00> : vector<8x128xf32>
    %333 = tpu.matmul %326, %332, %cst_117 {dimension_numbers = #tpu.dot_dimension_numbers<[1], [0], [0], [1], [0, 0, 1, 1], [], []>} : vector<8x128xf32>, vector<128x128xf32>, vector<8x128xf32> -> vector<8x128xf32>
    %334 = arith.addf %330, %333 : vector<8x128xf32>
    %c32_118 = arith.constant 32 : index
    %c0_119 = arith.constant 0 : index
    %335 = vector.load %arg14[%c32_118, %c0_119] : memref<64x1024xf32, #tpu.memory_space<vmem>>, vector<8x512xf32>
    %c24_120 = arith.constant 24 : index
    %c512_121 = arith.constant 512 : index
    %336 = vector.load %arg14[%c24_120, %c512_121] : memref<64x1024xf32, #tpu.memory_space<vmem>>, vector<8x512xf32>
    %c0_122 = arith.constant 0 : index
    %c0_123 = arith.constant 0 : index
    %337 = vector.load %arg8[%c0_122, %c0_123] : memref<128x512xf32, #tpu.memory_space<vmem>>, vector<128x512xf32>
    %cst_124 = arith.constant dense<0.000000e+00> : vector<8x512xf32>
    %338 = tpu.matmul %288, %337, %cst_124 {dimension_numbers = #tpu.dot_dimension_numbers<[1], [0], [0], [1], [0, 0, 1, 1], [], []>} : vector<8x128xf32>, vector<128x512xf32>, vector<8x512xf32> -> vector<8x512xf32>
    %339 = arith.addf %335, %338 : vector<8x512xf32>
    %340 = vector.extract_strided_slice %339 {offsets = [0, 0], sizes = [8, 128], strides = [1, 1]} : vector<8x512xf32> to vector<8x128xf32>
    %341 = arith.negf %340 : vector<8x128xf32>
    %342 = math.exp %341 : vector<8x128xf32>
    %cst_125 = arith.constant 1.000000e+00 : f32
    %343 = vector.broadcast %cst_125 : f32 to vector<8x128xf32>
    %344 = arith.addf %343, %342 : vector<8x128xf32>
    %345 = arith.divf %343, %344 : vector<8x128xf32>
    %346 = vector.extract_strided_slice %339 {offsets = [0, 128], sizes = [8, 128], strides = [1, 1]} : vector<8x512xf32> to vector<8x128xf32>
    %347 = arith.negf %346 : vector<8x128xf32>
    %348 = math.exp %347 : vector<8x128xf32>
    %cst_126 = arith.constant 1.000000e+00 : f32
    %349 = vector.broadcast %cst_126 : f32 to vector<8x128xf32>
    %350 = arith.addf %349, %348 : vector<8x128xf32>
    %351 = arith.divf %349, %350 : vector<8x128xf32>
    %352 = vector.extract_strided_slice %339 {offsets = [0, 256], sizes = [8, 128], strides = [1, 1]} : vector<8x512xf32> to vector<8x128xf32>
    %353 = math.tanh %352 : vector<8x128xf32>
    %354 = vector.extract_strided_slice %339 {offsets = [0, 384], sizes = [8, 128], strides = [1, 1]} : vector<8x512xf32> to vector<8x128xf32>
    %355 = arith.negf %354 : vector<8x128xf32>
    %356 = math.exp %355 : vector<8x128xf32>
    %cst_127 = arith.constant 1.000000e+00 : f32
    %357 = vector.broadcast %cst_127 : f32 to vector<8x128xf32>
    %358 = arith.addf %357, %356 : vector<8x128xf32>
    %359 = arith.divf %357, %358 : vector<8x128xf32>
    %360 = arith.mulf %351, %286 : vector<8x128xf32>
    %361 = arith.mulf %345, %353 : vector<8x128xf32>
    %362 = arith.addf %360, %361 : vector<8x128xf32>
    %363 = math.tanh %362 : vector<8x128xf32>
    %364 = arith.mulf %359, %363 : vector<8x128xf32>
    %c0_128 = arith.constant 0 : index
    %c0_129 = arith.constant 0 : index
    %365 = vector.load %arg9[%c0_128, %c0_129] : memref<128x512xf32, #tpu.memory_space<vmem>>, vector<128x512xf32>
    %cst_130 = arith.constant dense<0.000000e+00> : vector<8x512xf32>
    %366 = tpu.matmul %316, %365, %cst_130 {dimension_numbers = #tpu.dot_dimension_numbers<[1], [0], [0], [1], [0, 0, 1, 1], [], []>} : vector<8x128xf32>, vector<128x512xf32>, vector<8x512xf32> -> vector<8x512xf32>
    %367 = arith.addf %336, %366 : vector<8x512xf32>
    %368 = vector.extract_strided_slice %367 {offsets = [0, 0], sizes = [8, 128], strides = [1, 1]} : vector<8x512xf32> to vector<8x128xf32>
    %369 = arith.negf %368 : vector<8x128xf32>
    %370 = math.exp %369 : vector<8x128xf32>
    %cst_131 = arith.constant 1.000000e+00 : f32
    %371 = vector.broadcast %cst_131 : f32 to vector<8x128xf32>
    %372 = arith.addf %371, %370 : vector<8x128xf32>
    %373 = arith.divf %371, %372 : vector<8x128xf32>
    %374 = vector.extract_strided_slice %367 {offsets = [0, 128], sizes = [8, 128], strides = [1, 1]} : vector<8x512xf32> to vector<8x128xf32>
    %375 = arith.negf %374 : vector<8x128xf32>
    %376 = math.exp %375 : vector<8x128xf32>
    %cst_132 = arith.constant 1.000000e+00 : f32
    %377 = vector.broadcast %cst_132 : f32 to vector<8x128xf32>
    %378 = arith.addf %377, %376 : vector<8x128xf32>
    %379 = arith.divf %377, %378 : vector<8x128xf32>
    %380 = vector.extract_strided_slice %367 {offsets = [0, 256], sizes = [8, 128], strides = [1, 1]} : vector<8x512xf32> to vector<8x128xf32>
    %381 = math.tanh %380 : vector<8x128xf32>
    %382 = vector.extract_strided_slice %367 {offsets = [0, 384], sizes = [8, 128], strides = [1, 1]} : vector<8x512xf32> to vector<8x128xf32>
    %383 = arith.negf %382 : vector<8x128xf32>
    %384 = math.exp %383 : vector<8x128xf32>
    %cst_133 = arith.constant 1.000000e+00 : f32
    %385 = vector.broadcast %cst_133 : f32 to vector<8x128xf32>
    %386 = arith.addf %385, %384 : vector<8x128xf32>
    %387 = arith.divf %385, %386 : vector<8x128xf32>
    %388 = arith.mulf %379, %314 : vector<8x128xf32>
    %389 = arith.mulf %373, %381 : vector<8x128xf32>
    %390 = arith.addf %388, %389 : vector<8x128xf32>
    %391 = math.tanh %390 : vector<8x128xf32>
    %392 = arith.mulf %387, %391 : vector<8x128xf32>
    %cst_134 = arith.constant 0.000000e+00 : f32
    %393 = vector.broadcast %cst_134 : f32 to vector<8x128xf32>
    %394 = arith.cmpf ogt, %364, %393 : vector<8x128xf32>
    %cst_135 = arith.constant 0.00999999977 : f32
    %395 = vector.broadcast %cst_135 : f32 to vector<8x128xf32>
    %396 = arith.mulf %395, %364 : vector<8x128xf32>
    %397 = arith.select %394, %364, %396 : vector<8x128xi1>, vector<8x128xf32>
    %cst_136 = arith.constant 0.000000e+00 : f32
    %398 = vector.broadcast %cst_136 : f32 to vector<8x128xf32>
    %399 = arith.cmpf ogt, %392, %398 : vector<8x128xf32>
    %cst_137 = arith.constant 0.00999999977 : f32
    %400 = vector.broadcast %cst_137 : f32 to vector<8x128xf32>
    %401 = arith.mulf %400, %392 : vector<8x128xf32>
    %402 = arith.select %399, %392, %401 : vector<8x128xi1>, vector<8x128xf32>
    %c4_138 = arith.constant 4 : index
    %c0_139 = arith.constant 0 : index
    %c0_140 = arith.constant 0 : index
    %403 = vector.load %arg10[%c4_138, %c0_139, %c0_140] : memref<8x128x128xf32, #tpu.memory_space<vmem>>, vector<1x128x128xf32>
    %404 = vector.shape_cast %403 : vector<1x128x128xf32> to vector<128x128xf32>
    %cst_141 = arith.constant dense<0.000000e+00> : vector<8x128xf32>
    %405 = tpu.matmul %397, %404, %cst_141 {dimension_numbers = #tpu.dot_dimension_numbers<[1], [0], [0], [1], [0, 0, 1, 1], [], []>} : vector<8x128xf32>, vector<128x128xf32>, vector<8x128xf32> -> vector<8x128xf32>
    %406 = arith.addf %334, %405 : vector<8x128xf32>
    %c3_142 = arith.constant 3 : index
    %c0_143 = arith.constant 0 : index
    %c0_144 = arith.constant 0 : index
    %407 = vector.load %arg11[%c3_142, %c0_143, %c0_144] : memref<8x128x128xf32, #tpu.memory_space<vmem>>, vector<1x128x128xf32>
    %408 = vector.shape_cast %407 : vector<1x128x128xf32> to vector<128x128xf32>
    %cst_145 = arith.constant dense<0.000000e+00> : vector<8x128xf32>
    %409 = tpu.matmul %402, %408, %cst_145 {dimension_numbers = #tpu.dot_dimension_numbers<[1], [0], [0], [1], [0, 0, 1, 1], [], []>} : vector<8x128xf32>, vector<128x128xf32>, vector<8x128xf32> -> vector<8x128xf32>
    %410 = arith.addf %406, %409 : vector<8x128xf32>
    %c40_146 = arith.constant 40 : index
    %c0_147 = arith.constant 0 : index
    %411 = vector.load %arg14[%c40_146, %c0_147] : memref<64x1024xf32, #tpu.memory_space<vmem>>, vector<8x512xf32>
    %c16_148 = arith.constant 16 : index
    %c512_149 = arith.constant 512 : index
    %412 = vector.load %arg14[%c16_148, %c512_149] : memref<64x1024xf32, #tpu.memory_space<vmem>>, vector<8x512xf32>
    %c0_150 = arith.constant 0 : index
    %c0_151 = arith.constant 0 : index
    %413 = vector.load %arg8[%c0_150, %c0_151] : memref<128x512xf32, #tpu.memory_space<vmem>>, vector<128x512xf32>
    %cst_152 = arith.constant dense<0.000000e+00> : vector<8x512xf32>
    %414 = tpu.matmul %364, %413, %cst_152 {dimension_numbers = #tpu.dot_dimension_numbers<[1], [0], [0], [1], [0, 0, 1, 1], [], []>} : vector<8x128xf32>, vector<128x512xf32>, vector<8x512xf32> -> vector<8x512xf32>
    %415 = arith.addf %411, %414 : vector<8x512xf32>
    %416 = vector.extract_strided_slice %415 {offsets = [0, 0], sizes = [8, 128], strides = [1, 1]} : vector<8x512xf32> to vector<8x128xf32>
    %417 = arith.negf %416 : vector<8x128xf32>
    %418 = math.exp %417 : vector<8x128xf32>
    %cst_153 = arith.constant 1.000000e+00 : f32
    %419 = vector.broadcast %cst_153 : f32 to vector<8x128xf32>
    %420 = arith.addf %419, %418 : vector<8x128xf32>
    %421 = arith.divf %419, %420 : vector<8x128xf32>
    %422 = vector.extract_strided_slice %415 {offsets = [0, 128], sizes = [8, 128], strides = [1, 1]} : vector<8x512xf32> to vector<8x128xf32>
    %423 = arith.negf %422 : vector<8x128xf32>
    %424 = math.exp %423 : vector<8x128xf32>
    %cst_154 = arith.constant 1.000000e+00 : f32
    %425 = vector.broadcast %cst_154 : f32 to vector<8x128xf32>
    %426 = arith.addf %425, %424 : vector<8x128xf32>
    %427 = arith.divf %425, %426 : vector<8x128xf32>
    %428 = vector.extract_strided_slice %415 {offsets = [0, 256], sizes = [8, 128], strides = [1, 1]} : vector<8x512xf32> to vector<8x128xf32>
    %429 = math.tanh %428 : vector<8x128xf32>
    %430 = vector.extract_strided_slice %415 {offsets = [0, 384], sizes = [8, 128], strides = [1, 1]} : vector<8x512xf32> to vector<8x128xf32>
    %431 = arith.negf %430 : vector<8x128xf32>
    %432 = math.exp %431 : vector<8x128xf32>
    %cst_155 = arith.constant 1.000000e+00 : f32
    %433 = vector.broadcast %cst_155 : f32 to vector<8x128xf32>
    %434 = arith.addf %433, %432 : vector<8x128xf32>
    %435 = arith.divf %433, %434 : vector<8x128xf32>
    %436 = arith.mulf %427, %362 : vector<8x128xf32>
    %437 = arith.mulf %421, %429 : vector<8x128xf32>
    %438 = arith.addf %436, %437 : vector<8x128xf32>
    %439 = math.tanh %438 : vector<8x128xf32>
    %440 = arith.mulf %435, %439 : vector<8x128xf32>
    %c0_156 = arith.constant 0 : index
    %c0_157 = arith.constant 0 : index
    %441 = vector.load %arg9[%c0_156, %c0_157] : memref<128x512xf32, #tpu.memory_space<vmem>>, vector<128x512xf32>
    %cst_158 = arith.constant dense<0.000000e+00> : vector<8x512xf32>
    %442 = tpu.matmul %392, %441, %cst_158 {dimension_numbers = #tpu.dot_dimension_numbers<[1], [0], [0], [1], [0, 0, 1, 1], [], []>} : vector<8x128xf32>, vector<128x512xf32>, vector<8x512xf32> -> vector<8x512xf32>
    %443 = arith.addf %412, %442 : vector<8x512xf32>
    %444 = vector.extract_strided_slice %443 {offsets = [0, 0], sizes = [8, 128], strides = [1, 1]} : vector<8x512xf32> to vector<8x128xf32>
    %445 = arith.negf %444 : vector<8x128xf32>
    %446 = math.exp %445 : vector<8x128xf32>
    %cst_159 = arith.constant 1.000000e+00 : f32
    %447 = vector.broadcast %cst_159 : f32 to vector<8x128xf32>
    %448 = arith.addf %447, %446 : vector<8x128xf32>
    %449 = arith.divf %447, %448 : vector<8x128xf32>
    %450 = vector.extract_strided_slice %443 {offsets = [0, 128], sizes = [8, 128], strides = [1, 1]} : vector<8x512xf32> to vector<8x128xf32>
    %451 = arith.negf %450 : vector<8x128xf32>
    %452 = math.exp %451 : vector<8x128xf32>
    %cst_160 = arith.constant 1.000000e+00 : f32
    %453 = vector.broadcast %cst_160 : f32 to vector<8x128xf32>
    %454 = arith.addf %453, %452 : vector<8x128xf32>
    %455 = arith.divf %453, %454 : vector<8x128xf32>
    %456 = vector.extract_strided_slice %443 {offsets = [0, 256], sizes = [8, 128], strides = [1, 1]} : vector<8x512xf32> to vector<8x128xf32>
    %457 = math.tanh %456 : vector<8x128xf32>
    %458 = vector.extract_strided_slice %443 {offsets = [0, 384], sizes = [8, 128], strides = [1, 1]} : vector<8x512xf32> to vector<8x128xf32>
    %459 = arith.negf %458 : vector<8x128xf32>
    %460 = math.exp %459 : vector<8x128xf32>
    %cst_161 = arith.constant 1.000000e+00 : f32
    %461 = vector.broadcast %cst_161 : f32 to vector<8x128xf32>
    %462 = arith.addf %461, %460 : vector<8x128xf32>
    %463 = arith.divf %461, %462 : vector<8x128xf32>
    %464 = arith.mulf %455, %390 : vector<8x128xf32>
    %465 = arith.mulf %449, %457 : vector<8x128xf32>
    %466 = arith.addf %464, %465 : vector<8x128xf32>
    %467 = math.tanh %466 : vector<8x128xf32>
    %468 = arith.mulf %463, %467 : vector<8x128xf32>
    %cst_162 = arith.constant 0.000000e+00 : f32
    %469 = vector.broadcast %cst_162 : f32 to vector<8x128xf32>
    %470 = arith.cmpf ogt, %440, %469 : vector<8x128xf32>
    %cst_163 = arith.constant 0.00999999977 : f32
    %471 = vector.broadcast %cst_163 : f32 to vector<8x128xf32>
    %472 = arith.mulf %471, %440 : vector<8x128xf32>
    %473 = arith.select %470, %440, %472 : vector<8x128xi1>, vector<8x128xf32>
    %cst_164 = arith.constant 0.000000e+00 : f32
    %474 = vector.broadcast %cst_164 : f32 to vector<8x128xf32>
    %475 = arith.cmpf ogt, %468, %474 : vector<8x128xf32>
    %cst_165 = arith.constant 0.00999999977 : f32
    %476 = vector.broadcast %cst_165 : f32 to vector<8x128xf32>
    %477 = arith.mulf %476, %468 : vector<8x128xf32>
    %478 = arith.select %475, %468, %477 : vector<8x128xi1>, vector<8x128xf32>
    %c5_166 = arith.constant 5 : index
    %c0_167 = arith.constant 0 : index
    %c0_168 = arith.constant 0 : index
    %479 = vector.load %arg10[%c5_166, %c0_167, %c0_168] : memref<8x128x128xf32, #tpu.memory_space<vmem>>, vector<1x128x128xf32>
    %480 = vector.shape_cast %479 : vector<1x128x128xf32> to vector<128x128xf32>
    %cst_169 = arith.constant dense<0.000000e+00> : vector<8x128xf32>
    %481 = tpu.matmul %473, %480, %cst_169 {dimension_numbers = #tpu.dot_dimension_numbers<[1], [0], [0], [1], [0, 0, 1, 1], [], []>} : vector<8x128xf32>, vector<128x128xf32>, vector<8x128xf32> -> vector<8x128xf32>
    %482 = arith.addf %410, %481 : vector<8x128xf32>
    %c2_170 = arith.constant 2 : index
    %c0_171 = arith.constant 0 : index
    %c0_172 = arith.constant 0 : index
    %483 = vector.load %arg11[%c2_170, %c0_171, %c0_172] : memref<8x128x128xf32, #tpu.memory_space<vmem>>, vector<1x128x128xf32>
    %484 = vector.shape_cast %483 : vector<1x128x128xf32> to vector<128x128xf32>
    %cst_173 = arith.constant dense<0.000000e+00> : vector<8x128xf32>
    %485 = tpu.matmul %478, %484, %cst_173 {dimension_numbers = #tpu.dot_dimension_numbers<[1], [0], [0], [1], [0, 0, 1, 1], [], []>} : vector<8x128xf32>, vector<128x128xf32>, vector<8x128xf32> -> vector<8x128xf32>
    %486 = arith.addf %482, %485 : vector<8x128xf32>
    %c48_174 = arith.constant 48 : index
    %c0_175 = arith.constant 0 : index
    %487 = vector.load %arg14[%c48_174, %c0_175] : memref<64x1024xf32, #tpu.memory_space<vmem>>, vector<8x512xf32>
    %c8_176 = arith.constant 8 : index
    %c512_177 = arith.constant 512 : index
    %488 = vector.load %arg14[%c8_176, %c512_177] : memref<64x1024xf32, #tpu.memory_space<vmem>>, vector<8x512xf32>
    %c0_178 = arith.constant 0 : index
    %c0_179 = arith.constant 0 : index
    %489 = vector.load %arg8[%c0_178, %c0_179] : memref<128x512xf32, #tpu.memory_space<vmem>>, vector<128x512xf32>
    %cst_180 = arith.constant dense<0.000000e+00> : vector<8x512xf32>
    %490 = tpu.matmul %440, %489, %cst_180 {dimension_numbers = #tpu.dot_dimension_numbers<[1], [0], [0], [1], [0, 0, 1, 1], [], []>} : vector<8x128xf32>, vector<128x512xf32>, vector<8x512xf32> -> vector<8x512xf32>
    %491 = arith.addf %487, %490 : vector<8x512xf32>
    %492 = vector.extract_strided_slice %491 {offsets = [0, 0], sizes = [8, 128], strides = [1, 1]} : vector<8x512xf32> to vector<8x128xf32>
    %493 = arith.negf %492 : vector<8x128xf32>
    %494 = math.exp %493 : vector<8x128xf32>
    %cst_181 = arith.constant 1.000000e+00 : f32
    %495 = vector.broadcast %cst_181 : f32 to vector<8x128xf32>
    %496 = arith.addf %495, %494 : vector<8x128xf32>
    %497 = arith.divf %495, %496 : vector<8x128xf32>
    %498 = vector.extract_strided_slice %491 {offsets = [0, 128], sizes = [8, 128], strides = [1, 1]} : vector<8x512xf32> to vector<8x128xf32>
    %499 = arith.negf %498 : vector<8x128xf32>
    %500 = math.exp %499 : vector<8x128xf32>
    %cst_182 = arith.constant 1.000000e+00 : f32
    %501 = vector.broadcast %cst_182 : f32 to vector<8x128xf32>
    %502 = arith.addf %501, %500 : vector<8x128xf32>
    %503 = arith.divf %501, %502 : vector<8x128xf32>
    %504 = vector.extract_strided_slice %491 {offsets = [0, 256], sizes = [8, 128], strides = [1, 1]} : vector<8x512xf32> to vector<8x128xf32>
    %505 = math.tanh %504 : vector<8x128xf32>
    %506 = vector.extract_strided_slice %491 {offsets = [0, 384], sizes = [8, 128], strides = [1, 1]} : vector<8x512xf32> to vector<8x128xf32>
    %507 = arith.negf %506 : vector<8x128xf32>
    %508 = math.exp %507 : vector<8x128xf32>
    %cst_183 = arith.constant 1.000000e+00 : f32
    %509 = vector.broadcast %cst_183 : f32 to vector<8x128xf32>
    %510 = arith.addf %509, %508 : vector<8x128xf32>
    %511 = arith.divf %509, %510 : vector<8x128xf32>
    %512 = arith.mulf %503, %438 : vector<8x128xf32>
    %513 = arith.mulf %497, %505 : vector<8x128xf32>
    %514 = arith.addf %512, %513 : vector<8x128xf32>
    %515 = math.tanh %514 : vector<8x128xf32>
    %516 = arith.mulf %511, %515 : vector<8x128xf32>
    %c0_184 = arith.constant 0 : index
    %c0_185 = arith.constant 0 : index
    %517 = vector.load %arg9[%c0_184, %c0_185] : memref<128x512xf32, #tpu.memory_space<vmem>>, vector<128x512xf32>
    %cst_186 = arith.constant dense<0.000000e+00> : vector<8x512xf32>
    %518 = tpu.matmul %468, %517, %cst_186 {dimension_numbers = #tpu.dot_dimension_numbers<[1], [0], [0], [1], [0, 0, 1, 1], [], []>} : vector<8x128xf32>, vector<128x512xf32>, vector<8x512xf32> -> vector<8x512xf32>
    %519 = arith.addf %488, %518 : vector<8x512xf32>
    %520 = vector.extract_strided_slice %519 {offsets = [0, 0], sizes = [8, 128], strides = [1, 1]} : vector<8x512xf32> to vector<8x128xf32>
    %521 = arith.negf %520 : vector<8x128xf32>
    %522 = math.exp %521 : vector<8x128xf32>
    %cst_187 = arith.constant 1.000000e+00 : f32
    %523 = vector.broadcast %cst_187 : f32 to vector<8x128xf32>
    %524 = arith.addf %523, %522 : vector<8x128xf32>
    %525 = arith.divf %523, %524 : vector<8x128xf32>
    %526 = vector.extract_strided_slice %519 {offsets = [0, 128], sizes = [8, 128], strides = [1, 1]} : vector<8x512xf32> to vector<8x128xf32>
    %527 = arith.negf %526 : vector<8x128xf32>
    %528 = math.exp %527 : vector<8x128xf32>
    %cst_188 = arith.constant 1.000000e+00 : f32
    %529 = vector.broadcast %cst_188 : f32 to vector<8x128xf32>
    %530 = arith.addf %529, %528 : vector<8x128xf32>
    %531 = arith.divf %529, %530 : vector<8x128xf32>
    %532 = vector.extract_strided_slice %519 {offsets = [0, 256], sizes = [8, 128], strides = [1, 1]} : vector<8x512xf32> to vector<8x128xf32>
    %533 = math.tanh %532 : vector<8x128xf32>
    %534 = vector.extract_strided_slice %519 {offsets = [0, 384], sizes = [8, 128], strides = [1, 1]} : vector<8x512xf32> to vector<8x128xf32>
    %535 = arith.negf %534 : vector<8x128xf32>
    %536 = math.exp %535 : vector<8x128xf32>
    %cst_189 = arith.constant 1.000000e+00 : f32
    %537 = vector.broadcast %cst_189 : f32 to vector<8x128xf32>
    %538 = arith.addf %537, %536 : vector<8x128xf32>
    %539 = arith.divf %537, %538 : vector<8x128xf32>
    %540 = arith.mulf %531, %466 : vector<8x128xf32>
    %541 = arith.mulf %525, %533 : vector<8x128xf32>
    %542 = arith.addf %540, %541 : vector<8x128xf32>
    %543 = math.tanh %542 : vector<8x128xf32>
    %544 = arith.mulf %539, %543 : vector<8x128xf32>
    %cst_190 = arith.constant 0.000000e+00 : f32
    %545 = vector.broadcast %cst_190 : f32 to vector<8x128xf32>
    %546 = arith.cmpf ogt, %516, %545 : vector<8x128xf32>
    %cst_191 = arith.constant 0.00999999977 : f32
    %547 = vector.broadcast %cst_191 : f32 to vector<8x128xf32>
    %548 = arith.mulf %547, %516 : vector<8x128xf32>
    %549 = arith.select %546, %516, %548 : vector<8x128xi1>, vector<8x128xf32>
    %cst_192 = arith.constant 0.000000e+00 : f32
    %550 = vector.broadcast %cst_192 : f32 to vector<8x128xf32>
    %551 = arith.cmpf ogt, %544, %550 : vector<8x128xf32>
    %cst_193 = arith.constant 0.00999999977 : f32
    %552 = vector.broadcast %cst_193 : f32 to vector<8x128xf32>
    %553 = arith.mulf %552, %544 : vector<8x128xf32>
    %554 = arith.select %551, %544, %553 : vector<8x128xi1>, vector<8x128xf32>
    %c6_194 = arith.constant 6 : index
    %c0_195 = arith.constant 0 : index
    %c0_196 = arith.constant 0 : index
    %555 = vector.load %arg10[%c6_194, %c0_195, %c0_196] : memref<8x128x128xf32, #tpu.memory_space<vmem>>, vector<1x128x128xf32>
    %556 = vector.shape_cast %555 : vector<1x128x128xf32> to vector<128x128xf32>
    %cst_197 = arith.constant dense<0.000000e+00> : vector<8x128xf32>
    %557 = tpu.matmul %549, %556, %cst_197 {dimension_numbers = #tpu.dot_dimension_numbers<[1], [0], [0], [1], [0, 0, 1, 1], [], []>} : vector<8x128xf32>, vector<128x128xf32>, vector<8x128xf32> -> vector<8x128xf32>
    %558 = arith.addf %486, %557 : vector<8x128xf32>
    %c1_198 = arith.constant 1 : index
    %c0_199 = arith.constant 0 : index
    %c0_200 = arith.constant 0 : index
    %559 = vector.load %arg11[%c1_198, %c0_199, %c0_200] : memref<8x128x128xf32, #tpu.memory_space<vmem>>, vector<1x128x128xf32>
    %560 = vector.shape_cast %559 : vector<1x128x128xf32> to vector<128x128xf32>
    %cst_201 = arith.constant dense<0.000000e+00> : vector<8x128xf32>
    %561 = tpu.matmul %554, %560, %cst_201 {dimension_numbers = #tpu.dot_dimension_numbers<[1], [0], [0], [1], [0, 0, 1, 1], [], []>} : vector<8x128xf32>, vector<128x128xf32>, vector<8x128xf32> -> vector<8x128xf32>
    %562 = arith.addf %558, %561 : vector<8x128xf32>
    %c56_202 = arith.constant 56 : index
    %c0_203 = arith.constant 0 : index
    %563 = vector.load %arg14[%c56_202, %c0_203] : memref<64x1024xf32, #tpu.memory_space<vmem>>, vector<8x512xf32>
    %c0_204 = arith.constant 0 : index
    %c512_205 = arith.constant 512 : index
    %564 = vector.load %arg14[%c0_204, %c512_205] : memref<64x1024xf32, #tpu.memory_space<vmem>>, vector<8x512xf32>
    %c0_206 = arith.constant 0 : index
    %c0_207 = arith.constant 0 : index
    %565 = vector.load %arg8[%c0_206, %c0_207] : memref<128x512xf32, #tpu.memory_space<vmem>>, vector<128x512xf32>
    %cst_208 = arith.constant dense<0.000000e+00> : vector<8x512xf32>
    %566 = tpu.matmul %516, %565, %cst_208 {dimension_numbers = #tpu.dot_dimension_numbers<[1], [0], [0], [1], [0, 0, 1, 1], [], []>} : vector<8x128xf32>, vector<128x512xf32>, vector<8x512xf32> -> vector<8x512xf32>
    %567 = arith.addf %563, %566 : vector<8x512xf32>
    %568 = vector.extract_strided_slice %567 {offsets = [0, 0], sizes = [8, 128], strides = [1, 1]} : vector<8x512xf32> to vector<8x128xf32>
    %569 = arith.negf %568 : vector<8x128xf32>
    %570 = math.exp %569 : vector<8x128xf32>
    %cst_209 = arith.constant 1.000000e+00 : f32
    %571 = vector.broadcast %cst_209 : f32 to vector<8x128xf32>
    %572 = arith.addf %571, %570 : vector<8x128xf32>
    %573 = arith.divf %571, %572 : vector<8x128xf32>
    %574 = vector.extract_strided_slice %567 {offsets = [0, 128], sizes = [8, 128], strides = [1, 1]} : vector<8x512xf32> to vector<8x128xf32>
    %575 = arith.negf %574 : vector<8x128xf32>
    %576 = math.exp %575 : vector<8x128xf32>
    %cst_210 = arith.constant 1.000000e+00 : f32
    %577 = vector.broadcast %cst_210 : f32 to vector<8x128xf32>
    %578 = arith.addf %577, %576 : vector<8x128xf32>
    %579 = arith.divf %577, %578 : vector<8x128xf32>
    %580 = vector.extract_strided_slice %567 {offsets = [0, 256], sizes = [8, 128], strides = [1, 1]} : vector<8x512xf32> to vector<8x128xf32>
    %581 = math.tanh %580 : vector<8x128xf32>
    %582 = vector.extract_strided_slice %567 {offsets = [0, 384], sizes = [8, 128], strides = [1, 1]} : vector<8x512xf32> to vector<8x128xf32>
    %583 = arith.negf %582 : vector<8x128xf32>
    %584 = math.exp %583 : vector<8x128xf32>
    %cst_211 = arith.constant 1.000000e+00 : f32
    %585 = vector.broadcast %cst_211 : f32 to vector<8x128xf32>
    %586 = arith.addf %585, %584 : vector<8x128xf32>
    %587 = arith.divf %585, %586 : vector<8x128xf32>
    %588 = arith.mulf %579, %514 : vector<8x128xf32>
    %589 = arith.mulf %573, %581 : vector<8x128xf32>
    %590 = arith.addf %588, %589 : vector<8x128xf32>
    %591 = math.tanh %590 : vector<8x128xf32>
    %592 = arith.mulf %587, %591 : vector<8x128xf32>
    %c0_212 = arith.constant 0 : index
    %c0_213 = arith.constant 0 : index
    %593 = vector.load %arg9[%c0_212, %c0_213] : memref<128x512xf32, #tpu.memory_space<vmem>>, vector<128x512xf32>
    %cst_214 = arith.constant dense<0.000000e+00> : vector<8x512xf32>
    %594 = tpu.matmul %544, %593, %cst_214 {dimension_numbers = #tpu.dot_dimension_numbers<[1], [0], [0], [1], [0, 0, 1, 1], [], []>} : vector<8x128xf32>, vector<128x512xf32>, vector<8x512xf32> -> vector<8x512xf32>
    %595 = arith.addf %564, %594 : vector<8x512xf32>
    %596 = vector.extract_strided_slice %595 {offsets = [0, 0], sizes = [8, 128], strides = [1, 1]} : vector<8x512xf32> to vector<8x128xf32>
    %597 = arith.negf %596 : vector<8x128xf32>
    %598 = math.exp %597 : vector<8x128xf32>
    %cst_215 = arith.constant 1.000000e+00 : f32
    %599 = vector.broadcast %cst_215 : f32 to vector<8x128xf32>
    %600 = arith.addf %599, %598 : vector<8x128xf32>
    %601 = arith.divf %599, %600 : vector<8x128xf32>
    %602 = vector.extract_strided_slice %595 {offsets = [0, 128], sizes = [8, 128], strides = [1, 1]} : vector<8x512xf32> to vector<8x128xf32>
    %603 = arith.negf %602 : vector<8x128xf32>
    %604 = math.exp %603 : vector<8x128xf32>
    %cst_216 = arith.constant 1.000000e+00 : f32
    %605 = vector.broadcast %cst_216 : f32 to vector<8x128xf32>
    %606 = arith.addf %605, %604 : vector<8x128xf32>
    %607 = arith.divf %605, %606 : vector<8x128xf32>
    %608 = vector.extract_strided_slice %595 {offsets = [0, 256], sizes = [8, 128], strides = [1, 1]} : vector<8x512xf32> to vector<8x128xf32>
    %609 = math.tanh %608 : vector<8x128xf32>
    %610 = vector.extract_strided_slice %595 {offsets = [0, 384], sizes = [8, 128], strides = [1, 1]} : vector<8x512xf32> to vector<8x128xf32>
    %611 = arith.negf %610 : vector<8x128xf32>
    %612 = math.exp %611 : vector<8x128xf32>
    %cst_217 = arith.constant 1.000000e+00 : f32
    %613 = vector.broadcast %cst_217 : f32 to vector<8x128xf32>
    %614 = arith.addf %613, %612 : vector<8x128xf32>
    %615 = arith.divf %613, %614 : vector<8x128xf32>
    %616 = arith.mulf %607, %542 : vector<8x128xf32>
    %617 = arith.mulf %601, %609 : vector<8x128xf32>
    %618 = arith.addf %616, %617 : vector<8x128xf32>
    %619 = math.tanh %618 : vector<8x128xf32>
    %620 = arith.mulf %615, %619 : vector<8x128xf32>
    %cst_218 = arith.constant 0.000000e+00 : f32
    %621 = vector.broadcast %cst_218 : f32 to vector<8x128xf32>
    %622 = arith.cmpf ogt, %592, %621 : vector<8x128xf32>
    %cst_219 = arith.constant 0.00999999977 : f32
    %623 = vector.broadcast %cst_219 : f32 to vector<8x128xf32>
    %624 = arith.mulf %623, %592 : vector<8x128xf32>
    %625 = arith.select %622, %592, %624 : vector<8x128xi1>, vector<8x128xf32>
    %cst_220 = arith.constant 0.000000e+00 : f32
    %626 = vector.broadcast %cst_220 : f32 to vector<8x128xf32>
    %627 = arith.cmpf ogt, %620, %626 : vector<8x128xf32>
    %cst_221 = arith.constant 0.00999999977 : f32
    %628 = vector.broadcast %cst_221 : f32 to vector<8x128xf32>
    %629 = arith.mulf %628, %620 : vector<8x128xf32>
    %630 = arith.select %627, %620, %629 : vector<8x128xi1>, vector<8x128xf32>
    %c7_222 = arith.constant 7 : index
    %c0_223 = arith.constant 0 : index
    %c0_224 = arith.constant 0 : index
    %631 = vector.load %arg10[%c7_222, %c0_223, %c0_224] : memref<8x128x128xf32, #tpu.memory_space<vmem>>, vector<1x128x128xf32>
    %632 = vector.shape_cast %631 : vector<1x128x128xf32> to vector<128x128xf32>
    %cst_225 = arith.constant dense<0.000000e+00> : vector<8x128xf32>
    %633 = tpu.matmul %625, %632, %cst_225 {dimension_numbers = #tpu.dot_dimension_numbers<[1], [0], [0], [1], [0, 0, 1, 1], [], []>} : vector<8x128xf32>, vector<128x128xf32>, vector<8x128xf32> -> vector<8x128xf32>
    %634 = arith.addf %562, %633 : vector<8x128xf32>
    %c0_226 = arith.constant 0 : index
    %c0_227 = arith.constant 0 : index
    %c0_228 = arith.constant 0 : index
    %635 = vector.load %arg11[%c0_226, %c0_227, %c0_228] : memref<8x128x128xf32, #tpu.memory_space<vmem>>, vector<1x128x128xf32>
    %636 = vector.shape_cast %635 : vector<1x128x128xf32> to vector<128x128xf32>
    %cst_229 = arith.constant dense<0.000000e+00> : vector<8x128xf32>
    %637 = tpu.matmul %630, %636, %cst_229 {dimension_numbers = #tpu.dot_dimension_numbers<[1], [0], [0], [1], [0, 0, 1, 1], [], []>} : vector<8x128xf32>, vector<128x128xf32>, vector<8x128xf32> -> vector<8x128xf32>
    %638 = arith.addf %634, %637 : vector<8x128xf32>
    %c0_230 = arith.constant 0 : index
    %c0_231 = arith.constant 0 : index
    %639 = vector.load %arg12[%c0_230, %c0_231] : memref<1x128xf32, #tpu.memory_space<vmem>>, vector<1x128xf32>
    %640 = vector.broadcast %639 : vector<1x128xf32> to vector<8x128xf32>
    %641 = arith.addf %638, %640 : vector<8x128xf32>
    %cst_232 = arith.constant dense<0xFF800000> : vector<8xf32>
    %642 = vector.multi_reduction <maximumf>, %641, %cst_232 [1] : vector<8x128xf32> to vector<8xf32>
    %643 = vector.shape_cast %642 : vector<8xf32> to vector<8x1xf32>
    %644 = vector.broadcast %643 : vector<8x1xf32> to vector<8x128xf32>
    %645 = arith.subf %641, %644 : vector<8x128xf32>
    %646 = math.exp %645 : vector<8x128xf32>
    %cst_233 = arith.constant dense<0.000000e+00> : vector<8xf32>
    %647 = vector.multi_reduction <add>, %646, %cst_233 [1] : vector<8x128xf32> to vector<8xf32>
    %648 = vector.shape_cast %647 : vector<8xf32> to vector<8x1xf32>
    %649 = tpu.reciprocal %648 : vector<8x1xf32> -> vector<8x1xf32>
    %650 = vector.broadcast %649 : vector<8x1xf32> to vector<8x128xf32>
    %651 = arith.mulf %646, %650 : vector<8x128xf32>
    %c0_234 = arith.constant 0 : index
    %c0_235 = arith.constant 0 : index
    %652 = vector.load %arg13[%c0_234, %c0_235] : memref<8x128xf32, #tpu.memory_space<vmem>>, vector<8x128xf32>
    tpu.vector_store %arg13[%c0_234, %c0_235], %651 {strides = array<i32>} : memref<8x128xf32, #tpu.memory_space<vmem>>, vector<8x128xf32>,
    return
  }
  func.func @transform_0(%arg0: i32) -> (i32, i32, i32) {
    %c0_i32 = arith.constant 0 : i32
    %c0_i32_0 = arith.constant 0 : i32
    %c0_i32_1 = arith.constant 0 : i32
    return %arg0, %c0_i32, %c0_i32_0 : i32, i32, i32
  }
  func.func @transform_1(%arg0: i32) -> (i32, i32) {
    %c0_i32 = arith.constant 0 : i32
    %c0_i32_0 = arith.constant 0 : i32
    %c0_i32_1 = arith.constant 0 : i32
    return %c0_i32, %c0_i32_0 : i32, i32
  }
  func.func @transform_2(%arg0: i32) -> (i32, i32) {
    %c0_i32 = arith.constant 0 : i32
    %c0_i32_0 = arith.constant 0 : i32
    %c0_i32_1 = arith.constant 0 : i32
    return %c0_i32, %c0_i32_0 : i32, i32
  }
  func.func @transform_3(%arg0: i32) -> (i32, i32) {
    %c0_i32 = arith.constant 0 : i32
    %c0_i32_0 = arith.constant 0 : i32
    %c0_i32_1 = arith.constant 0 : i32
    return %c0_i32, %c0_i32_0 : i32, i32
  }
  func.func @transform_4(%arg0: i32) -> (i32, i32) {
    %c0_i32 = arith.constant 0 : i32
    %c0_i32_0 = arith.constant 0 : i32
    %c0_i32_1 = arith.constant 0 : i32
    return %c0_i32, %c0_i32_0 : i32, i32
  }
  func.func @transform_5(%arg0: i32) -> (i32, i32) {
    %c0_i32 = arith.constant 0 : i32
    %c0_i32_0 = arith.constant 0 : i32
    %c0_i32_1 = arith.constant 0 : i32
    return %c0_i32, %c0_i32_0 : i32, i32
  }
  func.func @transform_6(%arg0: i32) -> (i32, i32) {
    %c0_i32 = arith.constant 0 : i32
    %c0_i32_0 = arith.constant 0 : i32
    %c0_i32_1 = arith.constant 0 : i32
    return %c0_i32, %c0_i32_0 : i32, i32
  }
  func.func @transform_7(%arg0: i32) -> (i32, i32) {
    %c0_i32 = arith.constant 0 : i32
    %c0_i32_0 = arith.constant 0 : i32
    %c0_i32_1 = arith.constant 0 : i32
    return %c0_i32, %c0_i32_0 : i32, i32
  }
  func.func @transform_8(%arg0: i32) -> (i32, i32) {
    %c0_i32 = arith.constant 0 : i32
    %c0_i32_0 = arith.constant 0 : i32
    %c0_i32_1 = arith.constant 0 : i32
    return %c0_i32, %c0_i32_0 : i32, i32
  }
  func.func @transform_9(%arg0: i32) -> (i32, i32, i32) {
    %c0_i32 = arith.constant 0 : i32
    %c0_i32_0 = arith.constant 0 : i32
    %c0_i32_1 = arith.constant 0 : i32
    %c0_i32_2 = arith.constant 0 : i32
    return %c0_i32, %c0_i32_0, %c0_i32_1 : i32, i32, i32
  }
  func.func @transform_10(%arg0: i32) -> (i32, i32, i32) {
    %c0_i32 = arith.constant 0 : i32
    %c0_i32_0 = arith.constant 0 : i32
    %c0_i32_1 = arith.constant 0 : i32
    %c0_i32_2 = arith.constant 0 : i32
    return %c0_i32, %c0_i32_0, %c0_i32_1 : i32, i32, i32
  }
  func.func @transform_11(%arg0: i32) -> (i32, i32) {
    %c0_i32 = arith.constant 0 : i32
    %c0_i32_0 = arith.constant 0 : i32
    %c0_i32_1 = arith.constant 0 : i32
    return %c0_i32, %c0_i32_0 : i32, i32
  }
  func.func @transform_12(%arg0: i32) -> (i32, i32) {
    %c0_i32 = arith.constant 0 : i32
    %c0_i32_0 = arith.constant 0 : i32
    return %arg0, %c0_i32 : i32, i32
  }
}

</mosaic_0001>

<llo_original>
// kernel: mul.1
$region0: #{mul.1}
  %s0 = inlined_call_operand.vmem [shape: f32[8,6,3], index: 0, kind: input, shape index: {}]
  %s1 = inlined_call_operand.vmem [shape: f32[8,18], index: 1, kind: output, shape index: {}]
  $region1: #{mul.1} parent=0
    #allocation0 [shape = 'u8[24576]{0}', space=vmem, size = 0x6000, scoped, tag = 'scoped mem for input reshape']
    %s3 = sshllo.u32 0, 4
    %s4 = smul.addr 4, 5
    %s5 = scalar_lea.vmem %s0, %s4
    %v6 = vld [vmem:[%s5] sm:%s3]
    %s7 = scalar_lea.vmem [#allocation0], 40
    %8 = vst [vmem:[%s7] sm:%s3] %v6
    %s9 = smul.addr 4, 4
    %s10 = scalar_lea.vmem %s0, %s9
    %v11 = vld [vmem:[%s10] sm:%s3]
    %s12 = scalar_lea.vmem [#allocation0], 32
    %13 = vst [vmem:[%s12] sm:%s3] %v11
    %s14 = smul.addr 4, 3
    %s15 = scalar_lea.vmem %s0, %s14
    %v16 = vld [vmem:[%s15] sm:%s3]
    %s17 = scalar_lea.vmem [#allocation0], 24
    %18 = vst [vmem:[%s17] sm:%s3] %v16
    %s19 = smul.addr 4, 2
    %s20 = scalar_lea.vmem %s0, %s19
    %v21 = vld [vmem:[%s20] sm:%s3]
    %s22 = scalar_lea.vmem [#allocation0], 16
    %23 = vst [vmem:[%s22] sm:%s3] %v21
    %s24 = scalar_lea.vmem %s0, 4
    %v25 = vld [vmem:[%s24] sm:%s3]
    %s26 = scalar_lea.vmem [#allocation0], 8
    %27 = vst [vmem:[%s26] sm:%s3] %v25
    %v28 = vld [vmem:[%s0] sm:%s3]
    %29 = vst [vmem:[#allocation0] sm:%s3] %v28
    %v30 = vld [vmem:[#allocation0] sm:$0x7]
    %vm31 = vcmask 64512
    %32 = vst.msk [vmem:[%s1] sm:$0x7] %vm31, %v30
    %s33 = scalar_lea.vmem [#allocation0], 8
    %v34 = vld [vmem:[%s33] sm:$0x7]
    %vm35 = vcmask 64512
    %s36 = scalar_lea.vmem %s1, 3
    %37 = vst.msk [vmem:[%s36] sm:$0x7] %vm35, %v34
    %s38 = scalar_lea.vmem [#allocation0], 16
    %v39 = vld [vmem:[%s38] sm:$0x7]
    %vm40 = vcmask 64512
    %s41 = scalar_lea.vmem %s1, 6
    %42 = vst.msk [vmem:[%s41] sm:$0x7] %vm40, %v39
    %s43 = scalar_lea.vmem [#allocation0], 24
    %v44 = vld [vmem:[%s43] sm:$0x7]
    %vm45 = vcmask 64512
    %s46 = scalar_lea.vmem %s1, 9
    %47 = vst.msk [vmem:[%s46] sm:$0x7] %vm45, %v44
    %s48 = scalar_lea.vmem [#allocation0], 32
    %v49 = vld [vmem:[%s48] sm:$0x7]
    %vm50 = vcmask 64512
    %s51 = scalar_lea.vmem %s1, 12
    %52 = vst.msk [vmem:[%s51] sm:$0x7] %vm50, %v49
    %s53 = scalar_lea.vmem [#allocation0], 40
    %v54 = vld [vmem:[%s53] sm:$0x7]
    %vm55 = vcmask 64512
    %s56 = scalar_lea.vmem %s1, 15
    %57 = vst.msk [vmem:[%s56] sm:$0x7] %vm55, %v54

// kernel: crnn_forward.1
$region0: #{crnn_forward.1}
  #allocation0 [shape = 'u32[]', space=smem, size = 0x4, offset = 0x4, fixed_abs, tag = 'smem constant byte address 0x4 - core index']
  #allocation1 [shape = 'u32[144,128]{1,0:T(1,128)}', space=vmem, size = 0x12000, scoped, tag = 'internal scratch']
  #allocation2 [shape = 'f32[64,1024]{1,0:T(8,128)}', space=vmem, size = 0x40000, scoped, tag = 'scratch operand']
  %s0 = inlined_call_operand.vmem [shape: f32[1,144,384], index: 0, kind: input, shape index: {}]
  %s1 = inlined_call_operand.vmem [shape: f32[64,144], index: 1, kind: input, shape index: {}]
  %s2 = inlined_call_operand.vmem [shape: f32[64,1], index: 2, kind: input, shape index: {}]
  %s3 = inlined_call_operand.vmem [shape: f32[64,1], index: 3, kind: input, shape index: {}]
  %s4 = inlined_call_operand.vmem [shape: f32[64,1], index: 4, kind: input, shape index: {}]
  %s5 = inlined_call_operand.vmem [shape: f32[128,1024], index: 5, kind: input, shape index: {}]
  %s6 = inlined_call_operand.vmem [shape: f32[1,1024], index: 6, kind: input, shape index: {}]
  %s7 = inlined_call_operand.vmem [shape: f32[128,512], index: 7, kind: input, shape index: {}]
  %s8 = inlined_call_operand.vmem [shape: f32[128,512], index: 8, kind: input, shape index: {}]
  %s9 = inlined_call_operand.vmem [shape: f32[8,128,128], index: 9, kind: input, shape index: {}]
  %s10 = inlined_call_operand.vmem [shape: f32[8,128,128], index: 10, kind: input, shape index: {}]
  %s11 = inlined_call_operand.vmem [shape: f32[1,128], index: 11, kind: input, shape index: {}]
  %s12 = inlined_call_operand.vmem [shape: f32[8,128], index: 12, kind: output, shape index: {}]
  %s13 = sld [smem:[#allocation0]]
  $region58: #{crnn_forward.1} parent=0
    _
  %s15 = ssub.s32 1, %s13
  %s16 = scalar_select 0, %s15, %s13
  // Predicated region
  $region2: #{crnn_forward.1} parent=0 // pred_check
    _
  $region3: #{crnn_forward.1} parent=0 // pred_check_branch
    %18 = sbr.rel (0) target = $region5
  $region4: #{crnn_forward.1} parent=0 // pred_region
    _
  $region5: #{crnn_forward.1} parent=0 // pred_fallthru
    _
  // Predicated region
  $region6: #{crnn_forward.1} parent=0 // pred_check
    _
  $region7: #{crnn_forward.1} parent=0 // pred_check_branch
    %20 = sbr.rel (0) target = $region9
  $region8: #{crnn_forward.1} parent=0 // pred_region
    _
  $region9: #{crnn_forward.1} parent=0 // pred_fallthru
    _
  // Predicated region
  $region10: #{crnn_forward.1} parent=0 // pred_check
    _
  $region11: #{crnn_forward.1} parent=0 // pred_check_branch
    %22 = sbr.rel (0) target = $region13
  $region12: #{crnn_forward.1} parent=0 // pred_region
    _
  $region13: #{crnn_forward.1} parent=0 // pred_fallthru
    _
  // Predicated region
  $region14: #{crnn_forward.1} parent=0 // pred_check
    _
  $region15: #{crnn_forward.1} parent=0 // pred_check_branch
    %24 = sbr.rel (0) target = $region17
  $region16: #{crnn_forward.1} parent=0 // pred_region
    _
  $region17: #{crnn_forward.1} parent=0 // pred_fallthru
    _
  // Predicated region
  $region18: #{crnn_forward.1} parent=0 // pred_check
    _
  $region19: #{crnn_forward.1} parent=0 // pred_check_branch
    %26 = sbr.rel (0) target = $region21
  $region20: #{crnn_forward.1} parent=0 // pred_region
    _
  $region21: #{crnn_forward.1} parent=0 // pred_fallthru
    _
  // Predicated region
  $region22: #{crnn_forward.1} parent=0 // pred_check
    _
  $region23: #{crnn_forward.1} parent=0 // pred_check_branch
    %28 = sbr.rel (0) target = $region25
  $region24: #{crnn_forward.1} parent=0 // pred_region
    _
  $region25: #{crnn_forward.1} parent=0 // pred_fallthru
    _
  // Predicated region
  $region26: #{crnn_forward.1} parent=0 // pred_check
    _
  $region27: #{crnn_forward.1} parent=0 // pred_check_branch
    %30 = sbr.rel (0) target = $region29
  $region28: #{crnn_forward.1} parent=0 // pred_region
    _
  $region29: #{crnn_forward.1} parent=0 // pred_fallthru
    _
  // Predicated region
  $region30: #{crnn_forward.1} parent=0 // pred_check
    _
  $region31: #{crnn_forward.1} parent=0 // pred_check_branch
    %32 = sbr.rel (0) target = $region33
  $region32: #{crnn_forward.1} parent=0 // pred_region
    _
  $region33: #{crnn_forward.1} parent=0 // pred_fallthru
    _
  // Predicated region
  $region34: #{crnn_forward.1} parent=0 // pred_check
    _
  $region35: #{crnn_forward.1} parent=0 // pred_check_branch
    %34 = sbr.rel (0) target = $region37
  $region36: #{crnn_forward.1} parent=0 // pred_region
    _
  $region37: #{crnn_forward.1} parent=0 // pred_fallthru
    _
  // Predicated region
  $region38: #{crnn_forward.1} parent=0 // pred_check
    _
  $region39: #{crnn_forward.1} parent=0 // pred_check_branch
    %36 = sbr.rel (0) target = $region41
  $region40: #{crnn_forward.1} parent=0 // pred_region
    _
  $region41: #{crnn_forward.1} parent=0 // pred_fallthru
    _
  // Predicated region
  $region42: #{crnn_forward.1} parent=0 // pred_check
    _
  $region43: #{crnn_forward.1} parent=0 // pred_check_branch
    %38 = sbr.rel (0) target = $region45
  $region44: #{crnn_forward.1} parent=0 // pred_region
    _
  $region45: #{crnn_forward.1} parent=0 // pred_fallthru
    _
  // Predicated region
  $region46: #{crnn_forward.1} parent=0 // pred_check
    _
  $region47: #{crnn_forward.1} parent=0 // pred_check_branch
    %40 = sbr.rel (0) target = $region49
  $region48: #{crnn_forward.1} parent=0 // pred_region
    _
  $region49: #{crnn_forward.1} parent=0 // pred_fallthru
    _
  %v41 = vld [vmem:[%s1] sm:$0xff]
  %v42 = vld [vmem:[%s1 + $0x8] sm:$0xff]
  %v43 = vld [vmem:[%s1 + $0x10] sm:$0xff]
  %v44 = vld [vmem:[%s1 + $0x18] sm:$0xff]
  %v45 = vld [vmem:[%s1 + $0x20] sm:$0xff]
  %v46 = vld [vmem:[%s1 + $0x28] sm:$0xff]
  %v47 = vld [vmem:[%s1 + $0x30] sm:$0xff]
  %v48 = vld [vmem:[%s1 + $0x38] sm:$0xff]
  %v49 = vld [vmem:[%s1 + $0x40] sm:$0xff]
  %v50 = vld [vmem:[%s1 + $0x48] sm:$0xff]
  %v51 = vld [vmem:[%s1 + $0x50] sm:$0xff]
  %v52 = vld [vmem:[%s1 + $0x58] sm:$0xff]
  %v53 = vld [vmem:[%s1 + $0x60] sm:$0xff]
  %v54 = vld [vmem:[%s1 + $0x68] sm:$0xff]
  %v55 = vld [vmem:[%s1 + $0x70] sm:$0xff]
  %v56 = vld [vmem:[%s1 + $0x78] sm:$0xff]
  %v57 = vld [vmem:[%s0] sm:$0xff]
  %v58 = vld [vmem:[%s0 + $0x8] sm:$0xff]
  %v59 = vld [vmem:[%s0 + $0x10] sm:$0xff]
  %v60 = vld [vmem:[%s0 + $0x18] sm:$0xff]
  %v61 = vld [vmem:[%s0 + $0x20] sm:$0xff]
  %v62 = vld [vmem:[%s0 + $0x28] sm:$0xff]
  %v63 = vld [vmem:[%s0 + $0x30] sm:$0xff]
  %v64 = vld [vmem:[%s0 + $0x38] sm:$0xff]
  %v65 = vld [vmem:[%s0 + $0x40] sm:$0xff]
  %v66 = vld [vmem:[%s0 + $0x48] sm:$0xff]
  %v67 = vld [vmem:[%s0 + $0x50] sm:$0xff]
  %v68 = vld [vmem:[%s0 + $0x58] sm:$0xff]
  %v69 = vld [vmem:[%s0 + $0x60] sm:$0xff]
  %v70 = vld [vmem:[%s0 + $0x68] sm:$0xff]
  %v71 = vld [vmem:[%s0 + $0x70] sm:$0xff]
  %v72 = vld [vmem:[%s0 + $0x78] sm:$0xff]
  %v73 = vld [vmem:[%s0 + $0x80] sm:$0xff]
  %v74 = vld [vmem:[%s0 + $0x88] sm:$0xff]
  %v75 = vld [vmem:[%s0 + $0x90] sm:$0xff]
  %v76 = vld [vmem:[%s0 + $0x98] sm:$0xff]
  %v77 = vld [vmem:[%s0 + $0xa0] sm:$0xff]
  %v78 = vld [vmem:[%s0 + $0xa8] sm:$0xff]
  %v79 = vld [vmem:[%s0 + $0xb0] sm:$0xff]
  %v80 = vld [vmem:[%s0 + $0xb8] sm:$0xff]
  %v81 = vld [vmem:[%s0 + $0xc0] sm:$0xff]
  %v82 = vld [vmem:[%s0 + $0xc8] sm:$0xff]
  %v83 = vld [vmem:[%s0 + $0xd0] sm:$0xff]
  %v84 = vld [vmem:[%s0 + $0xd8] sm:$0xff]
  %v85 = vld [vmem:[%s0 + $0xe0] sm:$0xff]
  %v86 = vld [vmem:[%s0 + $0xe8] sm:$0xff]
  %v87 = vld [vmem:[%s0 + $0xf0] sm:$0xff]
  %v88 = vld [vmem:[%s0 + $0xf8] sm:$0xff]
  %v89 = vld [vmem:[%s0 + $0x100] sm:$0xff]
  %v90 = vld [vmem:[%s0 + $0x108] sm:$0xff]
  %v91 = vld [vmem:[%s0 + $0x110] sm:$0xff]
  %v92 = vld [vmem:[%s0 + $0x118] sm:$0xff]
  %v93 = vld [vmem:[%s0 + $0x120] sm:$0xff]
  %v94 = vld [vmem:[%s0 + $0x128] sm:$0xff]
  %v95 = vld [vmem:[%s0 + $0x130] sm:$0xff]
  %v96 = vld [vmem:[%s0 + $0x138] sm:$0xff]
  %v97 = vld [vmem:[%s0 + $0x140] sm:$0xff]
  %v98 = vld [vmem:[%s0 + $0x148] sm:$0xff]
  %v99 = vld [vmem:[%s0 + $0x150] sm:$0xff]
  %v100 = vld [vmem:[%s0 + $0x158] sm:$0xff]
  %v101 = vld [vmem:[%s0 + $0x160] sm:$0xff]
  %v102 = vld [vmem:[%s0 + $0x168] sm:$0xff]
  %v103 = vld [vmem:[%s0 + $0x170] sm:$0xff]
  %v104 = vld [vmem:[%s0 + $0x178] sm:$0xff]
  %v105 = vld [vmem:[%s0 + $0x180] sm:$0xff]
  %v106 = vld [vmem:[%s0 + $0x188] sm:$0xff]
  %v107 = vld [vmem:[%s0 + $0x190] sm:$0xff]
  %v108 = vld [vmem:[%s0 + $0x198] sm:$0xff]
  %v109 = vld [vmem:[%s0 + $0x1a0] sm:$0xff]
  %v110 = vld [vmem:[%s0 + $0x1a8] sm:$0xff]
  %vm111 = vcmask 130048
  %v113 = vsel %vm111, %v42, 0
  %v116 = vsel %vm111, %v44, 0
  %v119 = vsel %vm111, %v46, 0
  %v122 = vsel %vm111, %v48, 0
  %v125 = vsel %vm111, %v50, 0
  %v128 = vsel %vm111, %v52, 0
  %v131 = vsel %vm111, %v54, 0
  %v134 = vsel %vm111, %v56, 0
  %136 = vmatprep.subr.mxu0 %v58
  %137 = vmatpush1.msra.mxu0 %v57
  %138 = vmatprep.subr.mxu0 %v61
  %139 = vmatpush1.msra.mxu0 %v60
  %140 = vmatprep.subr.mxu0 %v64
  %141 = vmatpush1.msra.mxu0 %v63
  %142 = vmatprep.subr.mxu0 %v67
  %143 = vmatpush1.msra.mxu0 %v66
  %144 = vmatprep.subr.mxu0 %v70
  %145 = vmatpush1.msra.mxu0 %v69
  %146 = vmatprep.subr.mxu0 %v73
  %147 = vmatpush1.msra.mxu0 %v72
  %148 = vmatprep.subr.mxu0 %v76
  %149 = vmatpush1.msra.mxu0 %v75
  %150 = vmatprep.subr.mxu0 %v79
  %151 = vmatpush1.msra.mxu0 %v78
  %152 = vmatprep.subr.mxu0 %v82
  %153 = vmatpush1.msra.mxu0 %v81
  %154 = vmatprep.subr.mxu0 %v85
  %155 = vmatpush1.msra.mxu0 %v84
  %156 = vmatprep.subr.mxu0 %v88
  %157 = vmatpush1.msra.mxu0 %v87
  %158 = vmatprep.subr.mxu0 %v91
  %159 = vmatpush1.msra.mxu0 %v90
  %160 = vmatprep.subr.mxu0 %v94
  %161 = vmatpush1.msra.mxu0 %v93
  %162 = vmatprep.subr.mxu0 %v97
  %163 = vmatpush1.msra.mxu0 %v96
  %164 = vmatprep.subr.mxu0 %v100
  %165 = vmatpush1.msra.mxu0 %v99
  %166 = vmatprep.subr.mxu0 %v103
  %167 = vmatpush1.msra.mxu0 %v102
  %168 = vmatprep.subr.mxu0 %v106
  %169 = vmatpush1.msra.mxu0 %v105
  %170 = vmatprep.subr.mxu0 %v109
  %171 = vmatpush1.msra.mxu0 %v108
  %172 = vmatprep.subr.mxu0 0.0
  %173 = vmatpush1.msra.mxu0 0.0
  %174 = vmatprep.subr.mxu0 0.0
  %175 = vmatpush1.msra.mxu0 0.0
  %176 = vmatprep.subr.mxu0 0.0
  %177 = vmatpush1.msra.mxu0 0.0
  %178 = vmatprep.subr.mxu0 0.0
  %179 = vmatpush1.msra.mxu0 0.0
  %180 = vmatprep.subr.mxu0 0.0
  %181 = vmatpush1.msra.mxu0 0.0
  %182 = vmatprep.subr.mxu0 0.0
  %183 = vmatpush1.msra.mxu0 0.0
  %184 = vmatprep.subr.mxu0 0.0
  %185 = vmatpush1.msra.mxu0 0.0
  %186 = vmatprep.subr.mxu0 0.0
  %187 = vmatpush1.msra.mxu0 0.0
  %188 = vmatprep.subr.mxu0 0.0
  %189 = vmatpush1.msra.mxu0 0.0
  %190 = vmatprep.subr.mxu0 0.0
  %191 = vmatpush1.msra.mxu0 0.0
  %192 = vmatprep.subr.mxu0 0.0
  %193 = vmatpush1.msra.mxu0 0.0
  %194 = vmatprep.subr.mxu0 0.0
  %195 = vmatpush1.msra.mxu0 0.0
  %196 = vmatprep.subr.mxu0 0.0
  %197 = vmatpush1.msra.mxu0 0.0
  %198 = vmatprep.subr.mxu0 0.0
  %199 = vmatpush1.msra.mxu0 0.0
  %200 = vmatprep.mubr.f32.mxu0 %v113
  %201 = vmatmul.mubr.f32.gmra.mrb[0].mxu0 %v41
  %v202 = vpop.f32.mrb[0].mxu0
  %v203 = vadd.f32 0.0, %v202
  %v204 = vpop.f32.mrb[0].mxu0
  %v205 = vadd.f32 0.0, %v204
  %206 = vmatprep.mubr.f32.mxu0 %v116
  %207 = vmatmul.mubr.f32.gmra.mrb[0].mxu0 %v43
  %v208 = vpop.f32.mrb[0].mxu0
  %v209 = vadd.f32 0.0, %v208
  %v210 = vpop.f32.mrb[0].mxu0
  %v211 = vadd.f32 0.0, %v210
  %212 = vmatprep.mubr.f32.mxu0 %v119
  %213 = vmatmul.mubr.f32.gmra.mrb[0].mxu0 %v45
  %v214 = vpop.f32.mrb[0].mxu0
  %v215 = vadd.f32 0.0, %v214
  %v216 = vpop.f32.mrb[0].mxu0
  %v217 = vadd.f32 0.0, %v216
  %218 = vmatprep.mubr.f32.mxu0 %v122
  %219 = vmatmul.mubr.f32.gmra.mrb[0].mxu0 %v47
  %v220 = vpop.f32.mrb[0].mxu0
  %v221 = vadd.f32 0.0, %v220
  %v222 = vpop.f32.mrb[0].mxu0
  %v223 = vadd.f32 0.0, %v222
  %224 = vmatprep.mubr.f32.mxu0 %v125
  %225 = vmatmul.mubr.f32.gmra.mrb[0].mxu0 %v49
  %v226 = vpop.f32.mrb[0].mxu0
  %v227 = vadd.f32 0.0, %v226
  %v228 = vpop.f32.mrb[0].mxu0
  %v229 = vadd.f32 0.0, %v228
  %230 = vmatprep.mubr.f32.mxu0 %v128
  %231 = vmatmul.mubr.f32.gmra.mrb[0].mxu0 %v51
  %v232 = vpop.f32.mrb[0].mxu0
  %v233 = vadd.f32 0.0, %v232
  %v234 = vpop.f32.mrb[0].mxu0
  %v235 = vadd.f32 0.0, %v234
  %236 = vmatprep.mubr.f32.mxu0 %v131
  %237 = vmatmul.mubr.f32.gmra.mrb[0].mxu0 %v53
  %v238 = vpop.f32.mrb[0].mxu0
  %v239 = vadd.f32 0.0, %v238
  %v240 = vpop.f32.mrb[0].mxu0
  %v241 = vadd.f32 0.0, %v240
  %242 = vmatprep.mubr.f32.mxu0 %v134
  %243 = vmatmul.mubr.f32.gmra.mrb[0].mxu0 %v55
  %v244 = vpop.f32.mrb[0].mxu0
  %v245 = vadd.f32 0.0, %v244
  %v246 = vpop.f32.mrb[0].mxu0
  %v247 = vadd.f32 0.0, %v246
  %248 = vdwg.mxu0
  %249 = vmatprep.subr.mxu0 0.0
  %250 = vmatpush1.msra.mxu0 %v59
  %251 = vmatprep.subr.mxu0 0.0
  %252 = vmatpush1.msra.mxu0 %v62
  %253 = vmatprep.subr.mxu0 0.0
  %254 = vmatpush1.msra.mxu0 %v65
  %255 = vmatprep.subr.mxu0 0.0
  %256 = vmatpush1.msra.mxu0 %v68
  %257 = vmatprep.subr.mxu0 0.0
  %258 = vmatpush1.msra.mxu0 %v71
  %259 = vmatprep.subr.mxu0 0.0
  %260 = vmatpush1.msra.mxu0 %v74
  %261 = vmatprep.subr.mxu0 0.0
  %262 = vmatpush1.msra.mxu0 %v77
  %263 = vmatprep.subr.mxu0 0.0
  %264 = vmatpush1.msra.mxu0 %v80
  %265 = vmatprep.subr.mxu0 0.0
  %266 = vmatpush1.msra.mxu0 %v83
  %267 = vmatprep.subr.mxu0 0.0
  %268 = vmatpush1.msra.mxu0 %v86
  %269 = vmatprep.subr.mxu0 0.0
  %270 = vmatpush1.msra.mxu0 %v89
  %271 = vmatprep.subr.mxu0 0.0
  %272 = vmatpush1.msra.mxu0 %v92
  %273 = vmatprep.subr.mxu0 0.0
  %274 = vmatpush1.msra.mxu0 %v95
  %275 = vmatprep.subr.mxu0 0.0
  %276 = vmatpush1.msra.mxu0 %v98
  %277 = vmatprep.subr.mxu0 0.0
  %278 = vmatpush1.msra.mxu0 %v101
  %279 = vmatprep.subr.mxu0 0.0
  %280 = vmatpush1.msra.mxu0 %v104
  %281 = vmatprep.subr.mxu0 0.0
  %282 = vmatpush1.msra.mxu0 %v107
  %283 = vmatprep.subr.mxu0 0.0
  %284 = vmatpush1.msra.mxu0 %v110
  %285 = vmatprep.subr.mxu0 0.0
  %286 = vmatpush1.msra.mxu0 0.0
  %287 = vmatprep.subr.mxu0 0.0
  %288 = vmatpush1.msra.mxu0 0.0
  %289 = vmatprep.subr.mxu0 0.0
  %290 = vmatpush1.msra.mxu0 0.0
  %291 = vmatprep.subr.mxu0 0.0
  %292 = vmatpush1.msra.mxu0 0.0
  %293 = vmatprep.subr.mxu0 0.0
  %294 = vmatpush1.msra.mxu0 0.0
  %295 = vmatprep.subr.mxu0 0.0
  %296 = vmatpush1.msra.mxu0 0.0
  %297 = vmatprep.subr.mxu0 0.0
  %298 = vmatpush1.msra.mxu0 0.0
  %299 = vmatprep.subr.mxu0 0.0
  %300 = vmatpush1.msra.mxu0 0.0
  %301 = vmatprep.subr.mxu0 0.0
  %302 = vmatpush1.msra.mxu0 0.0
  %303 = vmatprep.subr.mxu0 0.0
  %304 = vmatpush1.msra.mxu0 0.0
  %305 = vmatprep.subr.mxu0 0.0
  %306 = vmatpush1.msra.mxu0 0.0
  %307 = vmatprep.subr.mxu0 0.0
  %308 = vmatpush1.msra.mxu0 0.0
  %309 = vmatprep.subr.mxu0 0.0
  %310 = vmatpush1.msra.mxu0 0.0
  %311 = vmatprep.subr.mxu0 0.0
  %312 = vmatpush1.msra.mxu0 0.0
  %313 = vmatprep.mubr.f32.mxu0 %v113
  %314 = vmatmul.mubr.f32.gmra.mrb[0].mxu0 %v41
  %v315 = vpop.f32.mrb[0].mxu0
  %v316 = vadd.f32 0.0, %v315
  %v317 = vpop.f32.mrb[0].mxu0
  %318 = vmatprep.mubr.f32.mxu0 %v116
  %319 = vmatmul.mubr.f32.gmra.mrb[0].mxu0 %v43
  %v320 = vpop.f32.mrb[0].mxu0
  %v321 = vadd.f32 0.0, %v320
  %v322 = vpop.f32.mrb[0].mxu0
  %323 = vmatprep.mubr.f32.mxu0 %v119
  %324 = vmatmul.mubr.f32.gmra.mrb[0].mxu0 %v45
  %v325 = vpop.f32.mrb[0].mxu0
  %v326 = vadd.f32 0.0, %v325
  %v327 = vpop.f32.mrb[0].mxu0
  %328 = vmatprep.mubr.f32.mxu0 %v122
  %329 = vmatmul.mubr.f32.gmra.mrb[0].mxu0 %v47
  %v330 = vpop.f32.mrb[0].mxu0
  %v331 = vadd.f32 0.0, %v330
  %v332 = vpop.f32.mrb[0].mxu0
  %333 = vmatprep.mubr.f32.mxu0 %v125
  %334 = vmatmul.mubr.f32.gmra.mrb[0].mxu0 %v49
  %v335 = vpop.f32.mrb[0].mxu0
  %v336 = vadd.f32 0.0, %v335
  %v337 = vpop.f32.mrb[0].mxu0
  %338 = vmatprep.mubr.f32.mxu0 %v128
  %339 = vmatmul.mubr.f32.gmra.mrb[0].mxu0 %v51
  %v340 = vpop.f32.mrb[0].mxu0
  %v341 = vadd.f32 0.0, %v340
  %v342 = vpop.f32.mrb[0].mxu0
  %343 = vmatprep.mubr.f32.mxu0 %v131
  %344 = vmatmul.mubr.f32.gmra.mrb[0].mxu0 %v53
  %v345 = vpop.f32.mrb[0].mxu0
  %v346 = vadd.f32 0.0, %v345
  %v347 = vpop.f32.mrb[0].mxu0
  %348 = vmatprep.mubr.f32.mxu0 %v134
  %349 = vmatmul.mubr.f32.gmra.mrb[0].mxu0 %v55
  %v350 = vpop.f32.mrb[0].mxu0
  %v351 = vadd.f32 0.0, %v350
  %v352 = vpop.f32.mrb[0].mxu0
  %353 = vdwg.mxu0
  %v354 = vmax.f32 %v203, %v205
  %v355 = vmax.f32 %v209, %v211
  %v356 = vmax.f32 %v215, %v217
  %v357 = vmax.f32 %v221, %v223
  %v358 = vmax.f32 %v227, %v229
  %v359 = vmax.f32 %v233, %v235
  %v360 = vmax.f32 %v239, %v241
  %v361 = vmax.f32 %v245, %v247
  %v362 = vmax.f32 %v354, %v316
  %v363 = vmax.f32 %v355, %v321
  %v364 = vmax.f32 %v356, %v326
  %v365 = vmax.f32 %v357, %v331
  %v366 = vmax.f32 %v358, %v336
  %v367 = vmax.f32 %v359, %v341
  %v368 = vmax.f32 %v360, %v346
  %v369 = vmax.f32 %v361, %v351
  %v370 = vld [vmem:[%s2] sm:$0xff]
  %v371 = vld [vmem:[%s2 + $0x8] sm:$0xff]
  %v372 = vld [vmem:[%s2 + $0x10] sm:$0xff]
  %v373 = vld [vmem:[%s2 + $0x18] sm:$0xff]
  %v374 = vld [vmem:[%s2 + $0x20] sm:$0xff]
  %v375 = vld [vmem:[%s2 + $0x28] sm:$0xff]
  %v376 = vld [vmem:[%s2 + $0x30] sm:$0xff]
  %v377 = vld [vmem:[%s2 + $0x38] sm:$0xff]
  %379 = vset.pattern.permute.xlu0 0
  %380 = vperm.xlu0 %379, %v370
  %v381 = vpop.permute.xlu0 %380
  %384 = vset.pattern.permute.xlu0 0
  %385 = vperm.xlu0 %384, %v371
  %v386 = vpop.permute.xlu0 %385
  %389 = vset.pattern.permute.xlu0 0
  %390 = vperm.xlu0 %389, %v372
  %v391 = vpop.permute.xlu0 %390
  %394 = vset.pattern.permute.xlu0 0
  %395 = vperm.xlu0 %394, %v373
  %v396 = vpop.permute.xlu0 %395
  %399 = vset.pattern.permute.xlu0 0
  %400 = vperm.xlu0 %399, %v374
  %v401 = vpop.permute.xlu0 %400
  %404 = vset.pattern.permute.xlu0 0
  %405 = vperm.xlu0 %404, %v375
  %v406 = vpop.permute.xlu0 %405
  %409 = vset.pattern.permute.xlu0 0
  %410 = vperm.xlu0 %409, %v376
  %v411 = vpop.permute.xlu0 %410
  %414 = vset.pattern.permute.xlu0 0
  %415 = vperm.xlu0 %414, %v377
  %v416 = vpop.permute.xlu0 %415
  %v418 = vadd.f32 %v362, %v381
  %v419 = vadd.f32 %v363, %v386
  %v420 = vadd.f32 %v364, %v391
  %v421 = vadd.f32 %v365, %v396
  %v422 = vadd.f32 %v366, %v401
  %v423 = vadd.f32 %v367, %v406
  %v424 = vadd.f32 %v368, %v411
  %v425 = vadd.f32 %v369, %v416
  %vm426 = vcmp.gt.f32.partialorder %v418, 0.0
  %vm427 = vcmp.gt.f32.partialorder %v419, 0.0
  %vm428 = vcmp.gt.f32.partialorder %v420, 0.0
  %vm429 = vcmp.gt.f32.partialorder %v421, 0.0
  %vm430 = vcmp.gt.f32.partialorder %v422, 0.0
  %vm431 = vcmp.gt.f32.partialorder %v423, 0.0
  %vm432 = vcmp.gt.f32.partialorder %v424, 0.0
  %vm433 = vcmp.gt.f32.partialorder %v425, 0.0
  %v434 = vmul.f32 %v418, 0.01
  %v435 = vmul.f32 %v419, 0.01
  %v436 = vmul.f32 %v420, 0.01
  %v437 = vmul.f32 %v421, 0.01
  %v438 = vmul.f32 %v422, 0.01
  %v439 = vmul.f32 %v423, 0.01
  %v440 = vmul.f32 %v424, 0.01
  %v441 = vmul.f32 %v425, 0.01
  %v442 = vsel %vm426, %v418, %v434
  %v443 = vsel %vm427, %v419, %v435
  %v444 = vsel %vm428, %v420, %v436
  %v445 = vsel %vm429, %v421, %v437
  %v446 = vsel %vm430, %v422, %v438
  %v447 = vsel %vm431, %v423, %v439
  %v448 = vsel %vm432, %v424, %v440
  %v449 = vsel %vm433, %v425, %v441
  %v450 = vld [vmem:[%s3] sm:$0xff]
  %v451 = vld [vmem:[%s3 + $0x8] sm:$0xff]
  %v452 = vld [vmem:[%s3 + $0x10] sm:$0xff]
  %v453 = vld [vmem:[%s3 + $0x18] sm:$0xff]
  %v454 = vld [vmem:[%s3 + $0x20] sm:$0xff]
  %v455 = vld [vmem:[%s3 + $0x28] sm:$0xff]
  %v456 = vld [vmem:[%s3 + $0x30] sm:$0xff]
  %v457 = vld [vmem:[%s3 + $0x38] sm:$0xff]
  %459 = vset.pattern.permute.xlu0 0
  %460 = vperm.xlu0 %459, %v450
  %v461 = vpop.permute.xlu0 %460
  %464 = vset.pattern.permute.xlu0 0
  %465 = vperm.xlu0 %464, %v451
  %v466 = vpop.permute.xlu0 %465
  %469 = vset.pattern.permute.xlu0 0
  %470 = vperm.xlu0 %469, %v452
  %v471 = vpop.permute.xlu0 %470
  %474 = vset.pattern.permute.xlu0 0
  %475 = vperm.xlu0 %474, %v453
  %v476 = vpop.permute.xlu0 %475
  %479 = vset.pattern.permute.xlu0 0
  %480 = vperm.xlu0 %479, %v454
  %v481 = vpop.permute.xlu0 %480
  %484 = vset.pattern.permute.xlu0 0
  %485 = vperm.xlu0 %484, %v455
  %v486 = vpop.permute.xlu0 %485
  %489 = vset.pattern.permute.xlu0 0
  %490 = vperm.xlu0 %489, %v456
  %v491 = vpop.permute.xlu0 %490
  %494 = vset.pattern.permute.xlu0 0
  %495 = vperm.xlu0 %494, %v457
  %v496 = vpop.permute.xlu0 %495
  %v498 = vmul.f32 %v442, %v461
  %v499 = vmul.f32 %v443, %v466
  %v500 = vmul.f32 %v444, %v471
  %v501 = vmul.f32 %v445, %v476
  %v502 = vmul.f32 %v446, %v481
  %v503 = vmul.f32 %v447, %v486
  %v504 = vmul.f32 %v448, %v491
  %v505 = vmul.f32 %v449, %v496
  %v506 = vld [vmem:[%s4] sm:$0xff]
  %v507 = vld [vmem:[%s4 + $0x8] sm:$0xff]
  %v508 = vld [vmem:[%s4 + $0x10] sm:$0xff]
  %v509 = vld [vmem:[%s4 + $0x18] sm:$0xff]
  %v510 = vld [vmem:[%s4 + $0x20] sm:$0xff]
  %v511 = vld [vmem:[%s4 + $0x28] sm:$0xff]
  %v512 = vld [vmem:[%s4 + $0x30] sm:$0xff]
  %v513 = vld [vmem:[%s4 + $0x38] sm:$0xff]
  %515 = vset.pattern.permute.xlu0 0
  %516 = vperm.xlu0 %515, %v506
  %v517 = vpop.permute.xlu0 %516
  %520 = vset.pattern.permute.xlu0 0
  %521 = vperm.xlu0 %520, %v507
  %v522 = vpop.permute.xlu0 %521
  %525 = vset.pattern.permute.xlu0 0
  %526 = vperm.xlu0 %525, %v508
  %v527 = vpop.permute.xlu0 %526
  %530 = vset.pattern.permute.xlu0 0
  %531 = vperm.xlu0 %530, %v509
  %v532 = vpop.permute.xlu0 %531
  %535 = vset.pattern.permute.xlu0 0
  %536 = vperm.xlu0 %535, %v510
  %v537 = vpop.permute.xlu0 %536
  %540 = vset.pattern.permute.xlu0 0
  %541 = vperm.xlu0 %540, %v511
  %v542 = vpop.permute.xlu0 %541
  %545 = vset.pattern.permute.xlu0 0
  %546 = vperm.xlu0 %545, %v512
  %v547 = vpop.permute.xlu0 %546
  %550 = vset.pattern.permute.xlu0 0
  %551 = vperm.xlu0 %550, %v513
  %v552 = vpop.permute.xlu0 %551
  %v554 = vadd.f32 %v498, %v517
  %v555 = vadd.f32 %v499, %v522
  %v556 = vadd.f32 %v500, %v527
  %v557 = vadd.f32 %v501, %v532
  %v558 = vadd.f32 %v502, %v537
  %v559 = vadd.f32 %v503, %v542
  %v560 = vadd.f32 %v504, %v547
  %v561 = vadd.f32 %v505, %v552
  %v562 = vld [vmem:[%s5] sm:$0xff]
  %v563 = vld [vmem:[%s5 + $0x8] sm:$0xff]
  %v564 = vld [vmem:[%s5 + $0x10] sm:$0xff]
  %v565 = vld [vmem:[%s5 + $0x18] sm:$0xff]
  %v566 = vld [vmem:[%s5 + $0x20] sm:$0xff]
  %v567 = vld [vmem:[%s5 + $0x28] sm:$0xff]
  %v568 = vld [vmem:[%s5 + $0x30] sm:$0xff]
  %v569 = vld [vmem:[%s5 + $0x38] sm:$0xff]
  %v570 = vld [vmem:[%s5 + $0x40] sm:$0xff]
  %v571 = vld [vmem:[%s5 + $0x48] sm:$0xff]
  %v572 = vld [vmem:[%s5 + $0x50] sm:$0xff]
  %v573 = vld [vmem:[%s5 + $0x58] sm:$0xff]
  %v574 = vld [vmem:[%s5 + $0x60] sm:$0xff]
  %v575 = vld [vmem:[%s5 + $0x68] sm:$0xff]
  %v576 = vld [vmem:[%s5 + $0x70] sm:$0xff]
  %v577 = vld [vmem:[%s5 + $0x78] sm:$0xff]
  %v578 = vld [vmem:[%s5 + $0x80] sm:$0xff]
  %v579 = vld [vmem:[%s5 + $0x88] sm:$0xff]
  %v580 = vld [vmem:[%s5 + $0x90] sm:$0xff]
  %v581 = vld [vmem:[%s5 + $0x98] sm:$0xff]
  %v582 = vld [vmem:[%s5 + $0xa0] sm:$0xff]
  %v583 = vld [vmem:[%s5 + $0xa8] sm:$0xff]
  %v584 = vld [vmem:[%s5 + $0xb0] sm:$0xff]
  %v585 = vld [vmem:[%s5 + $0xb8] sm:$0xff]
  %v586 = vld [vmem:[%s5 + $0xc0] sm:$0xff]
  %v587 = vld [vmem:[%s5 + $0xc8] sm:$0xff]
  %v588 = vld [vmem:[%s5 + $0xd0] sm:$0xff]
  %v589 = vld [vmem:[%s5 + $0xd8] sm:$0xff]
  %v590 = vld [vmem:[%s5 + $0xe0] sm:$0xff]
  %v591 = vld [vmem:[%s5 + $0xe8] sm:$0xff]
  %v592 = vld [vmem:[%s5 + $0xf0] sm:$0xff]
  %v593 = vld [vmem:[%s5 + $0xf8] sm:$0xff]
  %v594 = vld [vmem:[%s5 + $0x100] sm:$0xff]
  %v595 = vld [vmem:[%s5 + $0x108] sm:$0xff]
  %v596 = vld [vmem:[%s5 + $0x110] sm:$0xff]
  %v597 = vld [vmem:[%s5 + $0x118] sm:$0xff]
  %v598 = vld [vmem:[%s5 + $0x120] sm:$0xff]
  %v599 = vld [vmem:[%s5 + $0x128] sm:$0xff]
  %v600 = vld [vmem:[%s5 + $0x130] sm:$0xff]
  %v601 = vld [vmem:[%s5 + $0x138] sm:$0xff]
  %v602 = vld [vmem:[%s5 + $0x140] sm:$0xff]
  %v603 = vld [vmem:[%s5 + $0x148] sm:$0xff]
  %v604 = vld [vmem:[%s5 + $0x150] sm:$0xff]
  %v605 = vld [vmem:[%s5 + $0x158] sm:$0xff]
  %v606 = vld [vmem:[%s5 + $0x160] sm:$0xff]
  %v607 = vld [vmem:[%s5 + $0x168] sm:$0xff]
  %v608 = vld [vmem:[%s5 + $0x170] sm:$0xff]
  %v609 = vld [vmem:[%s5 + $0x178] sm:$0xff]
  %v610 = vld [vmem:[%s5 + $0x180] sm:$0xff]
  %v611 = vld [vmem:[%s5 + $0x188] sm:$0xff]
  %v612 = vld [vmem:[%s5 + $0x190] sm:$0xff]
  %v613 = vld [vmem:[%s5 + $0x198] sm:$0xff]
  %v614 = vld [vmem:[%s5 + $0x1a0] sm:$0xff]
  %v615 = vld [vmem:[%s5 + $0x1a8] sm:$0xff]
  %v616 = vld [vmem:[%s5 + $0x1b0] sm:$0xff]
  %v617 = vld [vmem:[%s5 + $0x1b8] sm:$0xff]
  %v618 = vld [vmem:[%s5 + $0x1c0] sm:$0xff]
  %v619 = vld [vmem:[%s5 + $0x1c8] sm:$0xff]
  %v620 = vld [vmem:[%s5 + $0x1d0] sm:$0xff]
  %v621 = vld [vmem:[%s5 + $0x1d8] sm:$0xff]
  %v622 = vld [vmem:[%s5 + $0x1e0] sm:$0xff]
  %v623 = vld [vmem:[%s5 + $0x1e8] sm:$0xff]
  %v624 = vld [vmem:[%s5 + $0x1f0] sm:$0xff]
  %v625 = vld [vmem:[%s5 + $0x1f8] sm:$0xff]
  %v626 = vld [vmem:[%s5 + $0x200] sm:$0xff]
  %v627 = vld [vmem:[%s5 + $0x208] sm:$0xff]
  %v628 = vld [vmem:[%s5 + $0x210] sm:$0xff]
  %v629 = vld [vmem:[%s5 + $0x218] sm:$0xff]
  %v630 = vld [vmem:[%s5 + $0x220] sm:$0xff]
  %v631 = vld [vmem:[%s5 + $0x228] sm:$0xff]
  %v632 = vld [vmem:[%s5 + $0x230] sm:$0xff]
  %v633 = vld [vmem:[%s5 + $0x238] sm:$0xff]
  %v634 = vld [vmem:[%s5 + $0x240] sm:$0xff]
  %v635 = vld [vmem:[%s5 + $0x248] sm:$0xff]
  %v636 = vld [vmem:[%s5 + $0x250] sm:$0xff]
  %v637 = vld [vmem:[%s5 + $0x258] sm:$0xff]
  %v638 = vld [vmem:[%s5 + $0x260] sm:$0xff]
  %v639 = vld [vmem:[%s5 + $0x268] sm:$0xff]
  %v640 = vld [vmem:[%s5 + $0x270] sm:$0xff]
  %v641 = vld [vmem:[%s5 + $0x278] sm:$0xff]
  %v642 = vld [vmem:[%s5 + $0x280] sm:$0xff]
  %v643 = vld [vmem:[%s5 + $0x288] sm:$0xff]
  %v644 = vld [vmem:[%s5 + $0x290] sm:$0xff]
  %v645 = vld [vmem:[%s5 + $0x298] sm:$0xff]
  %v646 = vld [vmem:[%s5 + $0x2a0] sm:$0xff]
  %v647 = vld [vmem:[%s5 + $0x2a8] sm:$0xff]
  %v648 = vld [vmem:[%s5 + $0x2b0] sm:$0xff]
  %v649 = vld [vmem:[%s5 + $0x2b8] sm:$0xff]
  %v650 = vld [vmem:[%s5 + $0x2c0] sm:$0xff]
  %v651 = vld [vmem:[%s5 + $0x2c8] sm:$0xff]
  %v652 = vld [vmem:[%s5 + $0x2d0] sm:$0xff]
  %v653 = vld [vmem:[%s5 + $0x2d8] sm:$0xff]
  %v654 = vld [vmem:[%s5 + $0x2e0] sm:$0xff]
  %v655 = vld [vmem:[%s5 + $0x2e8] sm:$0xff]
  %v656 = vld [vmem:[%s5 + $0x2f0] sm:$0xff]
  %v657 = vld [vmem:[%s5 + $0x2f8] sm:$0xff]
  %v658 = vld [vmem:[%s5 + $0x300] sm:$0xff]
  %v659 = vld [vmem:[%s5 + $0x308] sm:$0xff]
  %v660 = vld [vmem:[%s5 + $0x310] sm:$0xff]
  %v661 = vld [vmem:[%s5 + $0x318] sm:$0xff]
  %v662 = vld [vmem:[%s5 + $0x320] sm:$0xff]
  %v663 = vld [vmem:[%s5 + $0x328] sm:$0xff]
  %v664 = vld [vmem:[%s5 + $0x330] sm:$0xff]
  %v665 = vld [vmem:[%s5 + $0x338] sm:$0xff]
  %v666 = vld [vmem:[%s5 + $0x340] sm:$0xff]
  %v667 = vld [vmem:[%s5 + $0x348] sm:$0xff]
  %v668 = vld [vmem:[%s5 + $0x350] sm:$0xff]
  %v669 = vld [vmem:[%s5 + $0x358] sm:$0xff]
  %v670 = vld [vmem:[%s5 + $0x360] sm:$0xff]
  %v671 = vld [vmem:[%s5 + $0x368] sm:$0xff]
  %v672 = vld [vmem:[%s5 + $0x370] sm:$0xff]
  %v673 = vld [vmem:[%s5 + $0x378] sm:$0xff]
  %v674 = vld [vmem:[%s5 + $0x380] sm:$0xff]
  %v675 = vld [vmem:[%s5 + $0x388] sm:$0xff]
  %v676 = vld [vmem:[%s5 + $0x390] sm:$0xff]
  %v677 = vld [vmem:[%s5 + $0x398] sm:$0xff]
  %v678 = vld [vmem:[%s5 + $0x3a0] sm:$0xff]
  %v679 = vld [vmem:[%s5 + $0x3a8] sm:$0xff]
  %v680 = vld [vmem:[%s5 + $0x3b0] sm:$0xff]
  %v681 = vld [vmem:[%s5 + $0x3b8] sm:$0xff]
  %v682 = vld [vmem:[%s5 + $0x3c0] sm:$0xff]
  %v683 = vld [vmem:[%s5 + $0x3c8] sm:$0xff]
  %v684 = vld [vmem:[%s5 + $0x3d0] sm:$0xff]
  %v685 = vld [vmem:[%s5 + $0x3d8] sm:$0xff]
  %v686 = vld [vmem:[%s5 + $0x3e0] sm:$0xff]
  %v687 = vld [vmem:[%s5 + $0x3e8] sm:$0xff]
  %v688 = vld [vmem:[%s5 + $0x3f0] sm:$0xff]
  %v689 = vld [vmem:[%s5 + $0x3f8] sm:$0xff]
  %v690 = vld [vmem:[%s6] sm:$0xff]
  %v692 = vlaneseq
  %v693 = vshrl.u32 %v692, 7
  %v694 = vsub.s32 0, %v693
  %v695 = vrot.slane %v690, %v694
  %v696 = vlaneseq
  %v697 = vshrl.u32 %v696, 7
  %v698 = vsub.s32 1, %v697
  %v699 = vrot.slane %v690, %v698
  %v700 = vlaneseq
  %v701 = vshrl.u32 %v700, 7
  %v702 = vsub.s32 2, %v701
  %v703 = vrot.slane %v690, %v702
  %v704 = vlaneseq
  %v705 = vshrl.u32 %v704, 7
  %v706 = vsub.s32 3, %v705
  %v707 = vrot.slane %v690, %v706
  %v708 = vlaneseq
  %v709 = vshrl.u32 %v708, 7
  %v710 = vsub.s32 4, %v709
  %v711 = vrot.slane %v690, %v710
  %v712 = vlaneseq
  %v713 = vshrl.u32 %v712, 7
  %v714 = vsub.s32 5, %v713
  %v715 = vrot.slane %v690, %v714
  %v716 = vlaneseq
  %v717 = vshrl.u32 %v716, 7
  %v718 = vsub.s32 6, %v717
  %v719 = vrot.slane %v690, %v718
  %v720 = vlaneseq
  %v721 = vshrl.u32 %v720, 7
  %v722 = vsub.s32 7, %v721
  %v723 = vrot.slane %v690, %v722
  %732 = vmatprep.subr.mxu0 %v563
  %733 = vmatpush1.msra.mxu0 %v562
  %734 = vmatprep.subr.mxu0 %v571
  %735 = vmatpush1.msra.mxu0 %v570
  %736 = vmatprep.subr.mxu0 %v579
  %737 = vmatpush1.msra.mxu0 %v578
  %738 = vmatprep.subr.mxu0 %v587
  %739 = vmatpush1.msra.mxu0 %v586
  %740 = vmatprep.subr.mxu0 %v595
  %741 = vmatpush1.msra.mxu0 %v594
  %742 = vmatprep.subr.mxu0 %v603
  %743 = vmatpush1.msra.mxu0 %v602
  %744 = vmatprep.subr.mxu0 %v611
  %745 = vmatpush1.msra.mxu0 %v610
  %746 = vmatprep.subr.mxu0 %v619
  %747 = vmatpush1.msra.mxu0 %v618
  %748 = vmatprep.subr.mxu0 %v627
  %749 = vmatpush1.msra.mxu0 %v626
  %750 = vmatprep.subr.mxu0 %v635
  %751 = vmatpush1.msra.mxu0 %v634
  %752 = vmatprep.subr.mxu0 %v643
  %753 = vmatpush1.msra.mxu0 %v642
  %754 = vmatprep.subr.mxu0 %v651
  %755 = vmatpush1.msra.mxu0 %v650
  %756 = vmatprep.subr.mxu0 %v659
  %757 = vmatpush1.msra.mxu0 %v658
  %758 = vmatprep.subr.mxu0 %v667
  %759 = vmatpush1.msra.mxu0 %v666
  %760 = vmatprep.subr.mxu0 %v675
  %761 = vmatpush1.msra.mxu0 %v674
  %762 = vmatprep.subr.mxu0 %v683
  %763 = vmatpush1.msra.mxu0 %v682
  %764 = vmatprep.subr.mxu0 0.0
  %765 = vmatpush1.msra.mxu0 0.0
  %766 = vmatprep.subr.mxu0 0.0
  %767 = vmatpush1.msra.mxu0 0.0
  %768 = vmatprep.subr.mxu0 0.0
  %769 = vmatpush1.msra.mxu0 0.0
  %770 = vmatprep.subr.mxu0 0.0
  %771 = vmatpush1.msra.mxu0 0.0
  %772 = vmatprep.subr.mxu0 0.0
  %773 = vmatpush1.msra.mxu0 0.0
  %774 = vmatprep.subr.mxu0 0.0
  %775 = vmatpush1.msra.mxu0 0.0
  %776 = vmatprep.subr.mxu0 0.0
  %777 = vmatpush1.msra.mxu0 0.0
  %778 = vmatprep.subr.mxu0 0.0
  %779 = vmatpush1.msra.mxu0 0.0
  %780 = vmatprep.subr.mxu0 0.0
  %781 = vmatpush1.msra.mxu0 0.0
  %782 = vmatprep.subr.mxu0 0.0
  %783 = vmatpush1.msra.mxu0 0.0
  %784 = vmatprep.subr.mxu0 0.0
  %785 = vmatpush1.msra.mxu0 0.0
  %786 = vmatprep.subr.mxu0 0.0
  %787 = vmatpush1.msra.mxu0 0.0
  %788 = vmatprep.subr.mxu0 0.0
  %789 = vmatpush1.msra.mxu0 0.0
  %790 = vmatprep.subr.mxu0 0.0
  %791 = vmatpush1.msra.mxu0 0.0
  %792 = vmatprep.subr.mxu0 0.0
  %793 = vmatpush1.msra.mxu0 0.0
  %794 = vmatprep.subr.mxu0 0.0
  %795 = vmatpush1.msra.mxu0 0.0
  %796 = vmatprep.mubr.f32.mxu0 0.0
  %797 = vmatmul.mubr.f32.gmra.mrb[0].mxu0 %v554
  %v798 = vpop.f32.mrb[0].mxu0
  %v799 = vadd.f32 %v695, %v798
  %v800 = vpop.f32.mrb[0].mxu0
  %v801 = vadd.f32 %v699, %v800
  %802 = vmatprep.mubr.f32.mxu0 0.0
  %803 = vmatmul.mubr.f32.gmra.mrb[0].mxu0 %v555
  %v804 = vpop.f32.mrb[0].mxu0
  %v805 = vadd.f32 %v695, %v804
  %v806 = vpop.f32.mrb[0].mxu0
  %v807 = vadd.f32 %v699, %v806
  %808 = vmatprep.mubr.f32.mxu0 0.0
  %809 = vmatmul.mubr.f32.gmra.mrb[0].mxu0 %v556
  %v810 = vpop.f32.mrb[0].mxu0
  %v811 = vadd.f32 %v695, %v810
  %v812 = vpop.f32.mrb[0].mxu0
  %v813 = vadd.f32 %v699, %v812
  %814 = vmatprep.mubr.f32.mxu0 0.0
  %815 = vmatmul.mubr.f32.gmra.mrb[0].mxu0 %v557
  %v816 = vpop.f32.mrb[0].mxu0
  %v817 = vadd.f32 %v695, %v816
  %v818 = vpop.f32.mrb[0].mxu0
  %v819 = vadd.f32 %v699, %v818
  %820 = vmatprep.mubr.f32.mxu0 0.0
  %821 = vmatmul.mubr.f32.gmra.mrb[0].mxu0 %v558
  %v822 = vpop.f32.mrb[0].mxu0
  %v823 = vadd.f32 %v695, %v822
  %v824 = vpop.f32.mrb[0].mxu0
  %v825 = vadd.f32 %v699, %v824
  %826 = vmatprep.mubr.f32.mxu0 0.0
  %827 = vmatmul.mubr.f32.gmra.mrb[0].mxu0 %v559
  %v828 = vpop.f32.mrb[0].mxu0
  %v829 = vadd.f32 %v695, %v828
  %v830 = vpop.f32.mrb[0].mxu0
  %v831 = vadd.f32 %v699, %v830
  %832 = vmatprep.mubr.f32.mxu0 0.0
  %833 = vmatmul.mubr.f32.gmra.mrb[0].mxu0 %v560
  %v834 = vpop.f32.mrb[0].mxu0
  %v835 = vadd.f32 %v695, %v834
  %v836 = vpop.f32.mrb[0].mxu0
  %v837 = vadd.f32 %v699, %v836
  %838 = vmatprep.mubr.f32.mxu0 0.0
  %839 = vmatmul.mubr.f32.gmra.mrb[0].mxu0 %v561
  %v840 = vpop.f32.mrb[0].mxu0
  %v841 = vadd.f32 %v695, %v840
  %v842 = vpop.f32.mrb[0].mxu0
  %v843 = vadd.f32 %v699, %v842
  %844 = vdwg.mxu0
  %845 = vmatprep.subr.mxu0 %v565
  %846 = vmatpush1.msra.mxu0 %v564
  %847 = vmatprep.subr.mxu0 %v573
  %848 = vmatpush1.msra.mxu0 %v572
  %849 = vmatprep.subr.mxu0 %v581
  %850 = vmatpush1.msra.mxu0 %v580
  %851 = vmatprep.subr.mxu0 %v589
  %852 = vmatpush1.msra.mxu0 %v588
  %853 = vmatprep.subr.mxu0 %v597
  %854 = vmatpush1.msra.mxu0 %v596
  %855 = vmatprep.subr.mxu0 %v605
  %856 = vmatpush1.msra.mxu0 %v604
  %857 = vmatprep.subr.mxu0 %v613
  %858 = vmatpush1.msra.mxu0 %v612
  %859 = vmatprep.subr.mxu0 %v621
  %860 = vmatpush1.msra.mxu0 %v620
  %861 = vmatprep.subr.mxu0 %v629
  %862 = vmatpush1.msra.mxu0 %v628
  %863 = vmatprep.subr.mxu0 %v637
  %864 = vmatpush1.msra.mxu0 %v636
  %865 = vmatprep.subr.mxu0 %v645
  %866 = vmatpush1.msra.mxu0 %v644
  %867 = vmatprep.subr.mxu0 %v653
  %868 = vmatpush1.msra.mxu0 %v652
  %869 = vmatprep.subr.mxu0 %v661
  %870 = vmatpush1.msra.mxu0 %v660
  %871 = vmatprep.subr.mxu0 %v669
  %872 = vmatpush1.msra.mxu0 %v668
  %873 = vmatprep.subr.mxu0 %v677
  %874 = vmatpush1.msra.mxu0 %v676
  %875 = vmatprep.subr.mxu0 %v685
  %876 = vmatpush1.msra.mxu0 %v684
  %877 = vmatprep.subr.mxu0 0.0
  %878 = vmatpush1.msra.mxu0 0.0
  %879 = vmatprep.subr.mxu0 0.0
  %880 = vmatpush1.msra.mxu0 0.0
  %881 = vmatprep.subr.mxu0 0.0
  %882 = vmatpush1.msra.mxu0 0.0
  %883 = vmatprep.subr.mxu0 0.0
  %884 = vmatpush1.msra.mxu0 0.0
  %885 = vmatprep.subr.mxu0 0.0
  %886 = vmatpush1.msra.mxu0 0.0
  %887 = vmatprep.subr.mxu0 0.0
  %888 = vmatpush1.msra.mxu0 0.0
  %889 = vmatprep.subr.mxu0 0.0
  %890 = vmatpush1.msra.mxu0 0.0
  %891 = vmatprep.subr.mxu0 0.0
  %892 = vmatpush1.msra.mxu0 0.0
  %893 = vmatprep.subr.mxu0 0.0
  %894 = vmatpush1.msra.mxu0 0.0
  %895 = vmatprep.subr.mxu0 0.0
  %896 = vmatpush1.msra.mxu0 0.0
  %897 = vmatprep.subr.mxu0 0.0
  %898 = vmatpush1.msra.mxu0 0.0
  %899 = vmatprep.subr.mxu0 0.0
  %900 = vmatpush1.msra.mxu0 0.0
  %901 = vmatprep.subr.mxu0 0.0
  %902 = vmatpush1.msra.mxu0 0.0
  %903 = vmatprep.subr.mxu0 0.0
  %904 = vmatpush1.msra.mxu0 0.0
  %905 = vmatprep.subr.mxu0 0.0
  %906 = vmatpush1.msra.mxu0 0.0
  %907 = vmatprep.subr.mxu0 0.0
  %908 = vmatpush1.msra.mxu0 0.0
  %909 = vmatprep.mubr.f32.mxu0 0.0
  %910 = vmatmul.mubr.f32.gmra.mrb[0].mxu0 %v554
  %v911 = vpop.f32.mrb[0].mxu0
  %v912 = vadd.f32 %v703, %v911
  %v913 = vpop.f32.mrb[0].mxu0
  %v914 = vadd.f32 %v707, %v913
  %915 = vmatprep.mubr.f32.mxu0 0.0
  %916 = vmatmul.mubr.f32.gmra.mrb[0].mxu0 %v555
  %v917 = vpop.f32.mrb[0].mxu0
  %v918 = vadd.f32 %v703, %v917
  %v919 = vpop.f32.mrb[0].mxu0
  %v920 = vadd.f32 %v707, %v919
  %921 = vmatprep.mubr.f32.mxu0 0.0
  %922 = vmatmul.mubr.f32.gmra.mrb[0].mxu0 %v556
  %v923 = vpop.f32.mrb[0].mxu0
  %v924 = vadd.f32 %v703, %v923
  %v925 = vpop.f32.mrb[0].mxu0
  %v926 = vadd.f32 %v707, %v925
  %927 = vmatprep.mubr.f32.mxu0 0.0
  %928 = vmatmul.mubr.f32.gmra.mrb[0].mxu0 %v557
  %v929 = vpop.f32.mrb[0].mxu0
  %v930 = vadd.f32 %v703, %v929
  %v931 = vpop.f32.mrb[0].mxu0
  %v932 = vadd.f32 %v707, %v931
  %933 = vmatprep.mubr.f32.mxu0 0.0
  %934 = vmatmul.mubr.f32.gmra.mrb[0].mxu0 %v558
  %v935 = vpop.f32.mrb[0].mxu0
  %v936 = vadd.f32 %v703, %v935
  %v937 = vpop.f32.mrb[0].mxu0
  %v938 = vadd.f32 %v707, %v937
  %939 = vmatprep.mubr.f32.mxu0 0.0
  %940 = vmatmul.mubr.f32.gmra.mrb[0].mxu0 %v559
  %v941 = vpop.f32.mrb[0].mxu0
  %v942 = vadd.f32 %v703, %v941
  %v943 = vpop.f32.mrb[0].mxu0
  %v944 = vadd.f32 %v707, %v943
  %945 = vmatprep.mubr.f32.mxu0 0.0
  %946 = vmatmul.mubr.f32.gmra.mrb[0].mxu0 %v560
  %v947 = vpop.f32.mrb[0].mxu0
  %v948 = vadd.f32 %v703, %v947
  %v949 = vpop.f32.mrb[0].mxu0
  %v950 = vadd.f32 %v707, %v949
  %951 = vmatprep.mubr.f32.mxu0 0.0
  %952 = vmatmul.mubr.f32.gmra.mrb[0].mxu0 %v561
  %v953 = vpop.f32.mrb[0].mxu0
  %v954 = vadd.f32 %v703, %v953
  %v955 = vpop.f32.mrb[0].mxu0
  %v956 = vadd.f32 %v707, %v955
  %957 = vdwg.mxu0
  %958 = vmatprep.subr.mxu0 %v567
  %959 = vmatpush1.msra.mxu0 %v566
  %960 = vmatprep.subr.mxu0 %v575
  %961 = vmatpush1.msra.mxu0 %v574
  %962 = vmatprep.subr.mxu0 %v583
  %963 = vmatpush1.msra.mxu0 %v582
  %964 = vmatprep.subr.mxu0 %v591
  %965 = vmatpush1.msra.mxu0 %v590
  %966 = vmatprep.subr.mxu0 %v599
  %967 = vmatpush1.msra.mxu0 %v598
  %968 = vmatprep.subr.mxu0 %v607
  %969 = vmatpush1.msra.mxu0 %v606
  %970 = vmatprep.subr.mxu0 %v615
  %971 = vmatpush1.msra.mxu0 %v614
  %972 = vmatprep.subr.mxu0 %v623
  %973 = vmatpush1.msra.mxu0 %v622
  %974 = vmatprep.subr.mxu0 %v631
  %975 = vmatpush1.msra.mxu0 %v630
  %976 = vmatprep.subr.mxu0 %v639
  %977 = vmatpush1.msra.mxu0 %v638
  %978 = vmatprep.subr.mxu0 %v647
  %979 = vmatpush1.msra.mxu0 %v646
  %980 = vmatprep.subr.mxu0 %v655
  %981 = vmatpush1.msra.mxu0 %v654
  %982 = vmatprep.subr.mxu0 %v663
  %983 = vmatpush1.msra.mxu0 %v662
  %984 = vmatprep.subr.mxu0 %v671
  %985 = vmatpush1.msra.mxu0 %v670
  %986 = vmatprep.subr.mxu0 %v679
  %987 = vmatpush1.msra.mxu0 %v678
  %988 = vmatprep.subr.mxu0 %v687
  %989 = vmatpush1.msra.mxu0 %v686
  %990 = vmatprep.subr.mxu0 0.0
  %991 = vmatpush1.msra.mxu0 0.0
  %992 = vmatprep.subr.mxu0 0.0
  %993 = vmatpush1.msra.mxu0 0.0
  %994 = vmatprep.subr.mxu0 0.0
  %995 = vmatpush1.msra.mxu0 0.0
  %996 = vmatprep.subr.mxu0 0.0
  %997 = vmatpush1.msra.mxu0 0.0
  %998 = vmatprep.subr.mxu0 0.0
  %999 = vmatpush1.msra.mxu0 0.0
  %1000 = vmatprep.subr.mxu0 0.0
  %1001 = vmatpush1.msra.mxu0 0.0
  %1002 = vmatprep.subr.mxu0 0.0
  %1003 = vmatpush1.msra.mxu0 0.0
  %1004 = vmatprep.subr.mxu0 0.0
  %1005 = vmatpush1.msra.mxu0 0.0
  %1006 = vmatprep.subr.mxu0 0.0
  %1007 = vmatpush1.msra.mxu0 0.0
  %1008 = vmatprep.subr.mxu0 0.0
  %1009 = vmatpush1.msra.mxu0 0.0
  %1010 = vmatprep.subr.mxu0 0.0
  %1011 = vmatpush1.msra.mxu0 0.0
  %1012 = vmatprep.subr.mxu0 0.0
  %1013 = vmatpush1.msra.mxu0 0.0
  %1014 = vmatprep.subr.mxu0 0.0
  %1015 = vmatpush1.msra.mxu0 0.0
  %1016 = vmatprep.subr.mxu0 0.0
  %1017 = vmatpush1.msra.mxu0 0.0
  %1018 = vmatprep.subr.mxu0 0.0
  %1019 = vmatpush1.msra.mxu0 0.0
  %1020 = vmatprep.subr.mxu0 0.0
  %1021 = vmatpush1.msra.mxu0 0.0
  %1022 = vmatprep.mubr.f32.mxu0 0.0
  %1023 = vmatmul.mubr.f32.gmra.mrb[0].mxu0 %v554
  %v1024 = vpop.f32.mrb[0].mxu0
  %v1025 = vadd.f32 %v711, %v1024
  %v1026 = vpop.f32.mrb[0].mxu0
  %v1027 = vadd.f32 %v715, %v1026
  %1028 = vmatprep.mubr.f32.mxu0 0.0
  %1029 = vmatmul.mubr.f32.gmra.mrb[0].mxu0 %v555
  %v1030 = vpop.f32.mrb[0].mxu0
  %v1031 = vadd.f32 %v711, %v1030
  %v1032 = vpop.f32.mrb[0].mxu0
  %v1033 = vadd.f32 %v715, %v1032
  %1034 = vmatprep.mubr.f32.mxu0 0.0
  %1035 = vmatmul.mubr.f32.gmra.mrb[0].mxu0 %v556
  %v1036 = vpop.f32.mrb[0].mxu0
  %v1037 = vadd.f32 %v711, %v1036
  %v1038 = vpop.f32.mrb[0].mxu0
  %v1039 = vadd.f32 %v715, %v1038
  %1040 = vmatprep.mubr.f32.mxu0 0.0
  %1041 = vmatmul.mubr.f32.gmra.mrb[0].mxu0 %v557
  %v1042 = vpop.f32.mrb[0].mxu0
  %v1043 = vadd.f32 %v711, %v1042
  %v1044 = vpop.f32.mrb[0].mxu0
  %v1045 = vadd.f32 %v715, %v1044
  %1046 = vmatprep.mubr.f32.mxu0 0.0
  %1047 = vmatmul.mubr.f32.gmra.mrb[0].mxu0 %v558
  %v1048 = vpop.f32.mrb[0].mxu0
  %v1049 = vadd.f32 %v711, %v1048
  %v1050 = vpop.f32.mrb[0].mxu0
  %v1051 = vadd.f32 %v715, %v1050
  %1052 = vmatprep.mubr.f32.mxu0 0.0
  %1053 = vmatmul.mubr.f32.gmra.mrb[0].mxu0 %v559
  %v1054 = vpop.f32.mrb[0].mxu0
  %v1055 = vadd.f32 %v711, %v1054
  %v1056 = vpop.f32.mrb[0].mxu0
  %v1057 = vadd.f32 %v715, %v1056
  %1058 = vmatprep.mubr.f32.mxu0 0.0
  %1059 = vmatmul.mubr.f32.gmra.mrb[0].mxu0 %v560
  %v1060 = vpop.f32.mrb[0].mxu0
  %v1061 = vadd.f32 %v711, %v1060
  %v1062 = vpop.f32.mrb[0].mxu0
  %v1063 = vadd.f32 %v715, %v1062
  %1064 = vmatprep.mubr.f32.mxu0 0.0
  %1065 = vmatmul.mubr.f32.gmra.mrb[0].mxu0 %v561
  %v1066 = vpop.f32.mrb[0].mxu0
  %v1067 = vadd.f32 %v711, %v1066
  %v1068 = vpop.f32.mrb[0].mxu0
  %v1069 = vadd.f32 %v715, %v1068
  %1070 = vdwg.mxu0
  %1071 = vmatprep.subr.mxu0 %v569
  %1072 = vmatpush1.msra.mxu0 %v568
  %1073 = vmatprep.subr.mxu0 %v577
  %1074 = vmatpush1.msra.mxu0 %v576
  %1075 = vmatprep.subr.mxu0 %v585
  %1076 = vmatpush1.msra.mxu0 %v584
  %1077 = vmatprep.subr.mxu0 %v593
  %1078 = vmatpush1.msra.mxu0 %v592
  %1079 = vmatprep.subr.mxu0 %v601
  %1080 = vmatpush1.msra.mxu0 %v600
  %1081 = vmatprep.subr.mxu0 %v609
  %1082 = vmatpush1.msra.mxu0 %v608
  %1083 = vmatprep.subr.mxu0 %v617
  %1084 = vmatpush1.msra.mxu0 %v616
  %1085 = vmatprep.subr.mxu0 %v625
  %1086 = vmatpush1.msra.mxu0 %v624
  %1087 = vmatprep.subr.mxu0 %v633
  %1088 = vmatpush1.msra.mxu0 %v632
  %1089 = vmatprep.subr.mxu0 %v641
  %1090 = vmatpush1.msra.mxu0 %v640
  %1091 = vmatprep.subr.mxu0 %v649
  %1092 = vmatpush1.msra.mxu0 %v648
  %1093 = vmatprep.subr.mxu0 %v657
  %1094 = vmatpush1.msra.mxu0 %v656
  %1095 = vmatprep.subr.mxu0 %v665
  %1096 = vmatpush1.msra.mxu0 %v664
  %1097 = vmatprep.subr.mxu0 %v673
  %1098 = vmatpush1.msra.mxu0 %v672
  %1099 = vmatprep.subr.mxu0 %v681
  %1100 = vmatpush1.msra.mxu0 %v680
  %1101 = vmatprep.subr.mxu0 %v689
  %1102 = vmatpush1.msra.mxu0 %v688
  %1103 = vmatprep.subr.mxu0 0.0
  %1104 = vmatpush1.msra.mxu0 0.0
  %1105 = vmatprep.subr.mxu0 0.0
  %1106 = vmatpush1.msra.mxu0 0.0
  %1107 = vmatprep.subr.mxu0 0.0
  %1108 = vmatpush1.msra.mxu0 0.0
  %1109 = vmatprep.subr.mxu0 0.0
  %1110 = vmatpush1.msra.mxu0 0.0
  %1111 = vmatprep.subr.mxu0 0.0
  %1112 = vmatpush1.msra.mxu0 0.0
  %1113 = vmatprep.subr.mxu0 0.0
  %1114 = vmatpush1.msra.mxu0 0.0
  %1115 = vmatprep.subr.mxu0 0.0
  %1116 = vmatpush1.msra.mxu0 0.0
  %1117 = vmatprep.subr.mxu0 0.0
  %1118 = vmatpush1.msra.mxu0 0.0
  %1119 = vmatprep.subr.mxu0 0.0
  %1120 = vmatpush1.msra.mxu0 0.0
  %1121 = vmatprep.subr.mxu0 0.0
  %1122 = vmatpush1.msra.mxu0 0.0
  %1123 = vmatprep.subr.mxu0 0.0
  %1124 = vmatpush1.msra.mxu0 0.0
  %1125 = vmatprep.subr.mxu0 0.0
  %1126 = vmatpush1.msra.mxu0 0.0
  %1127 = vmatprep.subr.mxu0 0.0
  %1128 = vmatpush1.msra.mxu0 0.0
  %1129 = vmatprep.subr.mxu0 0.0
  %1130 = vmatpush1.msra.mxu0 0.0
  %1131 = vmatprep.subr.mxu0 0.0
  %1132 = vmatpush1.msra.mxu0 0.0
  %1133 = vmatprep.subr.mxu0 0.0
  %1134 = vmatpush1.msra.mxu0 0.0
  %1135 = vmatprep.mubr.f32.mxu0 0.0
  %1136 = vmatmul.mubr.f32.gmra.mrb[0].mxu0 %v554
  %v1137 = vpop.f32.mrb[0].mxu0
  %v1138 = vadd.f32 %v719, %v1137
  %v1139 = vpop.f32.mrb[0].mxu0
  %v1140 = vadd.f32 %v723, %v1139
  %1141 = vmatprep.mubr.f32.mxu0 0.0
  %1142 = vmatmul.mubr.f32.gmra.mrb[0].mxu0 %v555
  %v1143 = vpop.f32.mrb[0].mxu0
  %v1144 = vadd.f32 %v719, %v1143
  %v1145 = vpop.f32.mrb[0].mxu0
  %v1146 = vadd.f32 %v723, %v1145
  %1147 = vmatprep.mubr.f32.mxu0 0.0
  %1148 = vmatmul.mubr.f32.gmra.mrb[0].mxu0 %v556
  %v1149 = vpop.f32.mrb[0].mxu0
  %v1150 = vadd.f32 %v719, %v1149
  %v1151 = vpop.f32.mrb[0].mxu0
  %v1152 = vadd.f32 %v723, %v1151
  %1153 = vmatprep.mubr.f32.mxu0 0.0
  %1154 = vmatmul.mubr.f32.gmra.mrb[0].mxu0 %v557
  %v1155 = vpop.f32.mrb[0].mxu0
  %v1156 = vadd.f32 %v719, %v1155
  %v1157 = vpop.f32.mrb[0].mxu0
  %v1158 = vadd.f32 %v723, %v1157
  %1159 = vmatprep.mubr.f32.mxu0 0.0
  %1160 = vmatmul.mubr.f32.gmra.mrb[0].mxu0 %v558
  %v1161 = vpop.f32.mrb[0].mxu0
  %v1162 = vadd.f32 %v719, %v1161
  %v1163 = vpop.f32.mrb[0].mxu0
  %v1164 = vadd.f32 %v723, %v1163
  %1165 = vmatprep.mubr.f32.mxu0 0.0
  %1166 = vmatmul.mubr.f32.gmra.mrb[0].mxu0 %v559
  %v1167 = vpop.f32.mrb[0].mxu0
  %v1168 = vadd.f32 %v719, %v1167
  %v1169 = vpop.f32.mrb[0].mxu0
  %v1170 = vadd.f32 %v723, %v1169
  %1171 = vmatprep.mubr.f32.mxu0 0.0
  %1172 = vmatmul.mubr.f32.gmra.mrb[0].mxu0 %v560
  %v1173 = vpop.f32.mrb[0].mxu0
  %v1174 = vadd.f32 %v719, %v1173
  %v1175 = vpop.f32.mrb[0].mxu0
  %v1176 = vadd.f32 %v723, %v1175
  %1177 = vmatprep.mubr.f32.mxu0 0.0
  %1178 = vmatmul.mubr.f32.gmra.mrb[0].mxu0 %v561
  %v1179 = vpop.f32.mrb[0].mxu0
  %v1180 = vadd.f32 %v719, %v1179
  %v1181 = vpop.f32.mrb[0].mxu0
  %v1182 = vadd.f32 %v723, %v1181
  %1183 = vdwg.mxu0
  %1184 = vst [vmem:[#allocation2] sm:$0xff] %v799
  %1185 = vst [vmem:[#allocation2 + $0x8] sm:$0xff] %v801
  %1186 = vst [vmem:[#allocation2 + $0x10] sm:$0xff] %v912
  %1187 = vst [vmem:[#allocation2 + $0x18] sm:$0xff] %v914
  %1188 = vst [vmem:[#allocation2 + $0x20] sm:$0xff] %v1025
  %1189 = vst [vmem:[#allocation2 + $0x28] sm:$0xff] %v1027
  %1190 = vst [vmem:[#allocation2 + $0x30] sm:$0xff] %v1138
  %1191 = vst [vmem:[#allocation2 + $0x38] sm:$0xff] %v1140
  %1192 = vst [vmem:[#allocation2 + $0x40] sm:$0xff] %v805
  %1193 = vst [vmem:[#allocation2 + $0x48] sm:$0xff] %v807
  %1194 = vst [vmem:[#allocation2 + $0x50] sm:$0xff] %v918
  %1195 = vst [vmem:[#allocation2 + $0x58] sm:$0xff] %v920
  %1196 = vst [vmem:[#allocation2 + $0x60] sm:$0xff] %v1031
  %1197 = vst [vmem:[#allocation2 + $0x68] sm:$0xff] %v1033
  %1198 = vst [vmem:[#allocation2 + $0x70] sm:$0xff] %v1144
  %1199 = vst [vmem:[#allocation2 + $0x78] sm:$0xff] %v1146
  %1200 = vst [vmem:[#allocation2 + $0x80] sm:$0xff] %v811
  %1201 = vst [vmem:[#allocation2 + $0x88] sm:$0xff] %v813
  %1202 = vst [vmem:[#allocation2 + $0x90] sm:$0xff] %v924
  %1203 = vst [vmem:[#allocation2 + $0x98] sm:$0xff] %v926
  %1204 = vst [vmem:[#allocation2 + $0xa0] sm:$0xff] %v1037
  %1205 = vst [vmem:[#allocation2 + $0xa8] sm:$0xff] %v1039
  %1206 = vst [vmem:[#allocation2 + $0xb0] sm:$0xff] %v1150
  %1207 = vst [vmem:[#allocation2 + $0xb8] sm:$0xff] %v1152
  %1208 = vst [vmem:[#allocation2 + $0xc0] sm:$0xff] %v817
  %1209 = vst [vmem:[#allocation2 + $0xc8] sm:$0xff] %v819
  %1210 = vst [vmem:[#allocation2 + $0xd0] sm:$0xff] %v930
  %1211 = vst [vmem:[#allocation2 + $0xd8] sm:$0xff] %v932
  %1212 = vst [vmem:[#allocation2 + $0xe0] sm:$0xff] %v1043
  %1213 = vst [vmem:[#allocation2 + $0xe8] sm:$0xff] %v1045
  %1214 = vst [vmem:[#allocation2 + $0xf0] sm:$0xff] %v1156
  %1215 = vst [vmem:[#allocation2 + $0xf8] sm:$0xff] %v1158
  %1216 = vst [vmem:[#allocation2 + $0x100] sm:$0xff] %v823
  %1217 = vst [vmem:[#allocation2 + $0x108] sm:$0xff] %v825
  %1218 = vst [vmem:[#allocation2 + $0x110] sm:$0xff] %v936
  %1219 = vst [vmem:[#allocation2 + $0x118] sm:$0xff] %v938
  %1220 = vst [vmem:[#allocation2 + $0x120] sm:$0xff] %v1049
  %1221 = vst [vmem:[#allocation2 + $0x128] sm:$0xff] %v1051
  %1222 = vst [vmem:[#allocation2 + $0x130] sm:$0xff] %v1162
  %1223 = vst [vmem:[#allocation2 + $0x138] sm:$0xff] %v1164
  %1224 = vst [vmem:[#allocation2 + $0x140] sm:$0xff] %v829
  %1225 = vst [vmem:[#allocation2 + $0x148] sm:$0xff] %v831
  %1226 = vst [vmem:[#allocation2 + $0x150] sm:$0xff] %v942
  %1227 = vst [vmem:[#allocation2 + $0x158] sm:$0xff] %v944
  %1228 = vst [vmem:[#allocation2 + $0x160] sm:$0xff] %v1055
  %1229 = vst [vmem:[#allocation2 + $0x168] sm:$0xff] %v1057
  %1230 = vst [vmem:[#allocation2 + $0x170] sm:$0xff] %v1168
  %1231 = vst [vmem:[#allocation2 + $0x178] sm:$0xff] %v1170
  %1232 = vst [vmem:[#allocation2 + $0x180] sm:$0xff] %v835
  %1233 = vst [vmem:[#allocation2 + $0x188] sm:$0xff] %v837
  %1234 = vst [vmem:[#allocation2 + $0x190] sm:$0xff] %v948
  %1235 = vst [vmem:[#allocation2 + $0x198] sm:$0xff] %v950
  %1236 = vst [vmem:[#allocation2 + $0x1a0] sm:$0xff] %v1061
  %1237 = vst [vmem:[#allocation2 + $0x1a8] sm:$0xff] %v1063
  %1238 = vst [vmem:[#allocation2 + $0x1b0] sm:$0xff] %v1174
  %1239 = vst [vmem:[#allocation2 + $0x1b8] sm:$0xff] %v1176
  %1240 = vst [vmem:[#allocation2 + $0x1c0] sm:$0xff] %v841
  %1241 = vst [vmem:[#allocation2 + $0x1c8] sm:$0xff] %v843
  %1242 = vst [vmem:[#allocation2 + $0x1d0] sm:$0xff] %v954
  %1243 = vst [vmem:[#allocation2 + $0x1d8] sm:$0xff] %v956
  %1244 = vst [vmem:[#allocation2 + $0x1e0] sm:$0xff] %v1067
  %1245 = vst [vmem:[#allocation2 + $0x1e8] sm:$0xff] %v1069
  %1246 = vst [vmem:[#allocation2 + $0x1f0] sm:$0xff] %v1180
  %1247 = vst [vmem:[#allocation2 + $0x1f8] sm:$0xff] %v1182
  %v1248 = vld [vmem:[#allocation2] sm:$0xff]
  %v1249 = vld [vmem:[#allocation2 + $0x8] sm:$0xff]
  %v1250 = vld [vmem:[#allocation2 + $0x10] sm:$0xff]
  %v1251 = vld [vmem:[#allocation2 + $0x18] sm:$0xff]
  %v1252 = vld [vmem:[#allocation2 + $0x1e0] sm:$0xff]
  %v1253 = vld [vmem:[#allocation2 + $0x1e8] sm:$0xff]
  %v1254 = vld [vmem:[#allocation2 + $0x1f0] sm:$0xff]
  %v1255 = vld [vmem:[#allocation2 + $0x1f8] sm:$0xff]
  %v1256 = vld [vmem:[%s7] sm:$0xff]
  %v1257 = vld [vmem:[%s7 + $0x8] sm:$0xff]
  %v1258 = vld [vmem:[%s7 + $0x10] sm:$0xff]
  %v1259 = vld [vmem:[%s7 + $0x18] sm:$0xff]
  %v1260 = vld [vmem:[%s7 + $0x20] sm:$0xff]
  %v1261 = vld [vmem:[%s7 + $0x28] sm:$0xff]
  %v1262 = vld [vmem:[%s7 + $0x30] sm:$0xff]
  %v1263 = vld [vmem:[%s7 + $0x38] sm:$0xff]
  %v1264 = vld [vmem:[%s7 + $0x40] sm:$0xff]
  %v1265 = vld [vmem:[%s7 + $0x48] sm:$0xff]
  %v1266 = vld [vmem:[%s7 + $0x50] sm:$0xff]
  %v1267 = vld [vmem:[%s7 + $0x58] sm:$0xff]
  %v1268 = vld [vmem:[%s7 + $0x60] sm:$0xff]
  %v1269 = vld [vmem:[%s7 + $0x68] sm:$0xff]
  %v1270 = vld [vmem:[%s7 + $0x70] sm:$0xff]
  %v1271 = vld [vmem:[%s7 + $0x78] sm:$0xff]
  %v1272 = vld [vmem:[%s7 + $0x80] sm:$0xff]
  %v1273 = vld [vmem:[%s7 + $0x88] sm:$0xff]
  %v1274 = vld [vmem:[%s7 + $0x90] sm:$0xff]
  %v1275 = vld [vmem:[%s7 + $0x98] sm:$0xff]
  %v1276 = vld [vmem:[%s7 + $0xa0] sm:$0xff]
  %v1277 = vld [vmem:[%s7 + $0xa8] sm:$0xff]
  %v1278 = vld [vmem:[%s7 + $0xb0] sm:$0xff]
  %v1279 = vld [vmem:[%s7 + $0xb8] sm:$0xff]
  %v1280 = vld [vmem:[%s7 + $0xc0] sm:$0xff]
  %v1281 = vld [vmem:[%s7 + $0xc8] sm:$0xff]
  %v1282 = vld [vmem:[%s7 + $0xd0] sm:$0xff]
  %v1283 = vld [vmem:[%s7 + $0xd8] sm:$0xff]
  %v1284 = vld [vmem:[%s7 + $0xe0] sm:$0xff]
  %v1285 = vld [vmem:[%s7 + $0xe8] sm:$0xff]
  %v1286 = vld [vmem:[%s7 + $0xf0] sm:$0xff]
  %v1287 = vld [vmem:[%s7 + $0xf8] sm:$0xff]
  %v1288 = vld [vmem:[%s7 + $0x100] sm:$0xff]
  %v1289 = vld [vmem:[%s7 + $0x108] sm:$0xff]
  %v1290 = vld [vmem:[%s7 + $0x110] sm:$0xff]
  %v1291 = vld [vmem:[%s7 + $0x118] sm:$0xff]
  %v1292 = vld [vmem:[%s7 + $0x120] sm:$0xff]
  %v1293 = vld [vmem:[%s7 + $0x128] sm:$0xff]
  %v1294 = vld [vmem:[%s7 + $0x130] sm:$0xff]
  %v1295 = vld [vmem:[%s7 + $0x138] sm:$0xff]
  %v1296 = vld [vmem:[%s7 + $0x140] sm:$0xff]
  %v1297 = vld [vmem:[%s7 + $0x148] sm:$0xff]
  %v1298 = vld [vmem:[%s7 + $0x150] sm:$0xff]
  %v1299 = vld [vmem:[%s7 + $0x158] sm:$0xff]
  %v1300 = vld [vmem:[%s7 + $0x160] sm:$0xff]
  %v1301 = vld [vmem:[%s7 + $0x168] sm:$0xff]
  %v1302 = vld [vmem:[%s7 + $0x170] sm:$0xff]
  %v1303 = vld [vmem:[%s7 + $0x178] sm:$0xff]
  %v1304 = vld [vmem:[%s7 + $0x180] sm:$0xff]
  %v1305 = vld [vmem:[%s7 + $0x188] sm:$0xff]
  %v1306 = vld [vmem:[%s7 + $0x190] sm:$0xff]
  %v1307 = vld [vmem:[%s7 + $0x198] sm:$0xff]
  %v1308 = vld [vmem:[%s7 + $0x1a0] sm:$0xff]
  %v1309 = vld [vmem:[%s7 + $0x1a8] sm:$0xff]
  %v1310 = vld [vmem:[%s7 + $0x1b0] sm:$0xff]
  %v1311 = vld [vmem:[%s7 + $0x1b8] sm:$0xff]
  %v1312 = vld [vmem:[%s7 + $0x1c0] sm:$0xff]
  %v1313 = vld [vmem:[%s7 + $0x1c8] sm:$0xff]
  %v1314 = vld [vmem:[%s7 + $0x1d0] sm:$0xff]
  %v1315 = vld [vmem:[%s7 + $0x1d8] sm:$0xff]
  %v1316 = vld [vmem:[%s7 + $0x1e0] sm:$0xff]
  %v1317 = vld [vmem:[%s7 + $0x1e8] sm:$0xff]
  %v1318 = vld [vmem:[%s7 + $0x1f0] sm:$0xff]
  %v1319 = vld [vmem:[%s7 + $0x1f8] sm:$0xff]
  %1320 = vmatprep.subr.mxu0 %v1257
  %1321 = vmatpush1.msra.mxu0 %v1256
  %1322 = vmatprep.subr.mxu0 %v1261
  %1323 = vmatpush1.msra.mxu0 %v1260
  %1324 = vmatprep.subr.mxu0 %v1265
  %1325 = vmatpush1.msra.mxu0 %v1264
  %1326 = vmatprep.subr.mxu0 %v1269
  %1327 = vmatpush1.msra.mxu0 %v1268
  %1328 = vmatprep.subr.mxu0 %v1273
  %1329 = vmatpush1.msra.mxu0 %v1272
  %1330 = vmatprep.subr.mxu0 %v1277
  %1331 = vmatpush1.msra.mxu0 %v1276
  %1332 = vmatprep.subr.mxu0 %v1281
  %1333 = vmatpush1.msra.mxu0 %v1280
  %1334 = vmatprep.subr.mxu0 %v1285
  %1335 = vmatpush1.msra.mxu0 %v1284
  %1336 = vmatprep.subr.mxu0 %v1289
  %1337 = vmatpush1.msra.mxu0 %v1288
  %1338 = vmatprep.subr.mxu0 %v1293
  %1339 = vmatpush1.msra.mxu0 %v1292
  %1340 = vmatprep.subr.mxu0 %v1297
  %1341 = vmatpush1.msra.mxu0 %v1296
  %1342 = vmatprep.subr.mxu0 %v1301
  %1343 = vmatpush1.msra.mxu0 %v1300
  %1344 = vmatprep.subr.mxu0 %v1305
  %1345 = vmatpush1.msra.mxu0 %v1304
  %1346 = vmatprep.subr.mxu0 %v1309
  %1347 = vmatpush1.msra.mxu0 %v1308
  %1348 = vmatprep.subr.mxu0 %v1313
  %1349 = vmatpush1.msra.mxu0 %v1312
  %1350 = vmatprep.subr.mxu0 %v1317
  %1351 = vmatpush1.msra.mxu0 %v1316
  %1352 = vmatprep.subr.mxu0 0.0
  %1353 = vmatpush1.msra.mxu0 0.0
  %1354 = vmatprep.subr.mxu0 0.0
  %1355 = vmatpush1.msra.mxu0 0.0
  %1356 = vmatprep.subr.mxu0 0.0
  %1357 = vmatpush1.msra.mxu0 0.0
  %1358 = vmatprep.subr.mxu0 0.0
  %1359 = vmatpush1.msra.mxu0 0.0
  %1360 = vmatprep.subr.mxu0 0.0
  %1361 = vmatpush1.msra.mxu0 0.0
  %1362 = vmatprep.subr.mxu0 0.0
  %1363 = vmatpush1.msra.mxu0 0.0
  %1364 = vmatprep.subr.mxu0 0.0
  %1365 = vmatpush1.msra.mxu0 0.0
  %1366 = vmatprep.subr.mxu0 0.0
  %1367 = vmatpush1.msra.mxu0 0.0
  %1368 = vmatprep.subr.mxu0 0.0
  %1369 = vmatpush1.msra.mxu0 0.0
  %1370 = vmatprep.subr.mxu0 0.0
  %1371 = vmatpush1.msra.mxu0 0.0
  %1372 = vmatprep.subr.mxu0 0.0
  %1373 = vmatpush1.msra.mxu0 0.0
  %1374 = vmatprep.subr.mxu0 0.0
  %1375 = vmatpush1.msra.mxu0 0.0
  %1376 = vmatprep.subr.mxu0 0.0
  %1377 = vmatpush1.msra.mxu0 0.0
  %1378 = vmatprep.subr.mxu0 0.0
  %1379 = vmatpush1.msra.mxu0 0.0
  %1380 = vmatprep.subr.mxu0 0.0
  %1381 = vmatpush1.msra.mxu0 0.0
  %1382 = vmatprep.subr.mxu0 0.0
  %1383 = vmatpush1.msra.mxu0 0.0
  %1384 = vmatprep.mubr.f32.mxu0 0.0
  %1385 = vmatmul.mubr.f32.gmra.mrb[0].mxu0 0.0
  %v1386 = vpop.f32.mrb[0].mxu0
  %v1387 = vadd.f32 0.0, %v1386
  %v1388 = vpop.f32.mrb[0].mxu0
  %v1389 = vadd.f32 0.0, %v1388
  %1390 = vdwg.mxu0
  %1391 = vmatprep.subr.mxu0 %v1259
  %1392 = vmatpush1.msra.mxu0 %v1258
  %1393 = vmatprep.subr.mxu0 %v1263
  %1394 = vmatpush1.msra.mxu0 %v1262
  %1395 = vmatprep.subr.mxu0 %v1267
  %1396 = vmatpush1.msra.mxu0 %v1266
  %1397 = vmatprep.subr.mxu0 %v1271
  %1398 = vmatpush1.msra.mxu0 %v1270
  %1399 = vmatprep.subr.mxu0 %v1275
  %1400 = vmatpush1.msra.mxu0 %v1274
  %1401 = vmatprep.subr.mxu0 %v1279
  %1402 = vmatpush1.msra.mxu0 %v1278
  %1403 = vmatprep.subr.mxu0 %v1283
  %1404 = vmatpush1.msra.mxu0 %v1282
  %1405 = vmatprep.subr.mxu0 %v1287
  %1406 = vmatpush1.msra.mxu0 %v1286
  %1407 = vmatprep.subr.mxu0 %v1291
  %1408 = vmatpush1.msra.mxu0 %v1290
  %1409 = vmatprep.subr.mxu0 %v1295
  %1410 = vmatpush1.msra.mxu0 %v1294
  %1411 = vmatprep.subr.mxu0 %v1299
  %1412 = vmatpush1.msra.mxu0 %v1298
  %1413 = vmatprep.subr.mxu0 %v1303
  %1414 = vmatpush1.msra.mxu0 %v1302
  %1415 = vmatprep.subr.mxu0 %v1307
  %1416 = vmatpush1.msra.mxu0 %v1306
  %1417 = vmatprep.subr.mxu0 %v1311
  %1418 = vmatpush1.msra.mxu0 %v1310
  %1419 = vmatprep.subr.mxu0 %v1315
  %1420 = vmatpush1.msra.mxu0 %v1314
  %1421 = vmatprep.subr.mxu0 %v1319
  %1422 = vmatpush1.msra.mxu0 %v1318
  %1423 = vmatprep.subr.mxu0 0.0
  %1424 = vmatpush1.msra.mxu0 0.0
  %1425 = vmatprep.subr.mxu0 0.0
  %1426 = vmatpush1.msra.mxu0 0.0
  %1427 = vmatprep.subr.mxu0 0.0
  %1428 = vmatpush1.msra.mxu0 0.0
  %1429 = vmatprep.subr.mxu0 0.0
  %1430 = vmatpush1.msra.mxu0 0.0
  %1431 = vmatprep.subr.mxu0 0.0
  %1432 = vmatpush1.msra.mxu0 0.0
  %1433 = vmatprep.subr.mxu0 0.0
  %1434 = vmatpush1.msra.mxu0 0.0
  %1435 = vmatprep.subr.mxu0 0.0
  %1436 = vmatpush1.msra.mxu0 0.0
  %1437 = vmatprep.subr.mxu0 0.0
  %1438 = vmatpush1.msra.mxu0 0.0
  %1439 = vmatprep.subr.mxu0 0.0
  %1440 = vmatpush1.msra.mxu0 0.0
  %1441 = vmatprep.subr.mxu0 0.0
  %1442 = vmatpush1.msra.mxu0 0.0
  %1443 = vmatprep.subr.mxu0 0.0
  %1444 = vmatpush1.msra.mxu0 0.0
  %1445 = vmatprep.subr.mxu0 0.0
  %1446 = vmatpush1.msra.mxu0 0.0
  %1447 = vmatprep.subr.mxu0 0.0
  %1448 = vmatpush1.msra.mxu0 0.0
  %1449 = vmatprep.subr.mxu0 0.0
  %1450 = vmatpush1.msra.mxu0 0.0
  %1451 = vmatprep.subr.mxu0 0.0
  %1452 = vmatpush1.msra.mxu0 0.0
  %1453 = vmatprep.subr.mxu0 0.0
  %1454 = vmatpush1.msra.mxu0 0.0
  %1455 = vmatprep.mubr.f32.mxu0 0.0
  %1456 = vmatmul.mubr.f32.gmra.mrb[0].mxu0 0.0
  %v1457 = vpop.f32.mrb[0].mxu0
  %v1458 = vadd.f32 0.0, %v1457
  %v1459 = vpop.f32.mrb[0].mxu0
  %v1460 = vadd.f32 0.0, %v1459
  %1461 = vdwg.mxu0
  %v1462 = vadd.f32 %v1248, %v1387
  %v1463 = vadd.f32 %v1249, %v1389
  %v1464 = vadd.f32 %v1250, %v1458
  %v1465 = vadd.f32 %v1251, %v1460
  %v1466 = vxor.u32 %v1462, 2147483648
  %v1467 = vmul.f32 %v1466, 1.442695
  %v1468 = vpow.pop %v1467
  %v1469 = vadd.f32 %v1468, 1.0
  %v1470 = vrcp.pop %v1469
  %v1471 = vmul.f32 1.0, %v1470
  %v1472 = vxor.u32 %v1463, 2147483648
  %v1473 = vmul.f32 %v1472, 1.442695
  %v1474 = vpow.pop %v1473
  %v1475 = vadd.f32 %v1474, 1.0
  %v1476 = vrcp.pop %v1475
  %v1477 = vmul.f32 1.0, %v1476
  %v1478 = vtanh.pop %v1464
  %v1479 = vxor.u32 %v1465, 2147483648
  %v1480 = vmul.f32 %v1479, 1.442695
  %v1481 = vpow.pop %v1480
  %v1482 = vadd.f32 %v1481, 1.0
  %v1483 = vrcp.pop %v1482
  %v1484 = vmul.f32 1.0, %v1483
  %v1485 = vmul.f32 %v1477, 0.0
  %v1486 = vmul.f32 %v1471, %v1478
  %v1487 = vadd.f32 %v1485, %v1486
  %v1488 = vtanh.pop %v1487
  %v1489 = vmul.f32 %v1484, %v1488
  %v1490 = vld [vmem:[%s8] sm:$0xff]
  %v1491 = vld [vmem:[%s8 + $0x8] sm:$0xff]
  %v1492 = vld [vmem:[%s8 + $0x10] sm:$0xff]
  %v1493 = vld [vmem:[%s8 + $0x18] sm:$0xff]
  %v1494 = vld [vmem:[%s8 + $0x20] sm:$0xff]
  %v1495 = vld [vmem:[%s8 + $0x28] sm:$0xff]
  %v1496 = vld [vmem:[%s8 + $0x30] sm:$0xff]
  %v1497 = vld [vmem:[%s8 + $0x38] sm:$0xff]
  %v1498 = vld [vmem:[%s8 + $0x40] sm:$0xff]
  %v1499 = vld [vmem:[%s8 + $0x48] sm:$0xff]
  %v1500 = vld [vmem:[%s8 + $0x50] sm:$0xff]
  %v1501 = vld [vmem:[%s8 + $0x58] sm:$0xff]
  %v1502 = vld [vmem:[%s8 + $0x60] sm:$0xff]
  %v1503 = vld [vmem:[%s8 + $0x68] sm:$0xff]
  %v1504 = vld [vmem:[%s8 + $0x70] sm:$0xff]
  %v1505 = vld [vmem:[%s8 + $0x78] sm:$0xff]
  %v1506 = vld [vmem:[%s8 + $0x80] sm:$0xff]
  %v1507 = vld [vmem:[%s8 + $0x88] sm:$0xff]
  %v1508 = vld [vmem:[%s8 + $0x90] sm:$0xff]
  %v1509 = vld [vmem:[%s8 + $0x98] sm:$0xff]
  %v1510 = vld [vmem:[%s8 + $0xa0] sm:$0xff]
  %v1511 = vld [vmem:[%s8 + $0xa8] sm:$0xff]
  %v1512 = vld [vmem:[%s8 + $0xb0] sm:$0xff]
  %v1513 = vld [vmem:[%s8 + $0xb8] sm:$0xff]
  %v1514 = vld [vmem:[%s8 + $0xc0] sm:$0xff]
  %v1515 = vld [vmem:[%s8 + $0xc8] sm:$0xff]
  %v1516 = vld [vmem:[%s8 + $0xd0] sm:$0xff]
  %v1517 = vld [vmem:[%s8 + $0xd8] sm:$0xff]
  %v1518 = vld [vmem:[%s8 + $0xe0] sm:$0xff]
  %v1519 = vld [vmem:[%s8 + $0xe8] sm:$0xff]
  %v1520 = vld [vmem:[%s8 + $0xf0] sm:$0xff]
  %v1521 = vld [vmem:[%s8 + $0xf8] sm:$0xff]
  %v1522 = vld [vmem:[%s8 + $0x100] sm:$0xff]
  %v1523 = vld [vmem:[%s8 + $0x108] sm:$0xff]
  %v1524 = vld [vmem:[%s8 + $0x110] sm:$0xff]
  %v1525 = vld [vmem:[%s8 + $0x118] sm:$0xff]
  %v1526 = vld [vmem:[%s8 + $0x120] sm:$0xff]
  %v1527 = vld [vmem:[%s8 + $0x128] sm:$0xff]
  %v1528 = vld [vmem:[%s8 + $0x130] sm:$0xff]
  %v1529 = vld [vmem:[%s8 + $0x138] sm:$0xff]
  %v1530 = vld [vmem:[%s8 + $0x140] sm:$0xff]
  %v1531 = vld [vmem:[%s8 + $0x148] sm:$0xff]
  %v1532 = vld [vmem:[%s8 + $0x150] sm:$0xff]
  %v1533 = vld [vmem:[%s8 + $0x158] sm:$0xff]
  %v1534 = vld [vmem:[%s8 + $0x160] sm:$0xff]
  %v1535 = vld [vmem:[%s8 + $0x168] sm:$0xff]
  %v1536 = vld [vmem:[%s8 + $0x170] sm:$0xff]
  %v1537 = vld [vmem:[%s8 + $0x178] sm:$0xff]
  %v1538 = vld [vmem:[%s8 + $0x180] sm:$0xff]
  %v1539 = vld [vmem:[%s8 + $0x188] sm:$0xff]
  %v1540 = vld [vmem:[%s8 + $0x190] sm:$0xff]
  %v1541 = vld [vmem:[%s8 + $0x198] sm:$0xff]
  %v1542 = vld [vmem:[%s8 + $0x1a0] sm:$0xff]
  %v1543 = vld [vmem:[%s8 + $0x1a8] sm:$0xff]
  %v1544 = vld [vmem:[%s8 + $0x1b0] sm:$0xff]
  %v1545 = vld [vmem:[%s8 + $0x1b8] sm:$0xff]
  %v1546 = vld [vmem:[%s8 + $0x1c0] sm:$0xff]
  %v1547 = vld [vmem:[%s8 + $0x1c8] sm:$0xff]
  %v1548 = vld [vmem:[%s8 + $0x1d0] sm:$0xff]
  %v1549 = vld [vmem:[%s8 + $0x1d8] sm:$0xff]
  %v1550 = vld [vmem:[%s8 + $0x1e0] sm:$0xff]
  %v1551 = vld [vmem:[%s8 + $0x1e8] sm:$0xff]
  %v1552 = vld [vmem:[%s8 + $0x1f0] sm:$0xff]
  %v1553 = vld [vmem:[%s8 + $0x1f8] sm:$0xff]
  %1554 = vmatprep.subr.mxu0 %v1491
  %1555 = vmatpush1.msra.mxu0 %v1490
  %1556 = vmatprep.subr.mxu0 %v1495
  %1557 = vmatpush1.msra.mxu0 %v1494
  %1558 = vmatprep.subr.mxu0 %v1499
  %1559 = vmatpush1.msra.mxu0 %v1498
  %1560 = vmatprep.subr.mxu0 %v1503
  %1561 = vmatpush1.msra.mxu0 %v1502
  %1562 = vmatprep.subr.mxu0 %v1507
  %1563 = vmatpush1.msra.mxu0 %v1506
  %1564 = vmatprep.subr.mxu0 %v1511
  %1565 = vmatpush1.msra.mxu0 %v1510
  %1566 = vmatprep.subr.mxu0 %v1515
  %1567 = vmatpush1.msra.mxu0 %v1514
  %1568 = vmatprep.subr.mxu0 %v1519
  %1569 = vmatpush1.msra.mxu0 %v1518
  %1570 = vmatprep.subr.mxu0 %v1523
  %1571 = vmatpush1.msra.mxu0 %v1522
  %1572 = vmatprep.subr.mxu0 %v1527
  %1573 = vmatpush1.msra.mxu0 %v1526
  %1574 = vmatprep.subr.mxu0 %v1531
  %1575 = vmatpush1.msra.mxu0 %v1530
  %1576 = vmatprep.subr.mxu0 %v1535
  %1577 = vmatpush1.msra.mxu0 %v1534
  %1578 = vmatprep.subr.mxu0 %v1539
  %1579 = vmatpush1.msra.mxu0 %v1538
  %1580 = vmatprep.subr.mxu0 %v1543
  %1581 = vmatpush1.msra.mxu0 %v1542
  %1582 = vmatprep.subr.mxu0 %v1547
  %1583 = vmatpush1.msra.mxu0 %v1546
  %1584 = vmatprep.subr.mxu0 %v1551
  %1585 = vmatpush1.msra.mxu0 %v1550
  %1586 = vmatprep.subr.mxu0 0.0
  %1587 = vmatpush1.msra.mxu0 0.0
  %1588 = vmatprep.subr.mxu0 0.0
  %1589 = vmatpush1.msra.mxu0 0.0
  %1590 = vmatprep.subr.mxu0 0.0
  %1591 = vmatpush1.msra.mxu0 0.0
  %1592 = vmatprep.subr.mxu0 0.0
  %1593 = vmatpush1.msra.mxu0 0.0
  %1594 = vmatprep.subr.mxu0 0.0
  %1595 = vmatpush1.msra.mxu0 0.0
  %1596 = vmatprep.subr.mxu0 0.0
  %1597 = vmatpush1.msra.mxu0 0.0
  %1598 = vmatprep.subr.mxu0 0.0
  %1599 = vmatpush1.msra.mxu0 0.0
  %1600 = vmatprep.subr.mxu0 0.0
  %1601 = vmatpush1.msra.mxu0 0.0
  %1602 = vmatprep.subr.mxu0 0.0
  %1603 = vmatpush1.msra.mxu0 0.0
  %1604 = vmatprep.subr.mxu0 0.0
  %1605 = vmatpush1.msra.mxu0 0.0
  %1606 = vmatprep.subr.mxu0 0.0
  %1607 = vmatpush1.msra.mxu0 0.0
  %1608 = vmatprep.subr.mxu0 0.0
  %1609 = vmatpush1.msra.mxu0 0.0
  %1610 = vmatprep.subr.mxu0 0.0
  %1611 = vmatpush1.msra.mxu0 0.0
  %1612 = vmatprep.subr.mxu0 0.0
  %1613 = vmatpush1.msra.mxu0 0.0
  %1614 = vmatprep.subr.mxu0 0.0
  %1615 = vmatpush1.msra.mxu0 0.0
  %1616 = vmatprep.subr.mxu0 0.0
  %1617 = vmatpush1.msra.mxu0 0.0
  %1618 = vmatprep.mubr.f32.mxu0 0.0
  %1619 = vmatmul.mubr.f32.gmra.mrb[0].mxu0 0.0
  %v1620 = vpop.f32.mrb[0].mxu0
  %v1621 = vadd.f32 0.0, %v1620
  %v1622 = vpop.f32.mrb[0].mxu0
  %v1623 = vadd.f32 0.0, %v1622
  %1624 = vdwg.mxu0
  %1625 = vmatprep.subr.mxu0 %v1493
  %1626 = vmatpush1.msra.mxu0 %v1492
  %1627 = vmatprep.subr.mxu0 %v1497
  %1628 = vmatpush1.msra.mxu0 %v1496
  %1629 = vmatprep.subr.mxu0 %v1501
  %1630 = vmatpush1.msra.mxu0 %v1500
  %1631 = vmatprep.subr.mxu0 %v1505
  %1632 = vmatpush1.msra.mxu0 %v1504
  %1633 = vmatprep.subr.mxu0 %v1509
  %1634 = vmatpush1.msra.mxu0 %v1508
  %1635 = vmatprep.subr.mxu0 %v1513
  %1636 = vmatpush1.msra.mxu0 %v1512
  %1637 = vmatprep.subr.mxu0 %v1517
  %1638 = vmatpush1.msra.mxu0 %v1516
  %1639 = vmatprep.subr.mxu0 %v1521
  %1640 = vmatpush1.msra.mxu0 %v1520
  %1641 = vmatprep.subr.mxu0 %v1525
  %1642 = vmatpush1.msra.mxu0 %v1524
  %1643 = vmatprep.subr.mxu0 %v1529
  %1644 = vmatpush1.msra.mxu0 %v1528
  %1645 = vmatprep.subr.mxu0 %v1533
  %1646 = vmatpush1.msra.mxu0 %v1532
  %1647 = vmatprep.subr.mxu0 %v1537
  %1648 = vmatpush1.msra.mxu0 %v1536
  %1649 = vmatprep.subr.mxu0 %v1541
  %1650 = vmatpush1.msra.mxu0 %v1540
  %1651 = vmatprep.subr.mxu0 %v1545
  %1652 = vmatpush1.msra.mxu0 %v1544
  %1653 = vmatprep.subr.mxu0 %v1549
  %1654 = vmatpush1.msra.mxu0 %v1548
  %1655 = vmatprep.subr.mxu0 %v1553
  %1656 = vmatpush1.msra.mxu0 %v1552
  %1657 = vmatprep.subr.mxu0 0.0
  %1658 = vmatpush1.msra.mxu0 0.0
  %1659 = vmatprep.subr.mxu0 0.0
  %1660 = vmatpush1.msra.mxu0 0.0
  %1661 = vmatprep.subr.mxu0 0.0
  %1662 = vmatpush1.msra.mxu0 0.0
  %1663 = vmatprep.subr.mxu0 0.0
  %1664 = vmatpush1.msra.mxu0 0.0
  %1665 = vmatprep.subr.mxu0 0.0
  %1666 = vmatpush1.msra.mxu0 0.0
  %1667 = vmatprep.subr.mxu0 0.0
  %1668 = vmatpush1.msra.mxu0 0.0
  %1669 = vmatprep.subr.mxu0 0.0
  %1670 = vmatpush1.msra.mxu0 0.0
  %1671 = vmatprep.subr.mxu0 0.0
  %1672 = vmatpush1.msra.mxu0 0.0
  %1673 = vmatprep.subr.mxu0 0.0
  %1674 = vmatpush1.msra.mxu0 0.0
  %1675 = vmatprep.subr.mxu0 0.0
  %1676 = vmatpush1.msra.mxu0 0.0
  %1677 = vmatprep.subr.mxu0 0.0
  %1678 = vmatpush1.msra.mxu0 0.0
  %1679 = vmatprep.subr.mxu0 0.0
  %1680 = vmatpush1.msra.mxu0 0.0
  %1681 = vmatprep.subr.mxu0 0.0
  %1682 = vmatpush1.msra.mxu0 0.0
  %1683 = vmatprep.subr.mxu0 0.0
  %1684 = vmatpush1.msra.mxu0 0.0
  %1685 = vmatprep.subr.mxu0 0.0
  %1686 = vmatpush1.msra.mxu0 0.0
  %1687 = vmatprep.subr.mxu0 0.0
  %1688 = vmatpush1.msra.mxu0 0.0
  %1689 = vmatprep.mubr.f32.mxu0 0.0
  %1690 = vmatmul.mubr.f32.gmra.mrb[0].mxu0 0.0
  %v1691 = vpop.f32.mrb[0].mxu0
  %v1692 = vadd.f32 0.0, %v1691
  %v1693 = vpop.f32.mrb[0].mxu0
  %v1694 = vadd.f32 0.0, %v1693
  %1695 = vdwg.mxu0
  %v1696 = vadd.f32 %v1252, %v1621
  %v1697 = vadd.f32 %v1253, %v1623
  %v1698 = vadd.f32 %v1254, %v1692
  %v1699 = vadd.f32 %v1255, %v1694
  %v1700 = vxor.u32 %v1696, 2147483648
  %v1701 = vmul.f32 %v1700, 1.442695
  %v1702 = vpow.pop %v1701
  %v1703 = vadd.f32 %v1702, 1.0
  %v1704 = vrcp.pop %v1703
  %v1705 = vmul.f32 1.0, %v1704
  %v1706 = vxor.u32 %v1697, 2147483648
  %v1707 = vmul.f32 %v1706, 1.442695
  %v1708 = vpow.pop %v1707
  %v1709 = vadd.f32 %v1708, 1.0
  %v1710 = vrcp.pop %v1709
  %v1711 = vmul.f32 1.0, %v1710
  %v1712 = vtanh.pop %v1698
  %v1713 = vxor.u32 %v1699, 2147483648
  %v1714 = vmul.f32 %v1713, 1.442695
  %v1715 = vpow.pop %v1714
  %v1716 = vadd.f32 %v1715, 1.0
  %v1717 = vrcp.pop %v1716
  %v1718 = vmul.f32 1.0, %v1717
  %v1719 = vmul.f32 %v1711, 0.0
  %v1720 = vmul.f32 %v1705, %v1712
  %v1721 = vadd.f32 %v1719, %v1720
  %v1722 = vtanh.pop %v1721
  %v1723 = vmul.f32 %v1718, %v1722
  %vm1724 = vcmp.gt.f32.partialorder %v1489, 0.0
  %v1725 = vmul.f32 %v1489, 0.01
  %v1726 = vsel %vm1724, %v1489, %v1725
  %vm1727 = vcmp.gt.f32.partialorder %v1723, 0.0
  %v1728 = vmul.f32 %v1723, 0.01
  %v1729 = vsel %vm1727, %v1723, %v1728
  %v1730 = vld [vmem:[%s9] sm:$0xff]
  %v1731 = vld [vmem:[%s9 + $0x8] sm:$0xff]
  %v1732 = vld [vmem:[%s9 + $0x10] sm:$0xff]
  %v1733 = vld [vmem:[%s9 + $0x18] sm:$0xff]
  %v1734 = vld [vmem:[%s9 + $0x20] sm:$0xff]
  %v1735 = vld [vmem:[%s9 + $0x28] sm:$0xff]
  %v1736 = vld [vmem:[%s9 + $0x30] sm:$0xff]
  %v1737 = vld [vmem:[%s9 + $0x38] sm:$0xff]
  %v1738 = vld [vmem:[%s9 + $0x40] sm:$0xff]
  %v1739 = vld [vmem:[%s9 + $0x48] sm:$0xff]
  %v1740 = vld [vmem:[%s9 + $0x50] sm:$0xff]
  %v1741 = vld [vmem:[%s9 + $0x58] sm:$0xff]
  %v1742 = vld [vmem:[%s9 + $0x60] sm:$0xff]
  %v1743 = vld [vmem:[%s9 + $0x68] sm:$0xff]
  %v1744 = vld [vmem:[%s9 + $0x70] sm:$0xff]
  %v1745 = vld [vmem:[%s9 + $0x78] sm:$0xff]
  %s1746 = scalar_lea.vmem %s10, 896
  %v1747 = vld [vmem:[%s1746] sm:$0xff]
  %v1748 = vld [vmem:[%s1746 + $0x8] sm:$0xff]
  %v1749 = vld [vmem:[%s1746 + $0x10] sm:$0xff]
  %v1750 = vld [vmem:[%s1746 + $0x18] sm:$0xff]
  %v1751 = vld [vmem:[%s1746 + $0x20] sm:$0xff]
  %v1752 = vld [vmem:[%s1746 + $0x28] sm:$0xff]
  %v1753 = vld [vmem:[%s1746 + $0x30] sm:$0xff]
  %v1754 = vld [vmem:[%s1746 + $0x38] sm:$0xff]
  %v1755 = vld [vmem:[%s1746 + $0x40] sm:$0xff]
  %v1756 = vld [vmem:[%s1746 + $0x48] sm:$0xff]
  %v1757 = vld [vmem:[%s1746 + $0x50] sm:$0xff]
  %v1758 = vld [vmem:[%s1746 + $0x58] sm:$0xff]
  %v1759 = vld [vmem:[%s1746 + $0x60] sm:$0xff]
  %v1760 = vld [vmem:[%s1746 + $0x68] sm:$0xff]
  %v1761 = vld [vmem:[%s1746 + $0x70] sm:$0xff]
  %v1762 = vld [vmem:[%s1746 + $0x78] sm:$0xff]
  %1763 = vmatprep.subr.mxu0 0.0
  %1764 = vmatpush1.msra.mxu0 %v1747
  %1765 = vmatprep.subr.mxu0 0.0
  %1766 = vmatpush1.msra.mxu0 %v1748
  %1767 = vmatprep.subr.mxu0 0.0
  %1768 = vmatpush1.msra.mxu0 %v1749
  %1769 = vmatprep.subr.mxu0 0.0
  %1770 = vmatpush1.msra.mxu0 %v1750
  %1771 = vmatprep.subr.mxu0 0.0
  %1772 = vmatpush1.msra.mxu0 %v1751
  %1773 = vmatprep.subr.mxu0 0.0
  %1774 = vmatpush1.msra.mxu0 %v1752
  %1775 = vmatprep.subr.mxu0 0.0
  %1776 = vmatpush1.msra.mxu0 %v1753
  %1777 = vmatprep.subr.mxu0 0.0
  %1778 = vmatpush1.msra.mxu0 %v1754
  %1779 = vmatprep.subr.mxu0 0.0
  %1780 = vmatpush1.msra.mxu0 %v1755
  %1781 = vmatprep.subr.mxu0 0.0
  %1782 = vmatpush1.msra.mxu0 %v1756
  %1783 = vmatprep.subr.mxu0 0.0
  %1784 = vmatpush1.msra.mxu0 %v1757
  %1785 = vmatprep.subr.mxu0 0.0
  %1786 = vmatpush1.msra.mxu0 %v1758
  %1787 = vmatprep.subr.mxu0 0.0
  %1788 = vmatpush1.msra.mxu0 %v1759
  %1789 = vmatprep.subr.mxu0 0.0
  %1790 = vmatpush1.msra.mxu0 %v1760
  %1791 = vmatprep.subr.mxu0 0.0
  %1792 = vmatpush1.msra.mxu0 %v1761
  %1793 = vmatprep.subr.mxu0 0.0
  %1794 = vmatpush1.msra.mxu0 %v1762
  %1795 = vmatprep.subr.mxu0 0.0
  %1796 = vmatpush1.msra.mxu0 0.0
  %1797 = vmatprep.subr.mxu0 0.0
  %1798 = vmatpush1.msra.mxu0 0.0
  %1799 = vmatprep.subr.mxu0 0.0
  %1800 = vmatpush1.msra.mxu0 0.0
  %1801 = vmatprep.subr.mxu0 0.0
  %1802 = vmatpush1.msra.mxu0 0.0
  %1803 = vmatprep.subr.mxu0 0.0
  %1804 = vmatpush1.msra.mxu0 0.0
  %1805 = vmatprep.subr.mxu0 0.0
  %1806 = vmatpush1.msra.mxu0 0.0
  %1807 = vmatprep.subr.mxu0 0.0
  %1808 = vmatpush1.msra.mxu0 0.0
  %1809 = vmatprep.subr.mxu0 0.0
  %1810 = vmatpush1.msra.mxu0 0.0
  %1811 = vmatprep.subr.mxu0 0.0
  %1812 = vmatpush1.msra.mxu0 0.0
  %1813 = vmatprep.subr.mxu0 0.0
  %1814 = vmatpush1.msra.mxu0 0.0
  %1815 = vmatprep.subr.mxu0 0.0
  %1816 = vmatpush1.msra.mxu0 0.0
  %1817 = vmatprep.subr.mxu0 0.0
  %1818 = vmatpush1.msra.mxu0 0.0
  %1819 = vmatprep.subr.mxu0 0.0
  %1820 = vmatpush1.msra.mxu0 0.0
  %1821 = vmatprep.subr.mxu0 0.0
  %1822 = vmatpush1.msra.mxu0 0.0
  %1823 = vmatprep.subr.mxu0 0.0
  %1824 = vmatpush1.msra.mxu0 0.0
  %1825 = vmatprep.subr.mxu0 0.0
  %1826 = vmatpush1.msra.mxu0 0.0
  %1827 = vmatprep.mubr.f32.mxu0 0.0
  %1828 = vmatmul.mubr.f32.gmra.mrb[0].mxu0 %v1729
  %v1829 = vpop.f32.mrb[0].mxu0
  %v1830 = vadd.f32 0.0, %v1829
  %v1831 = vpop.f32.mrb[0].mxu0
  %1832 = vdwg.mxu0
  %1833 = vmatprep.subr.mxu0 0.0
  %1834 = vmatpush1.msra.mxu0 %v1730
  %1835 = vmatprep.subr.mxu0 0.0
  %1836 = vmatpush1.msra.mxu0 %v1731
  %1837 = vmatprep.subr.mxu0 0.0
  %1838 = vmatpush1.msra.mxu0 %v1732
  %1839 = vmatprep.subr.mxu0 0.0
  %1840 = vmatpush1.msra.mxu0 %v1733
  %1841 = vmatprep.subr.mxu0 0.0
  %1842 = vmatpush1.msra.mxu0 %v1734
  %1843 = vmatprep.subr.mxu0 0.0
  %1844 = vmatpush1.msra.mxu0 %v1735
  %1845 = vmatprep.subr.mxu0 0.0
  %1846 = vmatpush1.msra.mxu0 %v1736
  %1847 = vmatprep.subr.mxu0 0.0
  %1848 = vmatpush1.msra.mxu0 %v1737
  %1849 = vmatprep.subr.mxu0 0.0
  %1850 = vmatpush1.msra.mxu0 %v1738
  %1851 = vmatprep.subr.mxu0 0.0
  %1852 = vmatpush1.msra.mxu0 %v1739
  %1853 = vmatprep.subr.mxu0 0.0
  %1854 = vmatpush1.msra.mxu0 %v1740
  %1855 = vmatprep.subr.mxu0 0.0
  %1856 = vmatpush1.msra.mxu0 %v1741
  %1857 = vmatprep.subr.mxu0 0.0
  %1858 = vmatpush1.msra.mxu0 %v1742
  %1859 = vmatprep.subr.mxu0 0.0
  %1860 = vmatpush1.msra.mxu0 %v1743
  %1861 = vmatprep.subr.mxu0 0.0
  %1862 = vmatpush1.msra.mxu0 %v1744
  %1863 = vmatprep.subr.mxu0 0.0
  %1864 = vmatpush1.msra.mxu0 %v1745
  %1865 = vmatprep.subr.mxu0 0.0
  %1866 = vmatpush1.msra.mxu0 0.0
  %1867 = vmatprep.subr.mxu0 0.0
  %1868 = vmatpush1.msra.mxu0 0.0
  %1869 = vmatprep.subr.mxu0 0.0
  %1870 = vmatpush1.msra.mxu0 0.0
  %1871 = vmatprep.subr.mxu0 0.0
  %1872 = vmatpush1.msra.mxu0 0.0
  %1873 = vmatprep.subr.mxu0 0.0
  %1874 = vmatpush1.msra.mxu0 0.0
  %1875 = vmatprep.subr.mxu0 0.0
  %1876 = vmatpush1.msra.mxu0 0.0
  %1877 = vmatprep.subr.mxu0 0.0
  %1878 = vmatpush1.msra.mxu0 0.0
  %1879 = vmatprep.subr.mxu0 0.0
  %1880 = vmatpush1.msra.mxu0 0.0
  %1881 = vmatprep.subr.mxu0 0.0
  %1882 = vmatpush1.msra.mxu0 0.0
  %1883 = vmatprep.subr.mxu0 0.0
  %1884 = vmatpush1.msra.mxu0 0.0
  %1885 = vmatprep.subr.mxu0 0.0
  %1886 = vmatpush1.msra.mxu0 0.0
  %1887 = vmatprep.subr.mxu0 0.0
  %1888 = vmatpush1.msra.mxu0 0.0
  %1889 = vmatprep.subr.mxu0 0.0
  %1890 = vmatpush1.msra.mxu0 0.0
  %1891 = vmatprep.subr.mxu0 0.0
  %1892 = vmatpush1.msra.mxu0 0.0
  %1893 = vmatprep.subr.mxu0 0.0
  %1894 = vmatpush1.msra.mxu0 0.0
  %1895 = vmatprep.subr.mxu0 0.0
  %1896 = vmatpush1.msra.mxu0 0.0
  %1897 = vmatprep.mubr.f32.mxu0 0.0
  %1898 = vmatmul.mubr.f32.gmra.mrb[0].mxu0 %v1726
  %v1899 = vpop.f32.mrb[0].mxu0
  %v1900 = vadd.f32 %v1830, %v1899
  %v1901 = vpop.f32.mrb[0].mxu0
  %1902 = vdwg.mxu0
  %v1903 = vld [vmem:[#allocation2 + $0x40] sm:$0xff]
  %v1904 = vld [vmem:[#allocation2 + $0x48] sm:$0xff]
  %v1905 = vld [vmem:[#allocation2 + $0x50] sm:$0xff]
  %v1906 = vld [vmem:[#allocation2 + $0x58] sm:$0xff]
  %v1907 = vld [vmem:[#allocation2 + $0x1a0] sm:$0xff]
  %v1908 = vld [vmem:[#allocation2 + $0x1a8] sm:$0xff]
  %v1909 = vld [vmem:[#allocation2 + $0x1b0] sm:$0xff]
  %v1910 = vld [vmem:[#allocation2 + $0x1b8] sm:$0xff]
  %1911 = vmatprep.subr.mxu0 %v1257
  %1912 = vmatpush1.msra.mxu0 %v1256
  %1913 = vmatprep.subr.mxu0 %v1261
  %1914 = vmatpush1.msra.mxu0 %v1260
  %1915 = vmatprep.subr.mxu0 %v1265
  %1916 = vmatpush1.msra.mxu0 %v1264
  %1917 = vmatprep.subr.mxu0 %v1269
  %1918 = vmatpush1.msra.mxu0 %v1268
  %1919 = vmatprep.subr.mxu0 %v1273
  %1920 = vmatpush1.msra.mxu0 %v1272
  %1921 = vmatprep.subr.mxu0 %v1277
  %1922 = vmatpush1.msra.mxu0 %v1276
  %1923 = vmatprep.subr.mxu0 %v1281
  %1924 = vmatpush1.msra.mxu0 %v1280
  %1925 = vmatprep.subr.mxu0 %v1285
  %1926 = vmatpush1.msra.mxu0 %v1284
  %1927 = vmatprep.subr.mxu0 %v1289
  %1928 = vmatpush1.msra.mxu0 %v1288
  %1929 = vmatprep.subr.mxu0 %v1293
  %1930 = vmatpush1.msra.mxu0 %v1292
  %1931 = vmatprep.subr.mxu0 %v1297
  %1932 = vmatpush1.msra.mxu0 %v1296
  %1933 = vmatprep.subr.mxu0 %v1301
  %1934 = vmatpush1.msra.mxu0 %v1300
  %1935 = vmatprep.subr.mxu0 %v1305
  %1936 = vmatpush1.msra.mxu0 %v1304
  %1937 = vmatprep.subr.mxu0 %v1309
  %1938 = vmatpush1.msra.mxu0 %v1308
  %1939 = vmatprep.subr.mxu0 %v1313
  %1940 = vmatpush1.msra.mxu0 %v1312
  %1941 = vmatprep.subr.mxu0 %v1317
  %1942 = vmatpush1.msra.mxu0 %v1316
  %1943 = vmatprep.subr.mxu0 0.0
  %1944 = vmatpush1.msra.mxu0 0.0
  %1945 = vmatprep.subr.mxu0 0.0
  %1946 = vmatpush1.msra.mxu0 0.0
  %1947 = vmatprep.subr.mxu0 0.0
  %1948 = vmatpush1.msra.mxu0 0.0
  %1949 = vmatprep.subr.mxu0 0.0
  %1950 = vmatpush1.msra.mxu0 0.0
  %1951 = vmatprep.subr.mxu0 0.0
  %1952 = vmatpush1.msra.mxu0 0.0
  %1953 = vmatprep.subr.mxu0 0.0
  %1954 = vmatpush1.msra.mxu0 0.0
  %1955 = vmatprep.subr.mxu0 0.0
  %1956 = vmatpush1.msra.mxu0 0.0
  %1957 = vmatprep.subr.mxu0 0.0
  %1958 = vmatpush1.msra.mxu0 0.0
  %1959 = vmatprep.subr.mxu0 0.0
  %1960 = vmatpush1.msra.mxu0 0.0
  %1961 = vmatprep.subr.mxu0 0.0
  %1962 = vmatpush1.msra.mxu0 0.0
  %1963 = vmatprep.subr.mxu0 0.0
  %1964 = vmatpush1.msra.mxu0 0.0
  %1965 = vmatprep.subr.mxu0 0.0
  %1966 = vmatpush1.msra.mxu0 0.0
  %1967 = vmatprep.subr.mxu0 0.0
  %1968 = vmatpush1.msra.mxu0 0.0
  %1969 = vmatprep.subr.mxu0 0.0
  %1970 = vmatpush1.msra.mxu0 0.0
  %1971 = vmatprep.subr.mxu0 0.0
  %1972 = vmatpush1.msra.mxu0 0.0
  %1973 = vmatprep.subr.mxu0 0.0
  %1974 = vmatpush1.msra.mxu0 0.0
  %1975 = vmatprep.mubr.f32.mxu0 0.0
  %1976 = vmatmul.mubr.f32.gmra.mrb[0].mxu0 %v1489
  %v1977 = vpop.f32.mrb[0].mxu0
  %v1978 = vadd.f32 0.0, %v1977
  %v1979 = vpop.f32.mrb[0].mxu0
  %v1980 = vadd.f32 0.0, %v1979
  %1981 = vdwg.mxu0
  %1982 = vmatprep.subr.mxu0 %v1259
  %1983 = vmatpush1.msra.mxu0 %v1258
  %1984 = vmatprep.subr.mxu0 %v1263
  %1985 = vmatpush1.msra.mxu0 %v1262
  %1986 = vmatprep.subr.mxu0 %v1267
  %1987 = vmatpush1.msra.mxu0 %v1266
  %1988 = vmatprep.subr.mxu0 %v1271
  %1989 = vmatpush1.msra.mxu0 %v1270
  %1990 = vmatprep.subr.mxu0 %v1275
  %1991 = vmatpush1.msra.mxu0 %v1274
  %1992 = vmatprep.subr.mxu0 %v1279
  %1993 = vmatpush1.msra.mxu0 %v1278
  %1994 = vmatprep.subr.mxu0 %v1283
  %1995 = vmatpush1.msra.mxu0 %v1282
  %1996 = vmatprep.subr.mxu0 %v1287
  %1997 = vmatpush1.msra.mxu0 %v1286
  %1998 = vmatprep.subr.mxu0 %v1291
  %1999 = vmatpush1.msra.mxu0 %v1290
  %2000 = vmatprep.subr.mxu0 %v1295
  %2001 = vmatpush1.msra.mxu0 %v1294
  %2002 = vmatprep.subr.mxu0 %v1299
  %2003 = vmatpush1.msra.mxu0 %v1298
  %2004 = vmatprep.subr.mxu0 %v1303
  %2005 = vmatpush1.msra.mxu0 %v1302
  %2006 = vmatprep.subr.mxu0 %v1307
  %2007 = vmatpush1.msra.mxu0 %v1306
  %2008 = vmatprep.subr.mxu0 %v1311
  %2009 = vmatpush1.msra.mxu0 %v1310
  %2010 = vmatprep.subr.mxu0 %v1315
  %2011 = vmatpush1.msra.mxu0 %v1314
  %2012 = vmatprep.subr.mxu0 %v1319
  %2013 = vmatpush1.msra.mxu0 %v1318
  %2014 = vmatprep.subr.mxu0 0.0
  %2015 = vmatpush1.msra.mxu0 0.0
  %2016 = vmatprep.subr.mxu0 0.0
  %2017 = vmatpush1.msra.mxu0 0.0
  %2018 = vmatprep.subr.mxu0 0.0
  %2019 = vmatpush1.msra.mxu0 0.0
  %2020 = vmatprep.subr.mxu0 0.0
  %2021 = vmatpush1.msra.mxu0 0.0
  %2022 = vmatprep.subr.mxu0 0.0
  %2023 = vmatpush1.msra.mxu0 0.0
  %2024 = vmatprep.subr.mxu0 0.0
  %2025 = vmatpush1.msra.mxu0 0.0
  %2026 = vmatprep.subr.mxu0 0.0
  %2027 = vmatpush1.msra.mxu0 0.0
  %2028 = vmatprep.subr.mxu0 0.0
  %2029 = vmatpush1.msra.mxu0 0.0
  %2030 = vmatprep.subr.mxu0 0.0
  %2031 = vmatpush1.msra.mxu0 0.0
  %2032 = vmatprep.subr.mxu0 0.0
  %2033 = vmatpush1.msra.mxu0 0.0
  %2034 = vmatprep.subr.mxu0 0.0
  %2035 = vmatpush1.msra.mxu0 0.0
  %2036 = vmatprep.subr.mxu0 0.0
  %2037 = vmatpush1.msra.mxu0 0.0
  %2038 = vmatprep.subr.mxu0 0.0
  %2039 = vmatpush1.msra.mxu0 0.0
  %2040 = vmatprep.subr.mxu0 0.0
  %2041 = vmatpush1.msra.mxu0 0.0
  %2042 = vmatprep.subr.mxu0 0.0
  %2043 = vmatpush1.msra.mxu0 0.0
  %2044 = vmatprep.subr.mxu0 0.0
  %2045 = vmatpush1.msra.mxu0 0.0
  %2046 = vmatprep.mubr.f32.mxu0 0.0
  %2047 = vmatmul.mubr.f32.gmra.mrb[0].mxu0 %v1489
  %v2048 = vpop.f32.mrb[0].mxu0
  %v2049 = vadd.f32 0.0, %v2048
  %v2050 = vpop.f32.mrb[0].mxu0
  %v2051 = vadd.f32 0.0, %v2050
  %2052 = vdwg.mxu0
  %v2053 = vadd.f32 %v1903, %v1978
  %v2054 = vadd.f32 %v1904, %v1980
  %v2055 = vadd.f32 %v1905, %v2049
  %v2056 = vadd.f32 %v1906, %v2051
  %v2057 = vxor.u32 %v2053, 2147483648
  %v2058 = vmul.f32 %v2057, 1.442695
  %v2059 = vpow.pop %v2058
  %v2060 = vadd.f32 %v2059, 1.0
  %v2061 = vrcp.pop %v2060
  %v2062 = vmul.f32 1.0, %v2061
  %v2063 = vxor.u32 %v2054, 2147483648
  %v2064 = vmul.f32 %v2063, 1.442695
  %v2065 = vpow.pop %v2064
  %v2066 = vadd.f32 %v2065, 1.0
  %v2067 = vrcp.pop %v2066
  %v2068 = vmul.f32 1.0, %v2067
  %v2069 = vtanh.pop %v2055
  %v2070 = vxor.u32 %v2056, 2147483648
  %v2071 = vmul.f32 %v2070, 1.442695
  %v2072 = vpow.pop %v2071
  %v2073 = vadd.f32 %v2072, 1.0
  %v2074 = vrcp.pop %v2073
  %v2075 = vmul.f32 1.0, %v2074
  %v2076 = vmul.f32 %v2068, %v1487
  %v2077 = vmul.f32 %v2062, %v2069
  %v2078 = vadd.f32 %v2076, %v2077
  %v2079 = vtanh.pop %v2078
  %v2080 = vmul.f32 %v2075, %v2079
  %2081 = vmatprep.subr.mxu0 %v1491
  %2082 = vmatpush1.msra.mxu0 %v1490
  %2083 = vmatprep.subr.mxu0 %v1495
  %2084 = vmatpush1.msra.mxu0 %v1494
  %2085 = vmatprep.subr.mxu0 %v1499
  %2086 = vmatpush1.msra.mxu0 %v1498
  %2087 = vmatprep.subr.mxu0 %v1503
  %2088 = vmatpush1.msra.mxu0 %v1502
  %2089 = vmatprep.subr.mxu0 %v1507
  %2090 = vmatpush1.msra.mxu0 %v1506
  %2091 = vmatprep.subr.mxu0 %v1511
  %2092 = vmatpush1.msra.mxu0 %v1510
  %2093 = vmatprep.subr.mxu0 %v1515
  %2094 = vmatpush1.msra.mxu0 %v1514
  %2095 = vmatprep.subr.mxu0 %v1519
  %2096 = vmatpush1.msra.mxu0 %v1518
  %2097 = vmatprep.subr.mxu0 %v1523
  %2098 = vmatpush1.msra.mxu0 %v1522
  %2099 = vmatprep.subr.mxu0 %v1527
  %2100 = vmatpush1.msra.mxu0 %v1526
  %2101 = vmatprep.subr.mxu0 %v1531
  %2102 = vmatpush1.msra.mxu0 %v1530
  %2103 = vmatprep.subr.mxu0 %v1535
  %2104 = vmatpush1.msra.mxu0 %v1534
  %2105 = vmatprep.subr.mxu0 %v1539
  %2106 = vmatpush1.msra.mxu0 %v1538
  %2107 = vmatprep.subr.mxu0 %v1543
  %2108 = vmatpush1.msra.mxu0 %v1542
  %2109 = vmatprep.subr.mxu0 %v1547
  %2110 = vmatpush1.msra.mxu0 %v1546
  %2111 = vmatprep.subr.mxu0 %v1551
  %2112 = vmatpush1.msra.mxu0 %v1550
  %2113 = vmatprep.subr.mxu0 0.0
  %2114 = vmatpush1.msra.mxu0 0.0
  %2115 = vmatprep.subr.mxu0 0.0
  %2116 = vmatpush1.msra.mxu0 0.0
  %2117 = vmatprep.subr.mxu0 0.0
  %2118 = vmatpush1.msra.mxu0 0.0
  %2119 = vmatprep.subr.mxu0 0.0
  %2120 = vmatpush1.msra.mxu0 0.0
  %2121 = vmatprep.subr.mxu0 0.0
  %2122 = vmatpush1.msra.mxu0 0.0
  %2123 = vmatprep.subr.mxu0 0.0
  %2124 = vmatpush1.msra.mxu0 0.0
  %2125 = vmatprep.subr.mxu0 0.0
  %2126 = vmatpush1.msra.mxu0 0.0
  %2127 = vmatprep.subr.mxu0 0.0
  %2128 = vmatpush1.msra.mxu0 0.0
  %2129 = vmatprep.subr.mxu0 0.0
  %2130 = vmatpush1.msra.mxu0 0.0
  %2131 = vmatprep.subr.mxu0 0.0
  %2132 = vmatpush1.msra.mxu0 0.0
  %2133 = vmatprep.subr.mxu0 0.0
  %2134 = vmatpush1.msra.mxu0 0.0
  %2135 = vmatprep.subr.mxu0 0.0
  %2136 = vmatpush1.msra.mxu0 0.0
  %2137 = vmatprep.subr.mxu0 0.0
  %2138 = vmatpush1.msra.mxu0 0.0
  %2139 = vmatprep.subr.mxu0 0.0
  %2140 = vmatpush1.msra.mxu0 0.0
  %2141 = vmatprep.subr.mxu0 0.0
  %2142 = vmatpush1.msra.mxu0 0.0
  %2143 = vmatprep.subr.mxu0 0.0
  %2144 = vmatpush1.msra.mxu0 0.0
  %2145 = vmatprep.mubr.f32.mxu0 0.0
  %2146 = vmatmul.mubr.f32.gmra.mrb[0].mxu0 %v1723
  %v2147 = vpop.f32.mrb[0].mxu0
  %v2148 = vadd.f32 0.0, %v2147
  %v2149 = vpop.f32.mrb[0].mxu0
  %v2150 = vadd.f32 0.0, %v2149
  %2151 = vdwg.mxu0
  %2152 = vmatprep.subr.mxu0 %v1493
  %2153 = vmatpush1.msra.mxu0 %v1492
  %2154 = vmatprep.subr.mxu0 %v1497
  %2155 = vmatpush1.msra.mxu0 %v1496
  %2156 = vmatprep.subr.mxu0 %v1501
  %2157 = vmatpush1.msra.mxu0 %v1500
  %2158 = vmatprep.subr.mxu0 %v1505
  %2159 = vmatpush1.msra.mxu0 %v1504
  %2160 = vmatprep.subr.mxu0 %v1509
  %2161 = vmatpush1.msra.mxu0 %v1508
  %2162 = vmatprep.subr.mxu0 %v1513
  %2163 = vmatpush1.msra.mxu0 %v1512
  %2164 = vmatprep.subr.mxu0 %v1517
  %2165 = vmatpush1.msra.mxu0 %v1516
  %2166 = vmatprep.subr.mxu0 %v1521
  %2167 = vmatpush1.msra.mxu0 %v1520
  %2168 = vmatprep.subr.mxu0 %v1525
  %2169 = vmatpush1.msra.mxu0 %v1524
  %2170 = vmatprep.subr.mxu0 %v1529
  %2171 = vmatpush1.msra.mxu0 %v1528
  %2172 = vmatprep.subr.mxu0 %v1533
  %2173 = vmatpush1.msra.mxu0 %v1532
  %2174 = vmatprep.subr.mxu0 %v1537
  %2175 = vmatpush1.msra.mxu0 %v1536
  %2176 = vmatprep.subr.mxu0 %v1541
  %2177 = vmatpush1.msra.mxu0 %v1540
  %2178 = vmatprep.subr.mxu0 %v1545
  %2179 = vmatpush1.msra.mxu0 %v1544
  %2180 = vmatprep.subr.mxu0 %v1549
  %2181 = vmatpush1.msra.mxu0 %v1548
  %2182 = vmatprep.subr.mxu0 %v1553
  %2183 = vmatpush1.msra.mxu0 %v1552
  %2184 = vmatprep.subr.mxu0 0.0
  %2185 = vmatpush1.msra.mxu0 0.0
  %2186 = vmatprep.subr.mxu0 0.0
  %2187 = vmatpush1.msra.mxu0 0.0
  %2188 = vmatprep.subr.mxu0 0.0
  %2189 = vmatpush1.msra.mxu0 0.0
  %2190 = vmatprep.subr.mxu0 0.0
  %2191 = vmatpush1.msra.mxu0 0.0
  %2192 = vmatprep.subr.mxu0 0.0
  %2193 = vmatpush1.msra.mxu0 0.0
  %2194 = vmatprep.subr.mxu0 0.0
  %2195 = vmatpush1.msra.mxu0 0.0
  %2196 = vmatprep.subr.mxu0 0.0
  %2197 = vmatpush1.msra.mxu0 0.0
  %2198 = vmatprep.subr.mxu0 0.0
  %2199 = vmatpush1.msra.mxu0 0.0
  %2200 = vmatprep.subr.mxu0 0.0
  %2201 = vmatpush1.msra.mxu0 0.0
  %2202 = vmatprep.subr.mxu0 0.0
  %2203 = vmatpush1.msra.mxu0 0.0
  %2204 = vmatprep.subr.mxu0 0.0
  %2205 = vmatpush1.msra.mxu0 0.0
  %2206 = vmatprep.subr.mxu0 0.0
  %2207 = vmatpush1.msra.mxu0 0.0
  %2208 = vmatprep.subr.mxu0 0.0
  %2209 = vmatpush1.msra.mxu0 0.0
  %2210 = vmatprep.subr.mxu0 0.0
  %2211 = vmatpush1.msra.mxu0 0.0
  %2212 = vmatprep.subr.mxu0 0.0
  %2213 = vmatpush1.msra.mxu0 0.0
  %2214 = vmatprep.subr.mxu0 0.0
  %2215 = vmatpush1.msra.mxu0 0.0
  %2216 = vmatprep.mubr.f32.mxu0 0.0
  %2217 = vmatmul.mubr.f32.gmra.mrb[0].mxu0 %v1723
  %v2218 = vpop.f32.mrb[0].mxu0
  %v2219 = vadd.f32 0.0, %v2218
  %v2220 = vpop.f32.mrb[0].mxu0
  %v2221 = vadd.f32 0.0, %v2220
  %2222 = vdwg.mxu0
  %v2223 = vadd.f32 %v1907, %v2148
  %v2224 = vadd.f32 %v1908, %v2150
  %v2225 = vadd.f32 %v1909, %v2219
  %v2226 = vadd.f32 %v1910, %v2221
  %v2227 = vxor.u32 %v2223, 2147483648
  %v2228 = vmul.f32 %v2227, 1.442695
  %v2229 = vpow.pop %v2228
  %v2230 = vadd.f32 %v2229, 1.0
  %v2231 = vrcp.pop %v2230
  %v2232 = vmul.f32 1.0, %v2231
  %v2233 = vxor.u32 %v2224, 2147483648
  %v2234 = vmul.f32 %v2233, 1.442695
  %v2235 = vpow.pop %v2234
  %v2236 = vadd.f32 %v2235, 1.0
  %v2237 = vrcp.pop %v2236
  %v2238 = vmul.f32 1.0, %v2237
  %v2239 = vtanh.pop %v2225
  %v2240 = vxor.u32 %v2226, 2147483648
  %v2241 = vmul.f32 %v2240, 1.442695
  %v2242 = vpow.pop %v2241
  %v2243 = vadd.f32 %v2242, 1.0
  %v2244 = vrcp.pop %v2243
  %v2245 = vmul.f32 1.0, %v2244
  %v2246 = vmul.f32 %v2238, %v1721
  %v2247 = vmul.f32 %v2232, %v2239
  %v2248 = vadd.f32 %v2246, %v2247
  %v2249 = vtanh.pop %v2248
  %v2250 = vmul.f32 %v2245, %v2249
  %vm2251 = vcmp.gt.f32.partialorder %v2080, 0.0
  %v2252 = vmul.f32 %v2080, 0.01
  %v2253 = vsel %vm2251, %v2080, %v2252
  %vm2254 = vcmp.gt.f32.partialorder %v2250, 0.0
  %v2255 = vmul.f32 %v2250, 0.01
  %v2256 = vsel %vm2254, %v2250, %v2255
  %s2257 = scalar_lea.vmem %s9, 128
  %v2258 = vld [vmem:[%s2257] sm:$0xff]
  %v2259 = vld [vmem:[%s2257 + $0x8] sm:$0xff]
  %v2260 = vld [vmem:[%s2257 + $0x10] sm:$0xff]
  %v2261 = vld [vmem:[%s2257 + $0x18] sm:$0xff]
  %v2262 = vld [vmem:[%s2257 + $0x20] sm:$0xff]
  %v2263 = vld [vmem:[%s2257 + $0x28] sm:$0xff]
  %v2264 = vld [vmem:[%s2257 + $0x30] sm:$0xff]
  %v2265 = vld [vmem:[%s2257 + $0x38] sm:$0xff]
  %v2266 = vld [vmem:[%s2257 + $0x40] sm:$0xff]
  %v2267 = vld [vmem:[%s2257 + $0x48] sm:$0xff]
  %v2268 = vld [vmem:[%s2257 + $0x50] sm:$0xff]
  %v2269 = vld [vmem:[%s2257 + $0x58] sm:$0xff]
  %v2270 = vld [vmem:[%s2257 + $0x60] sm:$0xff]
  %v2271 = vld [vmem:[%s2257 + $0x68] sm:$0xff]
  %v2272 = vld [vmem:[%s2257 + $0x70] sm:$0xff]
  %v2273 = vld [vmem:[%s2257 + $0x78] sm:$0xff]
  %2274 = vmatprep.subr.mxu0 0.0
  %2275 = vmatpush1.msra.mxu0 %v2258
  %2276 = vmatprep.subr.mxu0 0.0
  %2277 = vmatpush1.msra.mxu0 %v2259
  %2278 = vmatprep.subr.mxu0 0.0
  %2279 = vmatpush1.msra.mxu0 %v2260
  %2280 = vmatprep.subr.mxu0 0.0
  %2281 = vmatpush1.msra.mxu0 %v2261
  %2282 = vmatprep.subr.mxu0 0.0
  %2283 = vmatpush1.msra.mxu0 %v2262
  %2284 = vmatprep.subr.mxu0 0.0
  %2285 = vmatpush1.msra.mxu0 %v2263
  %2286 = vmatprep.subr.mxu0 0.0
  %2287 = vmatpush1.msra.mxu0 %v2264
  %2288 = vmatprep.subr.mxu0 0.0
  %2289 = vmatpush1.msra.mxu0 %v2265
  %2290 = vmatprep.subr.mxu0 0.0
  %2291 = vmatpush1.msra.mxu0 %v2266
  %2292 = vmatprep.subr.mxu0 0.0
  %2293 = vmatpush1.msra.mxu0 %v2267
  %2294 = vmatprep.subr.mxu0 0.0
  %2295 = vmatpush1.msra.mxu0 %v2268
  %2296 = vmatprep.subr.mxu0 0.0
  %2297 = vmatpush1.msra.mxu0 %v2269
  %2298 = vmatprep.subr.mxu0 0.0
  %2299 = vmatpush1.msra.mxu0 %v2270
  %2300 = vmatprep.subr.mxu0 0.0
  %2301 = vmatpush1.msra.mxu0 %v2271
  %2302 = vmatprep.subr.mxu0 0.0
  %2303 = vmatpush1.msra.mxu0 %v2272
  %2304 = vmatprep.subr.mxu0 0.0
  %2305 = vmatpush1.msra.mxu0 %v2273
  %2306 = vmatprep.subr.mxu0 0.0
  %2307 = vmatpush1.msra.mxu0 0.0
  %2308 = vmatprep.subr.mxu0 0.0
  %2309 = vmatpush1.msra.mxu0 0.0
  %2310 = vmatprep.subr.mxu0 0.0
  %2311 = vmatpush1.msra.mxu0 0.0
  %2312 = vmatprep.subr.mxu0 0.0
  %2313 = vmatpush1.msra.mxu0 0.0
  %2314 = vmatprep.subr.mxu0 0.0
  %2315 = vmatpush1.msra.mxu0 0.0
  %2316 = vmatprep.subr.mxu0 0.0
  %2317 = vmatpush1.msra.mxu0 0.0
  %2318 = vmatprep.subr.mxu0 0.0
  %2319 = vmatpush1.msra.mxu0 0.0
  %2320 = vmatprep.subr.mxu0 0.0
  %2321 = vmatpush1.msra.mxu0 0.0
  %2322 = vmatprep.subr.mxu0 0.0
  %2323 = vmatpush1.msra.mxu0 0.0
  %2324 = vmatprep.subr.mxu0 0.0
  %2325 = vmatpush1.msra.mxu0 0.0
  %2326 = vmatprep.subr.mxu0 0.0
  %2327 = vmatpush1.msra.mxu0 0.0
  %2328 = vmatprep.subr.mxu0 0.0
  %2329 = vmatpush1.msra.mxu0 0.0
  %2330 = vmatprep.subr.mxu0 0.0
  %2331 = vmatpush1.msra.mxu0 0.0
  %2332 = vmatprep.subr.mxu0 0.0
  %2333 = vmatpush1.msra.mxu0 0.0
  %2334 = vmatprep.subr.mxu0 0.0
  %2335 = vmatpush1.msra.mxu0 0.0
  %2336 = vmatprep.subr.mxu0 0.0
  %2337 = vmatpush1.msra.mxu0 0.0
  %2338 = vmatprep.mubr.f32.mxu0 0.0
  %2339 = vmatmul.mubr.f32.gmra.mrb[0].mxu0 %v2253
  %v2340 = vpop.f32.mrb[0].mxu0
  %v2341 = vadd.f32 0.0, %v2340
  %v2342 = vpop.f32.mrb[0].mxu0
  %2343 = vdwg.mxu0
  %v2344 = vadd.f32 %v1900, %v2341
  %s2345 = scalar_lea.vmem %s10, 768
  %v2346 = vld [vmem:[%s2345] sm:$0xff]
  %v2347 = vld [vmem:[%s2345 + $0x8] sm:$0xff]
  %v2348 = vld [vmem:[%s2345 + $0x10] sm:$0xff]
  %v2349 = vld [vmem:[%s2345 + $0x18] sm:$0xff]
  %v2350 = vld [vmem:[%s2345 + $0x20] sm:$0xff]
  %v2351 = vld [vmem:[%s2345 + $0x28] sm:$0xff]
  %v2352 = vld [vmem:[%s2345 + $0x30] sm:$0xff]
  %v2353 = vld [vmem:[%s2345 + $0x38] sm:$0xff]
  %v2354 = vld [vmem:[%s2345 + $0x40] sm:$0xff]
  %v2355 = vld [vmem:[%s2345 + $0x48] sm:$0xff]
  %v2356 = vld [vmem:[%s2345 + $0x50] sm:$0xff]
  %v2357 = vld [vmem:[%s2345 + $0x58] sm:$0xff]
  %v2358 = vld [vmem:[%s2345 + $0x60] sm:$0xff]
  %v2359 = vld [vmem:[%s2345 + $0x68] sm:$0xff]
  %v2360 = vld [vmem:[%s2345 + $0x70] sm:$0xff]
  %v2361 = vld [vmem:[%s2345 + $0x78] sm:$0xff]
  %2362 = vmatprep.subr.mxu0 0.0
  %2363 = vmatpush1.msra.mxu0 %v2346
  %2364 = vmatprep.subr.mxu0 0.0
  %2365 = vmatpush1.msra.mxu0 %v2347
  %2366 = vmatprep.subr.mxu0 0.0
  %2367 = vmatpush1.msra.mxu0 %v2348
  %2368 = vmatprep.subr.mxu0 0.0
  %2369 = vmatpush1.msra.mxu0 %v2349
  %2370 = vmatprep.subr.mxu0 0.0
  %2371 = vmatpush1.msra.mxu0 %v2350
  %2372 = vmatprep.subr.mxu0 0.0
  %2373 = vmatpush1.msra.mxu0 %v2351
  %2374 = vmatprep.subr.mxu0 0.0
  %2375 = vmatpush1.msra.mxu0 %v2352
  %2376 = vmatprep.subr.mxu0 0.0
  %2377 = vmatpush1.msra.mxu0 %v2353
  %2378 = vmatprep.subr.mxu0 0.0
  %2379 = vmatpush1.msra.mxu0 %v2354
  %2380 = vmatprep.subr.mxu0 0.0
  %2381 = vmatpush1.msra.mxu0 %v2355
  %2382 = vmatprep.subr.mxu0 0.0
  %2383 = vmatpush1.msra.mxu0 %v2356
  %2384 = vmatprep.subr.mxu0 0.0
  %2385 = vmatpush1.msra.mxu0 %v2357
  %2386 = vmatprep.subr.mxu0 0.0
  %2387 = vmatpush1.msra.mxu0 %v2358
  %2388 = vmatprep.subr.mxu0 0.0
  %2389 = vmatpush1.msra.mxu0 %v2359
  %2390 = vmatprep.subr.mxu0 0.0
  %2391 = vmatpush1.msra.mxu0 %v2360
  %2392 = vmatprep.subr.mxu0 0.0
  %2393 = vmatpush1.msra.mxu0 %v2361
  %2394 = vmatprep.subr.mxu0 0.0
  %2395 = vmatpush1.msra.mxu0 0.0
  %2396 = vmatprep.subr.mxu0 0.0
  %2397 = vmatpush1.msra.mxu0 0.0
  %2398 = vmatprep.subr.mxu0 0.0
  %2399 = vmatpush1.msra.mxu0 0.0
  %2400 = vmatprep.subr.mxu0 0.0
  %2401 = vmatpush1.msra.mxu0 0.0
  %2402 = vmatprep.subr.mxu0 0.0
  %2403 = vmatpush1.msra.mxu0 0.0
  %2404 = vmatprep.subr.mxu0 0.0
  %2405 = vmatpush1.msra.mxu0 0.0
  %2406 = vmatprep.subr.mxu0 0.0
  %2407 = vmatpush1.msra.mxu0 0.0
  %2408 = vmatprep.subr.mxu0 0.0
  %2409 = vmatpush1.msra.mxu0 0.0
  %2410 = vmatprep.subr.mxu0 0.0
  %2411 = vmatpush1.msra.mxu0 0.0
  %2412 = vmatprep.subr.mxu0 0.0
  %2413 = vmatpush1.msra.mxu0 0.0
  %2414 = vmatprep.subr.mxu0 0.0
  %2415 = vmatpush1.msra.mxu0 0.0
  %2416 = vmatprep.subr.mxu0 0.0
  %2417 = vmatpush1.msra.mxu0 0.0
  %2418 = vmatprep.subr.mxu0 0.0
  %2419 = vmatpush1.msra.mxu0 0.0
  %2420 = vmatprep.subr.mxu0 0.0
  %2421 = vmatpush1.msra.mxu0 0.0
  %2422 = vmatprep.subr.mxu0 0.0
  %2423 = vmatpush1.msra.mxu0 0.0
  %2424 = vmatprep.subr.mxu0 0.0
  %2425 = vmatpush1.msra.mxu0 0.0
  %2426 = vmatprep.mubr.f32.mxu0 0.0
  %2427 = vmatmul.mubr.f32.gmra.mrb[0].mxu0 %v2256
  %v2428 = vpop.f32.mrb[0].mxu0
  %v2429 = vadd.f32 0.0, %v2428
  %v2430 = vpop.f32.mrb[0].mxu0
  %2431 = vdwg.mxu0
  %v2432 = vadd.f32 %v2344, %v2429
  %v2433 = vld [vmem:[#allocation2 + $0x80] sm:$0xff]
  %v2434 = vld [vmem:[#allocation2 + $0x88] sm:$0xff]
  %v2435 = vld [vmem:[#allocation2 + $0x90] sm:$0xff]
  %v2436 = vld [vmem:[#allocation2 + $0x98] sm:$0xff]
  %v2437 = vld [vmem:[#allocation2 + $0x160] sm:$0xff]
  %v2438 = vld [vmem:[#allocation2 + $0x168] sm:$0xff]
  %v2439 = vld [vmem:[#allocation2 + $0x170] sm:$0xff]
  %v2440 = vld [vmem:[#allocation2 + $0x178] sm:$0xff]
  %2441 = vmatprep.subr.mxu0 %v1257
  %2442 = vmatpush1.msra.mxu0 %v1256
  %2443 = vmatprep.subr.mxu0 %v1261
  %2444 = vmatpush1.msra.mxu0 %v1260
  %2445 = vmatprep.subr.mxu0 %v1265
  %2446 = vmatpush1.msra.mxu0 %v1264
  %2447 = vmatprep.subr.mxu0 %v1269
  %2448 = vmatpush1.msra.mxu0 %v1268
  %2449 = vmatprep.subr.mxu0 %v1273
  %2450 = vmatpush1.msra.mxu0 %v1272
  %2451 = vmatprep.subr.mxu0 %v1277
  %2452 = vmatpush1.msra.mxu0 %v1276
  %2453 = vmatprep.subr.mxu0 %v1281
  %2454 = vmatpush1.msra.mxu0 %v1280
  %2455 = vmatprep.subr.mxu0 %v1285
  %2456 = vmatpush1.msra.mxu0 %v1284
  %2457 = vmatprep.subr.mxu0 %v1289
  %2458 = vmatpush1.msra.mxu0 %v1288
  %2459 = vmatprep.subr.mxu0 %v1293
  %2460 = vmatpush1.msra.mxu0 %v1292
  %2461 = vmatprep.subr.mxu0 %v1297
  %2462 = vmatpush1.msra.mxu0 %v1296
  %2463 = vmatprep.subr.mxu0 %v1301
  %2464 = vmatpush1.msra.mxu0 %v1300
  %2465 = vmatprep.subr.mxu0 %v1305
  %2466 = vmatpush1.msra.mxu0 %v1304
  %2467 = vmatprep.subr.mxu0 %v1309
  %2468 = vmatpush1.msra.mxu0 %v1308
  %2469 = vmatprep.subr.mxu0 %v1313
  %2470 = vmatpush1.msra.mxu0 %v1312
  %2471 = vmatprep.subr.mxu0 %v1317
  %2472 = vmatpush1.msra.mxu0 %v1316
  %2473 = vmatprep.subr.mxu0 0.0
  %2474 = vmatpush1.msra.mxu0 0.0
  %2475 = vmatprep.subr.mxu0 0.0
  %2476 = vmatpush1.msra.mxu0 0.0
  %2477 = vmatprep.subr.mxu0 0.0
  %2478 = vmatpush1.msra.mxu0 0.0
  %2479 = vmatprep.subr.mxu0 0.0
  %2480 = vmatpush1.msra.mxu0 0.0
  %2481 = vmatprep.subr.mxu0 0.0
  %2482 = vmatpush1.msra.mxu0 0.0
  %2483 = vmatprep.subr.mxu0 0.0
  %2484 = vmatpush1.msra.mxu0 0.0
  %2485 = vmatprep.subr.mxu0 0.0
  %2486 = vmatpush1.msra.mxu0 0.0
  %2487 = vmatprep.subr.mxu0 0.0
  %2488 = vmatpush1.msra.mxu0 0.0
  %2489 = vmatprep.subr.mxu0 0.0
  %2490 = vmatpush1.msra.mxu0 0.0
  %2491 = vmatprep.subr.mxu0 0.0
  %2492 = vmatpush1.msra.mxu0 0.0
  %2493 = vmatprep.subr.mxu0 0.0
  %2494 = vmatpush1.msra.mxu0 0.0
  %2495 = vmatprep.subr.mxu0 0.0
  %2496 = vmatpush1.msra.mxu0 0.0
  %2497 = vmatprep.subr.mxu0 0.0
  %2498 = vmatpush1.msra.mxu0 0.0
  %2499 = vmatprep.subr.mxu0 0.0
  %2500 = vmatpush1.msra.mxu0 0.0
  %2501 = vmatprep.subr.mxu0 0.0
  %2502 = vmatpush1.msra.mxu0 0.0
  %2503 = vmatprep.subr.mxu0 0.0
  %2504 = vmatpush1.msra.mxu0 0.0
  %2505 = vmatprep.mubr.f32.mxu0 0.0
  %2506 = vmatmul.mubr.f32.gmra.mrb[0].mxu0 %v2080
  %v2507 = vpop.f32.mrb[0].mxu0
  %v2508 = vadd.f32 0.0, %v2507
  %v2509 = vpop.f32.mrb[0].mxu0
  %v2510 = vadd.f32 0.0, %v2509
  %2511 = vdwg.mxu0
  %2512 = vmatprep.subr.mxu0 %v1259
  %2513 = vmatpush1.msra.mxu0 %v1258
  %2514 = vmatprep.subr.mxu0 %v1263
  %2515 = vmatpush1.msra.mxu0 %v1262
  %2516 = vmatprep.subr.mxu0 %v1267
  %2517 = vmatpush1.msra.mxu0 %v1266
  %2518 = vmatprep.subr.mxu0 %v1271
  %2519 = vmatpush1.msra.mxu0 %v1270
  %2520 = vmatprep.subr.mxu0 %v1275
  %2521 = vmatpush1.msra.mxu0 %v1274
  %2522 = vmatprep.subr.mxu0 %v1279
  %2523 = vmatpush1.msra.mxu0 %v1278
  %2524 = vmatprep.subr.mxu0 %v1283
  %2525 = vmatpush1.msra.mxu0 %v1282
  %2526 = vmatprep.subr.mxu0 %v1287
  %2527 = vmatpush1.msra.mxu0 %v1286
  %2528 = vmatprep.subr.mxu0 %v1291
  %2529 = vmatpush1.msra.mxu0 %v1290
  %2530 = vmatprep.subr.mxu0 %v1295
  %2531 = vmatpush1.msra.mxu0 %v1294
  %2532 = vmatprep.subr.mxu0 %v1299
  %2533 = vmatpush1.msra.mxu0 %v1298
  %2534 = vmatprep.subr.mxu0 %v1303
  %2535 = vmatpush1.msra.mxu0 %v1302
  %2536 = vmatprep.subr.mxu0 %v1307
  %2537 = vmatpush1.msra.mxu0 %v1306
  %2538 = vmatprep.subr.mxu0 %v1311
  %2539 = vmatpush1.msra.mxu0 %v1310
  %2540 = vmatprep.subr.mxu0 %v1315
  %2541 = vmatpush1.msra.mxu0 %v1314
  %2542 = vmatprep.subr.mxu0 %v1319
  %2543 = vmatpush1.msra.mxu0 %v1318
  %2544 = vmatprep.subr.mxu0 0.0
  %2545 = vmatpush1.msra.mxu0 0.0
  %2546 = vmatprep.subr.mxu0 0.0
  %2547 = vmatpush1.msra.mxu0 0.0
  %2548 = vmatprep.subr.mxu0 0.0
  %2549 = vmatpush1.msra.mxu0 0.0
  %2550 = vmatprep.subr.mxu0 0.0
  %2551 = vmatpush1.msra.mxu0 0.0
  %2552 = vmatprep.subr.mxu0 0.0
  %2553 = vmatpush1.msra.mxu0 0.0
  %2554 = vmatprep.subr.mxu0 0.0
  %2555 = vmatpush1.msra.mxu0 0.0
  %2556 = vmatprep.subr.mxu0 0.0
  %2557 = vmatpush1.msra.mxu0 0.0
  %2558 = vmatprep.subr.mxu0 0.0
  %2559 = vmatpush1.msra.mxu0 0.0
  %2560 = vmatprep.subr.mxu0 0.0
  %2561 = vmatpush1.msra.mxu0 0.0
  %2562 = vmatprep.subr.mxu0 0.0
  %2563 = vmatpush1.msra.mxu0 0.0
  %2564 = vmatprep.subr.mxu0 0.0
  %2565 = vmatpush1.msra.mxu0 0.0
  %2566 = vmatprep.subr.mxu0 0.0
  %2567 = vmatpush1.msra.mxu0 0.0
  %2568 = vmatprep.subr.mxu0 0.0
  %2569 = vmatpush1.msra.mxu0 0.0
  %2570 = vmatprep.subr.mxu0 0.0
  %2571 = vmatpush1.msra.mxu0 0.0
  %2572 = vmatprep.subr.mxu0 0.0
  %2573 = vmatpush1.msra.mxu0 0.0
  %2574 = vmatprep.subr.mxu0 0.0
  %2575 = vmatpush1.msra.mxu0 0.0
  %2576 = vmatprep.mubr.f32.mxu0 0.0
  %2577 = vmatmul.mubr.f32.gmra.mrb[0].mxu0 %v2080
  %v2578 = vpop.f32.mrb[0].mxu0
  %v2579 = vadd.f32 0.0, %v2578
  %v2580 = vpop.f32.mrb[0].mxu0
  %v2581 = vadd.f32 0.0, %v2580
  %2582 = vdwg.mxu0
  %v2583 = vadd.f32 %v2433, %v2508
  %v2584 = vadd.f32 %v2434, %v2510
  %v2585 = vadd.f32 %v2435, %v2579
  %v2586 = vadd.f32 %v2436, %v2581
  %v2587 = vxor.u32 %v2583, 2147483648
  %v2588 = vmul.f32 %v2587, 1.442695
  %v2589 = vpow.pop %v2588
  %v2590 = vadd.f32 %v2589, 1.0
  %v2591 = vrcp.pop %v2590
  %v2592 = vmul.f32 1.0, %v2591
  %v2593 = vxor.u32 %v2584, 2147483648
  %v2594 = vmul.f32 %v2593, 1.442695
  %v2595 = vpow.pop %v2594
  %v2596 = vadd.f32 %v2595, 1.0
  %v2597 = vrcp.pop %v2596
  %v2598 = vmul.f32 1.0, %v2597
  %v2599 = vtanh.pop %v2585
  %v2600 = vxor.u32 %v2586, 2147483648
  %v2601 = vmul.f32 %v2600, 1.442695
  %v2602 = vpow.pop %v2601
  %v2603 = vadd.f32 %v2602, 1.0
  %v2604 = vrcp.pop %v2603
  %v2605 = vmul.f32 1.0, %v2604
  %v2606 = vmul.f32 %v2598, %v2078
  %v2607 = vmul.f32 %v2592, %v2599
  %v2608 = vadd.f32 %v2606, %v2607
  %v2609 = vtanh.pop %v2608
  %v2610 = vmul.f32 %v2605, %v2609
  %2611 = vmatprep.subr.mxu0 %v1491
  %2612 = vmatpush1.msra.mxu0 %v1490
  %2613 = vmatprep.subr.mxu0 %v1495
  %2614 = vmatpush1.msra.mxu0 %v1494
  %2615 = vmatprep.subr.mxu0 %v1499
  %2616 = vmatpush1.msra.mxu0 %v1498
  %2617 = vmatprep.subr.mxu0 %v1503
  %2618 = vmatpush1.msra.mxu0 %v1502
  %2619 = vmatprep.subr.mxu0 %v1507
  %2620 = vmatpush1.msra.mxu0 %v1506
  %2621 = vmatprep.subr.mxu0 %v1511
  %2622 = vmatpush1.msra.mxu0 %v1510
  %2623 = vmatprep.subr.mxu0 %v1515
  %2624 = vmatpush1.msra.mxu0 %v1514
  %2625 = vmatprep.subr.mxu0 %v1519
  %2626 = vmatpush1.msra.mxu0 %v1518
  %2627 = vmatprep.subr.mxu0 %v1523
  %2628 = vmatpush1.msra.mxu0 %v1522
  %2629 = vmatprep.subr.mxu0 %v1527
  %2630 = vmatpush1.msra.mxu0 %v1526
  %2631 = vmatprep.subr.mxu0 %v1531
  %2632 = vmatpush1.msra.mxu0 %v1530
  %2633 = vmatprep.subr.mxu0 %v1535
  %2634 = vmatpush1.msra.mxu0 %v1534
  %2635 = vmatprep.subr.mxu0 %v1539
  %2636 = vmatpush1.msra.mxu0 %v1538
  %2637 = vmatprep.subr.mxu0 %v1543
  %2638 = vmatpush1.msra.mxu0 %v1542
  %2639 = vmatprep.subr.mxu0 %v1547
  %2640 = vmatpush1.msra.mxu0 %v1546
  %2641 = vmatprep.subr.mxu0 %v1551
  %2642 = vmatpush1.msra.mxu0 %v1550
  %2643 = vmatprep.subr.mxu0 0.0
  %2644 = vmatpush1.msra.mxu0 0.0
  %2645 = vmatprep.subr.mxu0 0.0
  %2646 = vmatpush1.msra.mxu0 0.0
  %2647 = vmatprep.subr.mxu0 0.0
  %2648 = vmatpush1.msra.mxu0 0.0
  %2649 = vmatprep.subr.mxu0 0.0
  %2650 = vmatpush1.msra.mxu0 0.0
  %2651 = vmatprep.subr.mxu0 0.0
  %2652 = vmatpush1.msra.mxu0 0.0
  %2653 = vmatprep.subr.mxu0 0.0
  %2654 = vmatpush1.msra.mxu0 0.0
  %2655 = vmatprep.subr.mxu0 0.0
  %2656 = vmatpush1.msra.mxu0 0.0
  %2657 = vmatprep.subr.mxu0 0.0
  %2658 = vmatpush1.msra.mxu0 0.0
  %2659 = vmatprep.subr.mxu0 0.0
  %2660 = vmatpush1.msra.mxu0 0.0
  %2661 = vmatprep.subr.mxu0 0.0
  %2662 = vmatpush1.msra.mxu0 0.0
  %2663 = vmatprep.subr.mxu0 0.0
  %2664 = vmatpush1.msra.mxu0 0.0
  %2665 = vmatprep.subr.mxu0 0.0
  %2666 = vmatpush1.msra.mxu0 0.0
  %2667 = vmatprep.subr.mxu0 0.0
  %2668 = vmatpush1.msra.mxu0 0.0
  %2669 = vmatprep.subr.mxu0 0.0
  %2670 = vmatpush1.msra.mxu0 0.0
  %2671 = vmatprep.subr.mxu0 0.0
  %2672 = vmatpush1.msra.mxu0 0.0
  %2673 = vmatprep.subr.mxu0 0.0
  %2674 = vmatpush1.msra.mxu0 0.0
  %2675 = vmatprep.mubr.f32.mxu0 0.0
  %2676 = vmatmul.mubr.f32.gmra.mrb[0].mxu0 %v2250
  %v2677 = vpop.f32.mrb[0].mxu0
  %v2678 = vadd.f32 0.0, %v2677
  %v2679 = vpop.f32.mrb[0].mxu0
  %v2680 = vadd.f32 0.0, %v2679
  %2681 = vdwg.mxu0
  %2682 = vmatprep.subr.mxu0 %v1493
  %2683 = vmatpush1.msra.mxu0 %v1492
  %2684 = vmatprep.subr.mxu0 %v1497
  %2685 = vmatpush1.msra.mxu0 %v1496
  %2686 = vmatprep.subr.mxu0 %v1501
  %2687 = vmatpush1.msra.mxu0 %v1500
  %2688 = vmatprep.subr.mxu0 %v1505
  %2689 = vmatpush1.msra.mxu0 %v1504
  %2690 = vmatprep.subr.mxu0 %v1509
  %2691 = vmatpush1.msra.mxu0 %v1508
  %2692 = vmatprep.subr.mxu0 %v1513
  %2693 = vmatpush1.msra.mxu0 %v1512
  %2694 = vmatprep.subr.mxu0 %v1517
  %2695 = vmatpush1.msra.mxu0 %v1516
  %2696 = vmatprep.subr.mxu0 %v1521
  %2697 = vmatpush1.msra.mxu0 %v1520
  %2698 = vmatprep.subr.mxu0 %v1525
  %2699 = vmatpush1.msra.mxu0 %v1524
  %2700 = vmatprep.subr.mxu0 %v1529
  %2701 = vmatpush1.msra.mxu0 %v1528
  %2702 = vmatprep.subr.mxu0 %v1533
  %2703 = vmatpush1.msra.mxu0 %v1532
  %2704 = vmatprep.subr.mxu0 %v1537
  %2705 = vmatpush1.msra.mxu0 %v1536
  %2706 = vmatprep.subr.mxu0 %v1541
  %2707 = vmatpush1.msra.mxu0 %v1540
  %2708 = vmatprep.subr.mxu0 %v1545
  %2709 = vmatpush1.msra.mxu0 %v1544
  %2710 = vmatprep.subr.mxu0 %v1549
  %2711 = vmatpush1.msra.mxu0 %v1548
  %2712 = vmatprep.subr.mxu0 %v1553
  %2713 = vmatpush1.msra.mxu0 %v1552
  %2714 = vmatprep.subr.mxu0 0.0
  %2715 = vmatpush1.msra.mxu0 0.0
  %2716 = vmatprep.subr.mxu0 0.0
  %2717 = vmatpush1.msra.mxu0 0.0
  %2718 = vmatprep.subr.mxu0 0.0
  %2719 = vmatpush1.msra.mxu0 0.0
  %2720 = vmatprep.subr.mxu0 0.0
  %2721 = vmatpush1.msra.mxu0 0.0
  %2722 = vmatprep.subr.mxu0 0.0
  %2723 = vmatpush1.msra.mxu0 0.0
  %2724 = vmatprep.subr.mxu0 0.0
  %2725 = vmatpush1.msra.mxu0 0.0
  %2726 = vmatprep.subr.mxu0 0.0
  %2727 = vmatpush1.msra.mxu0 0.0
  %2728 = vmatprep.subr.mxu0 0.0
  %2729 = vmatpush1.msra.mxu0 0.0
  %2730 = vmatprep.subr.mxu0 0.0
  %2731 = vmatpush1.msra.mxu0 0.0
  %2732 = vmatprep.subr.mxu0 0.0
  %2733 = vmatpush1.msra.mxu0 0.0
  %2734 = vmatprep.subr.mxu0 0.0
  %2735 = vmatpush1.msra.mxu0 0.0
  %2736 = vmatprep.subr.mxu0 0.0
  %2737 = vmatpush1.msra.mxu0 0.0
  %2738 = vmatprep.subr.mxu0 0.0
  %2739 = vmatpush1.msra.mxu0 0.0
  %2740 = vmatprep.subr.mxu0 0.0
  %2741 = vmatpush1.msra.mxu0 0.0
  %2742 = vmatprep.subr.mxu0 0.0
  %2743 = vmatpush1.msra.mxu0 0.0
  %2744 = vmatprep.subr.mxu0 0.0
  %2745 = vmatpush1.msra.mxu0 0.0
  %2746 = vmatprep.mubr.f32.mxu0 0.0
  %2747 = vmatmul.mubr.f32.gmra.mrb[0].mxu0 %v2250
  %v2748 = vpop.f32.mrb[0].mxu0
  %v2749 = vadd.f32 0.0, %v2748
  %v2750 = vpop.f32.mrb[0].mxu0
  %v2751 = vadd.f32 0.0, %v2750
  %2752 = vdwg.mxu0
  %v2753 = vadd.f32 %v2437, %v2678
  %v2754 = vadd.f32 %v2438, %v2680
  %v2755 = vadd.f32 %v2439, %v2749
  %v2756 = vadd.f32 %v2440, %v2751
  %v2757 = vxor.u32 %v2753, 2147483648
  %v2758 = vmul.f32 %v2757, 1.442695
  %v2759 = vpow.pop %v2758
  %v2760 = vadd.f32 %v2759, 1.0
  %v2761 = vrcp.pop %v2760
  %v2762 = vmul.f32 1.0, %v2761
  %v2763 = vxor.u32 %v2754, 2147483648
  %v2764 = vmul.f32 %v2763, 1.442695
  %v2765 = vpow.pop %v2764
  %v2766 = vadd.f32 %v2765, 1.0
  %v2767 = vrcp.pop %v2766
  %v2768 = vmul.f32 1.0, %v2767
  %v2769 = vtanh.pop %v2755
  %v2770 = vxor.u32 %v2756, 2147483648
  %v2771 = vmul.f32 %v2770, 1.442695
  %v2772 = vpow.pop %v2771
  %v2773 = vadd.f32 %v2772, 1.0
  %v2774 = vrcp.pop %v2773
  %v2775 = vmul.f32 1.0, %v2774
  %v2776 = vmul.f32 %v2768, %v2248
  %v2777 = vmul.f32 %v2762, %v2769
  %v2778 = vadd.f32 %v2776, %v2777
  %v2779 = vtanh.pop %v2778
  %v2780 = vmul.f32 %v2775, %v2779
  %vm2781 = vcmp.gt.f32.partialorder %v2610, 0.0
  %v2782 = vmul.f32 %v2610, 0.01
  %v2783 = vsel %vm2781, %v2610, %v2782
  %vm2784 = vcmp.gt.f32.partialorder %v2780, 0.0
  %v2785 = vmul.f32 %v2780, 0.01
  %v2786 = vsel %vm2784, %v2780, %v2785
  %s2787 = scalar_lea.vmem %s9, 256
  %v2788 = vld [vmem:[%s2787] sm:$0xff]
  %v2789 = vld [vmem:[%s2787 + $0x8] sm:$0xff]
  %v2790 = vld [vmem:[%s2787 + $0x10] sm:$0xff]
  %v2791 = vld [vmem:[%s2787 + $0x18] sm:$0xff]
  %v2792 = vld [vmem:[%s2787 + $0x20] sm:$0xff]
  %v2793 = vld [vmem:[%s2787 + $0x28] sm:$0xff]
  %v2794 = vld [vmem:[%s2787 + $0x30] sm:$0xff]
  %v2795 = vld [vmem:[%s2787 + $0x38] sm:$0xff]
  %v2796 = vld [vmem:[%s2787 + $0x40] sm:$0xff]
  %v2797 = vld [vmem:[%s2787 + $0x48] sm:$0xff]
  %v2798 = vld [vmem:[%s2787 + $0x50] sm:$0xff]
  %v2799 = vld [vmem:[%s2787 + $0x58] sm:$0xff]
  %v2800 = vld [vmem:[%s2787 + $0x60] sm:$0xff]
  %v2801 = vld [vmem:[%s2787 + $0x68] sm:$0xff]
  %v2802 = vld [vmem:[%s2787 + $0x70] sm:$0xff]
  %v2803 = vld [vmem:[%s2787 + $0x78] sm:$0xff]
  %2804 = vmatprep.subr.mxu0 0.0
  %2805 = vmatpush1.msra.mxu0 %v2788
  %2806 = vmatprep.subr.mxu0 0.0
  %2807 = vmatpush1.msra.mxu0 %v2789
  %2808 = vmatprep.subr.mxu0 0.0
  %2809 = vmatpush1.msra.mxu0 %v2790
  %2810 = vmatprep.subr.mxu0 0.0
  %2811 = vmatpush1.msra.mxu0 %v2791
  %2812 = vmatprep.subr.mxu0 0.0
  %2813 = vmatpush1.msra.mxu0 %v2792
  %2814 = vmatprep.subr.mxu0 0.0
  %2815 = vmatpush1.msra.mxu0 %v2793
  %2816 = vmatprep.subr.mxu0 0.0
  %2817 = vmatpush1.msra.mxu0 %v2794
  %2818 = vmatprep.subr.mxu0 0.0
  %2819 = vmatpush1.msra.mxu0 %v2795
  %2820 = vmatprep.subr.mxu0 0.0
  %2821 = vmatpush1.msra.mxu0 %v2796
  %2822 = vmatprep.subr.mxu0 0.0
  %2823 = vmatpush1.msra.mxu0 %v2797
  %2824 = vmatprep.subr.mxu0 0.0
  %2825 = vmatpush1.msra.mxu0 %v2798
  %2826 = vmatprep.subr.mxu0 0.0
  %2827 = vmatpush1.msra.mxu0 %v2799
  %2828 = vmatprep.subr.mxu0 0.0
  %2829 = vmatpush1.msra.mxu0 %v2800
  %2830 = vmatprep.subr.mxu0 0.0
  %2831 = vmatpush1.msra.mxu0 %v2801
  %2832 = vmatprep.subr.mxu0 0.0
  %2833 = vmatpush1.msra.mxu0 %v2802
  %2834 = vmatprep.subr.mxu0 0.0
  %2835 = vmatpush1.msra.mxu0 %v2803
  %2836 = vmatprep.subr.mxu0 0.0
  %2837 = vmatpush1.msra.mxu0 0.0
  %2838 = vmatprep.subr.mxu0 0.0
  %2839 = vmatpush1.msra.mxu0 0.0
  %2840 = vmatprep.subr.mxu0 0.0
  %2841 = vmatpush1.msra.mxu0 0.0
  %2842 = vmatprep.subr.mxu0 0.0
  %2843 = vmatpush1.msra.mxu0 0.0
  %2844 = vmatprep.subr.mxu0 0.0
  %2845 = vmatpush1.msra.mxu0 0.0
  %2846 = vmatprep.subr.mxu0 0.0
  %2847 = vmatpush1.msra.mxu0 0.0
  %2848 = vmatprep.subr.mxu0 0.0
  %2849 = vmatpush1.msra.mxu0 0.0
  %2850 = vmatprep.subr.mxu0 0.0
  %2851 = vmatpush1.msra.mxu0 0.0
  %2852 = vmatprep.subr.mxu0 0.0
  %2853 = vmatpush1.msra.mxu0 0.0
  %2854 = vmatprep.subr.mxu0 0.0
  %2855 = vmatpush1.msra.mxu0 0.0
  %2856 = vmatprep.subr.mxu0 0.0
  %2857 = vmatpush1.msra.mxu0 0.0
  %2858 = vmatprep.subr.mxu0 0.0
  %2859 = vmatpush1.msra.mxu0 0.0
  %2860 = vmatprep.subr.mxu0 0.0
  %2861 = vmatpush1.msra.mxu0 0.0
  %2862 = vmatprep.subr.mxu0 0.0
  %2863 = vmatpush1.msra.mxu0 0.0
  %2864 = vmatprep.subr.mxu0 0.0
  %2865 = vmatpush1.msra.mxu0 0.0
  %2866 = vmatprep.subr.mxu0 0.0
  %2867 = vmatpush1.msra.mxu0 0.0
  %2868 = vmatprep.mubr.f32.mxu0 0.0
  %2869 = vmatmul.mubr.f32.gmra.mrb[0].mxu0 %v2783
  %v2870 = vpop.f32.mrb[0].mxu0
  %v2871 = vadd.f32 0.0, %v2870
  %v2872 = vpop.f32.mrb[0].mxu0
  %2873 = vdwg.mxu0
  %v2874 = vadd.f32 %v2432, %v2871
  %s2875 = scalar_lea.vmem %s10, 640
  %v2876 = vld [vmem:[%s2875] sm:$0xff]
  %v2877 = vld [vmem:[%s2875 + $0x8] sm:$0xff]
  %v2878 = vld [vmem:[%s2875 + $0x10] sm:$0xff]
  %v2879 = vld [vmem:[%s2875 + $0x18] sm:$0xff]
  %v2880 = vld [vmem:[%s2875 + $0x20] sm:$0xff]
  %v2881 = vld [vmem:[%s2875 + $0x28] sm:$0xff]
  %v2882 = vld [vmem:[%s2875 + $0x30] sm:$0xff]
  %v2883 = vld [vmem:[%s2875 + $0x38] sm:$0xff]
  %v2884 = vld [vmem:[%s2875 + $0x40] sm:$0xff]
  %v2885 = vld [vmem:[%s2875 + $0x48] sm:$0xff]
  %v2886 = vld [vmem:[%s2875 + $0x50] sm:$0xff]
  %v2887 = vld [vmem:[%s2875 + $0x58] sm:$0xff]
  %v2888 = vld [vmem:[%s2875 + $0x60] sm:$0xff]
  %v2889 = vld [vmem:[%s2875 + $0x68] sm:$0xff]
  %v2890 = vld [vmem:[%s2875 + $0x70] sm:$0xff]
  %v2891 = vld [vmem:[%s2875 + $0x78] sm:$0xff]
  %2892 = vmatprep.subr.mxu0 0.0
  %2893 = vmatpush1.msra.mxu0 %v2876
  %2894 = vmatprep.subr.mxu0 0.0
  %2895 = vmatpush1.msra.mxu0 %v2877
  %2896 = vmatprep.subr.mxu0 0.0
  %2897 = vmatpush1.msra.mxu0 %v2878
  %2898 = vmatprep.subr.mxu0 0.0
  %2899 = vmatpush1.msra.mxu0 %v2879
  %2900 = vmatprep.subr.mxu0 0.0
  %2901 = vmatpush1.msra.mxu0 %v2880
  %2902 = vmatprep.subr.mxu0 0.0
  %2903 = vmatpush1.msra.mxu0 %v2881
  %2904 = vmatprep.subr.mxu0 0.0
  %2905 = vmatpush1.msra.mxu0 %v2882
  %2906 = vmatprep.subr.mxu0 0.0
  %2907 = vmatpush1.msra.mxu0 %v2883
  %2908 = vmatprep.subr.mxu0 0.0
  %2909 = vmatpush1.msra.mxu0 %v2884
  %2910 = vmatprep.subr.mxu0 0.0
  %2911 = vmatpush1.msra.mxu0 %v2885
  %2912 = vmatprep.subr.mxu0 0.0
  %2913 = vmatpush1.msra.mxu0 %v2886
  %2914 = vmatprep.subr.mxu0 0.0
  %2915 = vmatpush1.msra.mxu0 %v2887
  %2916 = vmatprep.subr.mxu0 0.0
  %2917 = vmatpush1.msra.mxu0 %v2888
  %2918 = vmatprep.subr.mxu0 0.0
  %2919 = vmatpush1.msra.mxu0 %v2889
  %2920 = vmatprep.subr.mxu0 0.0
  %2921 = vmatpush1.msra.mxu0 %v2890
  %2922 = vmatprep.subr.mxu0 0.0
  %2923 = vmatpush1.msra.mxu0 %v2891
  %2924 = vmatprep.subr.mxu0 0.0
  %2925 = vmatpush1.msra.mxu0 0.0
  %2926 = vmatprep.subr.mxu0 0.0
  %2927 = vmatpush1.msra.mxu0 0.0
  %2928 = vmatprep.subr.mxu0 0.0
  %2929 = vmatpush1.msra.mxu0 0.0
  %2930 = vmatprep.subr.mxu0 0.0
  %2931 = vmatpush1.msra.mxu0 0.0
  %2932 = vmatprep.subr.mxu0 0.0
  %2933 = vmatpush1.msra.mxu0 0.0
  %2934 = vmatprep.subr.mxu0 0.0
  %2935 = vmatpush1.msra.mxu0 0.0
  %2936 = vmatprep.subr.mxu0 0.0
  %2937 = vmatpush1.msra.mxu0 0.0
  %2938 = vmatprep.subr.mxu0 0.0
  %2939 = vmatpush1.msra.mxu0 0.0
  %2940 = vmatprep.subr.mxu0 0.0
  %2941 = vmatpush1.msra.mxu0 0.0
  %2942 = vmatprep.subr.mxu0 0.0
  %2943 = vmatpush1.msra.mxu0 0.0
  %2944 = vmatprep.subr.mxu0 0.0
  %2945 = vmatpush1.msra.mxu0 0.0
  %2946 = vmatprep.subr.mxu0 0.0
  %2947 = vmatpush1.msra.mxu0 0.0
  %2948 = vmatprep.subr.mxu0 0.0
  %2949 = vmatpush1.msra.mxu0 0.0
  %2950 = vmatprep.subr.mxu0 0.0
  %2951 = vmatpush1.msra.mxu0 0.0
  %2952 = vmatprep.subr.mxu0 0.0
  %2953 = vmatpush1.msra.mxu0 0.0
  %2954 = vmatprep.subr.mxu0 0.0
  %2955 = vmatpush1.msra.mxu0 0.0
  %2956 = vmatprep.mubr.f32.mxu0 0.0
  %2957 = vmatmul.mubr.f32.gmra.mrb[0].mxu0 %v2786
  %v2958 = vpop.f32.mrb[0].mxu0
  %v2959 = vadd.f32 0.0, %v2958
  %v2960 = vpop.f32.mrb[0].mxu0
  %2961 = vdwg.mxu0
  %v2962 = vadd.f32 %v2874, %v2959
  %v2963 = vld [vmem:[#allocation2 + $0xc0] sm:$0xff]
  %v2964 = vld [vmem:[#allocation2 + $0xc8] sm:$0xff]
  %v2965 = vld [vmem:[#allocation2 + $0xd0] sm:$0xff]
  %v2966 = vld [vmem:[#allocation2 + $0xd8] sm:$0xff]
  %v2967 = vld [vmem:[#allocation2 + $0x120] sm:$0xff]
  %v2968 = vld [vmem:[#allocation2 + $0x128] sm:$0xff]
  %v2969 = vld [vmem:[#allocation2 + $0x130] sm:$0xff]
  %v2970 = vld [vmem:[#allocation2 + $0x138] sm:$0xff]
  %2971 = vmatprep.subr.mxu0 %v1257
  %2972 = vmatpush1.msra.mxu0 %v1256
  %2973 = vmatprep.subr.mxu0 %v1261
  %2974 = vmatpush1.msra.mxu0 %v1260
  %2975 = vmatprep.subr.mxu0 %v1265
  %2976 = vmatpush1.msra.mxu0 %v1264
  %2977 = vmatprep.subr.mxu0 %v1269
  %2978 = vmatpush1.msra.mxu0 %v1268
  %2979 = vmatprep.subr.mxu0 %v1273
  %2980 = vmatpush1.msra.mxu0 %v1272
  %2981 = vmatprep.subr.mxu0 %v1277
  %2982 = vmatpush1.msra.mxu0 %v1276
  %2983 = vmatprep.subr.mxu0 %v1281
  %2984 = vmatpush1.msra.mxu0 %v1280
  %2985 = vmatprep.subr.mxu0 %v1285
  %2986 = vmatpush1.msra.mxu0 %v1284
  %2987 = vmatprep.subr.mxu0 %v1289
  %2988 = vmatpush1.msra.mxu0 %v1288
  %2989 = vmatprep.subr.mxu0 %v1293
  %2990 = vmatpush1.msra.mxu0 %v1292
  %2991 = vmatprep.subr.mxu0 %v1297
  %2992 = vmatpush1.msra.mxu0 %v1296
  %2993 = vmatprep.subr.mxu0 %v1301
  %2994 = vmatpush1.msra.mxu0 %v1300
  %2995 = vmatprep.subr.mxu0 %v1305
  %2996 = vmatpush1.msra.mxu0 %v1304
  %2997 = vmatprep.subr.mxu0 %v1309
  %2998 = vmatpush1.msra.mxu0 %v1308
  %2999 = vmatprep.subr.mxu0 %v1313
  %3000 = vmatpush1.msra.mxu0 %v1312
  %3001 = vmatprep.subr.mxu0 %v1317
  %3002 = vmatpush1.msra.mxu0 %v1316
  %3003 = vmatprep.subr.mxu0 0.0
  %3004 = vmatpush1.msra.mxu0 0.0
  %3005 = vmatprep.subr.mxu0 0.0
  %3006 = vmatpush1.msra.mxu0 0.0
  %3007 = vmatprep.subr.mxu0 0.0
  %3008 = vmatpush1.msra.mxu0 0.0
  %3009 = vmatprep.subr.mxu0 0.0
  %3010 = vmatpush1.msra.mxu0 0.0
  %3011 = vmatprep.subr.mxu0 0.0
  %3012 = vmatpush1.msra.mxu0 0.0
  %3013 = vmatprep.subr.mxu0 0.0
  %3014 = vmatpush1.msra.mxu0 0.0
  %3015 = vmatprep.subr.mxu0 0.0
  %3016 = vmatpush1.msra.mxu0 0.0
  %3017 = vmatprep.subr.mxu0 0.0
  %3018 = vmatpush1.msra.mxu0 0.0
  %3019 = vmatprep.subr.mxu0 0.0
  %3020 = vmatpush1.msra.mxu0 0.0
  %3021 = vmatprep.subr.mxu0 0.0
  %3022 = vmatpush1.msra.mxu0 0.0
  %3023 = vmatprep.subr.mxu0 0.0
  %3024 = vmatpush1.msra.mxu0 0.0
  %3025 = vmatprep.subr.mxu0 0.0
  %3026 = vmatpush1.msra.mxu0 0.0
  %3027 = vmatprep.subr.mxu0 0.0
  %3028 = vmatpush1.msra.mxu0 0.0
  %3029 = vmatprep.subr.mxu0 0.0
  %3030 = vmatpush1.msra.mxu0 0.0
  %3031 = vmatprep.subr.mxu0 0.0
  %3032 = vmatpush1.msra.mxu0 0.0
  %3033 = vmatprep.subr.mxu0 0.0
  %3034 = vmatpush1.msra.mxu0 0.0
  %3035 = vmatprep.mubr.f32.mxu0 0.0
  %3036 = vmatmul.mubr.f32.gmra.mrb[0].mxu0 %v2610
  %v3037 = vpop.f32.mrb[0].mxu0
  %v3038 = vadd.f32 0.0, %v3037
  %v3039 = vpop.f32.mrb[0].mxu0
  %v3040 = vadd.f32 0.0, %v3039
  %3041 = vdwg.mxu0
  %3042 = vmatprep.subr.mxu0 %v1259
  %3043 = vmatpush1.msra.mxu0 %v1258
  %3044 = vmatprep.subr.mxu0 %v1263
  %3045 = vmatpush1.msra.mxu0 %v1262
  %3046 = vmatprep.subr.mxu0 %v1267
  %3047 = vmatpush1.msra.mxu0 %v1266
  %3048 = vmatprep.subr.mxu0 %v1271
  %3049 = vmatpush1.msra.mxu0 %v1270
  %3050 = vmatprep.subr.mxu0 %v1275
  %3051 = vmatpush1.msra.mxu0 %v1274
  %3052 = vmatprep.subr.mxu0 %v1279
  %3053 = vmatpush1.msra.mxu0 %v1278
  %3054 = vmatprep.subr.mxu0 %v1283
  %3055 = vmatpush1.msra.mxu0 %v1282
  %3056 = vmatprep.subr.mxu0 %v1287
  %3057 = vmatpush1.msra.mxu0 %v1286
  %3058 = vmatprep.subr.mxu0 %v1291
  %3059 = vmatpush1.msra.mxu0 %v1290
  %3060 = vmatprep.subr.mxu0 %v1295
  %3061 = vmatpush1.msra.mxu0 %v1294
  %3062 = vmatprep.subr.mxu0 %v1299
  %3063 = vmatpush1.msra.mxu0 %v1298
  %3064 = vmatprep.subr.mxu0 %v1303
  %3065 = vmatpush1.msra.mxu0 %v1302
  %3066 = vmatprep.subr.mxu0 %v1307
  %3067 = vmatpush1.msra.mxu0 %v1306
  %3068 = vmatprep.subr.mxu0 %v1311
  %3069 = vmatpush1.msra.mxu0 %v1310
  %3070 = vmatprep.subr.mxu0 %v1315
  %3071 = vmatpush1.msra.mxu0 %v1314
  %3072 = vmatprep.subr.mxu0 %v1319
  %3073 = vmatpush1.msra.mxu0 %v1318
  %3074 = vmatprep.subr.mxu0 0.0
  %3075 = vmatpush1.msra.mxu0 0.0
  %3076 = vmatprep.subr.mxu0 0.0
  %3077 = vmatpush1.msra.mxu0 0.0
  %3078 = vmatprep.subr.mxu0 0.0
  %3079 = vmatpush1.msra.mxu0 0.0
  %3080 = vmatprep.subr.mxu0 0.0
  %3081 = vmatpush1.msra.mxu0 0.0
  %3082 = vmatprep.subr.mxu0 0.0
  %3083 = vmatpush1.msra.mxu0 0.0
  %3084 = vmatprep.subr.mxu0 0.0
  %3085 = vmatpush1.msra.mxu0 0.0
  %3086 = vmatprep.subr.mxu0 0.0
  %3087 = vmatpush1.msra.mxu0 0.0
  %3088 = vmatprep.subr.mxu0 0.0
  %3089 = vmatpush1.msra.mxu0 0.0
  %3090 = vmatprep.subr.mxu0 0.0
  %3091 = vmatpush1.msra.mxu0 0.0
  %3092 = vmatprep.subr.mxu0 0.0
  %3093 = vmatpush1.msra.mxu0 0.0
  %3094 = vmatprep.subr.mxu0 0.0
  %3095 = vmatpush1.msra.mxu0 0.0
  %3096 = vmatprep.subr.mxu0 0.0
  %3097 = vmatpush1.msra.mxu0 0.0
  %3098 = vmatprep.subr.mxu0 0.0
  %3099 = vmatpush1.msra.mxu0 0.0
  %3100 = vmatprep.subr.mxu0 0.0
  %3101 = vmatpush1.msra.mxu0 0.0
  %3102 = vmatprep.subr.mxu0 0.0
  %3103 = vmatpush1.msra.mxu0 0.0
  %3104 = vmatprep.subr.mxu0 0.0
  %3105 = vmatpush1.msra.mxu0 0.0
  %3106 = vmatprep.mubr.f32.mxu0 0.0
  %3107 = vmatmul.mubr.f32.gmra.mrb[0].mxu0 %v2610
  %v3108 = vpop.f32.mrb[0].mxu0
  %v3109 = vadd.f32 0.0, %v3108
  %v3110 = vpop.f32.mrb[0].mxu0
  %v3111 = vadd.f32 0.0, %v3110
  %3112 = vdwg.mxu0
  %v3113 = vadd.f32 %v2963, %v3038
  %v3114 = vadd.f32 %v2964, %v3040
  %v3115 = vadd.f32 %v2965, %v3109
  %v3116 = vadd.f32 %v2966, %v3111
  %v3117 = vxor.u32 %v3113, 2147483648
  %v3118 = vmul.f32 %v3117, 1.442695
  %v3119 = vpow.pop %v3118
  %v3120 = vadd.f32 %v3119, 1.0
  %v3121 = vrcp.pop %v3120
  %v3122 = vmul.f32 1.0, %v3121
  %v3123 = vxor.u32 %v3114, 2147483648
  %v3124 = vmul.f32 %v3123, 1.442695
  %v3125 = vpow.pop %v3124
  %v3126 = vadd.f32 %v3125, 1.0
  %v3127 = vrcp.pop %v3126
  %v3128 = vmul.f32 1.0, %v3127
  %v3129 = vtanh.pop %v3115
  %v3130 = vxor.u32 %v3116, 2147483648
  %v3131 = vmul.f32 %v3130, 1.442695
  %v3132 = vpow.pop %v3131
  %v3133 = vadd.f32 %v3132, 1.0
  %v3134 = vrcp.pop %v3133
  %v3135 = vmul.f32 1.0, %v3134
  %v3136 = vmul.f32 %v3128, %v2608
  %v3137 = vmul.f32 %v3122, %v3129
  %v3138 = vadd.f32 %v3136, %v3137
  %v3139 = vtanh.pop %v3138
  %v3140 = vmul.f32 %v3135, %v3139
  %3141 = vmatprep.subr.mxu0 %v1491
  %3142 = vmatpush1.msra.mxu0 %v1490
  %3143 = vmatprep.subr.mxu0 %v1495
  %3144 = vmatpush1.msra.mxu0 %v1494
  %3145 = vmatprep.subr.mxu0 %v1499
  %3146 = vmatpush1.msra.mxu0 %v1498
  %3147 = vmatprep.subr.mxu0 %v1503
  %3148 = vmatpush1.msra.mxu0 %v1502
  %3149 = vmatprep.subr.mxu0 %v1507
  %3150 = vmatpush1.msra.mxu0 %v1506
  %3151 = vmatprep.subr.mxu0 %v1511
  %3152 = vmatpush1.msra.mxu0 %v1510
  %3153 = vmatprep.subr.mxu0 %v1515
  %3154 = vmatpush1.msra.mxu0 %v1514
  %3155 = vmatprep.subr.mxu0 %v1519
  %3156 = vmatpush1.msra.mxu0 %v1518
  %3157 = vmatprep.subr.mxu0 %v1523
  %3158 = vmatpush1.msra.mxu0 %v1522
  %3159 = vmatprep.subr.mxu0 %v1527
  %3160 = vmatpush1.msra.mxu0 %v1526
  %3161 = vmatprep.subr.mxu0 %v1531
  %3162 = vmatpush1.msra.mxu0 %v1530
  %3163 = vmatprep.subr.mxu0 %v1535
  %3164 = vmatpush1.msra.mxu0 %v1534
  %3165 = vmatprep.subr.mxu0 %v1539
  %3166 = vmatpush1.msra.mxu0 %v1538
  %3167 = vmatprep.subr.mxu0 %v1543
  %3168 = vmatpush1.msra.mxu0 %v1542
  %3169 = vmatprep.subr.mxu0 %v1547
  %3170 = vmatpush1.msra.mxu0 %v1546
  %3171 = vmatprep.subr.mxu0 %v1551
  %3172 = vmatpush1.msra.mxu0 %v1550
  %3173 = vmatprep.subr.mxu0 0.0
  %3174 = vmatpush1.msra.mxu0 0.0
  %3175 = vmatprep.subr.mxu0 0.0
  %3176 = vmatpush1.msra.mxu0 0.0
  %3177 = vmatprep.subr.mxu0 0.0
  %3178 = vmatpush1.msra.mxu0 0.0
  %3179 = vmatprep.subr.mxu0 0.0
  %3180 = vmatpush1.msra.mxu0 0.0
  %3181 = vmatprep.subr.mxu0 0.0
  %3182 = vmatpush1.msra.mxu0 0.0
  %3183 = vmatprep.subr.mxu0 0.0
  %3184 = vmatpush1.msra.mxu0 0.0
  %3185 = vmatprep.subr.mxu0 0.0
  %3186 = vmatpush1.msra.mxu0 0.0
  %3187 = vmatprep.subr.mxu0 0.0
  %3188 = vmatpush1.msra.mxu0 0.0
  %3189 = vmatprep.subr.mxu0 0.0
  %3190 = vmatpush1.msra.mxu0 0.0
  %3191 = vmatprep.subr.mxu0 0.0
  %3192 = vmatpush1.msra.mxu0 0.0
  %3193 = vmatprep.subr.mxu0 0.0
  %3194 = vmatpush1.msra.mxu0 0.0
  %3195 = vmatprep.subr.mxu0 0.0
  %3196 = vmatpush1.msra.mxu0 0.0
  %3197 = vmatprep.subr.mxu0 0.0
  %3198 = vmatpush1.msra.mxu0 0.0
  %3199 = vmatprep.subr.mxu0 0.0
  %3200 = vmatpush1.msra.mxu0 0.0
  %3201 = vmatprep.subr.mxu0 0.0
  %3202 = vmatpush1.msra.mxu0 0.0
  %3203 = vmatprep.subr.mxu0 0.0
  %3204 = vmatpush1.msra.mxu0 0.0
  %3205 = vmatprep.mubr.f32.mxu0 0.0
  %3206 = vmatmul.mubr.f32.gmra.mrb[0].mxu0 %v2780
  %v3207 = vpop.f32.mrb[0].mxu0
  %v3208 = vadd.f32 0.0, %v3207
  %v3209 = vpop.f32.mrb[0].mxu0
  %v3210 = vadd.f32 0.0, %v3209
  %3211 = vdwg.mxu0
  %3212 = vmatprep.subr.mxu0 %v1493
  %3213 = vmatpush1.msra.mxu0 %v1492
  %3214 = vmatprep.subr.mxu0 %v1497
  %3215 = vmatpush1.msra.mxu0 %v1496
  %3216 = vmatprep.subr.mxu0 %v1501
  %3217 = vmatpush1.msra.mxu0 %v1500
  %3218 = vmatprep.subr.mxu0 %v1505
  %3219 = vmatpush1.msra.mxu0 %v1504
  %3220 = vmatprep.subr.mxu0 %v1509
  %3221 = vmatpush1.msra.mxu0 %v1508
  %3222 = vmatprep.subr.mxu0 %v1513
  %3223 = vmatpush1.msra.mxu0 %v1512
  %3224 = vmatprep.subr.mxu0 %v1517
  %3225 = vmatpush1.msra.mxu0 %v1516
  %3226 = vmatprep.subr.mxu0 %v1521
  %3227 = vmatpush1.msra.mxu0 %v1520
  %3228 = vmatprep.subr.mxu0 %v1525
  %3229 = vmatpush1.msra.mxu0 %v1524
  %3230 = vmatprep.subr.mxu0 %v1529
  %3231 = vmatpush1.msra.mxu0 %v1528
  %3232 = vmatprep.subr.mxu0 %v1533
  %3233 = vmatpush1.msra.mxu0 %v1532
  %3234 = vmatprep.subr.mxu0 %v1537
  %3235 = vmatpush1.msra.mxu0 %v1536
  %3236 = vmatprep.subr.mxu0 %v1541
  %3237 = vmatpush1.msra.mxu0 %v1540
  %3238 = vmatprep.subr.mxu0 %v1545
  %3239 = vmatpush1.msra.mxu0 %v1544
  %3240 = vmatprep.subr.mxu0 %v1549
  %3241 = vmatpush1.msra.mxu0 %v1548
  %3242 = vmatprep.subr.mxu0 %v1553
  %3243 = vmatpush1.msra.mxu0 %v1552
  %3244 = vmatprep.subr.mxu0 0.0
  %3245 = vmatpush1.msra.mxu0 0.0
  %3246 = vmatprep.subr.mxu0 0.0
  %3247 = vmatpush1.msra.mxu0 0.0
  %3248 = vmatprep.subr.mxu0 0.0
  %3249 = vmatpush1.msra.mxu0 0.0
  %3250 = vmatprep.subr.mxu0 0.0
  %3251 = vmatpush1.msra.mxu0 0.0
  %3252 = vmatprep.subr.mxu0 0.0
  %3253 = vmatpush1.msra.mxu0 0.0
  %3254 = vmatprep.subr.mxu0 0.0
  %3255 = vmatpush1.msra.mxu0 0.0
  %3256 = vmatprep.subr.mxu0 0.0
  %3257 = vmatpush1.msra.mxu0 0.0
  %3258 = vmatprep.subr.mxu0 0.0
  %3259 = vmatpush1.msra.mxu0 0.0
  %3260 = vmatprep.subr.mxu0 0.0
  %3261 = vmatpush1.msra.mxu0 0.0
  %3262 = vmatprep.subr.mxu0 0.0
  %3263 = vmatpush1.msra.mxu0 0.0
  %3264 = vmatprep.subr.mxu0 0.0
  %3265 = vmatpush1.msra.mxu0 0.0
  %3266 = vmatprep.subr.mxu0 0.0
  %3267 = vmatpush1.msra.mxu0 0.0
  %3268 = vmatprep.subr.mxu0 0.0
  %3269 = vmatpush1.msra.mxu0 0.0
  %3270 = vmatprep.subr.mxu0 0.0
  %3271 = vmatpush1.msra.mxu0 0.0
  %3272 = vmatprep.subr.mxu0 0.0
  %3273 = vmatpush1.msra.mxu0 0.0
  %3274 = vmatprep.subr.mxu0 0.0
  %3275 = vmatpush1.msra.mxu0 0.0
  %3276 = vmatprep.mubr.f32.mxu0 0.0
  %3277 = vmatmul.mubr.f32.gmra.mrb[0].mxu0 %v2780
  %v3278 = vpop.f32.mrb[0].mxu0
  %v3279 = vadd.f32 0.0, %v3278
  %v3280 = vpop.f32.mrb[0].mxu0
  %v3281 = vadd.f32 0.0, %v3280
  %3282 = vdwg.mxu0
  %v3283 = vadd.f32 %v2967, %v3208
  %v3284 = vadd.f32 %v2968, %v3210
  %v3285 = vadd.f32 %v2969, %v3279
  %v3286 = vadd.f32 %v2970, %v3281
  %v3287 = vxor.u32 %v3283, 2147483648
  %v3288 = vmul.f32 %v3287, 1.442695
  %v3289 = vpow.pop %v3288
  %v3290 = vadd.f32 %v3289, 1.0
  %v3291 = vrcp.pop %v3290
  %v3292 = vmul.f32 1.0, %v3291
  %v3293 = vxor.u32 %v3284, 2147483648
  %v3294 = vmul.f32 %v3293, 1.442695
  %v3295 = vpow.pop %v3294
  %v3296 = vadd.f32 %v3295, 1.0
  %v3297 = vrcp.pop %v3296
  %v3298 = vmul.f32 1.0, %v3297
  %v3299 = vtanh.pop %v3285
  %v3300 = vxor.u32 %v3286, 2147483648
  %v3301 = vmul.f32 %v3300, 1.442695
  %v3302 = vpow.pop %v3301
  %v3303 = vadd.f32 %v3302, 1.0
  %v3304 = vrcp.pop %v3303
  %v3305 = vmul.f32 1.0, %v3304
  %v3306 = vmul.f32 %v3298, %v2778
  %v3307 = vmul.f32 %v3292, %v3299
  %v3308 = vadd.f32 %v3306, %v3307
  %v3309 = vtanh.pop %v3308
  %v3310 = vmul.f32 %v3305, %v3309
  %vm3311 = vcmp.gt.f32.partialorder %v3140, 0.0
  %v3312 = vmul.f32 %v3140, 0.01
  %v3313 = vsel %vm3311, %v3140, %v3312
  %vm3314 = vcmp.gt.f32.partialorder %v3310, 0.0
  %v3315 = vmul.f32 %v3310, 0.01
  %v3316 = vsel %vm3314, %v3310, %v3315
  %s3317 = scalar_lea.vmem %s9, 384
  %v3318 = vld [vmem:[%s3317] sm:$0xff]
  %v3319 = vld [vmem:[%s3317 + $0x8] sm:$0xff]
  %v3320 = vld [vmem:[%s3317 + $0x10] sm:$0xff]
  %v3321 = vld [vmem:[%s3317 + $0x18] sm:$0xff]
  %v3322 = vld [vmem:[%s3317 + $0x20] sm:$0xff]
  %v3323 = vld [vmem:[%s3317 + $0x28] sm:$0xff]
  %v3324 = vld [vmem:[%s3317 + $0x30] sm:$0xff]
  %v3325 = vld [vmem:[%s3317 + $0x38] sm:$0xff]
  %v3326 = vld [vmem:[%s3317 + $0x40] sm:$0xff]
  %v3327 = vld [vmem:[%s3317 + $0x48] sm:$0xff]
  %v3328 = vld [vmem:[%s3317 + $0x50] sm:$0xff]
  %v3329 = vld [vmem:[%s3317 + $0x58] sm:$0xff]
  %v3330 = vld [vmem:[%s3317 + $0x60] sm:$0xff]
  %v3331 = vld [vmem:[%s3317 + $0x68] sm:$0xff]
  %v3332 = vld [vmem:[%s3317 + $0x70] sm:$0xff]
  %v3333 = vld [vmem:[%s3317 + $0x78] sm:$0xff]
  %3334 = vmatprep.subr.mxu0 0.0
  %3335 = vmatpush1.msra.mxu0 %v3318
  %3336 = vmatprep.subr.mxu0 0.0
  %3337 = vmatpush1.msra.mxu0 %v3319
  %3338 = vmatprep.subr.mxu0 0.0
  %3339 = vmatpush1.msra.mxu0 %v3320
  %3340 = vmatprep.subr.mxu0 0.0
  %3341 = vmatpush1.msra.mxu0 %v3321
  %3342 = vmatprep.subr.mxu0 0.0
  %3343 = vmatpush1.msra.mxu0 %v3322
  %3344 = vmatprep.subr.mxu0 0.0
  %3345 = vmatpush1.msra.mxu0 %v3323
  %3346 = vmatprep.subr.mxu0 0.0
  %3347 = vmatpush1.msra.mxu0 %v3324
  %3348 = vmatprep.subr.mxu0 0.0
  %3349 = vmatpush1.msra.mxu0 %v3325
  %3350 = vmatprep.subr.mxu0 0.0
  %3351 = vmatpush1.msra.mxu0 %v3326
  %3352 = vmatprep.subr.mxu0 0.0
  %3353 = vmatpush1.msra.mxu0 %v3327
  %3354 = vmatprep.subr.mxu0 0.0
  %3355 = vmatpush1.msra.mxu0 %v3328
  %3356 = vmatprep.subr.mxu0 0.0
  %3357 = vmatpush1.msra.mxu0 %v3329
  %3358 = vmatprep.subr.mxu0 0.0
  %3359 = vmatpush1.msra.mxu0 %v3330
  %3360 = vmatprep.subr.mxu0 0.0
  %3361 = vmatpush1.msra.mxu0 %v3331
  %3362 = vmatprep.subr.mxu0 0.0
  %3363 = vmatpush1.msra.mxu0 %v3332
  %3364 = vmatprep.subr.mxu0 0.0
  %3365 = vmatpush1.msra.mxu0 %v3333
  %3366 = vmatprep.subr.mxu0 0.0
  %3367 = vmatpush1.msra.mxu0 0.0
  %3368 = vmatprep.subr.mxu0 0.0
  %3369 = vmatpush1.msra.mxu0 0.0
  %3370 = vmatprep.subr.mxu0 0.0
  %3371 = vmatpush1.msra.mxu0 0.0
  %3372 = vmatprep.subr.mxu0 0.0
  %3373 = vmatpush1.msra.mxu0 0.0
  %3374 = vmatprep.subr.mxu0 0.0
  %3375 = vmatpush1.msra.mxu0 0.0
  %3376 = vmatprep.subr.mxu0 0.0
  %3377 = vmatpush1.msra.mxu0 0.0
  %3378 = vmatprep.subr.mxu0 0.0
  %3379 = vmatpush1.msra.mxu0 0.0
  %3380 = vmatprep.subr.mxu0 0.0
  %3381 = vmatpush1.msra.mxu0 0.0
  %3382 = vmatprep.subr.mxu0 0.0
  %3383 = vmatpush1.msra.mxu0 0.0
  %3384 = vmatprep.subr.mxu0 0.0
  %3385 = vmatpush1.msra.mxu0 0.0
  %3386 = vmatprep.subr.mxu0 0.0
  %3387 = vmatpush1.msra.mxu0 0.0
  %3388 = vmatprep.subr.mxu0 0.0
  %3389 = vmatpush1.msra.mxu0 0.0
  %3390 = vmatprep.subr.mxu0 0.0
  %3391 = vmatpush1.msra.mxu0 0.0
  %3392 = vmatprep.subr.mxu0 0.0
  %3393 = vmatpush1.msra.mxu0 0.0
  %3394 = vmatprep.subr.mxu0 0.0
  %3395 = vmatpush1.msra.mxu0 0.0
  %3396 = vmatprep.subr.mxu0 0.0
  %3397 = vmatpush1.msra.mxu0 0.0
  %3398 = vmatprep.mubr.f32.mxu0 0.0
  %3399 = vmatmul.mubr.f32.gmra.mrb[0].mxu0 %v3313
  %v3400 = vpop.f32.mrb[0].mxu0
  %v3401 = vadd.f32 0.0, %v3400
  %v3402 = vpop.f32.mrb[0].mxu0
  %3403 = vdwg.mxu0
  %v3404 = vadd.f32 %v2962, %v3401
  %s3405 = scalar_lea.vmem %s10, 512
  %v3406 = vld [vmem:[%s3405] sm:$0xff]
  %v3407 = vld [vmem:[%s3405 + $0x8] sm:$0xff]
  %v3408 = vld [vmem:[%s3405 + $0x10] sm:$0xff]
  %v3409 = vld [vmem:[%s3405 + $0x18] sm:$0xff]
  %v3410 = vld [vmem:[%s3405 + $0x20] sm:$0xff]
  %v3411 = vld [vmem:[%s3405 + $0x28] sm:$0xff]
  %v3412 = vld [vmem:[%s3405 + $0x30] sm:$0xff]
  %v3413 = vld [vmem:[%s3405 + $0x38] sm:$0xff]
  %v3414 = vld [vmem:[%s3405 + $0x40] sm:$0xff]
  %v3415 = vld [vmem:[%s3405 + $0x48] sm:$0xff]
  %v3416 = vld [vmem:[%s3405 + $0x50] sm:$0xff]
  %v3417 = vld [vmem:[%s3405 + $0x58] sm:$0xff]
  %v3418 = vld [vmem:[%s3405 + $0x60] sm:$0xff]
  %v3419 = vld [vmem:[%s3405 + $0x68] sm:$0xff]
  %v3420 = vld [vmem:[%s3405 + $0x70] sm:$0xff]
  %v3421 = vld [vmem:[%s3405 + $0x78] sm:$0xff]
  %3422 = vmatprep.subr.mxu0 0.0
  %3423 = vmatpush1.msra.mxu0 %v3406
  %3424 = vmatprep.subr.mxu0 0.0
  %3425 = vmatpush1.msra.mxu0 %v3407
  %3426 = vmatprep.subr.mxu0 0.0
  %3427 = vmatpush1.msra.mxu0 %v3408
  %3428 = vmatprep.subr.mxu0 0.0
  %3429 = vmatpush1.msra.mxu0 %v3409
  %3430 = vmatprep.subr.mxu0 0.0
  %3431 = vmatpush1.msra.mxu0 %v3410
  %3432 = vmatprep.subr.mxu0 0.0
  %3433 = vmatpush1.msra.mxu0 %v3411
  %3434 = vmatprep.subr.mxu0 0.0
  %3435 = vmatpush1.msra.mxu0 %v3412
  %3436 = vmatprep.subr.mxu0 0.0
  %3437 = vmatpush1.msra.mxu0 %v3413
  %3438 = vmatprep.subr.mxu0 0.0
  %3439 = vmatpush1.msra.mxu0 %v3414
  %3440 = vmatprep.subr.mxu0 0.0
  %3441 = vmatpush1.msra.mxu0 %v3415
  %3442 = vmatprep.subr.mxu0 0.0
  %3443 = vmatpush1.msra.mxu0 %v3416
  %3444 = vmatprep.subr.mxu0 0.0
  %3445 = vmatpush1.msra.mxu0 %v3417
  %3446 = vmatprep.subr.mxu0 0.0
  %3447 = vmatpush1.msra.mxu0 %v3418
  %3448 = vmatprep.subr.mxu0 0.0
  %3449 = vmatpush1.msra.mxu0 %v3419
  %3450 = vmatprep.subr.mxu0 0.0
  %3451 = vmatpush1.msra.mxu0 %v3420
  %3452 = vmatprep.subr.mxu0 0.0
  %3453 = vmatpush1.msra.mxu0 %v3421
  %3454 = vmatprep.subr.mxu0 0.0
  %3455 = vmatpush1.msra.mxu0 0.0
  %3456 = vmatprep.subr.mxu0 0.0
  %3457 = vmatpush1.msra.mxu0 0.0
  %3458 = vmatprep.subr.mxu0 0.0
  %3459 = vmatpush1.msra.mxu0 0.0
  %3460 = vmatprep.subr.mxu0 0.0
  %3461 = vmatpush1.msra.mxu0 0.0
  %3462 = vmatprep.subr.mxu0 0.0
  %3463 = vmatpush1.msra.mxu0 0.0
  %3464 = vmatprep.subr.mxu0 0.0
  %3465 = vmatpush1.msra.mxu0 0.0
  %3466 = vmatprep.subr.mxu0 0.0
  %3467 = vmatpush1.msra.mxu0 0.0
  %3468 = vmatprep.subr.mxu0 0.0
  %3469 = vmatpush1.msra.mxu0 0.0
  %3470 = vmatprep.subr.mxu0 0.0
  %3471 = vmatpush1.msra.mxu0 0.0
  %3472 = vmatprep.subr.mxu0 0.0
  %3473 = vmatpush1.msra.mxu0 0.0
  %3474 = vmatprep.subr.mxu0 0.0
  %3475 = vmatpush1.msra.mxu0 0.0
  %3476 = vmatprep.subr.mxu0 0.0
  %3477 = vmatpush1.msra.mxu0 0.0
  %3478 = vmatprep.subr.mxu0 0.0
  %3479 = vmatpush1.msra.mxu0 0.0
  %3480 = vmatprep.subr.mxu0 0.0
  %3481 = vmatpush1.msra.mxu0 0.0
  %3482 = vmatprep.subr.mxu0 0.0
  %3483 = vmatpush1.msra.mxu0 0.0
  %3484 = vmatprep.subr.mxu0 0.0
  %3485 = vmatpush1.msra.mxu0 0.0
  %3486 = vmatprep.mubr.f32.mxu0 0.0
  %3487 = vmatmul.mubr.f32.gmra.mrb[0].mxu0 %v3316
  %v3488 = vpop.f32.mrb[0].mxu0
  %v3489 = vadd.f32 0.0, %v3488
  %v3490 = vpop.f32.mrb[0].mxu0
  %3491 = vdwg.mxu0
  %v3492 = vadd.f32 %v3404, %v3489
  %v3493 = vld [vmem:[#allocation2 + $0x100] sm:$0xff]
  %v3494 = vld [vmem:[#allocation2 + $0x108] sm:$0xff]
  %v3495 = vld [vmem:[#allocation2 + $0x110] sm:$0xff]
  %v3496 = vld [vmem:[#allocation2 + $0x118] sm:$0xff]
  %v3497 = vld [vmem:[#allocation2 + $0xe0] sm:$0xff]
  %v3498 = vld [vmem:[#allocation2 + $0xe8] sm:$0xff]
  %v3499 = vld [vmem:[#allocation2 + $0xf0] sm:$0xff]
  %v3500 = vld [vmem:[#allocation2 + $0xf8] sm:$0xff]
  %3501 = vmatprep.subr.mxu0 %v1257
  %3502 = vmatpush1.msra.mxu0 %v1256
  %3503 = vmatprep.subr.mxu0 %v1261
  %3504 = vmatpush1.msra.mxu0 %v1260
  %3505 = vmatprep.subr.mxu0 %v1265
  %3506 = vmatpush1.msra.mxu0 %v1264
  %3507 = vmatprep.subr.mxu0 %v1269
  %3508 = vmatpush1.msra.mxu0 %v1268
  %3509 = vmatprep.subr.mxu0 %v1273
  %3510 = vmatpush1.msra.mxu0 %v1272
  %3511 = vmatprep.subr.mxu0 %v1277
  %3512 = vmatpush1.msra.mxu0 %v1276
  %3513 = vmatprep.subr.mxu0 %v1281
  %3514 = vmatpush1.msra.mxu0 %v1280
  %3515 = vmatprep.subr.mxu0 %v1285
  %3516 = vmatpush1.msra.mxu0 %v1284
  %3517 = vmatprep.subr.mxu0 %v1289
  %3518 = vmatpush1.msra.mxu0 %v1288
  %3519 = vmatprep.subr.mxu0 %v1293
  %3520 = vmatpush1.msra.mxu0 %v1292
  %3521 = vmatprep.subr.mxu0 %v1297
  %3522 = vmatpush1.msra.mxu0 %v1296
  %3523 = vmatprep.subr.mxu0 %v1301
  %3524 = vmatpush1.msra.mxu0 %v1300
  %3525 = vmatprep.subr.mxu0 %v1305
  %3526 = vmatpush1.msra.mxu0 %v1304
  %3527 = vmatprep.subr.mxu0 %v1309
  %3528 = vmatpush1.msra.mxu0 %v1308
  %3529 = vmatprep.subr.mxu0 %v1313
  %3530 = vmatpush1.msra.mxu0 %v1312
  %3531 = vmatprep.subr.mxu0 %v1317
  %3532 = vmatpush1.msra.mxu0 %v1316
  %3533 = vmatprep.subr.mxu0 0.0
  %3534 = vmatpush1.msra.mxu0 0.0
  %3535 = vmatprep.subr.mxu0 0.0
  %3536 = vmatpush1.msra.mxu0 0.0
  %3537 = vmatprep.subr.mxu0 0.0
  %3538 = vmatpush1.msra.mxu0 0.0
  %3539 = vmatprep.subr.mxu0 0.0
  %3540 = vmatpush1.msra.mxu0 0.0
  %3541 = vmatprep.subr.mxu0 0.0
  %3542 = vmatpush1.msra.mxu0 0.0
  %3543 = vmatprep.subr.mxu0 0.0
  %3544 = vmatpush1.msra.mxu0 0.0
  %3545 = vmatprep.subr.mxu0 0.0
  %3546 = vmatpush1.msra.mxu0 0.0
  %3547 = vmatprep.subr.mxu0 0.0
  %3548 = vmatpush1.msra.mxu0 0.0
  %3549 = vmatprep.subr.mxu0 0.0
  %3550 = vmatpush1.msra.mxu0 0.0
  %3551 = vmatprep.subr.mxu0 0.0
  %3552 = vmatpush1.msra.mxu0 0.0
  %3553 = vmatprep.subr.mxu0 0.0
  %3554 = vmatpush1.msra.mxu0 0.0
  %3555 = vmatprep.subr.mxu0 0.0
  %3556 = vmatpush1.msra.mxu0 0.0
  %3557 = vmatprep.subr.mxu0 0.0
  %3558 = vmatpush1.msra.mxu0 0.0
  %3559 = vmatprep.subr.mxu0 0.0
  %3560 = vmatpush1.msra.mxu0 0.0
  %3561 = vmatprep.subr.mxu0 0.0
  %3562 = vmatpush1.msra.mxu0 0.0
  %3563 = vmatprep.subr.mxu0 0.0
  %3564 = vmatpush1.msra.mxu0 0.0
  %3565 = vmatprep.mubr.f32.mxu0 0.0
  %3566 = vmatmul.mubr.f32.gmra.mrb[0].mxu0 %v3140
  %v3567 = vpop.f32.mrb[0].mxu0
  %v3568 = vadd.f32 0.0, %v3567
  %v3569 = vpop.f32.mrb[0].mxu0
  %v3570 = vadd.f32 0.0, %v3569
  %3571 = vdwg.mxu0
  %3572 = vmatprep.subr.mxu0 %v1259
  %3573 = vmatpush1.msra.mxu0 %v1258
  %3574 = vmatprep.subr.mxu0 %v1263
  %3575 = vmatpush1.msra.mxu0 %v1262
  %3576 = vmatprep.subr.mxu0 %v1267
  %3577 = vmatpush1.msra.mxu0 %v1266
  %3578 = vmatprep.subr.mxu0 %v1271
  %3579 = vmatpush1.msra.mxu0 %v1270
  %3580 = vmatprep.subr.mxu0 %v1275
  %3581 = vmatpush1.msra.mxu0 %v1274
  %3582 = vmatprep.subr.mxu0 %v1279
  %3583 = vmatpush1.msra.mxu0 %v1278
  %3584 = vmatprep.subr.mxu0 %v1283
  %3585 = vmatpush1.msra.mxu0 %v1282
  %3586 = vmatprep.subr.mxu0 %v1287
  %3587 = vmatpush1.msra.mxu0 %v1286
  %3588 = vmatprep.subr.mxu0 %v1291
  %3589 = vmatpush1.msra.mxu0 %v1290
  %3590 = vmatprep.subr.mxu0 %v1295
  %3591 = vmatpush1.msra.mxu0 %v1294
  %3592 = vmatprep.subr.mxu0 %v1299
  %3593 = vmatpush1.msra.mxu0 %v1298
  %3594 = vmatprep.subr.mxu0 %v1303
  %3595 = vmatpush1.msra.mxu0 %v1302
  %3596 = vmatprep.subr.mxu0 %v1307
  %3597 = vmatpush1.msra.mxu0 %v1306
  %3598 = vmatprep.subr.mxu0 %v1311
  %3599 = vmatpush1.msra.mxu0 %v1310
  %3600 = vmatprep.subr.mxu0 %v1315
  %3601 = vmatpush1.msra.mxu0 %v1314
  %3602 = vmatprep.subr.mxu0 %v1319
  %3603 = vmatpush1.msra.mxu0 %v1318
  %3604 = vmatprep.subr.mxu0 0.0
  %3605 = vmatpush1.msra.mxu0 0.0
  %3606 = vmatprep.subr.mxu0 0.0
  %3607 = vmatpush1.msra.mxu0 0.0
  %3608 = vmatprep.subr.mxu0 0.0
  %3609 = vmatpush1.msra.mxu0 0.0
  %3610 = vmatprep.subr.mxu0 0.0
  %3611 = vmatpush1.msra.mxu0 0.0
  %3612 = vmatprep.subr.mxu0 0.0
  %3613 = vmatpush1.msra.mxu0 0.0
  %3614 = vmatprep.subr.mxu0 0.0
  %3615 = vmatpush1.msra.mxu0 0.0
  %3616 = vmatprep.subr.mxu0 0.0
  %3617 = vmatpush1.msra.mxu0 0.0
  %3618 = vmatprep.subr.mxu0 0.0
  %3619 = vmatpush1.msra.mxu0 0.0
  %3620 = vmatprep.subr.mxu0 0.0
  %3621 = vmatpush1.msra.mxu0 0.0
  %3622 = vmatprep.subr.mxu0 0.0
  %3623 = vmatpush1.msra.mxu0 0.0
  %3624 = vmatprep.subr.mxu0 0.0
  %3625 = vmatpush1.msra.mxu0 0.0
  %3626 = vmatprep.subr.mxu0 0.0
  %3627 = vmatpush1.msra.mxu0 0.0
  %3628 = vmatprep.subr.mxu0 0.0
  %3629 = vmatpush1.msra.mxu0 0.0
  %3630 = vmatprep.subr.mxu0 0.0
  %3631 = vmatpush1.msra.mxu0 0.0
  %3632 = vmatprep.subr.mxu0 0.0
  %3633 = vmatpush1.msra.mxu0 0.0
  %3634 = vmatprep.subr.mxu0 0.0
  %3635 = vmatpush1.msra.mxu0 0.0
  %3636 = vmatprep.mubr.f32.mxu0 0.0
  %3637 = vmatmul.mubr.f32.gmra.mrb[0].mxu0 %v3140
  %v3638 = vpop.f32.mrb[0].mxu0
  %v3639 = vadd.f32 0.0, %v3638
  %v3640 = vpop.f32.mrb[0].mxu0
  %v3641 = vadd.f32 0.0, %v3640
  %3642 = vdwg.mxu0
  %v3643 = vadd.f32 %v3493, %v3568
  %v3644 = vadd.f32 %v3494, %v3570
  %v3645 = vadd.f32 %v3495, %v3639
  %v3646 = vadd.f32 %v3496, %v3641
  %v3647 = vxor.u32 %v3643, 2147483648
  %v3648 = vmul.f32 %v3647, 1.442695
  %v3649 = vpow.pop %v3648
  %v3650 = vadd.f32 %v3649, 1.0
  %v3651 = vrcp.pop %v3650
  %v3652 = vmul.f32 1.0, %v3651
  %v3653 = vxor.u32 %v3644, 2147483648
  %v3654 = vmul.f32 %v3653, 1.442695
  %v3655 = vpow.pop %v3654
  %v3656 = vadd.f32 %v3655, 1.0
  %v3657 = vrcp.pop %v3656
  %v3658 = vmul.f32 1.0, %v3657
  %v3659 = vtanh.pop %v3645
  %v3660 = vxor.u32 %v3646, 2147483648
  %v3661 = vmul.f32 %v3660, 1.442695
  %v3662 = vpow.pop %v3661
  %v3663 = vadd.f32 %v3662, 1.0
  %v3664 = vrcp.pop %v3663
  %v3665 = vmul.f32 1.0, %v3664
  %v3666 = vmul.f32 %v3658, %v3138
  %v3667 = vmul.f32 %v3652, %v3659
  %v3668 = vadd.f32 %v3666, %v3667
  %v3669 = vtanh.pop %v3668
  %v3670 = vmul.f32 %v3665, %v3669
  %3671 = vmatprep.subr.mxu0 %v1491
  %3672 = vmatpush1.msra.mxu0 %v1490
  %3673 = vmatprep.subr.mxu0 %v1495
  %3674 = vmatpush1.msra.mxu0 %v1494
  %3675 = vmatprep.subr.mxu0 %v1499
  %3676 = vmatpush1.msra.mxu0 %v1498
  %3677 = vmatprep.subr.mxu0 %v1503
  %3678 = vmatpush1.msra.mxu0 %v1502
  %3679 = vmatprep.subr.mxu0 %v1507
  %3680 = vmatpush1.msra.mxu0 %v1506
  %3681 = vmatprep.subr.mxu0 %v1511
  %3682 = vmatpush1.msra.mxu0 %v1510
  %3683 = vmatprep.subr.mxu0 %v1515
  %3684 = vmatpush1.msra.mxu0 %v1514
  %3685 = vmatprep.subr.mxu0 %v1519
  %3686 = vmatpush1.msra.mxu0 %v1518
  %3687 = vmatprep.subr.mxu0 %v1523
  %3688 = vmatpush1.msra.mxu0 %v1522
  %3689 = vmatprep.subr.mxu0 %v1527
  %3690 = vmatpush1.msra.mxu0 %v1526
  %3691 = vmatprep.subr.mxu0 %v1531
  %3692 = vmatpush1.msra.mxu0 %v1530
  %3693 = vmatprep.subr.mxu0 %v1535
  %3694 = vmatpush1.msra.mxu0 %v1534
  %3695 = vmatprep.subr.mxu0 %v1539
  %3696 = vmatpush1.msra.mxu0 %v1538
  %3697 = vmatprep.subr.mxu0 %v1543
  %3698 = vmatpush1.msra.mxu0 %v1542
  %3699 = vmatprep.subr.mxu0 %v1547
  %3700 = vmatpush1.msra.mxu0 %v1546
  %3701 = vmatprep.subr.mxu0 %v1551
  %3702 = vmatpush1.msra.mxu0 %v1550
  %3703 = vmatprep.subr.mxu0 0.0
  %3704 = vmatpush1.msra.mxu0 0.0
  %3705 = vmatprep.subr.mxu0 0.0
  %3706 = vmatpush1.msra.mxu0 0.0
  %3707 = vmatprep.subr.mxu0 0.0
  %3708 = vmatpush1.msra.mxu0 0.0
  %3709 = vmatprep.subr.mxu0 0.0
  %3710 = vmatpush1.msra.mxu0 0.0
  %3711 = vmatprep.subr.mxu0 0.0
  %3712 = vmatpush1.msra.mxu0 0.0
  %3713 = vmatprep.subr.mxu0 0.0
  %3714 = vmatpush1.msra.mxu0 0.0
  %3715 = vmatprep.subr.mxu0 0.0
  %3716 = vmatpush1.msra.mxu0 0.0
  %3717 = vmatprep.subr.mxu0 0.0
  %3718 = vmatpush1.msra.mxu0 0.0
  %3719 = vmatprep.subr.mxu0 0.0
  %3720 = vmatpush1.msra.mxu0 0.0
  %3721 = vmatprep.subr.mxu0 0.0
  %3722 = vmatpush1.msra.mxu0 0.0
  %3723 = vmatprep.subr.mxu0 0.0
  %3724 = vmatpush1.msra.mxu0 0.0
  %3725 = vmatprep.subr.mxu0 0.0
  %3726 = vmatpush1.msra.mxu0 0.0
  %3727 = vmatprep.subr.mxu0 0.0
  %3728 = vmatpush1.msra.mxu0 0.0
  %3729 = vmatprep.subr.mxu0 0.0
  %3730 = vmatpush1.msra.mxu0 0.0
  %3731 = vmatprep.subr.mxu0 0.0
  %3732 = vmatpush1.msra.mxu0 0.0
  %3733 = vmatprep.subr.mxu0 0.0
  %3734 = vmatpush1.msra.mxu0 0.0
  %3735 = vmatprep.mubr.f32.mxu0 0.0
  %3736 = vmatmul.mubr.f32.gmra.mrb[0].mxu0 %v3310
  %v3737 = vpop.f32.mrb[0].mxu0
  %v3738 = vadd.f32 0.0, %v3737
  %v3739 = vpop.f32.mrb[0].mxu0
  %v3740 = vadd.f32 0.0, %v3739
  %3741 = vdwg.mxu0
  %3742 = vmatprep.subr.mxu0 %v1493
  %3743 = vmatpush1.msra.mxu0 %v1492
  %3744 = vmatprep.subr.mxu0 %v1497
  %3745 = vmatpush1.msra.mxu0 %v1496
  %3746 = vmatprep.subr.mxu0 %v1501
  %3747 = vmatpush1.msra.mxu0 %v1500
  %3748 = vmatprep.subr.mxu0 %v1505
  %3749 = vmatpush1.msra.mxu0 %v1504
  %3750 = vmatprep.subr.mxu0 %v1509
  %3751 = vmatpush1.msra.mxu0 %v1508
  %3752 = vmatprep.subr.mxu0 %v1513
  %3753 = vmatpush1.msra.mxu0 %v1512
  %3754 = vmatprep.subr.mxu0 %v1517
  %3755 = vmatpush1.msra.mxu0 %v1516
  %3756 = vmatprep.subr.mxu0 %v1521
  %3757 = vmatpush1.msra.mxu0 %v1520
  %3758 = vmatprep.subr.mxu0 %v1525
  %3759 = vmatpush1.msra.mxu0 %v1524
  %3760 = vmatprep.subr.mxu0 %v1529
  %3761 = vmatpush1.msra.mxu0 %v1528
  %3762 = vmatprep.subr.mxu0 %v1533
  %3763 = vmatpush1.msra.mxu0 %v1532
  %3764 = vmatprep.subr.mxu0 %v1537
  %3765 = vmatpush1.msra.mxu0 %v1536
  %3766 = vmatprep.subr.mxu0 %v1541
  %3767 = vmatpush1.msra.mxu0 %v1540
  %3768 = vmatprep.subr.mxu0 %v1545
  %3769 = vmatpush1.msra.mxu0 %v1544
  %3770 = vmatprep.subr.mxu0 %v1549
  %3771 = vmatpush1.msra.mxu0 %v1548
  %3772 = vmatprep.subr.mxu0 %v1553
  %3773 = vmatpush1.msra.mxu0 %v1552
  %3774 = vmatprep.subr.mxu0 0.0
  %3775 = vmatpush1.msra.mxu0 0.0
  %3776 = vmatprep.subr.mxu0 0.0
  %3777 = vmatpush1.msra.mxu0 0.0
  %3778 = vmatprep.subr.mxu0 0.0
  %3779 = vmatpush1.msra.mxu0 0.0
  %3780 = vmatprep.subr.mxu0 0.0
  %3781 = vmatpush1.msra.mxu0 0.0
  %3782 = vmatprep.subr.mxu0 0.0
  %3783 = vmatpush1.msra.mxu0 0.0
  %3784 = vmatprep.subr.mxu0 0.0
  %3785 = vmatpush1.msra.mxu0 0.0
  %3786 = vmatprep.subr.mxu0 0.0
  %3787 = vmatpush1.msra.mxu0 0.0
  %3788 = vmatprep.subr.mxu0 0.0
  %3789 = vmatpush1.msra.mxu0 0.0
  %3790 = vmatprep.subr.mxu0 0.0
  %3791 = vmatpush1.msra.mxu0 0.0
  %3792 = vmatprep.subr.mxu0 0.0
  %3793 = vmatpush1.msra.mxu0 0.0
  %3794 = vmatprep.subr.mxu0 0.0
  %3795 = vmatpush1.msra.mxu0 0.0
  %3796 = vmatprep.subr.mxu0 0.0
  %3797 = vmatpush1.msra.mxu0 0.0
  %3798 = vmatprep.subr.mxu0 0.0
  %3799 = vmatpush1.msra.mxu0 0.0
  %3800 = vmatprep.subr.mxu0 0.0
  %3801 = vmatpush1.msra.mxu0 0.0
  %3802 = vmatprep.subr.mxu0 0.0
  %3803 = vmatpush1.msra.mxu0 0.0
  %3804 = vmatprep.subr.mxu0 0.0
  %3805 = vmatpush1.msra.mxu0 0.0
  %3806 = vmatprep.mubr.f32.mxu0 0.0
  %3807 = vmatmul.mubr.f32.gmra.mrb[0].mxu0 %v3310
  %v3808 = vpop.f32.mrb[0].mxu0
  %v3809 = vadd.f32 0.0, %v3808
  %v3810 = vpop.f32.mrb[0].mxu0
  %v3811 = vadd.f32 0.0, %v3810
  %3812 = vdwg.mxu0
  %v3813 = vadd.f32 %v3497, %v3738
  %v3814 = vadd.f32 %v3498, %v3740
  %v3815 = vadd.f32 %v3499, %v3809
  %v3816 = vadd.f32 %v3500, %v3811
  %v3817 = vxor.u32 %v3813, 2147483648
  %v3818 = vmul.f32 %v3817, 1.442695
  %v3819 = vpow.pop %v3818
  %v3820 = vadd.f32 %v3819, 1.0
  %v3821 = vrcp.pop %v3820
  %v3822 = vmul.f32 1.0, %v3821
  %v3823 = vxor.u32 %v3814, 2147483648
  %v3824 = vmul.f32 %v3823, 1.442695
  %v3825 = vpow.pop %v3824
  %v3826 = vadd.f32 %v3825, 1.0
  %v3827 = vrcp.pop %v3826
  %v3828 = vmul.f32 1.0, %v3827
  %v3829 = vtanh.pop %v3815
  %v3830 = vxor.u32 %v3816, 2147483648
  %v3831 = vmul.f32 %v3830, 1.442695
  %v3832 = vpow.pop %v3831
  %v3833 = vadd.f32 %v3832, 1.0
  %v3834 = vrcp.pop %v3833
  %v3835 = vmul.f32 1.0, %v3834
  %v3836 = vmul.f32 %v3828, %v3308
  %v3837 = vmul.f32 %v3822, %v3829
  %v3838 = vadd.f32 %v3836, %v3837
  %v3839 = vtanh.pop %v3838
  %v3840 = vmul.f32 %v3835, %v3839
  %vm3841 = vcmp.gt.f32.partialorder %v3670, 0.0
  %v3842 = vmul.f32 %v3670, 0.01
  %v3843 = vsel %vm3841, %v3670, %v3842
  %vm3844 = vcmp.gt.f32.partialorder %v3840, 0.0
  %v3845 = vmul.f32 %v3840, 0.01
  %v3846 = vsel %vm3844, %v3840, %v3845
  %s3847 = scalar_lea.vmem %s9, 512
  %v3848 = vld [vmem:[%s3847] sm:$0xff]
  %v3849 = vld [vmem:[%s3847 + $0x8] sm:$0xff]
  %v3850 = vld [vmem:[%s3847 + $0x10] sm:$0xff]
  %v3851 = vld [vmem:[%s3847 + $0x18] sm:$0xff]
  %v3852 = vld [vmem:[%s3847 + $0x20] sm:$0xff]
  %v3853 = vld [vmem:[%s3847 + $0x28] sm:$0xff]
  %v3854 = vld [vmem:[%s3847 + $0x30] sm:$0xff]
  %v3855 = vld [vmem:[%s3847 + $0x38] sm:$0xff]
  %v3856 = vld [vmem:[%s3847 + $0x40] sm:$0xff]
  %v3857 = vld [vmem:[%s3847 + $0x48] sm:$0xff]
  %v3858 = vld [vmem:[%s3847 + $0x50] sm:$0xff]
  %v3859 = vld [vmem:[%s3847 + $0x58] sm:$0xff]
  %v3860 = vld [vmem:[%s3847 + $0x60] sm:$0xff]
  %v3861 = vld [vmem:[%s3847 + $0x68] sm:$0xff]
  %v3862 = vld [vmem:[%s3847 + $0x70] sm:$0xff]
  %v3863 = vld [vmem:[%s3847 + $0x78] sm:$0xff]
  %3864 = vmatprep.subr.mxu0 0.0
  %3865 = vmatpush1.msra.mxu0 %v3848
  %3866 = vmatprep.subr.mxu0 0.0
  %3867 = vmatpush1.msra.mxu0 %v3849
  %3868 = vmatprep.subr.mxu0 0.0
  %3869 = vmatpush1.msra.mxu0 %v3850
  %3870 = vmatprep.subr.mxu0 0.0
  %3871 = vmatpush1.msra.mxu0 %v3851
  %3872 = vmatprep.subr.mxu0 0.0
  %3873 = vmatpush1.msra.mxu0 %v3852
  %3874 = vmatprep.subr.mxu0 0.0
  %3875 = vmatpush1.msra.mxu0 %v3853
  %3876 = vmatprep.subr.mxu0 0.0
  %3877 = vmatpush1.msra.mxu0 %v3854
  %3878 = vmatprep.subr.mxu0 0.0
  %3879 = vmatpush1.msra.mxu0 %v3855
  %3880 = vmatprep.subr.mxu0 0.0
  %3881 = vmatpush1.msra.mxu0 %v3856
  %3882 = vmatprep.subr.mxu0 0.0
  %3883 = vmatpush1.msra.mxu0 %v3857
  %3884 = vmatprep.subr.mxu0 0.0
  %3885 = vmatpush1.msra.mxu0 %v3858
  %3886 = vmatprep.subr.mxu0 0.0
  %3887 = vmatpush1.msra.mxu0 %v3859
  %3888 = vmatprep.subr.mxu0 0.0
  %3889 = vmatpush1.msra.mxu0 %v3860
  %3890 = vmatprep.subr.mxu0 0.0
  %3891 = vmatpush1.msra.mxu0 %v3861
  %3892 = vmatprep.subr.mxu0 0.0
  %3893 = vmatpush1.msra.mxu0 %v3862
  %3894 = vmatprep.subr.mxu0 0.0
  %3895 = vmatpush1.msra.mxu0 %v3863
  %3896 = vmatprep.subr.mxu0 0.0
  %3897 = vmatpush1.msra.mxu0 0.0
  %3898 = vmatprep.subr.mxu0 0.0
  %3899 = vmatpush1.msra.mxu0 0.0
  %3900 = vmatprep.subr.mxu0 0.0
  %3901 = vmatpush1.msra.mxu0 0.0
  %3902 = vmatprep.subr.mxu0 0.0
  %3903 = vmatpush1.msra.mxu0 0.0
  %3904 = vmatprep.subr.mxu0 0.0
  %3905 = vmatpush1.msra.mxu0 0.0
  %3906 = vmatprep.subr.mxu0 0.0
  %3907 = vmatpush1.msra.mxu0 0.0
  %3908 = vmatprep.subr.mxu0 0.0
  %3909 = vmatpush1.msra.mxu0 0.0
  %3910 = vmatprep.subr.mxu0 0.0
  %3911 = vmatpush1.msra.mxu0 0.0
  %3912 = vmatprep.subr.mxu0 0.0
  %3913 = vmatpush1.msra.mxu0 0.0
  %3914 = vmatprep.subr.mxu0 0.0
  %3915 = vmatpush1.msra.mxu0 0.0
  %3916 = vmatprep.subr.mxu0 0.0
  %3917 = vmatpush1.msra.mxu0 0.0
  %3918 = vmatprep.subr.mxu0 0.0
  %3919 = vmatpush1.msra.mxu0 0.0
  %3920 = vmatprep.subr.mxu0 0.0
  %3921 = vmatpush1.msra.mxu0 0.0
  %3922 = vmatprep.subr.mxu0 0.0
  %3923 = vmatpush1.msra.mxu0 0.0
  %3924 = vmatprep.subr.mxu0 0.0
  %3925 = vmatpush1.msra.mxu0 0.0
  %3926 = vmatprep.subr.mxu0 0.0
  %3927 = vmatpush1.msra.mxu0 0.0
  %3928 = vmatprep.mubr.f32.mxu0 0.0
  %3929 = vmatmul.mubr.f32.gmra.mrb[0].mxu0 %v3843
  %v3930 = vpop.f32.mrb[0].mxu0
  %v3931 = vadd.f32 0.0, %v3930
  %v3932 = vpop.f32.mrb[0].mxu0
  %3933 = vdwg.mxu0
  %v3934 = vadd.f32 %v3492, %v3931
  %s3935 = scalar_lea.vmem %s10, 384
  %v3936 = vld [vmem:[%s3935] sm:$0xff]
  %v3937 = vld [vmem:[%s3935 + $0x8] sm:$0xff]
  %v3938 = vld [vmem:[%s3935 + $0x10] sm:$0xff]
  %v3939 = vld [vmem:[%s3935 + $0x18] sm:$0xff]
  %v3940 = vld [vmem:[%s3935 + $0x20] sm:$0xff]
  %v3941 = vld [vmem:[%s3935 + $0x28] sm:$0xff]
  %v3942 = vld [vmem:[%s3935 + $0x30] sm:$0xff]
  %v3943 = vld [vmem:[%s3935 + $0x38] sm:$0xff]
  %v3944 = vld [vmem:[%s3935 + $0x40] sm:$0xff]
  %v3945 = vld [vmem:[%s3935 + $0x48] sm:$0xff]
  %v3946 = vld [vmem:[%s3935 + $0x50] sm:$0xff]
  %v3947 = vld [vmem:[%s3935 + $0x58] sm:$0xff]
  %v3948 = vld [vmem:[%s3935 + $0x60] sm:$0xff]
  %v3949 = vld [vmem:[%s3935 + $0x68] sm:$0xff]
  %v3950 = vld [vmem:[%s3935 + $0x70] sm:$0xff]
  %v3951 = vld [vmem:[%s3935 + $0x78] sm:$0xff]
  %3952 = vmatprep.subr.mxu0 0.0
  %3953 = vmatpush1.msra.mxu0 %v3936
  %3954 = vmatprep.subr.mxu0 0.0
  %3955 = vmatpush1.msra.mxu0 %v3937
  %3956 = vmatprep.subr.mxu0 0.0
  %3957 = vmatpush1.msra.mxu0 %v3938
  %3958 = vmatprep.subr.mxu0 0.0
  %3959 = vmatpush1.msra.mxu0 %v3939
  %3960 = vmatprep.subr.mxu0 0.0
  %3961 = vmatpush1.msra.mxu0 %v3940
  %3962 = vmatprep.subr.mxu0 0.0
  %3963 = vmatpush1.msra.mxu0 %v3941
  %3964 = vmatprep.subr.mxu0 0.0
  %3965 = vmatpush1.msra.mxu0 %v3942
  %3966 = vmatprep.subr.mxu0 0.0
  %3967 = vmatpush1.msra.mxu0 %v3943
  %3968 = vmatprep.subr.mxu0 0.0
  %3969 = vmatpush1.msra.mxu0 %v3944
  %3970 = vmatprep.subr.mxu0 0.0
  %3971 = vmatpush1.msra.mxu0 %v3945
  %3972 = vmatprep.subr.mxu0 0.0
  %3973 = vmatpush1.msra.mxu0 %v3946
  %3974 = vmatprep.subr.mxu0 0.0
  %3975 = vmatpush1.msra.mxu0 %v3947
  %3976 = vmatprep.subr.mxu0 0.0
  %3977 = vmatpush1.msra.mxu0 %v3948
  %3978 = vmatprep.subr.mxu0 0.0
  %3979 = vmatpush1.msra.mxu0 %v3949
  %3980 = vmatprep.subr.mxu0 0.0
  %3981 = vmatpush1.msra.mxu0 %v3950
  %3982 = vmatprep.subr.mxu0 0.0
  %3983 = vmatpush1.msra.mxu0 %v3951
  %3984 = vmatprep.subr.mxu0 0.0
  %3985 = vmatpush1.msra.mxu0 0.0
  %3986 = vmatprep.subr.mxu0 0.0
  %3987 = vmatpush1.msra.mxu0 0.0
  %3988 = vmatprep.subr.mxu0 0.0
  %3989 = vmatpush1.msra.mxu0 0.0
  %3990 = vmatprep.subr.mxu0 0.0
  %3991 = vmatpush1.msra.mxu0 0.0
  %3992 = vmatprep.subr.mxu0 0.0
  %3993 = vmatpush1.msra.mxu0 0.0
  %3994 = vmatprep.subr.mxu0 0.0
  %3995 = vmatpush1.msra.mxu0 0.0
  %3996 = vmatprep.subr.mxu0 0.0
  %3997 = vmatpush1.msra.mxu0 0.0
  %3998 = vmatprep.subr.mxu0 0.0
  %3999 = vmatpush1.msra.mxu0 0.0
  %4000 = vmatprep.subr.mxu0 0.0
  %4001 = vmatpush1.msra.mxu0 0.0
  %4002 = vmatprep.subr.mxu0 0.0
  %4003 = vmatpush1.msra.mxu0 0.0
  %4004 = vmatprep.subr.mxu0 0.0
  %4005 = vmatpush1.msra.mxu0 0.0
  %4006 = vmatprep.subr.mxu0 0.0
  %4007 = vmatpush1.msra.mxu0 0.0
  %4008 = vmatprep.subr.mxu0 0.0
  %4009 = vmatpush1.msra.mxu0 0.0
  %4010 = vmatprep.subr.mxu0 0.0
  %4011 = vmatpush1.msra.mxu0 0.0
  %4012 = vmatprep.subr.mxu0 0.0
  %4013 = vmatpush1.msra.mxu0 0.0
  %4014 = vmatprep.subr.mxu0 0.0
  %4015 = vmatpush1.msra.mxu0 0.0
  %4016 = vmatprep.mubr.f32.mxu0 0.0
  %4017 = vmatmul.mubr.f32.gmra.mrb[0].mxu0 %v3846
  %v4018 = vpop.f32.mrb[0].mxu0
  %v4019 = vadd.f32 0.0, %v4018
  %v4020 = vpop.f32.mrb[0].mxu0
  %4021 = vdwg.mxu0
  %v4022 = vadd.f32 %v3934, %v4019
  %v4023 = vld [vmem:[#allocation2 + $0x140] sm:$0xff]
  %v4024 = vld [vmem:[#allocation2 + $0x148] sm:$0xff]
  %v4025 = vld [vmem:[#allocation2 + $0x150] sm:$0xff]
  %v4026 = vld [vmem:[#allocation2 + $0x158] sm:$0xff]
  %v4027 = vld [vmem:[#allocation2 + $0xa0] sm:$0xff]
  %v4028 = vld [vmem:[#allocation2 + $0xa8] sm:$0xff]
  %v4029 = vld [vmem:[#allocation2 + $0xb0] sm:$0xff]
  %v4030 = vld [vmem:[#allocation2 + $0xb8] sm:$0xff]
  %4031 = vmatprep.subr.mxu0 %v1257
  %4032 = vmatpush1.msra.mxu0 %v1256
  %4033 = vmatprep.subr.mxu0 %v1261
  %4034 = vmatpush1.msra.mxu0 %v1260
  %4035 = vmatprep.subr.mxu0 %v1265
  %4036 = vmatpush1.msra.mxu0 %v1264
  %4037 = vmatprep.subr.mxu0 %v1269
  %4038 = vmatpush1.msra.mxu0 %v1268
  %4039 = vmatprep.subr.mxu0 %v1273
  %4040 = vmatpush1.msra.mxu0 %v1272
  %4041 = vmatprep.subr.mxu0 %v1277
  %4042 = vmatpush1.msra.mxu0 %v1276
  %4043 = vmatprep.subr.mxu0 %v1281
  %4044 = vmatpush1.msra.mxu0 %v1280
  %4045 = vmatprep.subr.mxu0 %v1285
  %4046 = vmatpush1.msra.mxu0 %v1284
  %4047 = vmatprep.subr.mxu0 %v1289
  %4048 = vmatpush1.msra.mxu0 %v1288
  %4049 = vmatprep.subr.mxu0 %v1293
  %4050 = vmatpush1.msra.mxu0 %v1292
  %4051 = vmatprep.subr.mxu0 %v1297
  %4052 = vmatpush1.msra.mxu0 %v1296
  %4053 = vmatprep.subr.mxu0 %v1301
  %4054 = vmatpush1.msra.mxu0 %v1300
  %4055 = vmatprep.subr.mxu0 %v1305
  %4056 = vmatpush1.msra.mxu0 %v1304
  %4057 = vmatprep.subr.mxu0 %v1309
  %4058 = vmatpush1.msra.mxu0 %v1308
  %4059 = vmatprep.subr.mxu0 %v1313
  %4060 = vmatpush1.msra.mxu0 %v1312
  %4061 = vmatprep.subr.mxu0 %v1317
  %4062 = vmatpush1.msra.mxu0 %v1316
  %4063 = vmatprep.subr.mxu0 0.0
  %4064 = vmatpush1.msra.mxu0 0.0
  %4065 = vmatprep.subr.mxu0 0.0
  %4066 = vmatpush1.msra.mxu0 0.0
  %4067 = vmatprep.subr.mxu0 0.0
  %4068 = vmatpush1.msra.mxu0 0.0
  %4069 = vmatprep.subr.mxu0 0.0
  %4070 = vmatpush1.msra.mxu0 0.0
  %4071 = vmatprep.subr.mxu0 0.0
  %4072 = vmatpush1.msra.mxu0 0.0
  %4073 = vmatprep.subr.mxu0 0.0
  %4074 = vmatpush1.msra.mxu0 0.0
  %4075 = vmatprep.subr.mxu0 0.0
  %4076 = vmatpush1.msra.mxu0 0.0
  %4077 = vmatprep.subr.mxu0 0.0
  %4078 = vmatpush1.msra.mxu0 0.0
  %4079 = vmatprep.subr.mxu0 0.0
  %4080 = vmatpush1.msra.mxu0 0.0
  %4081 = vmatprep.subr.mxu0 0.0
  %4082 = vmatpush1.msra.mxu0 0.0
  %4083 = vmatprep.subr.mxu0 0.0
  %4084 = vmatpush1.msra.mxu0 0.0
  %4085 = vmatprep.subr.mxu0 0.0
  %4086 = vmatpush1.msra.mxu0 0.0
  %4087 = vmatprep.subr.mxu0 0.0
  %4088 = vmatpush1.msra.mxu0 0.0
  %4089 = vmatprep.subr.mxu0 0.0
  %4090 = vmatpush1.msra.mxu0 0.0
  %4091 = vmatprep.subr.mxu0 0.0
  %4092 = vmatpush1.msra.mxu0 0.0
  %4093 = vmatprep.subr.mxu0 0.0
  %4094 = vmatpush1.msra.mxu0 0.0
  %4095 = vmatprep.mubr.f32.mxu0 0.0
  %4096 = vmatmul.mubr.f32.gmra.mrb[0].mxu0 %v3670
  %v4097 = vpop.f32.mrb[0].mxu0
  %v4098 = vadd.f32 0.0, %v4097
  %v4099 = vpop.f32.mrb[0].mxu0
  %v4100 = vadd.f32 0.0, %v4099
  %4101 = vdwg.mxu0
  %4102 = vmatprep.subr.mxu0 %v1259
  %4103 = vmatpush1.msra.mxu0 %v1258
  %4104 = vmatprep.subr.mxu0 %v1263
  %4105 = vmatpush1.msra.mxu0 %v1262
  %4106 = vmatprep.subr.mxu0 %v1267
  %4107 = vmatpush1.msra.mxu0 %v1266
  %4108 = vmatprep.subr.mxu0 %v1271
  %4109 = vmatpush1.msra.mxu0 %v1270
  %4110 = vmatprep.subr.mxu0 %v1275
  %4111 = vmatpush1.msra.mxu0 %v1274
  %4112 = vmatprep.subr.mxu0 %v1279
  %4113 = vmatpush1.msra.mxu0 %v1278
  %4114 = vmatprep.subr.mxu0 %v1283
  %4115 = vmatpush1.msra.mxu0 %v1282
  %4116 = vmatprep.subr.mxu0 %v1287
  %4117 = vmatpush1.msra.mxu0 %v1286
  %4118 = vmatprep.subr.mxu0 %v1291
  %4119 = vmatpush1.msra.mxu0 %v1290
  %4120 = vmatprep.subr.mxu0 %v1295
  %4121 = vmatpush1.msra.mxu0 %v1294
  %4122 = vmatprep.subr.mxu0 %v1299
  %4123 = vmatpush1.msra.mxu0 %v1298
  %4124 = vmatprep.subr.mxu0 %v1303
  %4125 = vmatpush1.msra.mxu0 %v1302
  %4126 = vmatprep.subr.mxu0 %v1307
  %4127 = vmatpush1.msra.mxu0 %v1306
  %4128 = vmatprep.subr.mxu0 %v1311
  %4129 = vmatpush1.msra.mxu0 %v1310
  %4130 = vmatprep.subr.mxu0 %v1315
  %4131 = vmatpush1.msra.mxu0 %v1314
  %4132 = vmatprep.subr.mxu0 %v1319
  %4133 = vmatpush1.msra.mxu0 %v1318
  %4134 = vmatprep.subr.mxu0 0.0
  %4135 = vmatpush1.msra.mxu0 0.0
  %4136 = vmatprep.subr.mxu0 0.0
  %4137 = vmatpush1.msra.mxu0 0.0
  %4138 = vmatprep.subr.mxu0 0.0
  %4139 = vmatpush1.msra.mxu0 0.0
  %4140 = vmatprep.subr.mxu0 0.0
  %4141 = vmatpush1.msra.mxu0 0.0
  %4142 = vmatprep.subr.mxu0 0.0
  %4143 = vmatpush1.msra.mxu0 0.0
  %4144 = vmatprep.subr.mxu0 0.0
  %4145 = vmatpush1.msra.mxu0 0.0
  %4146 = vmatprep.subr.mxu0 0.0
  %4147 = vmatpush1.msra.mxu0 0.0
  %4148 = vmatprep.subr.mxu0 0.0
  %4149 = vmatpush1.msra.mxu0 0.0
  %4150 = vmatprep.subr.mxu0 0.0
  %4151 = vmatpush1.msra.mxu0 0.0
  %4152 = vmatprep.subr.mxu0 0.0
  %4153 = vmatpush1.msra.mxu0 0.0
  %4154 = vmatprep.subr.mxu0 0.0
  %4155 = vmatpush1.msra.mxu0 0.0
  %4156 = vmatprep.subr.mxu0 0.0
  %4157 = vmatpush1.msra.mxu0 0.0
  %4158 = vmatprep.subr.mxu0 0.0
  %4159 = vmatpush1.msra.mxu0 0.0
  %4160 = vmatprep.subr.mxu0 0.0
  %4161 = vmatpush1.msra.mxu0 0.0
  %4162 = vmatprep.subr.mxu0 0.0
  %4163 = vmatpush1.msra.mxu0 0.0
  %4164 = vmatprep.subr.mxu0 0.0
  %4165 = vmatpush1.msra.mxu0 0.0
  %4166 = vmatprep.mubr.f32.mxu0 0.0
  %4167 = vmatmul.mubr.f32.gmra.mrb[0].mxu0 %v3670
  %v4168 = vpop.f32.mrb[0].mxu0
  %v4169 = vadd.f32 0.0, %v4168
  %v4170 = vpop.f32.mrb[0].mxu0
  %v4171 = vadd.f32 0.0, %v4170
  %4172 = vdwg.mxu0
  %v4173 = vadd.f32 %v4023, %v4098
  %v4174 = vadd.f32 %v4024, %v4100
  %v4175 = vadd.f32 %v4025, %v4169
  %v4176 = vadd.f32 %v4026, %v4171
  %v4177 = vxor.u32 %v4173, 2147483648
  %v4178 = vmul.f32 %v4177, 1.442695
  %v4179 = vpow.pop %v4178
  %v4180 = vadd.f32 %v4179, 1.0
  %v4181 = vrcp.pop %v4180
  %v4182 = vmul.f32 1.0, %v4181
  %v4183 = vxor.u32 %v4174, 2147483648
  %v4184 = vmul.f32 %v4183, 1.442695
  %v4185 = vpow.pop %v4184
  %v4186 = vadd.f32 %v4185, 1.0
  %v4187 = vrcp.pop %v4186
  %v4188 = vmul.f32 1.0, %v4187
  %v4189 = vtanh.pop %v4175
  %v4190 = vxor.u32 %v4176, 2147483648
  %v4191 = vmul.f32 %v4190, 1.442695
  %v4192 = vpow.pop %v4191
  %v4193 = vadd.f32 %v4192, 1.0
  %v4194 = vrcp.pop %v4193
  %v4195 = vmul.f32 1.0, %v4194
  %v4196 = vmul.f32 %v4188, %v3668
  %v4197 = vmul.f32 %v4182, %v4189
  %v4198 = vadd.f32 %v4196, %v4197
  %v4199 = vtanh.pop %v4198
  %v4200 = vmul.f32 %v4195, %v4199
  %4201 = vmatprep.subr.mxu0 %v1491
  %4202 = vmatpush1.msra.mxu0 %v1490
  %4203 = vmatprep.subr.mxu0 %v1495
  %4204 = vmatpush1.msra.mxu0 %v1494
  %4205 = vmatprep.subr.mxu0 %v1499
  %4206 = vmatpush1.msra.mxu0 %v1498
  %4207 = vmatprep.subr.mxu0 %v1503
  %4208 = vmatpush1.msra.mxu0 %v1502
  %4209 = vmatprep.subr.mxu0 %v1507
  %4210 = vmatpush1.msra.mxu0 %v1506
  %4211 = vmatprep.subr.mxu0 %v1511
  %4212 = vmatpush1.msra.mxu0 %v1510
  %4213 = vmatprep.subr.mxu0 %v1515
  %4214 = vmatpush1.msra.mxu0 %v1514
  %4215 = vmatprep.subr.mxu0 %v1519
  %4216 = vmatpush1.msra.mxu0 %v1518
  %4217 = vmatprep.subr.mxu0 %v1523
  %4218 = vmatpush1.msra.mxu0 %v1522
  %4219 = vmatprep.subr.mxu0 %v1527
  %4220 = vmatpush1.msra.mxu0 %v1526
  %4221 = vmatprep.subr.mxu0 %v1531
  %4222 = vmatpush1.msra.mxu0 %v1530
  %4223 = vmatprep.subr.mxu0 %v1535
  %4224 = vmatpush1.msra.mxu0 %v1534
  %4225 = vmatprep.subr.mxu0 %v1539
  %4226 = vmatpush1.msra.mxu0 %v1538
  %4227 = vmatprep.subr.mxu0 %v1543
  %4228 = vmatpush1.msra.mxu0 %v1542
  %4229 = vmatprep.subr.mxu0 %v1547
  %4230 = vmatpush1.msra.mxu0 %v1546
  %4231 = vmatprep.subr.mxu0 %v1551
  %4232 = vmatpush1.msra.mxu0 %v1550
  %4233 = vmatprep.subr.mxu0 0.0
  %4234 = vmatpush1.msra.mxu0 0.0
  %4235 = vmatprep.subr.mxu0 0.0
  %4236 = vmatpush1.msra.mxu0 0.0
  %4237 = vmatprep.subr.mxu0 0.0
  %4238 = vmatpush1.msra.mxu0 0.0
  %4239 = vmatprep.subr.mxu0 0.0
  %4240 = vmatpush1.msra.mxu0 0.0
  %4241 = vmatprep.subr.mxu0 0.0
  %4242 = vmatpush1.msra.mxu0 0.0
  %4243 = vmatprep.subr.mxu0 0.0
  %4244 = vmatpush1.msra.mxu0 0.0
  %4245 = vmatprep.subr.mxu0 0.0
  %4246 = vmatpush1.msra.mxu0 0.0
  %4247 = vmatprep.subr.mxu0 0.0
  %4248 = vmatpush1.msra.mxu0 0.0
  %4249 = vmatprep.subr.mxu0 0.0
  %4250 = vmatpush1.msra.mxu0 0.0
  %4251 = vmatprep.subr.mxu0 0.0
  %4252 = vmatpush1.msra.mxu0 0.0
  %4253 = vmatprep.subr.mxu0 0.0
  %4254 = vmatpush1.msra.mxu0 0.0
  %4255 = vmatprep.subr.mxu0 0.0
  %4256 = vmatpush1.msra.mxu0 0.0
  %4257 = vmatprep.subr.mxu0 0.0
  %4258 = vmatpush1.msra.mxu0 0.0
  %4259 = vmatprep.subr.mxu0 0.0
  %4260 = vmatpush1.msra.mxu0 0.0
  %4261 = vmatprep.subr.mxu0 0.0
  %4262 = vmatpush1.msra.mxu0 0.0
  %4263 = vmatprep.subr.mxu0 0.0
  %4264 = vmatpush1.msra.mxu0 0.0
  %4265 = vmatprep.mubr.f32.mxu0 0.0
  %4266 = vmatmul.mubr.f32.gmra.mrb[0].mxu0 %v3840
  %v4267 = vpop.f32.mrb[0].mxu0
  %v4268 = vadd.f32 0.0, %v4267
  %v4269 = vpop.f32.mrb[0].mxu0
  %v4270 = vadd.f32 0.0, %v4269
  %4271 = vdwg.mxu0
  %4272 = vmatprep.subr.mxu0 %v1493
  %4273 = vmatpush1.msra.mxu0 %v1492
  %4274 = vmatprep.subr.mxu0 %v1497
  %4275 = vmatpush1.msra.mxu0 %v1496
  %4276 = vmatprep.subr.mxu0 %v1501
  %4277 = vmatpush1.msra.mxu0 %v1500
  %4278 = vmatprep.subr.mxu0 %v1505
  %4279 = vmatpush1.msra.mxu0 %v1504
  %4280 = vmatprep.subr.mxu0 %v1509
  %4281 = vmatpush1.msra.mxu0 %v1508
  %4282 = vmatprep.subr.mxu0 %v1513
  %4283 = vmatpush1.msra.mxu0 %v1512
  %4284 = vmatprep.subr.mxu0 %v1517
  %4285 = vmatpush1.msra.mxu0 %v1516
  %4286 = vmatprep.subr.mxu0 %v1521
  %4287 = vmatpush1.msra.mxu0 %v1520
  %4288 = vmatprep.subr.mxu0 %v1525
  %4289 = vmatpush1.msra.mxu0 %v1524
  %4290 = vmatprep.subr.mxu0 %v1529
  %4291 = vmatpush1.msra.mxu0 %v1528
  %4292 = vmatprep.subr.mxu0 %v1533
  %4293 = vmatpush1.msra.mxu0 %v1532
  %4294 = vmatprep.subr.mxu0 %v1537
  %4295 = vmatpush1.msra.mxu0 %v1536
  %4296 = vmatprep.subr.mxu0 %v1541
  %4297 = vmatpush1.msra.mxu0 %v1540
  %4298 = vmatprep.subr.mxu0 %v1545
  %4299 = vmatpush1.msra.mxu0 %v1544
  %4300 = vmatprep.subr.mxu0 %v1549
  %4301 = vmatpush1.msra.mxu0 %v1548
  %4302 = vmatprep.subr.mxu0 %v1553
  %4303 = vmatpush1.msra.mxu0 %v1552
  %4304 = vmatprep.subr.mxu0 0.0
  %4305 = vmatpush1.msra.mxu0 0.0
  %4306 = vmatprep.subr.mxu0 0.0
  %4307 = vmatpush1.msra.mxu0 0.0
  %4308 = vmatprep.subr.mxu0 0.0
  %4309 = vmatpush1.msra.mxu0 0.0
  %4310 = vmatprep.subr.mxu0 0.0
  %4311 = vmatpush1.msra.mxu0 0.0
  %4312 = vmatprep.subr.mxu0 0.0
  %4313 = vmatpush1.msra.mxu0 0.0
  %4314 = vmatprep.subr.mxu0 0.0
  %4315 = vmatpush1.msra.mxu0 0.0
  %4316 = vmatprep.subr.mxu0 0.0
  %4317 = vmatpush1.msra.mxu0 0.0
  %4318 = vmatprep.subr.mxu0 0.0
  %4319 = vmatpush1.msra.mxu0 0.0
  %4320 = vmatprep.subr.mxu0 0.0
  %4321 = vmatpush1.msra.mxu0 0.0
  %4322 = vmatprep.subr.mxu0 0.0
  %4323 = vmatpush1.msra.mxu0 0.0
  %4324 = vmatprep.subr.mxu0 0.0
  %4325 = vmatpush1.msra.mxu0 0.0
  %4326 = vmatprep.subr.mxu0 0.0
  %4327 = vmatpush1.msra.mxu0 0.0
  %4328 = vmatprep.subr.mxu0 0.0
  %4329 = vmatpush1.msra.mxu0 0.0
  %4330 = vmatprep.subr.mxu0 0.0
  %4331 = vmatpush1.msra.mxu0 0.0
  %4332 = vmatprep.subr.mxu0 0.0
  %4333 = vmatpush1.msra.mxu0 0.0
  %4334 = vmatprep.subr.mxu0 0.0
  %4335 = vmatpush1.msra.mxu0 0.0
  %4336 = vmatprep.mubr.f32.mxu0 0.0
  %4337 = vmatmul.mubr.f32.gmra.mrb[0].mxu0 %v3840
  %v4338 = vpop.f32.mrb[0].mxu0
  %v4339 = vadd.f32 0.0, %v4338
  %v4340 = vpop.f32.mrb[0].mxu0
  %v4341 = vadd.f32 0.0, %v4340
  %4342 = vdwg.mxu0
  %v4343 = vadd.f32 %v4027, %v4268
  %v4344 = vadd.f32 %v4028, %v4270
  %v4345 = vadd.f32 %v4029, %v4339
  %v4346 = vadd.f32 %v4030, %v4341
  %v4347 = vxor.u32 %v4343, 2147483648
  %v4348 = vmul.f32 %v4347, 1.442695
  %v4349 = vpow.pop %v4348
  %v4350 = vadd.f32 %v4349, 1.0
  %v4351 = vrcp.pop %v4350
  %v4352 = vmul.f32 1.0, %v4351
  %v4353 = vxor.u32 %v4344, 2147483648
  %v4354 = vmul.f32 %v4353, 1.442695
  %v4355 = vpow.pop %v4354
  %v4356 = vadd.f32 %v4355, 1.0
  %v4357 = vrcp.pop %v4356
  %v4358 = vmul.f32 1.0, %v4357
  %v4359 = vtanh.pop %v4345
  %v4360 = vxor.u32 %v4346, 2147483648
  %v4361 = vmul.f32 %v4360, 1.442695
  %v4362 = vpow.pop %v4361
  %v4363 = vadd.f32 %v4362, 1.0
  %v4364 = vrcp.pop %v4363
  %v4365 = vmul.f32 1.0, %v4364
  %v4366 = vmul.f32 %v4358, %v3838
  %v4367 = vmul.f32 %v4352, %v4359
  %v4368 = vadd.f32 %v4366, %v4367
  %v4369 = vtanh.pop %v4368
  %v4370 = vmul.f32 %v4365, %v4369
  %vm4371 = vcmp.gt.f32.partialorder %v4200, 0.0
  %v4372 = vmul.f32 %v4200, 0.01
  %v4373 = vsel %vm4371, %v4200, %v4372
  %vm4374 = vcmp.gt.f32.partialorder %v4370, 0.0
  %v4375 = vmul.f32 %v4370, 0.01
  %v4376 = vsel %vm4374, %v4370, %v4375
  %s4377 = scalar_lea.vmem %s9, 640
  %v4378 = vld [vmem:[%s4377] sm:$0xff]
  %v4379 = vld [vmem:[%s4377 + $0x8] sm:$0xff]
  %v4380 = vld [vmem:[%s4377 + $0x10] sm:$0xff]
  %v4381 = vld [vmem:[%s4377 + $0x18] sm:$0xff]
  %v4382 = vld [vmem:[%s4377 + $0x20] sm:$0xff]
  %v4383 = vld [vmem:[%s4377 + $0x28] sm:$0xff]
  %v4384 = vld [vmem:[%s4377 + $0x30] sm:$0xff]
  %v4385 = vld [vmem:[%s4377 + $0x38] sm:$0xff]
  %v4386 = vld [vmem:[%s4377 + $0x40] sm:$0xff]
  %v4387 = vld [vmem:[%s4377 + $0x48] sm:$0xff]
  %v4388 = vld [vmem:[%s4377 + $0x50] sm:$0xff]
  %v4389 = vld [vmem:[%s4377 + $0x58] sm:$0xff]
  %v4390 = vld [vmem:[%s4377 + $0x60] sm:$0xff]
  %v4391 = vld [vmem:[%s4377 + $0x68] sm:$0xff]
  %v4392 = vld [vmem:[%s4377 + $0x70] sm:$0xff]
  %v4393 = vld [vmem:[%s4377 + $0x78] sm:$0xff]
  %4394 = vmatprep.subr.mxu0 0.0
  %4395 = vmatpush1.msra.mxu0 %v4378
  %4396 = vmatprep.subr.mxu0 0.0
  %4397 = vmatpush1.msra.mxu0 %v4379
  %4398 = vmatprep.subr.mxu0 0.0
  %4399 = vmatpush1.msra.mxu0 %v4380
  %4400 = vmatprep.subr.mxu0 0.0
  %4401 = vmatpush1.msra.mxu0 %v4381
  %4402 = vmatprep.subr.mxu0 0.0
  %4403 = vmatpush1.msra.mxu0 %v4382
  %4404 = vmatprep.subr.mxu0 0.0
  %4405 = vmatpush1.msra.mxu0 %v4383
  %4406 = vmatprep.subr.mxu0 0.0
  %4407 = vmatpush1.msra.mxu0 %v4384
  %4408 = vmatprep.subr.mxu0 0.0
  %4409 = vmatpush1.msra.mxu0 %v4385
  %4410 = vmatprep.subr.mxu0 0.0
  %4411 = vmatpush1.msra.mxu0 %v4386
  %4412 = vmatprep.subr.mxu0 0.0
  %4413 = vmatpush1.msra.mxu0 %v4387
  %4414 = vmatprep.subr.mxu0 0.0
  %4415 = vmatpush1.msra.mxu0 %v4388
  %4416 = vmatprep.subr.mxu0 0.0
  %4417 = vmatpush1.msra.mxu0 %v4389
  %4418 = vmatprep.subr.mxu0 0.0
  %4419 = vmatpush1.msra.mxu0 %v4390
  %4420 = vmatprep.subr.mxu0 0.0
  %4421 = vmatpush1.msra.mxu0 %v4391
  %4422 = vmatprep.subr.mxu0 0.0
  %4423 = vmatpush1.msra.mxu0 %v4392
  %4424 = vmatprep.subr.mxu0 0.0
  %4425 = vmatpush1.msra.mxu0 %v4393
  %4426 = vmatprep.subr.mxu0 0.0
  %4427 = vmatpush1.msra.mxu0 0.0
  %4428 = vmatprep.subr.mxu0 0.0
  %4429 = vmatpush1.msra.mxu0 0.0
  %4430 = vmatprep.subr.mxu0 0.0
  %4431 = vmatpush1.msra.mxu0 0.0
  %4432 = vmatprep.subr.mxu0 0.0
  %4433 = vmatpush1.msra.mxu0 0.0
  %4434 = vmatprep.subr.mxu0 0.0
  %4435 = vmatpush1.msra.mxu0 0.0
  %4436 = vmatprep.subr.mxu0 0.0
  %4437 = vmatpush1.msra.mxu0 0.0
  %4438 = vmatprep.subr.mxu0 0.0
  %4439 = vmatpush1.msra.mxu0 0.0
  %4440 = vmatprep.subr.mxu0 0.0
  %4441 = vmatpush1.msra.mxu0 0.0
  %4442 = vmatprep.subr.mxu0 0.0
  %4443 = vmatpush1.msra.mxu0 0.0
  %4444 = vmatprep.subr.mxu0 0.0
  %4445 = vmatpush1.msra.mxu0 0.0
  %4446 = vmatprep.subr.mxu0 0.0
  %4447 = vmatpush1.msra.mxu0 0.0
  %4448 = vmatprep.subr.mxu0 0.0
  %4449 = vmatpush1.msra.mxu0 0.0
  %4450 = vmatprep.subr.mxu0 0.0
  %4451 = vmatpush1.msra.mxu0 0.0
  %4452 = vmatprep.subr.mxu0 0.0
  %4453 = vmatpush1.msra.mxu0 0.0
  %4454 = vmatprep.subr.mxu0 0.0
  %4455 = vmatpush1.msra.mxu0 0.0
  %4456 = vmatprep.subr.mxu0 0.0
  %4457 = vmatpush1.msra.mxu0 0.0
  %4458 = vmatprep.mubr.f32.mxu0 0.0
  %4459 = vmatmul.mubr.f32.gmra.mrb[0].mxu0 %v4373
  %v4460 = vpop.f32.mrb[0].mxu0
  %v4461 = vadd.f32 0.0, %v4460
  %v4462 = vpop.f32.mrb[0].mxu0
  %4463 = vdwg.mxu0
  %v4464 = vadd.f32 %v4022, %v4461
  %s4465 = scalar_lea.vmem %s10, 256
  %v4466 = vld [vmem:[%s4465] sm:$0xff]
  %v4467 = vld [vmem:[%s4465 + $0x8] sm:$0xff]
  %v4468 = vld [vmem:[%s4465 + $0x10] sm:$0xff]
  %v4469 = vld [vmem:[%s4465 + $0x18] sm:$0xff]
  %v4470 = vld [vmem:[%s4465 + $0x20] sm:$0xff]
  %v4471 = vld [vmem:[%s4465 + $0x28] sm:$0xff]
  %v4472 = vld [vmem:[%s4465 + $0x30] sm:$0xff]
  %v4473 = vld [vmem:[%s4465 + $0x38] sm:$0xff]
  %v4474 = vld [vmem:[%s4465 + $0x40] sm:$0xff]
  %v4475 = vld [vmem:[%s4465 + $0x48] sm:$0xff]
  %v4476 = vld [vmem:[%s4465 + $0x50] sm:$0xff]
  %v4477 = vld [vmem:[%s4465 + $0x58] sm:$0xff]
  %v4478 = vld [vmem:[%s4465 + $0x60] sm:$0xff]
  %v4479 = vld [vmem:[%s4465 + $0x68] sm:$0xff]
  %v4480 = vld [vmem:[%s4465 + $0x70] sm:$0xff]
  %v4481 = vld [vmem:[%s4465 + $0x78] sm:$0xff]
  %4482 = vmatprep.subr.mxu0 0.0
  %4483 = vmatpush1.msra.mxu0 %v4466
  %4484 = vmatprep.subr.mxu0 0.0
  %4485 = vmatpush1.msra.mxu0 %v4467
  %4486 = vmatprep.subr.mxu0 0.0
  %4487 = vmatpush1.msra.mxu0 %v4468
  %4488 = vmatprep.subr.mxu0 0.0
  %4489 = vmatpush1.msra.mxu0 %v4469
  %4490 = vmatprep.subr.mxu0 0.0
  %4491 = vmatpush1.msra.mxu0 %v4470
  %4492 = vmatprep.subr.mxu0 0.0
  %4493 = vmatpush1.msra.mxu0 %v4471
  %4494 = vmatprep.subr.mxu0 0.0
  %4495 = vmatpush1.msra.mxu0 %v4472
  %4496 = vmatprep.subr.mxu0 0.0
  %4497 = vmatpush1.msra.mxu0 %v4473
  %4498 = vmatprep.subr.mxu0 0.0
  %4499 = vmatpush1.msra.mxu0 %v4474
  %4500 = vmatprep.subr.mxu0 0.0
  %4501 = vmatpush1.msra.mxu0 %v4475
  %4502 = vmatprep.subr.mxu0 0.0
  %4503 = vmatpush1.msra.mxu0 %v4476
  %4504 = vmatprep.subr.mxu0 0.0
  %4505 = vmatpush1.msra.mxu0 %v4477
  %4506 = vmatprep.subr.mxu0 0.0
  %4507 = vmatpush1.msra.mxu0 %v4478
  %4508 = vmatprep.subr.mxu0 0.0
  %4509 = vmatpush1.msra.mxu0 %v4479
  %4510 = vmatprep.subr.mxu0 0.0
  %4511 = vmatpush1.msra.mxu0 %v4480
  %4512 = vmatprep.subr.mxu0 0.0
  %4513 = vmatpush1.msra.mxu0 %v4481
  %4514 = vmatprep.subr.mxu0 0.0
  %4515 = vmatpush1.msra.mxu0 0.0
  %4516 = vmatprep.subr.mxu0 0.0
  %4517 = vmatpush1.msra.mxu0 0.0
  %4518 = vmatprep.subr.mxu0 0.0
  %4519 = vmatpush1.msra.mxu0 0.0
  %4520 = vmatprep.subr.mxu0 0.0
  %4521 = vmatpush1.msra.mxu0 0.0
  %4522 = vmatprep.subr.mxu0 0.0
  %4523 = vmatpush1.msra.mxu0 0.0
  %4524 = vmatprep.subr.mxu0 0.0
  %4525 = vmatpush1.msra.mxu0 0.0
  %4526 = vmatprep.subr.mxu0 0.0
  %4527 = vmatpush1.msra.mxu0 0.0
  %4528 = vmatprep.subr.mxu0 0.0
  %4529 = vmatpush1.msra.mxu0 0.0
  %4530 = vmatprep.subr.mxu0 0.0
  %4531 = vmatpush1.msra.mxu0 0.0
  %4532 = vmatprep.subr.mxu0 0.0
  %4533 = vmatpush1.msra.mxu0 0.0
  %4534 = vmatprep.subr.mxu0 0.0
  %4535 = vmatpush1.msra.mxu0 0.0
  %4536 = vmatprep.subr.mxu0 0.0
  %4537 = vmatpush1.msra.mxu0 0.0
  %4538 = vmatprep.subr.mxu0 0.0
  %4539 = vmatpush1.msra.mxu0 0.0
  %4540 = vmatprep.subr.mxu0 0.0
  %4541 = vmatpush1.msra.mxu0 0.0
  %4542 = vmatprep.subr.mxu0 0.0
  %4543 = vmatpush1.msra.mxu0 0.0
  %4544 = vmatprep.subr.mxu0 0.0
  %4545 = vmatpush1.msra.mxu0 0.0
  %4546 = vmatprep.mubr.f32.mxu0 0.0
  %4547 = vmatmul.mubr.f32.gmra.mrb[0].mxu0 %v4376
  %v4548 = vpop.f32.mrb[0].mxu0
  %v4549 = vadd.f32 0.0, %v4548
  %v4550 = vpop.f32.mrb[0].mxu0
  %4551 = vdwg.mxu0
  %v4552 = vadd.f32 %v4464, %v4549
  %v4553 = vld [vmem:[#allocation2 + $0x180] sm:$0xff]
  %v4554 = vld [vmem:[#allocation2 + $0x188] sm:$0xff]
  %v4555 = vld [vmem:[#allocation2 + $0x190] sm:$0xff]
  %v4556 = vld [vmem:[#allocation2 + $0x198] sm:$0xff]
  %v4557 = vld [vmem:[#allocation2 + $0x60] sm:$0xff]
  %v4558 = vld [vmem:[#allocation2 + $0x68] sm:$0xff]
  %v4559 = vld [vmem:[#allocation2 + $0x70] sm:$0xff]
  %v4560 = vld [vmem:[#allocation2 + $0x78] sm:$0xff]
  %4561 = vmatprep.subr.mxu0 %v1257
  %4562 = vmatpush1.msra.mxu0 %v1256
  %4563 = vmatprep.subr.mxu0 %v1261
  %4564 = vmatpush1.msra.mxu0 %v1260
  %4565 = vmatprep.subr.mxu0 %v1265
  %4566 = vmatpush1.msra.mxu0 %v1264
  %4567 = vmatprep.subr.mxu0 %v1269
  %4568 = vmatpush1.msra.mxu0 %v1268
  %4569 = vmatprep.subr.mxu0 %v1273
  %4570 = vmatpush1.msra.mxu0 %v1272
  %4571 = vmatprep.subr.mxu0 %v1277
  %4572 = vmatpush1.msra.mxu0 %v1276
  %4573 = vmatprep.subr.mxu0 %v1281
  %4574 = vmatpush1.msra.mxu0 %v1280
  %4575 = vmatprep.subr.mxu0 %v1285
  %4576 = vmatpush1.msra.mxu0 %v1284
  %4577 = vmatprep.subr.mxu0 %v1289
  %4578 = vmatpush1.msra.mxu0 %v1288
  %4579 = vmatprep.subr.mxu0 %v1293
  %4580 = vmatpush1.msra.mxu0 %v1292
  %4581 = vmatprep.subr.mxu0 %v1297
  %4582 = vmatpush1.msra.mxu0 %v1296
  %4583 = vmatprep.subr.mxu0 %v1301
  %4584 = vmatpush1.msra.mxu0 %v1300
  %4585 = vmatprep.subr.mxu0 %v1305
  %4586 = vmatpush1.msra.mxu0 %v1304
  %4587 = vmatprep.subr.mxu0 %v1309
  %4588 = vmatpush1.msra.mxu0 %v1308
  %4589 = vmatprep.subr.mxu0 %v1313
  %4590 = vmatpush1.msra.mxu0 %v1312
  %4591 = vmatprep.subr.mxu0 %v1317
  %4592 = vmatpush1.msra.mxu0 %v1316
  %4593 = vmatprep.subr.mxu0 0.0
  %4594 = vmatpush1.msra.mxu0 0.0
  %4595 = vmatprep.subr.mxu0 0.0
  %4596 = vmatpush1.msra.mxu0 0.0
  %4597 = vmatprep.subr.mxu0 0.0
  %4598 = vmatpush1.msra.mxu0 0.0
  %4599 = vmatprep.subr.mxu0 0.0
  %4600 = vmatpush1.msra.mxu0 0.0
  %4601 = vmatprep.subr.mxu0 0.0
  %4602 = vmatpush1.msra.mxu0 0.0
  %4603 = vmatprep.subr.mxu0 0.0
  %4604 = vmatpush1.msra.mxu0 0.0
  %4605 = vmatprep.subr.mxu0 0.0
  %4606 = vmatpush1.msra.mxu0 0.0
  %4607 = vmatprep.subr.mxu0 0.0
  %4608 = vmatpush1.msra.mxu0 0.0
  %4609 = vmatprep.subr.mxu0 0.0
  %4610 = vmatpush1.msra.mxu0 0.0
  %4611 = vmatprep.subr.mxu0 0.0
  %4612 = vmatpush1.msra.mxu0 0.0
  %4613 = vmatprep.subr.mxu0 0.0
  %4614 = vmatpush1.msra.mxu0 0.0
  %4615 = vmatprep.subr.mxu0 0.0
  %4616 = vmatpush1.msra.mxu0 0.0
  %4617 = vmatprep.subr.mxu0 0.0
  %4618 = vmatpush1.msra.mxu0 0.0
  %4619 = vmatprep.subr.mxu0 0.0
  %4620 = vmatpush1.msra.mxu0 0.0
  %4621 = vmatprep.subr.mxu0 0.0
  %4622 = vmatpush1.msra.mxu0 0.0
  %4623 = vmatprep.subr.mxu0 0.0
  %4624 = vmatpush1.msra.mxu0 0.0
  %4625 = vmatprep.mubr.f32.mxu0 0.0
  %4626 = vmatmul.mubr.f32.gmra.mrb[0].mxu0 %v4200
  %v4627 = vpop.f32.mrb[0].mxu0
  %v4628 = vadd.f32 0.0, %v4627
  %v4629 = vpop.f32.mrb[0].mxu0
  %v4630 = vadd.f32 0.0, %v4629
  %4631 = vdwg.mxu0
  %4632 = vmatprep.subr.mxu0 %v1259
  %4633 = vmatpush1.msra.mxu0 %v1258
  %4634 = vmatprep.subr.mxu0 %v1263
  %4635 = vmatpush1.msra.mxu0 %v1262
  %4636 = vmatprep.subr.mxu0 %v1267
  %4637 = vmatpush1.msra.mxu0 %v1266
  %4638 = vmatprep.subr.mxu0 %v1271
  %4639 = vmatpush1.msra.mxu0 %v1270
  %4640 = vmatprep.subr.mxu0 %v1275
  %4641 = vmatpush1.msra.mxu0 %v1274
  %4642 = vmatprep.subr.mxu0 %v1279
  %4643 = vmatpush1.msra.mxu0 %v1278
  %4644 = vmatprep.subr.mxu0 %v1283
  %4645 = vmatpush1.msra.mxu0 %v1282
  %4646 = vmatprep.subr.mxu0 %v1287
  %4647 = vmatpush1.msra.mxu0 %v1286
  %4648 = vmatprep.subr.mxu0 %v1291
  %4649 = vmatpush1.msra.mxu0 %v1290
  %4650 = vmatprep.subr.mxu0 %v1295
  %4651 = vmatpush1.msra.mxu0 %v1294
  %4652 = vmatprep.subr.mxu0 %v1299
  %4653 = vmatpush1.msra.mxu0 %v1298
  %4654 = vmatprep.subr.mxu0 %v1303
  %4655 = vmatpush1.msra.mxu0 %v1302
  %4656 = vmatprep.subr.mxu0 %v1307
  %4657 = vmatpush1.msra.mxu0 %v1306
  %4658 = vmatprep.subr.mxu0 %v1311
  %4659 = vmatpush1.msra.mxu0 %v1310
  %4660 = vmatprep.subr.mxu0 %v1315
  %4661 = vmatpush1.msra.mxu0 %v1314
  %4662 = vmatprep.subr.mxu0 %v1319
  %4663 = vmatpush1.msra.mxu0 %v1318
  %4664 = vmatprep.subr.mxu0 0.0
  %4665 = vmatpush1.msra.mxu0 0.0
  %4666 = vmatprep.subr.mxu0 0.0
  %4667 = vmatpush1.msra.mxu0 0.0
  %4668 = vmatprep.subr.mxu0 0.0
  %4669 = vmatpush1.msra.mxu0 0.0
  %4670 = vmatprep.subr.mxu0 0.0
  %4671 = vmatpush1.msra.mxu0 0.0
  %4672 = vmatprep.subr.mxu0 0.0
  %4673 = vmatpush1.msra.mxu0 0.0
  %4674 = vmatprep.subr.mxu0 0.0
  %4675 = vmatpush1.msra.mxu0 0.0
  %4676 = vmatprep.subr.mxu0 0.0
  %4677 = vmatpush1.msra.mxu0 0.0
  %4678 = vmatprep.subr.mxu0 0.0
  %4679 = vmatpush1.msra.mxu0 0.0
  %4680 = vmatprep.subr.mxu0 0.0
  %4681 = vmatpush1.msra.mxu0 0.0
  %4682 = vmatprep.subr.mxu0 0.0
  %4683 = vmatpush1.msra.mxu0 0.0
  %4684 = vmatprep.subr.mxu0 0.0
  %4685 = vmatpush1.msra.mxu0 0.0
  %4686 = vmatprep.subr.mxu0 0.0
  %4687 = vmatpush1.msra.mxu0 0.0
  %4688 = vmatprep.subr.mxu0 0.0
  %4689 = vmatpush1.msra.mxu0 0.0
  %4690 = vmatprep.subr.mxu0 0.0
  %4691 = vmatpush1.msra.mxu0 0.0
  %4692 = vmatprep.subr.mxu0 0.0
  %4693 = vmatpush1.msra.mxu0 0.0
  %4694 = vmatprep.subr.mxu0 0.0
  %4695 = vmatpush1.msra.mxu0 0.0
  %4696 = vmatprep.mubr.f32.mxu0 0.0
  %4697 = vmatmul.mubr.f32.gmra.mrb[0].mxu0 %v4200
  %v4698 = vpop.f32.mrb[0].mxu0
  %v4699 = vadd.f32 0.0, %v4698
  %v4700 = vpop.f32.mrb[0].mxu0
  %v4701 = vadd.f32 0.0, %v4700
  %4702 = vdwg.mxu0
  %v4703 = vadd.f32 %v4553, %v4628
  %v4704 = vadd.f32 %v4554, %v4630
  %v4705 = vadd.f32 %v4555, %v4699
  %v4706 = vadd.f32 %v4556, %v4701
  %v4707 = vxor.u32 %v4703, 2147483648
  %v4708 = vmul.f32 %v4707, 1.442695
  %v4709 = vpow.pop %v4708
  %v4710 = vadd.f32 %v4709, 1.0
  %v4711 = vrcp.pop %v4710
  %v4712 = vmul.f32 1.0, %v4711
  %v4713 = vxor.u32 %v4704, 2147483648
  %v4714 = vmul.f32 %v4713, 1.442695
  %v4715 = vpow.pop %v4714
  %v4716 = vadd.f32 %v4715, 1.0
  %v4717 = vrcp.pop %v4716
  %v4718 = vmul.f32 1.0, %v4717
  %v4719 = vtanh.pop %v4705
  %v4720 = vxor.u32 %v4706, 2147483648
  %v4721 = vmul.f32 %v4720, 1.442695
  %v4722 = vpow.pop %v4721
  %v4723 = vadd.f32 %v4722, 1.0
  %v4724 = vrcp.pop %v4723
  %v4725 = vmul.f32 1.0, %v4724
  %v4726 = vmul.f32 %v4718, %v4198
  %v4727 = vmul.f32 %v4712, %v4719
  %v4728 = vadd.f32 %v4726, %v4727
  %v4729 = vtanh.pop %v4728
  %v4730 = vmul.f32 %v4725, %v4729
  %4731 = vmatprep.subr.mxu0 %v1491
  %4732 = vmatpush1.msra.mxu0 %v1490
  %4733 = vmatprep.subr.mxu0 %v1495
  %4734 = vmatpush1.msra.mxu0 %v1494
  %4735 = vmatprep.subr.mxu0 %v1499
  %4736 = vmatpush1.msra.mxu0 %v1498
  %4737 = vmatprep.subr.mxu0 %v1503
  %4738 = vmatpush1.msra.mxu0 %v1502
  %4739 = vmatprep.subr.mxu0 %v1507
  %4740 = vmatpush1.msra.mxu0 %v1506
  %4741 = vmatprep.subr.mxu0 %v1511
  %4742 = vmatpush1.msra.mxu0 %v1510
  %4743 = vmatprep.subr.mxu0 %v1515
  %4744 = vmatpush1.msra.mxu0 %v1514
  %4745 = vmatprep.subr.mxu0 %v1519
  %4746 = vmatpush1.msra.mxu0 %v1518
  %4747 = vmatprep.subr.mxu0 %v1523
  %4748 = vmatpush1.msra.mxu0 %v1522
  %4749 = vmatprep.subr.mxu0 %v1527
  %4750 = vmatpush1.msra.mxu0 %v1526
  %4751 = vmatprep.subr.mxu0 %v1531
  %4752 = vmatpush1.msra.mxu0 %v1530
  %4753 = vmatprep.subr.mxu0 %v1535
  %4754 = vmatpush1.msra.mxu0 %v1534
  %4755 = vmatprep.subr.mxu0 %v1539
  %4756 = vmatpush1.msra.mxu0 %v1538
  %4757 = vmatprep.subr.mxu0 %v1543
  %4758 = vmatpush1.msra.mxu0 %v1542
  %4759 = vmatprep.subr.mxu0 %v1547
  %4760 = vmatpush1.msra.mxu0 %v1546
  %4761 = vmatprep.subr.mxu0 %v1551
  %4762 = vmatpush1.msra.mxu0 %v1550
  %4763 = vmatprep.subr.mxu0 0.0
  %4764 = vmatpush1.msra.mxu0 0.0
  %4765 = vmatprep.subr.mxu0 0.0
  %4766 = vmatpush1.msra.mxu0 0.0
  %4767 = vmatprep.subr.mxu0 0.0
  %4768 = vmatpush1.msra.mxu0 0.0
  %4769 = vmatprep.subr.mxu0 0.0
  %4770 = vmatpush1.msra.mxu0 0.0
  %4771 = vmatprep.subr.mxu0 0.0
  %4772 = vmatpush1.msra.mxu0 0.0
  %4773 = vmatprep.subr.mxu0 0.0
  %4774 = vmatpush1.msra.mxu0 0.0
  %4775 = vmatprep.subr.mxu0 0.0
  %4776 = vmatpush1.msra.mxu0 0.0
  %4777 = vmatprep.subr.mxu0 0.0
  %4778 = vmatpush1.msra.mxu0 0.0
  %4779 = vmatprep.subr.mxu0 0.0
  %4780 = vmatpush1.msra.mxu0 0.0
  %4781 = vmatprep.subr.mxu0 0.0
  %4782 = vmatpush1.msra.mxu0 0.0
  %4783 = vmatprep.subr.mxu0 0.0
  %4784 = vmatpush1.msra.mxu0 0.0
  %4785 = vmatprep.subr.mxu0 0.0
  %4786 = vmatpush1.msra.mxu0 0.0
  %4787 = vmatprep.subr.mxu0 0.0
  %4788 = vmatpush1.msra.mxu0 0.0
  %4789 = vmatprep.subr.mxu0 0.0
  %4790 = vmatpush1.msra.mxu0 0.0
  %4791 = vmatprep.subr.mxu0 0.0
  %4792 = vmatpush1.msra.mxu0 0.0
  %4793 = vmatprep.subr.mxu0 0.0
  %4794 = vmatpush1.msra.mxu0 0.0
  %4795 = vmatprep.mubr.f32.mxu0 0.0
  %4796 = vmatmul.mubr.f32.gmra.mrb[0].mxu0 %v4370
  %v4797 = vpop.f32.mrb[0].mxu0
  %v4798 = vadd.f32 0.0, %v4797
  %v4799 = vpop.f32.mrb[0].mxu0
  %v4800 = vadd.f32 0.0, %v4799
  %4801 = vdwg.mxu0
  %4802 = vmatprep.subr.mxu0 %v1493
  %4803 = vmatpush1.msra.mxu0 %v1492
  %4804 = vmatprep.subr.mxu0 %v1497
  %4805 = vmatpush1.msra.mxu0 %v1496
  %4806 = vmatprep.subr.mxu0 %v1501
  %4807 = vmatpush1.msra.mxu0 %v1500
  %4808 = vmatprep.subr.mxu0 %v1505
  %4809 = vmatpush1.msra.mxu0 %v1504
  %4810 = vmatprep.subr.mxu0 %v1509
  %4811 = vmatpush1.msra.mxu0 %v1508
  %4812 = vmatprep.subr.mxu0 %v1513
  %4813 = vmatpush1.msra.mxu0 %v1512
  %4814 = vmatprep.subr.mxu0 %v1517
  %4815 = vmatpush1.msra.mxu0 %v1516
  %4816 = vmatprep.subr.mxu0 %v1521
  %4817 = vmatpush1.msra.mxu0 %v1520
  %4818 = vmatprep.subr.mxu0 %v1525
  %4819 = vmatpush1.msra.mxu0 %v1524
  %4820 = vmatprep.subr.mxu0 %v1529
  %4821 = vmatpush1.msra.mxu0 %v1528
  %4822 = vmatprep.subr.mxu0 %v1533
  %4823 = vmatpush1.msra.mxu0 %v1532
  %4824 = vmatprep.subr.mxu0 %v1537
  %4825 = vmatpush1.msra.mxu0 %v1536
  %4826 = vmatprep.subr.mxu0 %v1541
  %4827 = vmatpush1.msra.mxu0 %v1540
  %4828 = vmatprep.subr.mxu0 %v1545
  %4829 = vmatpush1.msra.mxu0 %v1544
  %4830 = vmatprep.subr.mxu0 %v1549
  %4831 = vmatpush1.msra.mxu0 %v1548
  %4832 = vmatprep.subr.mxu0 %v1553
  %4833 = vmatpush1.msra.mxu0 %v1552
  %4834 = vmatprep.subr.mxu0 0.0
  %4835 = vmatpush1.msra.mxu0 0.0
  %4836 = vmatprep.subr.mxu0 0.0
  %4837 = vmatpush1.msra.mxu0 0.0
  %4838 = vmatprep.subr.mxu0 0.0
  %4839 = vmatpush1.msra.mxu0 0.0
  %4840 = vmatprep.subr.mxu0 0.0
  %4841 = vmatpush1.msra.mxu0 0.0
  %4842 = vmatprep.subr.mxu0 0.0
  %4843 = vmatpush1.msra.mxu0 0.0
  %4844 = vmatprep.subr.mxu0 0.0
  %4845 = vmatpush1.msra.mxu0 0.0
  %4846 = vmatprep.subr.mxu0 0.0
  %4847 = vmatpush1.msra.mxu0 0.0
  %4848 = vmatprep.subr.mxu0 0.0
  %4849 = vmatpush1.msra.mxu0 0.0
  %4850 = vmatprep.subr.mxu0 0.0
  %4851 = vmatpush1.msra.mxu0 0.0
  %4852 = vmatprep.subr.mxu0 0.0
  %4853 = vmatpush1.msra.mxu0 0.0
  %4854 = vmatprep.subr.mxu0 0.0
  %4855 = vmatpush1.msra.mxu0 0.0
  %4856 = vmatprep.subr.mxu0 0.0
  %4857 = vmatpush1.msra.mxu0 0.0
  %4858 = vmatprep.subr.mxu0 0.0
  %4859 = vmatpush1.msra.mxu0 0.0
  %4860 = vmatprep.subr.mxu0 0.0
  %4861 = vmatpush1.msra.mxu0 0.0
  %4862 = vmatprep.subr.mxu0 0.0
  %4863 = vmatpush1.msra.mxu0 0.0
  %4864 = vmatprep.subr.mxu0 0.0
  %4865 = vmatpush1.msra.mxu0 0.0
  %4866 = vmatprep.mubr.f32.mxu0 0.0
  %4867 = vmatmul.mubr.f32.gmra.mrb[0].mxu0 %v4370
  %v4868 = vpop.f32.mrb[0].mxu0
  %v4869 = vadd.f32 0.0, %v4868
  %v4870 = vpop.f32.mrb[0].mxu0
  %v4871 = vadd.f32 0.0, %v4870
  %4872 = vdwg.mxu0
  %v4873 = vadd.f32 %v4557, %v4798
  %v4874 = vadd.f32 %v4558, %v4800
  %v4875 = vadd.f32 %v4559, %v4869
  %v4876 = vadd.f32 %v4560, %v4871
  %v4877 = vxor.u32 %v4873, 2147483648
  %v4878 = vmul.f32 %v4877, 1.442695
  %v4879 = vpow.pop %v4878
  %v4880 = vadd.f32 %v4879, 1.0
  %v4881 = vrcp.pop %v4880
  %v4882 = vmul.f32 1.0, %v4881
  %v4883 = vxor.u32 %v4874, 2147483648
  %v4884 = vmul.f32 %v4883, 1.442695
  %v4885 = vpow.pop %v4884
  %v4886 = vadd.f32 %v4885, 1.0
  %v4887 = vrcp.pop %v4886
  %v4888 = vmul.f32 1.0, %v4887
  %v4889 = vtanh.pop %v4875
  %v4890 = vxor.u32 %v4876, 2147483648
  %v4891 = vmul.f32 %v4890, 1.442695
  %v4892 = vpow.pop %v4891
  %v4893 = vadd.f32 %v4892, 1.0
  %v4894 = vrcp.pop %v4893
  %v4895 = vmul.f32 1.0, %v4894
  %v4896 = vmul.f32 %v4888, %v4368
  %v4897 = vmul.f32 %v4882, %v4889
  %v4898 = vadd.f32 %v4896, %v4897
  %v4899 = vtanh.pop %v4898
  %v4900 = vmul.f32 %v4895, %v4899
  %vm4901 = vcmp.gt.f32.partialorder %v4730, 0.0
  %v4902 = vmul.f32 %v4730, 0.01
  %v4903 = vsel %vm4901, %v4730, %v4902
  %vm4904 = vcmp.gt.f32.partialorder %v4900, 0.0
  %v4905 = vmul.f32 %v4900, 0.01
  %v4906 = vsel %vm4904, %v4900, %v4905
  %s4907 = scalar_lea.vmem %s9, 768
  %v4908 = vld [vmem:[%s4907] sm:$0xff]
  %v4909 = vld [vmem:[%s4907 + $0x8] sm:$0xff]
  %v4910 = vld [vmem:[%s4907 + $0x10] sm:$0xff]
  %v4911 = vld [vmem:[%s4907 + $0x18] sm:$0xff]
  %v4912 = vld [vmem:[%s4907 + $0x20] sm:$0xff]
  %v4913 = vld [vmem:[%s4907 + $0x28] sm:$0xff]
  %v4914 = vld [vmem:[%s4907 + $0x30] sm:$0xff]
  %v4915 = vld [vmem:[%s4907 + $0x38] sm:$0xff]
  %v4916 = vld [vmem:[%s4907 + $0x40] sm:$0xff]
  %v4917 = vld [vmem:[%s4907 + $0x48] sm:$0xff]
  %v4918 = vld [vmem:[%s4907 + $0x50] sm:$0xff]
  %v4919 = vld [vmem:[%s4907 + $0x58] sm:$0xff]
  %v4920 = vld [vmem:[%s4907 + $0x60] sm:$0xff]
  %v4921 = vld [vmem:[%s4907 + $0x68] sm:$0xff]
  %v4922 = vld [vmem:[%s4907 + $0x70] sm:$0xff]
  %v4923 = vld [vmem:[%s4907 + $0x78] sm:$0xff]
  %4924 = vmatprep.subr.mxu0 0.0
  %4925 = vmatpush1.msra.mxu0 %v4908
  %4926 = vmatprep.subr.mxu0 0.0
  %4927 = vmatpush1.msra.mxu0 %v4909
  %4928 = vmatprep.subr.mxu0 0.0
  %4929 = vmatpush1.msra.mxu0 %v4910
  %4930 = vmatprep.subr.mxu0 0.0
  %4931 = vmatpush1.msra.mxu0 %v4911
  %4932 = vmatprep.subr.mxu0 0.0
  %4933 = vmatpush1.msra.mxu0 %v4912
  %4934 = vmatprep.subr.mxu0 0.0
  %4935 = vmatpush1.msra.mxu0 %v4913
  %4936 = vmatprep.subr.mxu0 0.0
  %4937 = vmatpush1.msra.mxu0 %v4914
  %4938 = vmatprep.subr.mxu0 0.0
  %4939 = vmatpush1.msra.mxu0 %v4915
  %4940 = vmatprep.subr.mxu0 0.0
  %4941 = vmatpush1.msra.mxu0 %v4916
  %4942 = vmatprep.subr.mxu0 0.0
  %4943 = vmatpush1.msra.mxu0 %v4917
  %4944 = vmatprep.subr.mxu0 0.0
  %4945 = vmatpush1.msra.mxu0 %v4918
  %4946 = vmatprep.subr.mxu0 0.0
  %4947 = vmatpush1.msra.mxu0 %v4919
  %4948 = vmatprep.subr.mxu0 0.0
  %4949 = vmatpush1.msra.mxu0 %v4920
  %4950 = vmatprep.subr.mxu0 0.0
  %4951 = vmatpush1.msra.mxu0 %v4921
  %4952 = vmatprep.subr.mxu0 0.0
  %4953 = vmatpush1.msra.mxu0 %v4922
  %4954 = vmatprep.subr.mxu0 0.0
  %4955 = vmatpush1.msra.mxu0 %v4923
  %4956 = vmatprep.subr.mxu0 0.0
  %4957 = vmatpush1.msra.mxu0 0.0
  %4958 = vmatprep.subr.mxu0 0.0
  %4959 = vmatpush1.msra.mxu0 0.0
  %4960 = vmatprep.subr.mxu0 0.0
  %4961 = vmatpush1.msra.mxu0 0.0
  %4962 = vmatprep.subr.mxu0 0.0
  %4963 = vmatpush1.msra.mxu0 0.0
  %4964 = vmatprep.subr.mxu0 0.0
  %4965 = vmatpush1.msra.mxu0 0.0
  %4966 = vmatprep.subr.mxu0 0.0
  %4967 = vmatpush1.msra.mxu0 0.0
  %4968 = vmatprep.subr.mxu0 0.0
  %4969 = vmatpush1.msra.mxu0 0.0
  %4970 = vmatprep.subr.mxu0 0.0
  %4971 = vmatpush1.msra.mxu0 0.0
  %4972 = vmatprep.subr.mxu0 0.0
  %4973 = vmatpush1.msra.mxu0 0.0
  %4974 = vmatprep.subr.mxu0 0.0
  %4975 = vmatpush1.msra.mxu0 0.0
  %4976 = vmatprep.subr.mxu0 0.0
  %4977 = vmatpush1.msra.mxu0 0.0
  %4978 = vmatprep.subr.mxu0 0.0
  %4979 = vmatpush1.msra.mxu0 0.0
  %4980 = vmatprep.subr.mxu0 0.0
  %4981 = vmatpush1.msra.mxu0 0.0
  %4982 = vmatprep.subr.mxu0 0.0
  %4983 = vmatpush1.msra.mxu0 0.0
  %4984 = vmatprep.subr.mxu0 0.0
  %4985 = vmatpush1.msra.mxu0 0.0
  %4986 = vmatprep.subr.mxu0 0.0
  %4987 = vmatpush1.msra.mxu0 0.0
  %4988 = vmatprep.mubr.f32.mxu0 0.0
  %4989 = vmatmul.mubr.f32.gmra.mrb[0].mxu0 %v4903
  %v4990 = vpop.f32.mrb[0].mxu0
  %v4991 = vadd.f32 0.0, %v4990
  %v4992 = vpop.f32.mrb[0].mxu0
  %4993 = vdwg.mxu0
  %v4994 = vadd.f32 %v4552, %v4991
  %s4995 = scalar_lea.vmem %s10, 128
  %v4996 = vld [vmem:[%s4995] sm:$0xff]
  %v4997 = vld [vmem:[%s4995 + $0x8] sm:$0xff]
  %v4998 = vld [vmem:[%s4995 + $0x10] sm:$0xff]
  %v4999 = vld [vmem:[%s4995 + $0x18] sm:$0xff]
  %v5000 = vld [vmem:[%s4995 + $0x20] sm:$0xff]
  %v5001 = vld [vmem:[%s4995 + $0x28] sm:$0xff]
  %v5002 = vld [vmem:[%s4995 + $0x30] sm:$0xff]
  %v5003 = vld [vmem:[%s4995 + $0x38] sm:$0xff]
  %v5004 = vld [vmem:[%s4995 + $0x40] sm:$0xff]
  %v5005 = vld [vmem:[%s4995 + $0x48] sm:$0xff]
  %v5006 = vld [vmem:[%s4995 + $0x50] sm:$0xff]
  %v5007 = vld [vmem:[%s4995 + $0x58] sm:$0xff]
  %v5008 = vld [vmem:[%s4995 + $0x60] sm:$0xff]
  %v5009 = vld [vmem:[%s4995 + $0x68] sm:$0xff]
  %v5010 = vld [vmem:[%s4995 + $0x70] sm:$0xff]
  %v5011 = vld [vmem:[%s4995 + $0x78] sm:$0xff]
  %5012 = vmatprep.subr.mxu0 0.0
  %5013 = vmatpush1.msra.mxu0 %v4996
  %5014 = vmatprep.subr.mxu0 0.0
  %5015 = vmatpush1.msra.mxu0 %v4997
  %5016 = vmatprep.subr.mxu0 0.0
  %5017 = vmatpush1.msra.mxu0 %v4998
  %5018 = vmatprep.subr.mxu0 0.0
  %5019 = vmatpush1.msra.mxu0 %v4999
  %5020 = vmatprep.subr.mxu0 0.0
  %5021 = vmatpush1.msra.mxu0 %v5000
  %5022 = vmatprep.subr.mxu0 0.0
  %5023 = vmatpush1.msra.mxu0 %v5001
  %5024 = vmatprep.subr.mxu0 0.0
  %5025 = vmatpush1.msra.mxu0 %v5002
  %5026 = vmatprep.subr.mxu0 0.0
  %5027 = vmatpush1.msra.mxu0 %v5003
  %5028 = vmatprep.subr.mxu0 0.0
  %5029 = vmatpush1.msra.mxu0 %v5004
  %5030 = vmatprep.subr.mxu0 0.0
  %5031 = vmatpush1.msra.mxu0 %v5005
  %5032 = vmatprep.subr.mxu0 0.0
  %5033 = vmatpush1.msra.mxu0 %v5006
  %5034 = vmatprep.subr.mxu0 0.0
  %5035 = vmatpush1.msra.mxu0 %v5007
  %5036 = vmatprep.subr.mxu0 0.0
  %5037 = vmatpush1.msra.mxu0 %v5008
  %5038 = vmatprep.subr.mxu0 0.0
  %5039 = vmatpush1.msra.mxu0 %v5009
  %5040 = vmatprep.subr.mxu0 0.0
  %5041 = vmatpush1.msra.mxu0 %v5010
  %5042 = vmatprep.subr.mxu0 0.0
  %5043 = vmatpush1.msra.mxu0 %v5011
  %5044 = vmatprep.subr.mxu0 0.0
  %5045 = vmatpush1.msra.mxu0 0.0
  %5046 = vmatprep.subr.mxu0 0.0
  %5047 = vmatpush1.msra.mxu0 0.0
  %5048 = vmatprep.subr.mxu0 0.0
  %5049 = vmatpush1.msra.mxu0 0.0
  %5050 = vmatprep.subr.mxu0 0.0
  %5051 = vmatpush1.msra.mxu0 0.0
  %5052 = vmatprep.subr.mxu0 0.0
  %5053 = vmatpush1.msra.mxu0 0.0
  %5054 = vmatprep.subr.mxu0 0.0
  %5055 = vmatpush1.msra.mxu0 0.0
  %5056 = vmatprep.subr.mxu0 0.0
  %5057 = vmatpush1.msra.mxu0 0.0
  %5058 = vmatprep.subr.mxu0 0.0
  %5059 = vmatpush1.msra.mxu0 0.0
  %5060 = vmatprep.subr.mxu0 0.0
  %5061 = vmatpush1.msra.mxu0 0.0
  %5062 = vmatprep.subr.mxu0 0.0
  %5063 = vmatpush1.msra.mxu0 0.0
  %5064 = vmatprep.subr.mxu0 0.0
  %5065 = vmatpush1.msra.mxu0 0.0
  %5066 = vmatprep.subr.mxu0 0.0
  %5067 = vmatpush1.msra.mxu0 0.0
  %5068 = vmatprep.subr.mxu0 0.0
  %5069 = vmatpush1.msra.mxu0 0.0
  %5070 = vmatprep.subr.mxu0 0.0
  %5071 = vmatpush1.msra.mxu0 0.0
  %5072 = vmatprep.subr.mxu0 0.0
  %5073 = vmatpush1.msra.mxu0 0.0
  %5074 = vmatprep.subr.mxu0 0.0
  %5075 = vmatpush1.msra.mxu0 0.0
  %5076 = vmatprep.mubr.f32.mxu0 0.0
  %5077 = vmatmul.mubr.f32.gmra.mrb[0].mxu0 %v4906
  %v5078 = vpop.f32.mrb[0].mxu0
  %v5079 = vadd.f32 0.0, %v5078
  %v5080 = vpop.f32.mrb[0].mxu0
  %5081 = vdwg.mxu0
  %v5082 = vadd.f32 %v4994, %v5079
  %v5083 = vld [vmem:[#allocation2 + $0x1c0] sm:$0xff]
  %v5084 = vld [vmem:[#allocation2 + $0x1c8] sm:$0xff]
  %v5085 = vld [vmem:[#allocation2 + $0x1d0] sm:$0xff]
  %v5086 = vld [vmem:[#allocation2 + $0x1d8] sm:$0xff]
  %v5087 = vld [vmem:[#allocation2 + $0x20] sm:$0xff]
  %v5088 = vld [vmem:[#allocation2 + $0x28] sm:$0xff]
  %v5089 = vld [vmem:[#allocation2 + $0x30] sm:$0xff]
  %v5090 = vld [vmem:[#allocation2 + $0x38] sm:$0xff]
  %5091 = vmatprep.subr.mxu0 %v1257
  %5092 = vmatpush1.msra.mxu0 %v1256
  %5093 = vmatprep.subr.mxu0 %v1261
  %5094 = vmatpush1.msra.mxu0 %v1260
  %5095 = vmatprep.subr.mxu0 %v1265
  %5096 = vmatpush1.msra.mxu0 %v1264
  %5097 = vmatprep.subr.mxu0 %v1269
  %5098 = vmatpush1.msra.mxu0 %v1268
  %5099 = vmatprep.subr.mxu0 %v1273
  %5100 = vmatpush1.msra.mxu0 %v1272
  %5101 = vmatprep.subr.mxu0 %v1277
  %5102 = vmatpush1.msra.mxu0 %v1276
  %5103 = vmatprep.subr.mxu0 %v1281
  %5104 = vmatpush1.msra.mxu0 %v1280
  %5105 = vmatprep.subr.mxu0 %v1285
  %5106 = vmatpush1.msra.mxu0 %v1284
  %5107 = vmatprep.subr.mxu0 %v1289
  %5108 = vmatpush1.msra.mxu0 %v1288
  %5109 = vmatprep.subr.mxu0 %v1293
  %5110 = vmatpush1.msra.mxu0 %v1292
  %5111 = vmatprep.subr.mxu0 %v1297
  %5112 = vmatpush1.msra.mxu0 %v1296
  %5113 = vmatprep.subr.mxu0 %v1301
  %5114 = vmatpush1.msra.mxu0 %v1300
  %5115 = vmatprep.subr.mxu0 %v1305
  %5116 = vmatpush1.msra.mxu0 %v1304
  %5117 = vmatprep.subr.mxu0 %v1309
  %5118 = vmatpush1.msra.mxu0 %v1308
  %5119 = vmatprep.subr.mxu0 %v1313
  %5120 = vmatpush1.msra.mxu0 %v1312
  %5121 = vmatprep.subr.mxu0 %v1317
  %5122 = vmatpush1.msra.mxu0 %v1316
  %5123 = vmatprep.subr.mxu0 0.0
  %5124 = vmatpush1.msra.mxu0 0.0
  %5125 = vmatprep.subr.mxu0 0.0
  %5126 = vmatpush1.msra.mxu0 0.0
  %5127 = vmatprep.subr.mxu0 0.0
  %5128 = vmatpush1.msra.mxu0 0.0
  %5129 = vmatprep.subr.mxu0 0.0
  %5130 = vmatpush1.msra.mxu0 0.0
  %5131 = vmatprep.subr.mxu0 0.0
  %5132 = vmatpush1.msra.mxu0 0.0
  %5133 = vmatprep.subr.mxu0 0.0
  %5134 = vmatpush1.msra.mxu0 0.0
  %5135 = vmatprep.subr.mxu0 0.0
  %5136 = vmatpush1.msra.mxu0 0.0
  %5137 = vmatprep.subr.mxu0 0.0
  %5138 = vmatpush1.msra.mxu0 0.0
  %5139 = vmatprep.subr.mxu0 0.0
  %5140 = vmatpush1.msra.mxu0 0.0
  %5141 = vmatprep.subr.mxu0 0.0
  %5142 = vmatpush1.msra.mxu0 0.0
  %5143 = vmatprep.subr.mxu0 0.0
  %5144 = vmatpush1.msra.mxu0 0.0
  %5145 = vmatprep.subr.mxu0 0.0
  %5146 = vmatpush1.msra.mxu0 0.0
  %5147 = vmatprep.subr.mxu0 0.0
  %5148 = vmatpush1.msra.mxu0 0.0
  %5149 = vmatprep.subr.mxu0 0.0
  %5150 = vmatpush1.msra.mxu0 0.0
  %5151 = vmatprep.subr.mxu0 0.0
  %5152 = vmatpush1.msra.mxu0 0.0
  %5153 = vmatprep.subr.mxu0 0.0
  %5154 = vmatpush1.msra.mxu0 0.0
  %5155 = vmatprep.mubr.f32.mxu0 0.0
  %5156 = vmatmul.mubr.f32.gmra.mrb[0].mxu0 %v4730
  %v5157 = vpop.f32.mrb[0].mxu0
  %v5158 = vadd.f32 0.0, %v5157
  %v5159 = vpop.f32.mrb[0].mxu0
  %v5160 = vadd.f32 0.0, %v5159
  %5161 = vdwg.mxu0
  %5162 = vmatprep.subr.mxu0 %v1259
  %5163 = vmatpush1.msra.mxu0 %v1258
  %5164 = vmatprep.subr.mxu0 %v1263
  %5165 = vmatpush1.msra.mxu0 %v1262
  %5166 = vmatprep.subr.mxu0 %v1267
  %5167 = vmatpush1.msra.mxu0 %v1266
  %5168 = vmatprep.subr.mxu0 %v1271
  %5169 = vmatpush1.msra.mxu0 %v1270
  %5170 = vmatprep.subr.mxu0 %v1275
  %5171 = vmatpush1.msra.mxu0 %v1274
  %5172 = vmatprep.subr.mxu0 %v1279
  %5173 = vmatpush1.msra.mxu0 %v1278
  %5174 = vmatprep.subr.mxu0 %v1283
  %5175 = vmatpush1.msra.mxu0 %v1282
  %5176 = vmatprep.subr.mxu0 %v1287
  %5177 = vmatpush1.msra.mxu0 %v1286
  %5178 = vmatprep.subr.mxu0 %v1291
  %5179 = vmatpush1.msra.mxu0 %v1290
  %5180 = vmatprep.subr.mxu0 %v1295
  %5181 = vmatpush1.msra.mxu0 %v1294
  %5182 = vmatprep.subr.mxu0 %v1299
  %5183 = vmatpush1.msra.mxu0 %v1298
  %5184 = vmatprep.subr.mxu0 %v1303
  %5185 = vmatpush1.msra.mxu0 %v1302
  %5186 = vmatprep.subr.mxu0 %v1307
  %5187 = vmatpush1.msra.mxu0 %v1306
  %5188 = vmatprep.subr.mxu0 %v1311
  %5189 = vmatpush1.msra.mxu0 %v1310
  %5190 = vmatprep.subr.mxu0 %v1315
  %5191 = vmatpush1.msra.mxu0 %v1314
  %5192 = vmatprep.subr.mxu0 %v1319
  %5193 = vmatpush1.msra.mxu0 %v1318
  %5194 = vmatprep.subr.mxu0 0.0
  %5195 = vmatpush1.msra.mxu0 0.0
  %5196 = vmatprep.subr.mxu0 0.0
  %5197 = vmatpush1.msra.mxu0 0.0
  %5198 = vmatprep.subr.mxu0 0.0
  %5199 = vmatpush1.msra.mxu0 0.0
  %5200 = vmatprep.subr.mxu0 0.0
  %5201 = vmatpush1.msra.mxu0 0.0
  %5202 = vmatprep.subr.mxu0 0.0
  %5203 = vmatpush1.msra.mxu0 0.0
  %5204 = vmatprep.subr.mxu0 0.0
  %5205 = vmatpush1.msra.mxu0 0.0
  %5206 = vmatprep.subr.mxu0 0.0
  %5207 = vmatpush1.msra.mxu0 0.0
  %5208 = vmatprep.subr.mxu0 0.0
  %5209 = vmatpush1.msra.mxu0 0.0
  %5210 = vmatprep.subr.mxu0 0.0
  %5211 = vmatpush1.msra.mxu0 0.0
  %5212 = vmatprep.subr.mxu0 0.0
  %5213 = vmatpush1.msra.mxu0 0.0
  %5214 = vmatprep.subr.mxu0 0.0
  %5215 = vmatpush1.msra.mxu0 0.0
  %5216 = vmatprep.subr.mxu0 0.0
  %5217 = vmatpush1.msra.mxu0 0.0
  %5218 = vmatprep.subr.mxu0 0.0
  %5219 = vmatpush1.msra.mxu0 0.0
  %5220 = vmatprep.subr.mxu0 0.0
  %5221 = vmatpush1.msra.mxu0 0.0
  %5222 = vmatprep.subr.mxu0 0.0
  %5223 = vmatpush1.msra.mxu0 0.0
  %5224 = vmatprep.subr.mxu0 0.0
  %5225 = vmatpush1.msra.mxu0 0.0
  %5226 = vmatprep.mubr.f32.mxu0 0.0
  %5227 = vmatmul.mubr.f32.gmra.mrb[0].mxu0 %v4730
  %v5228 = vpop.f32.mrb[0].mxu0
  %v5229 = vadd.f32 0.0, %v5228
  %v5230 = vpop.f32.mrb[0].mxu0
  %v5231 = vadd.f32 0.0, %v5230
  %5232 = vdwg.mxu0
  %v5233 = vadd.f32 %v5083, %v5158
  %v5234 = vadd.f32 %v5084, %v5160
  %v5235 = vadd.f32 %v5085, %v5229
  %v5236 = vadd.f32 %v5086, %v5231
  %v5237 = vxor.u32 %v5233, 2147483648
  %v5238 = vmul.f32 %v5237, 1.442695
  %v5239 = vpow.pop %v5238
  %v5240 = vadd.f32 %v5239, 1.0
  %v5241 = vrcp.pop %v5240
  %v5242 = vmul.f32 1.0, %v5241
  %v5243 = vxor.u32 %v5234, 2147483648
  %v5244 = vmul.f32 %v5243, 1.442695
  %v5245 = vpow.pop %v5244
  %v5246 = vadd.f32 %v5245, 1.0
  %v5247 = vrcp.pop %v5246
  %v5248 = vmul.f32 1.0, %v5247
  %v5249 = vtanh.pop %v5235
  %v5250 = vxor.u32 %v5236, 2147483648
  %v5251 = vmul.f32 %v5250, 1.442695
  %v5252 = vpow.pop %v5251
  %v5253 = vadd.f32 %v5252, 1.0
  %v5254 = vrcp.pop %v5253
  %v5255 = vmul.f32 1.0, %v5254
  %v5256 = vmul.f32 %v5248, %v4728
  %v5257 = vmul.f32 %v5242, %v5249
  %v5258 = vadd.f32 %v5256, %v5257
  %v5259 = vtanh.pop %v5258
  %v5260 = vmul.f32 %v5255, %v5259
  %5261 = vmatprep.subr.mxu0 %v1491
  %5262 = vmatpush1.msra.mxu0 %v1490
  %5263 = vmatprep.subr.mxu0 %v1495
  %5264 = vmatpush1.msra.mxu0 %v1494
  %5265 = vmatprep.subr.mxu0 %v1499
  %5266 = vmatpush1.msra.mxu0 %v1498
  %5267 = vmatprep.subr.mxu0 %v1503
  %5268 = vmatpush1.msra.mxu0 %v1502
  %5269 = vmatprep.subr.mxu0 %v1507
  %5270 = vmatpush1.msra.mxu0 %v1506
  %5271 = vmatprep.subr.mxu0 %v1511
  %5272 = vmatpush1.msra.mxu0 %v1510
  %5273 = vmatprep.subr.mxu0 %v1515
  %5274 = vmatpush1.msra.mxu0 %v1514
  %5275 = vmatprep.subr.mxu0 %v1519
  %5276 = vmatpush1.msra.mxu0 %v1518
  %5277 = vmatprep.subr.mxu0 %v1523
  %5278 = vmatpush1.msra.mxu0 %v1522
  %5279 = vmatprep.subr.mxu0 %v1527
  %5280 = vmatpush1.msra.mxu0 %v1526
  %5281 = vmatprep.subr.mxu0 %v1531
  %5282 = vmatpush1.msra.mxu0 %v1530
  %5283 = vmatprep.subr.mxu0 %v1535
  %5284 = vmatpush1.msra.mxu0 %v1534
  %5285 = vmatprep.subr.mxu0 %v1539
  %5286 = vmatpush1.msra.mxu0 %v1538
  %5287 = vmatprep.subr.mxu0 %v1543
  %5288 = vmatpush1.msra.mxu0 %v1542
  %5289 = vmatprep.subr.mxu0 %v1547
  %5290 = vmatpush1.msra.mxu0 %v1546
  %5291 = vmatprep.subr.mxu0 %v1551
  %5292 = vmatpush1.msra.mxu0 %v1550
  %5293 = vmatprep.subr.mxu0 0.0
  %5294 = vmatpush1.msra.mxu0 0.0
  %5295 = vmatprep.subr.mxu0 0.0
  %5296 = vmatpush1.msra.mxu0 0.0
  %5297 = vmatprep.subr.mxu0 0.0
  %5298 = vmatpush1.msra.mxu0 0.0
  %5299 = vmatprep.subr.mxu0 0.0
  %5300 = vmatpush1.msra.mxu0 0.0
  %5301 = vmatprep.subr.mxu0 0.0
  %5302 = vmatpush1.msra.mxu0 0.0
  %5303 = vmatprep.subr.mxu0 0.0
  %5304 = vmatpush1.msra.mxu0 0.0
  %5305 = vmatprep.subr.mxu0 0.0
  %5306 = vmatpush1.msra.mxu0 0.0
  %5307 = vmatprep.subr.mxu0 0.0
  %5308 = vmatpush1.msra.mxu0 0.0
  %5309 = vmatprep.subr.mxu0 0.0
  %5310 = vmatpush1.msra.mxu0 0.0
  %5311 = vmatprep.subr.mxu0 0.0
  %5312 = vmatpush1.msra.mxu0 0.0
  %5313 = vmatprep.subr.mxu0 0.0
  %5314 = vmatpush1.msra.mxu0 0.0
  %5315 = vmatprep.subr.mxu0 0.0
  %5316 = vmatpush1.msra.mxu0 0.0
  %5317 = vmatprep.subr.mxu0 0.0
  %5318 = vmatpush1.msra.mxu0 0.0
  %5319 = vmatprep.subr.mxu0 0.0
  %5320 = vmatpush1.msra.mxu0 0.0
  %5321 = vmatprep.subr.mxu0 0.0
  %5322 = vmatpush1.msra.mxu0 0.0
  %5323 = vmatprep.subr.mxu0 0.0
  %5324 = vmatpush1.msra.mxu0 0.0
  %5325 = vmatprep.mubr.f32.mxu0 0.0
  %5326 = vmatmul.mubr.f32.gmra.mrb[0].mxu0 %v4900
  %v5327 = vpop.f32.mrb[0].mxu0
  %v5328 = vadd.f32 0.0, %v5327
  %v5329 = vpop.f32.mrb[0].mxu0
  %v5330 = vadd.f32 0.0, %v5329
  %5331 = vdwg.mxu0
  %5332 = vmatprep.subr.mxu0 %v1493
  %5333 = vmatpush1.msra.mxu0 %v1492
  %5334 = vmatprep.subr.mxu0 %v1497
  %5335 = vmatpush1.msra.mxu0 %v1496
  %5336 = vmatprep.subr.mxu0 %v1501
  %5337 = vmatpush1.msra.mxu0 %v1500
  %5338 = vmatprep.subr.mxu0 %v1505
  %5339 = vmatpush1.msra.mxu0 %v1504
  %5340 = vmatprep.subr.mxu0 %v1509
  %5341 = vmatpush1.msra.mxu0 %v1508
  %5342 = vmatprep.subr.mxu0 %v1513
  %5343 = vmatpush1.msra.mxu0 %v1512
  %5344 = vmatprep.subr.mxu0 %v1517
  %5345 = vmatpush1.msra.mxu0 %v1516
  %5346 = vmatprep.subr.mxu0 %v1521
  %5347 = vmatpush1.msra.mxu0 %v1520
  %5348 = vmatprep.subr.mxu0 %v1525
  %5349 = vmatpush1.msra.mxu0 %v1524
  %5350 = vmatprep.subr.mxu0 %v1529
  %5351 = vmatpush1.msra.mxu0 %v1528
  %5352 = vmatprep.subr.mxu0 %v1533
  %5353 = vmatpush1.msra.mxu0 %v1532
  %5354 = vmatprep.subr.mxu0 %v1537
  %5355 = vmatpush1.msra.mxu0 %v1536
  %5356 = vmatprep.subr.mxu0 %v1541
  %5357 = vmatpush1.msra.mxu0 %v1540
  %5358 = vmatprep.subr.mxu0 %v1545
  %5359 = vmatpush1.msra.mxu0 %v1544
  %5360 = vmatprep.subr.mxu0 %v1549
  %5361 = vmatpush1.msra.mxu0 %v1548
  %5362 = vmatprep.subr.mxu0 %v1553
  %5363 = vmatpush1.msra.mxu0 %v1552
  %5364 = vmatprep.subr.mxu0 0.0
  %5365 = vmatpush1.msra.mxu0 0.0
  %5366 = vmatprep.subr.mxu0 0.0
  %5367 = vmatpush1.msra.mxu0 0.0
  %5368 = vmatprep.subr.mxu0 0.0
  %5369 = vmatpush1.msra.mxu0 0.0
  %5370 = vmatprep.subr.mxu0 0.0
  %5371 = vmatpush1.msra.mxu0 0.0
  %5372 = vmatprep.subr.mxu0 0.0
  %5373 = vmatpush1.msra.mxu0 0.0
  %5374 = vmatprep.subr.mxu0 0.0
  %5375 = vmatpush1.msra.mxu0 0.0
  %5376 = vmatprep.subr.mxu0 0.0
  %5377 = vmatpush1.msra.mxu0 0.0
  %5378 = vmatprep.subr.mxu0 0.0
  %5379 = vmatpush1.msra.mxu0 0.0
  %5380 = vmatprep.subr.mxu0 0.0
  %5381 = vmatpush1.msra.mxu0 0.0
  %5382 = vmatprep.subr.mxu0 0.0
  %5383 = vmatpush1.msra.mxu0 0.0
  %5384 = vmatprep.subr.mxu0 0.0
  %5385 = vmatpush1.msra.mxu0 0.0
  %5386 = vmatprep.subr.mxu0 0.0
  %5387 = vmatpush1.msra.mxu0 0.0
  %5388 = vmatprep.subr.mxu0 0.0
  %5389 = vmatpush1.msra.mxu0 0.0
  %5390 = vmatprep.subr.mxu0 0.0
  %5391 = vmatpush1.msra.mxu0 0.0
  %5392 = vmatprep.subr.mxu0 0.0
  %5393 = vmatpush1.msra.mxu0 0.0
  %5394 = vmatprep.subr.mxu0 0.0
  %5395 = vmatpush1.msra.mxu0 0.0
  %5396 = vmatprep.mubr.f32.mxu0 0.0
  %5397 = vmatmul.mubr.f32.gmra.mrb[0].mxu0 %v4900
  %v5398 = vpop.f32.mrb[0].mxu0
  %v5399 = vadd.f32 0.0, %v5398
  %v5400 = vpop.f32.mrb[0].mxu0
  %v5401 = vadd.f32 0.0, %v5400
  %5402 = vdwg.mxu0
  %v5403 = vadd.f32 %v5087, %v5328
  %v5404 = vadd.f32 %v5088, %v5330
  %v5405 = vadd.f32 %v5089, %v5399
  %v5406 = vadd.f32 %v5090, %v5401
  %v5407 = vxor.u32 %v5403, 2147483648
  %v5408 = vmul.f32 %v5407, 1.442695
  %v5409 = vpow.pop %v5408
  %v5410 = vadd.f32 %v5409, 1.0
  %v5411 = vrcp.pop %v5410
  %v5412 = vmul.f32 1.0, %v5411
  %v5413 = vxor.u32 %v5404, 2147483648
  %v5414 = vmul.f32 %v5413, 1.442695
  %v5415 = vpow.pop %v5414
  %v5416 = vadd.f32 %v5415, 1.0
  %v5417 = vrcp.pop %v5416
  %v5418 = vmul.f32 1.0, %v5417
  %v5419 = vtanh.pop %v5405
  %v5420 = vxor.u32 %v5406, 2147483648
  %v5421 = vmul.f32 %v5420, 1.442695
  %v5422 = vpow.pop %v5421
  %v5423 = vadd.f32 %v5422, 1.0
  %v5424 = vrcp.pop %v5423
  %v5425 = vmul.f32 1.0, %v5424
  %v5426 = vmul.f32 %v5418, %v4898
  %v5427 = vmul.f32 %v5412, %v5419
  %v5428 = vadd.f32 %v5426, %v5427
  %v5429 = vtanh.pop %v5428
  %v5430 = vmul.f32 %v5425, %v5429
  %vm5431 = vcmp.gt.f32.partialorder %v5260, 0.0
  %v5432 = vmul.f32 %v5260, 0.01
  %v5433 = vsel %vm5431, %v5260, %v5432
  %vm5434 = vcmp.gt.f32.partialorder %v5430, 0.0
  %v5435 = vmul.f32 %v5430, 0.01
  %v5436 = vsel %vm5434, %v5430, %v5435
  %s5437 = scalar_lea.vmem %s9, 896
  %v5438 = vld [vmem:[%s5437] sm:$0xff]
  %v5439 = vld [vmem:[%s5437 + $0x8] sm:$0xff]
  %v5440 = vld [vmem:[%s5437 + $0x10] sm:$0xff]
  %v5441 = vld [vmem:[%s5437 + $0x18] sm:$0xff]
  %v5442 = vld [vmem:[%s5437 + $0x20] sm:$0xff]
  %v5443 = vld [vmem:[%s5437 + $0x28] sm:$0xff]
  %v5444 = vld [vmem:[%s5437 + $0x30] sm:$0xff]
  %v5445 = vld [vmem:[%s5437 + $0x38] sm:$0xff]
  %v5446 = vld [vmem:[%s5437 + $0x40] sm:$0xff]
  %v5447 = vld [vmem:[%s5437 + $0x48] sm:$0xff]
  %v5448 = vld [vmem:[%s5437 + $0x50] sm:$0xff]
  %v5449 = vld [vmem:[%s5437 + $0x58] sm:$0xff]
  %v5450 = vld [vmem:[%s5437 + $0x60] sm:$0xff]
  %v5451 = vld [vmem:[%s5437 + $0x68] sm:$0xff]
  %v5452 = vld [vmem:[%s5437 + $0x70] sm:$0xff]
  %v5453 = vld [vmem:[%s5437 + $0x78] sm:$0xff]
  %5454 = vmatprep.subr.mxu0 0.0
  %5455 = vmatpush1.msra.mxu0 %v5438
  %5456 = vmatprep.subr.mxu0 0.0
  %5457 = vmatpush1.msra.mxu0 %v5439
  %5458 = vmatprep.subr.mxu0 0.0
  %5459 = vmatpush1.msra.mxu0 %v5440
  %5460 = vmatprep.subr.mxu0 0.0
  %5461 = vmatpush1.msra.mxu0 %v5441
  %5462 = vmatprep.subr.mxu0 0.0
  %5463 = vmatpush1.msra.mxu0 %v5442
  %5464 = vmatprep.subr.mxu0 0.0
  %5465 = vmatpush1.msra.mxu0 %v5443
  %5466 = vmatprep.subr.mxu0 0.0
  %5467 = vmatpush1.msra.mxu0 %v5444
  %5468 = vmatprep.subr.mxu0 0.0
  %5469 = vmatpush1.msra.mxu0 %v5445
  %5470 = vmatprep.subr.mxu0 0.0
  %5471 = vmatpush1.msra.mxu0 %v5446
  %5472 = vmatprep.subr.mxu0 0.0
  %5473 = vmatpush1.msra.mxu0 %v5447
  %5474 = vmatprep.subr.mxu0 0.0
  %5475 = vmatpush1.msra.mxu0 %v5448
  %5476 = vmatprep.subr.mxu0 0.0
  %5477 = vmatpush1.msra.mxu0 %v5449
  %5478 = vmatprep.subr.mxu0 0.0
  %5479 = vmatpush1.msra.mxu0 %v5450
  %5480 = vmatprep.subr.mxu0 0.0
  %5481 = vmatpush1.msra.mxu0 %v5451
  %5482 = vmatprep.subr.mxu0 0.0
  %5483 = vmatpush1.msra.mxu0 %v5452
  %5484 = vmatprep.subr.mxu0 0.0
  %5485 = vmatpush1.msra.mxu0 %v5453
  %5486 = vmatprep.subr.mxu0 0.0
  %5487 = vmatpush1.msra.mxu0 0.0
  %5488 = vmatprep.subr.mxu0 0.0
  %5489 = vmatpush1.msra.mxu0 0.0
  %5490 = vmatprep.subr.mxu0 0.0
  %5491 = vmatpush1.msra.mxu0 0.0
  %5492 = vmatprep.subr.mxu0 0.0
  %5493 = vmatpush1.msra.mxu0 0.0
  %5494 = vmatprep.subr.mxu0 0.0
  %5495 = vmatpush1.msra.mxu0 0.0
  %5496 = vmatprep.subr.mxu0 0.0
  %5497 = vmatpush1.msra.mxu0 0.0
  %5498 = vmatprep.subr.mxu0 0.0
  %5499 = vmatpush1.msra.mxu0 0.0
  %5500 = vmatprep.subr.mxu0 0.0
  %5501 = vmatpush1.msra.mxu0 0.0
  %5502 = vmatprep.subr.mxu0 0.0
  %5503 = vmatpush1.msra.mxu0 0.0
  %5504 = vmatprep.subr.mxu0 0.0
  %5505 = vmatpush1.msra.mxu0 0.0
  %5506 = vmatprep.subr.mxu0 0.0
  %5507 = vmatpush1.msra.mxu0 0.0
  %5508 = vmatprep.subr.mxu0 0.0
  %5509 = vmatpush1.msra.mxu0 0.0
  %5510 = vmatprep.subr.mxu0 0.0
  %5511 = vmatpush1.msra.mxu0 0.0
  %5512 = vmatprep.subr.mxu0 0.0
  %5513 = vmatpush1.msra.mxu0 0.0
  %5514 = vmatprep.subr.mxu0 0.0
  %5515 = vmatpush1.msra.mxu0 0.0
  %5516 = vmatprep.subr.mxu0 0.0
  %5517 = vmatpush1.msra.mxu0 0.0
  %5518 = vmatprep.mubr.f32.mxu0 0.0
  %5519 = vmatmul.mubr.f32.gmra.mrb[0].mxu0 %v5433
  %v5520 = vpop.f32.mrb[0].mxu0
  %v5521 = vadd.f32 0.0, %v5520
  %v5522 = vpop.f32.mrb[0].mxu0
  %5523 = vdwg.mxu0
  %v5524 = vadd.f32 %v5082, %v5521
  %v5525 = vld [vmem:[%s10] sm:$0xff]
  %v5526 = vld [vmem:[%s10 + $0x8] sm:$0xff]
  %v5527 = vld [vmem:[%s10 + $0x10] sm:$0xff]
  %v5528 = vld [vmem:[%s10 + $0x18] sm:$0xff]
  %v5529 = vld [vmem:[%s10 + $0x20] sm:$0xff]
  %v5530 = vld [vmem:[%s10 + $0x28] sm:$0xff]
  %v5531 = vld [vmem:[%s10 + $0x30] sm:$0xff]
  %v5532 = vld [vmem:[%s10 + $0x38] sm:$0xff]
  %v5533 = vld [vmem:[%s10 + $0x40] sm:$0xff]
  %v5534 = vld [vmem:[%s10 + $0x48] sm:$0xff]
  %v5535 = vld [vmem:[%s10 + $0x50] sm:$0xff]
  %v5536 = vld [vmem:[%s10 + $0x58] sm:$0xff]
  %v5537 = vld [vmem:[%s10 + $0x60] sm:$0xff]
  %v5538 = vld [vmem:[%s10 + $0x68] sm:$0xff]
  %v5539 = vld [vmem:[%s10 + $0x70] sm:$0xff]
  %v5540 = vld [vmem:[%s10 + $0x78] sm:$0xff]
  %5541 = vmatprep.subr.mxu0 0.0
  %5542 = vmatpush1.msra.mxu0 %v5525
  %5543 = vmatprep.subr.mxu0 0.0
  %5544 = vmatpush1.msra.mxu0 %v5526
  %5545 = vmatprep.subr.mxu0 0.0
  %5546 = vmatpush1.msra.mxu0 %v5527
  %5547 = vmatprep.subr.mxu0 0.0
  %5548 = vmatpush1.msra.mxu0 %v5528
  %5549 = vmatprep.subr.mxu0 0.0
  %5550 = vmatpush1.msra.mxu0 %v5529
  %5551 = vmatprep.subr.mxu0 0.0
  %5552 = vmatpush1.msra.mxu0 %v5530
  %5553 = vmatprep.subr.mxu0 0.0
  %5554 = vmatpush1.msra.mxu0 %v5531
  %5555 = vmatprep.subr.mxu0 0.0
  %5556 = vmatpush1.msra.mxu0 %v5532
  %5557 = vmatprep.subr.mxu0 0.0
  %5558 = vmatpush1.msra.mxu0 %v5533
  %5559 = vmatprep.subr.mxu0 0.0
  %5560 = vmatpush1.msra.mxu0 %v5534
  %5561 = vmatprep.subr.mxu0 0.0
  %5562 = vmatpush1.msra.mxu0 %v5535
  %5563 = vmatprep.subr.mxu0 0.0
  %5564 = vmatpush1.msra.mxu0 %v5536
  %5565 = vmatprep.subr.mxu0 0.0
  %5566 = vmatpush1.msra.mxu0 %v5537
  %5567 = vmatprep.subr.mxu0 0.0
  %5568 = vmatpush1.msra.mxu0 %v5538
  %5569 = vmatprep.subr.mxu0 0.0
  %5570 = vmatpush1.msra.mxu0 %v5539
  %5571 = vmatprep.subr.mxu0 0.0
  %5572 = vmatpush1.msra.mxu0 %v5540
  %5573 = vmatprep.subr.mxu0 0.0
  %5574 = vmatpush1.msra.mxu0 0.0
  %5575 = vmatprep.subr.mxu0 0.0
  %5576 = vmatpush1.msra.mxu0 0.0
  %5577 = vmatprep.subr.mxu0 0.0
  %5578 = vmatpush1.msra.mxu0 0.0
  %5579 = vmatprep.subr.mxu0 0.0
  %5580 = vmatpush1.msra.mxu0 0.0
  %5581 = vmatprep.subr.mxu0 0.0
  %5582 = vmatpush1.msra.mxu0 0.0
  %5583 = vmatprep.subr.mxu0 0.0
  %5584 = vmatpush1.msra.mxu0 0.0
  %5585 = vmatprep.subr.mxu0 0.0
  %5586 = vmatpush1.msra.mxu0 0.0
  %5587 = vmatprep.subr.mxu0 0.0
  %5588 = vmatpush1.msra.mxu0 0.0
  %5589 = vmatprep.subr.mxu0 0.0
  %5590 = vmatpush1.msra.mxu0 0.0
  %5591 = vmatprep.subr.mxu0 0.0
  %5592 = vmatpush1.msra.mxu0 0.0
  %5593 = vmatprep.subr.mxu0 0.0
  %5594 = vmatpush1.msra.mxu0 0.0
  %5595 = vmatprep.subr.mxu0 0.0
  %5596 = vmatpush1.msra.mxu0 0.0
  %5597 = vmatprep.subr.mxu0 0.0
  %5598 = vmatpush1.msra.mxu0 0.0
  %5599 = vmatprep.subr.mxu0 0.0
  %5600 = vmatpush1.msra.mxu0 0.0
  %5601 = vmatprep.subr.mxu0 0.0
  %5602 = vmatpush1.msra.mxu0 0.0
  %5603 = vmatprep.subr.mxu0 0.0
  %5604 = vmatpush1.msra.mxu0 0.0
  %5605 = vmatprep.mubr.f32.mxu0 0.0
  %5606 = vmatmul.mubr.f32.gmra.mrb[0].mxu0 %v5436
  %v5607 = vpop.f32.mrb[0].mxu0
  %v5608 = vadd.f32 0.0, %v5607
  %v5609 = vpop.f32.mrb[0].mxu0
  %5610 = vdwg.mxu0
  %v5611 = vadd.f32 %v5524, %v5608
  %v5612 = vld [vmem:[%s11] sm:$0x1]
  %v5614 = vlaneseq
  %v5615 = vshrl.u32 %v5614, 7
  %v5616 = vsub.s32 0, %v5615
  %v5617 = vrot.slane %v5612, %v5616
  %v5619 = vadd.f32 %v5611, %v5617
  %5620 = vmax.xlane.f32.xlu0 %v5619
  %v5621 = vpop.xlane.xlu0 %5620
  %v5622 = vsub.f32 %v5619, %v5621
  %v5623 = vmul.f32 %v5622, 1.442695
  %v5624 = vpow.pop %v5623
  %5625 = vadd.xlane.f32.xlu0 %v5624
  %v5626 = vpop.xlane.xlu0 %5625
  %v5627 = vrcp.pop %v5626
  %v5628 = vmul.f32 %v5624, %v5627
  %5629 = vst [vmem:[%s12] sm:$0xff] %v5628
  // Predicated region
  $region50: #{crnn_forward.1} parent=0 // pred_check
    _
  $region51: #{crnn_forward.1} parent=0 // pred_check_branch
    %5631 = sbr.rel (0) target = $region53
  $region52: #{crnn_forward.1} parent=0 // pred_region
    _
  $region53: #{crnn_forward.1} parent=0 // pred_fallthru
    _
  // Predicated region
  $region54: #{crnn_forward.1} parent=0 // pred_check
    _
  $region55: #{crnn_forward.1} parent=0 // pred_check_branch
    %5633 = sbr.rel (0) target = $region57
  $region56: #{crnn_forward.1} parent=0 // pred_region
    _
  $region57: #{crnn_forward.1} parent=0 // pred_fallthru
    _

</llo_original>
